<compile_context>
chip_gen: v7x
topology: tpu7x:2x2x1
jax: 0.10.0
libtpu: 0.0.40
codegen_flags: <defaults>
</compile_context>

<pallas_src>
import jax
import jax.numpy as jnp
from jax import lax
from jax.experimental import pallas as pl
from jax.experimental.pallas import tpu as pltpu


def _zero_border(pad_ref):
    """Zero the 1-pixel border of a (Hp, Wp, C) padded scratch buffer."""
    Hp, Wp, C = pad_ref.shape
    zrow = jnp.zeros((1, Wp, C), pad_ref.dtype)
    zcol = jnp.zeros((Hp, 1, C), pad_ref.dtype)
    pad_ref[0:1, :, :] = zrow
    pad_ref[Hp - 1:Hp, :, :] = zrow
    pad_ref[:, 0:1, :] = zcol
    pad_ref[:, Wp - 1:Wp, :] = zcol


def _conv3x3_relu(pad_ref, w_ref, b_ref, H, W):
    """3x3 'same' conv + ReLU from a zero-padded (H+2, W+2, Cin) f32 buffer.

    w_ref: (9*Cin, Cout) bf16 (rows ordered (kh, kw, cin));  b_ref: (1, Cout) f32.
    Returns (H*W, Cout) f32.
    """
    cin = pad_ref.shape[-1]
    # im2col: 9 shifted views concatenated on the channel (lane) axis.
    taps = [pad_ref[dy:dy + H, dx:dx + W, :] for dy in range(3) for dx in range(3)]
    patches = jnp.concatenate(taps, axis=-1).reshape(H * W, 9 * cin)
    acc = jnp.dot(patches.astype(jnp.bfloat16), w_ref[...],
                  preferred_element_type=jnp.float32)
    acc = acc + b_ref[...]
    return jnp.maximum(acc, 0.0)


def fcn_kernel(x_ref,
               w1, b1, w2, b2, w3, b3, w4, b4, w5, b5, wl_t, bl_t,
               out_ref,
               pad_in, pad_mid):
    # x_ref block: (1, H, W, Cin) f32;  out_ref block: (1, num_classes, H*W) f32
    H, W = x_ref.shape[1], x_ref.shape[2]

    # Keep the zero-padding invariant by touching only the borders (cheap),
    # every step (safe under megacore sharding of the batch axis).
    _zero_border(pad_in)
    _zero_border(pad_mid)

    # conv1
    pad_in[1:H + 1, 1:W + 1, :] = x_ref[0]
    a = _conv3x3_relu(pad_in, w1, b1, H, W)                 # (H*W, nf) f32

    # conv2..conv5
    for w_ref, b_ref in ((w2, b2), (w3, b3), (w4, b4), (w5, b5)):
        nf = w_ref.shape[-1]
        pad_mid[1:H + 1, 1:W + 1, :] = a.reshape(H, W, nf)
        a = _conv3x3_relu(pad_mid, w_ref, b_ref, H, W)

    # last: 1x1 conv, no ReLU.  Compute it transposed (ncls, H*W) = Wl_t . a^T via an
    # NT dot_general so the output store is lane-dense (H*W on the lane axis).
    out_t = lax.dot_general(wl_t[...], a.astype(jnp.bfloat16),
                            (((1,), (1,)), ((), ())),
                            preferred_element_type=jnp.float32)
    out_ref[0] = (out_t + bl_t[...]).astype(out_ref.dtype)


def fcn_forward(x_nchw, params):
    """params: list of 6 tuples (w_hwio, b); w (kh, kw, I, O), b (O,). Returns NCHW."""
    B, Cin, H, W = x_nchw.shape
    # NCHW -> NHWC once on the (tiny, 4-channel) input; kernel is MXU-bound so this
    # is negligible.  The output side needs no transpose at all (free reshape below).
    x = jnp.transpose(x_nchw, (0, 2, 3, 1)).astype(jnp.float32)

    nf = params[0][0].shape[-1]
    ncls = params[-1][0].shape[-1]

    # Repack weights: 3x3 -> (9*I, O) bf16, bias (1, O) f32;
    # 1x1 -> transposed (O, I) bf16, bias (O, 1) f32 (for the NT final matmul).
    kernel_args = []
    for (w, b) in params[:5]:
        kh, kw, ci, co = w.shape
        kernel_args.append(w.reshape(kh * kw * ci, co).astype(jnp.bfloat16))
        kernel_args.append(b.reshape(1, co).astype(jnp.float32))
    wl, bl = params[5]
    kernel_args.append(wl.reshape(nf, ncls).T.astype(jnp.bfloat16))   # (ncls, nf)
    kernel_args.append(bl.reshape(ncls, 1).astype(jnp.float32))       # (ncls, 1)

    in_specs = [pl.BlockSpec((1, H, W, Cin), lambda b: (b, 0, 0, 0))]
    for p in kernel_args:
        # full-array blocks for the small weights/biases, invariant over the grid
        in_specs.append(pl.BlockSpec(p.shape, lambda b, n=p.ndim: (0,) * n))

    flops = 2 * B * H * W * (9 * Cin * nf + 4 * 9 * nf * nf + nf * ncls)
    bytes_accessed = int(x.size) * 4 + B * ncls * H * W * 4 + sum(
        int(p.size) * p.dtype.itemsize for p in kernel_args)

    out = pl.pallas_call(
        fcn_kernel,
        out_shape=jax.ShapeDtypeStruct((B, ncls, H * W), jnp.float32),
        grid_spec=pltpu.PrefetchScalarGridSpec(
            num_scalar_prefetch=0,
            grid=(B,),
            in_specs=in_specs,
            out_specs=pl.BlockSpec((1, ncls, H * W), lambda b: (b, 0, 0)),
            scratch_shapes=[
                pltpu.VMEM((H + 2, W + 2, Cin), jnp.float32),
                pltpu.VMEM((H + 2, W + 2, nf), jnp.float32),
            ]),
        compiler_params=pltpu.CompilerParams(
            dimension_semantics=("parallel",),        # batch steps are independent
            vmem_limit_bytes=32 * 1024 * 1024),
        cost_estimate=pl.CostEstimate(
            flops=flops, transcendentals=0, bytes_accessed=bytes_accessed),
    )(x, *kernel_args)

    # (B, ncls, H*W) -> NCHW: pure reshape, no data movement.
    return out.reshape(B, ncls, H, W)


def fcn_reference(x_nchw, params):
    """Pure-JAX f32 reference (lax.conv) for correctness checking."""
    a = jnp.transpose(x_nchw, (0, 2, 3, 1)).astype(jnp.float32)
    for i, (w, b) in enumerate(params):
        pad = "SAME" if w.shape[0] == 3 else "VALID"
        a = lax.conv_general_dilated(
            a, w.astype(jnp.float32), (1, 1), pad,
            dimension_numbers=("NHWC", "HWIO", "NHWC")) + b
        if i < 5:
            a = jnp.maximum(a, 0.0)
    return jnp.transpose(a, (0, 3, 1, 2))


def init_fcn_params(key, in_channels, num_classes, num_filters):
    """Deterministic init; weights stored HWIO, biases (O,)."""
    shapes = [
        (3, 3, in_channels, num_filters),
        (3, 3, num_filters, num_filters),
        (3, 3, num_filters, num_filters),
        (3, 3, num_filters, num_filters),
        (3, 3, num_filters, num_filters),
        (1, 1, num_filters, num_classes),
    ]
    params = []
    for s in shapes:
        key, kw, kb = jax.random.split(key, 3)
        fan_in = s[0] * s[1] * s[2]
        bound = 1.0 / jnp.sqrt(fan_in)
        w = jax.random.uniform(kw, s, jnp.float32, -bound, bound)
        b = jax.random.uniform(kb, (s[3],), jnp.float32, -bound, bound)
        params.append((w, b))
    return params


if __name__ == "__main__":
    B, in_channels, num_classes, num_filters = 2, 4, 3, 32
    H = W = 16

    key = jax.random.PRNGKey(0)
    key, kx = jax.random.split(key)
    x = jax.random.normal(kx, (B, in_channels, H, W), jnp.float32)  # NCHW like PyTorch

    params = init_fcn_params(key, in_channels, num_classes, num_filters)

    out = fcn_forward(x, params)
    out = jax.block_until_ready(out)

    ref = fcn_reference(x, params)
    assert out.shape == (B, num_classes, H, W)
    # bf16 matmul operands (f32 accumulation) -> loosened tolerance vs the f32 reference.
    assert jnp.allclose(out, ref, atol=5e-2, rtol=5e-2)

    print("KERNEL_OK")
</pallas_src>

<mosaic_0001>
module attributes {stable_mosaic.version = 11 : i64} {
  func.func @fcn_kernel(%arg0: i32, %arg1: memref<1x16x16x4xf32, #tpu.memory_space<vmem>>, %arg2: memref<36x32xbf16, #tpu.memory_space<vmem>>, %arg3: memref<1x32xf32, #tpu.memory_space<vmem>>, %arg4: memref<288x32xbf16, #tpu.memory_space<vmem>>, %arg5: memref<1x32xf32, #tpu.memory_space<vmem>>, %arg6: memref<288x32xbf16, #tpu.memory_space<vmem>>, %arg7: memref<1x32xf32, #tpu.memory_space<vmem>>, %arg8: memref<288x32xbf16, #tpu.memory_space<vmem>>, %arg9: memref<1x32xf32, #tpu.memory_space<vmem>>, %arg10: memref<288x32xbf16, #tpu.memory_space<vmem>>, %arg11: memref<1x32xf32, #tpu.memory_space<vmem>>, %arg12: memref<3x32xbf16, #tpu.memory_space<vmem>>, %arg13: memref<3x1xf32, #tpu.memory_space<vmem>>, %arg14: memref<1x3x256xf32, #tpu.memory_space<vmem>>, %arg15: memref<18x18x4xf32, #tpu.memory_space<vmem>>, %arg16: memref<18x18x32xf32, #tpu.memory_space<vmem>>) attributes {dimension_semantics = [#tpu.dimension_semantics<parallel>], iteration_bounds = array<i64: 2>, scalar_prefetch = 0 : i64, scratch_operands = 2 : i64, tpu.core_type = #tpu.core_type<tc>, window_params = [{transform_indices = @transform_0, window_bounds = array<i64: 1, 16, 16, 4>}, {pipeline_mode = #tpu.pipeline_mode<synchronous>, transform_indices = @transform_1, window_bounds = array<i64: 36, 32>}, {pipeline_mode = #tpu.pipeline_mode<synchronous>, transform_indices = @transform_2, window_bounds = array<i64: 1, 32>}, {pipeline_mode = #tpu.pipeline_mode<synchronous>, transform_indices = @transform_3, window_bounds = array<i64: 288, 32>}, {pipeline_mode = #tpu.pipeline_mode<synchronous>, transform_indices = @transform_4, window_bounds = array<i64: 1, 32>}, {pipeline_mode = #tpu.pipeline_mode<synchronous>, transform_indices = @transform_5, window_bounds = array<i64: 288, 32>}, {pipeline_mode = #tpu.pipeline_mode<synchronous>, transform_indices = @transform_6, window_bounds = array<i64: 1, 32>}, {pipeline_mode = #tpu.pipeline_mode<synchronous>, transform_indices = @transform_7, window_bounds = array<i64: 288, 32>}, {pipeline_mode = #tpu.pipeline_mode<synchronous>, transform_indices = @transform_8, window_bounds = array<i64: 1, 32>}, {pipeline_mode = #tpu.pipeline_mode<synchronous>, transform_indices = @transform_9, window_bounds = array<i64: 288, 32>}, {pipeline_mode = #tpu.pipeline_mode<synchronous>, transform_indices = @transform_10, window_bounds = array<i64: 1, 32>}, {pipeline_mode = #tpu.pipeline_mode<synchronous>, transform_indices = @transform_11, window_bounds = array<i64: 3, 32>}, {pipeline_mode = #tpu.pipeline_mode<synchronous>, transform_indices = @transform_12, window_bounds = array<i64: 3, 1>}, {transform_indices = @transform_13, window_bounds = array<i64: 1, 3, 256>}]} {
    %cst = arith.constant 0.000000e+00 : f32
    %0 = vector.broadcast %cst : f32 to vector<1x18x4xf32>
    %cst_0 = arith.constant 0.000000e+00 : f32
    %1 = vector.broadcast %cst_0 : f32 to vector<18x1x4xf32>
    %c0 = arith.constant 0 : index
    %c0_1 = arith.constant 0 : index
    %c0_2 = arith.constant 0 : index
    %2 = vector.load %arg15[%c0, %c0_1, %c0_2] : memref<18x18x4xf32, #tpu.memory_space<vmem>>, vector<1x18x4xf32>
    tpu.vector_store %arg15[%c0, %c0_1, %c0_2], %0 {strides = array<i32>} : memref<18x18x4xf32, #tpu.memory_space<vmem>>, vector<1x18x4xf32>,
    %c17 = arith.constant 17 : index
    %c0_3 = arith.constant 0 : index
    %c0_4 = arith.constant 0 : index
    %3 = vector.load %arg15[%c17, %c0_3, %c0_4] : memref<18x18x4xf32, #tpu.memory_space<vmem>>, vector<1x18x4xf32>
    tpu.vector_store %arg15[%c17, %c0_3, %c0_4], %0 {strides = array<i32>} : memref<18x18x4xf32, #tpu.memory_space<vmem>>, vector<1x18x4xf32>,
    %c0_5 = arith.constant 0 : index
    %c0_6 = arith.constant 0 : index
    %c0_7 = arith.constant 0 : index
    %4 = vector.load %arg15[%c0_5, %c0_6, %c0_7] : memref<18x18x4xf32, #tpu.memory_space<vmem>>, vector<18x1x4xf32>
    tpu.vector_store %arg15[%c0_5, %c0_6, %c0_7], %1 {strides = array<i32>} : memref<18x18x4xf32, #tpu.memory_space<vmem>>, vector<18x1x4xf32>,
    %c0_8 = arith.constant 0 : index
    %c17_9 = arith.constant 17 : index
    %c0_10 = arith.constant 0 : index
    %5 = vector.load %arg15[%c0_8, %c17_9, %c0_10] : memref<18x18x4xf32, #tpu.memory_space<vmem>>, vector<18x1x4xf32>
    tpu.vector_store %arg15[%c0_8, %c17_9, %c0_10], %1 {strides = array<i32>} : memref<18x18x4xf32, #tpu.memory_space<vmem>>, vector<18x1x4xf32>,
    %cst_11 = arith.constant 0.000000e+00 : f32
    %6 = vector.broadcast %cst_11 : f32 to vector<1x18x32xf32>
    %cst_12 = arith.constant 0.000000e+00 : f32
    %7 = vector.broadcast %cst_12 : f32 to vector<18x1x32xf32>
    %c0_13 = arith.constant 0 : index
    %c0_14 = arith.constant 0 : index
    %c0_15 = arith.constant 0 : index
    %8 = vector.load %arg16[%c0_13, %c0_14, %c0_15] : memref<18x18x32xf32, #tpu.memory_space<vmem>>, vector<1x18x32xf32>
    tpu.vector_store %arg16[%c0_13, %c0_14, %c0_15], %6 {strides = array<i32>} : memref<18x18x32xf32, #tpu.memory_space<vmem>>, vector<1x18x32xf32>,
    %c17_16 = arith.constant 17 : index
    %c0_17 = arith.constant 0 : index
    %c0_18 = arith.constant 0 : index
    %9 = vector.load %arg16[%c17_16, %c0_17, %c0_18] : memref<18x18x32xf32, #tpu.memory_space<vmem>>, vector<1x18x32xf32>
    tpu.vector_store %arg16[%c17_16, %c0_17, %c0_18], %6 {strides = array<i32>} : memref<18x18x32xf32, #tpu.memory_space<vmem>>, vector<1x18x32xf32>,
    %c0_19 = arith.constant 0 : index
    %c0_20 = arith.constant 0 : index
    %c0_21 = arith.constant 0 : index
    %10 = vector.load %arg16[%c0_19, %c0_20, %c0_21] : memref<18x18x32xf32, #tpu.memory_space<vmem>>, vector<18x1x32xf32>
    tpu.vector_store %arg16[%c0_19, %c0_20, %c0_21], %7 {strides = array<i32>} : memref<18x18x32xf32, #tpu.memory_space<vmem>>, vector<18x1x32xf32>,
    %c0_22 = arith.constant 0 : index
    %c17_23 = arith.constant 17 : index
    %c0_24 = arith.constant 0 : index
    %11 = vector.load %arg16[%c0_22, %c17_23, %c0_24] : memref<18x18x32xf32, #tpu.memory_space<vmem>>, vector<18x1x32xf32>
    tpu.vector_store %arg16[%c0_22, %c17_23, %c0_24], %7 {strides = array<i32>} : memref<18x18x32xf32, #tpu.memory_space<vmem>>, vector<18x1x32xf32>,
    %c0_25 = arith.constant 0 : index
    %c0_26 = arith.constant 0 : index
    %c0_27 = arith.constant 0 : index
    %c0_28 = arith.constant 0 : index
    %12 = vector.load %arg1[%c0_25, %c0_26, %c0_27, %c0_28] : memref<1x16x16x4xf32, #tpu.memory_space<vmem>>, vector<1x16x16x4xf32>
    %13 = vector.shape_cast %12 : vector<1x16x16x4xf32> to vector<16x16x4xf32>
    %c1 = arith.constant 1 : index
    %c1_29 = arith.constant 1 : index
    %c0_30 = arith.constant 0 : index
    %14 = vector.load %arg15[%c1, %c1_29, %c0_30] : memref<18x18x4xf32, #tpu.memory_space<vmem>>, vector<16x16x4xf32>
    tpu.vector_store %arg15[%c1, %c1_29, %c0_30], %13 {strides = array<i32>} : memref<18x18x4xf32, #tpu.memory_space<vmem>>, vector<16x16x4xf32>,
    %c0_31 = arith.constant 0 : index
    %c0_32 = arith.constant 0 : index
    %c0_33 = arith.constant 0 : index
    %15 = vector.load %arg15[%c0_31, %c0_32, %c0_33] : memref<18x18x4xf32, #tpu.memory_space<vmem>>, vector<16x16x4xf32>
    %c0_34 = arith.constant 0 : index
    %c1_35 = arith.constant 1 : index
    %c0_36 = arith.constant 0 : index
    %16 = vector.load %arg15[%c0_34, %c1_35, %c0_36] : memref<18x18x4xf32, #tpu.memory_space<vmem>>, vector<16x16x4xf32>
    %c0_37 = arith.constant 0 : index
    %c2 = arith.constant 2 : index
    %c0_38 = arith.constant 0 : index
    %17 = vector.load %arg15[%c0_37, %c2, %c0_38] : memref<18x18x4xf32, #tpu.memory_space<vmem>>, vector<16x16x4xf32>
    %c1_39 = arith.constant 1 : index
    %c0_40 = arith.constant 0 : index
    %c0_41 = arith.constant 0 : index
    %18 = vector.load %arg15[%c1_39, %c0_40, %c0_41] : memref<18x18x4xf32, #tpu.memory_space<vmem>>, vector<16x16x4xf32>
    %c1_42 = arith.constant 1 : index
    %c1_43 = arith.constant 1 : index
    %c0_44 = arith.constant 0 : index
    %19 = vector.load %arg15[%c1_42, %c1_43, %c0_44] : memref<18x18x4xf32, #tpu.memory_space<vmem>>, vector<16x16x4xf32>
    %c1_45 = arith.constant 1 : index
    %c2_46 = arith.constant 2 : index
    %c0_47 = arith.constant 0 : index
    %20 = vector.load %arg15[%c1_45, %c2_46, %c0_47] : memref<18x18x4xf32, #tpu.memory_space<vmem>>, vector<16x16x4xf32>
    %c2_48 = arith.constant 2 : index
    %c0_49 = arith.constant 0 : index
    %c0_50 = arith.constant 0 : index
    %21 = vector.load %arg15[%c2_48, %c0_49, %c0_50] : memref<18x18x4xf32, #tpu.memory_space<vmem>>, vector<16x16x4xf32>
    %c2_51 = arith.constant 2 : index
    %c1_52 = arith.constant 1 : index
    %c0_53 = arith.constant 0 : index
    %22 = vector.load %arg15[%c2_51, %c1_52, %c0_53] : memref<18x18x4xf32, #tpu.memory_space<vmem>>, vector<16x16x4xf32>
    %c2_54 = arith.constant 2 : index
    %c2_55 = arith.constant 2 : index
    %c0_56 = arith.constant 0 : index
    %23 = vector.load %arg15[%c2_54, %c2_55, %c0_56] : memref<18x18x4xf32, #tpu.memory_space<vmem>>, vector<16x16x4xf32>
    %24 = tpu.concatenate %15, %16, %17, %18, %19, %20, %21, %22, %23 in 2 : vector<16x16x4xf32>, vector<16x16x4xf32>, vector<16x16x4xf32>, vector<16x16x4xf32>, vector<16x16x4xf32>, vector<16x16x4xf32>, vector<16x16x4xf32>, vector<16x16x4xf32>, vector<16x16x4xf32> -> vector<16x16x36xf32>
    %25 = vector.shape_cast %24 : vector<16x16x36xf32> to vector<256x36xf32>
    %26 = arith.truncf %25 : vector<256x36xf32> to vector<256x36xbf16>
    %c0_57 = arith.constant 0 : index
    %c0_58 = arith.constant 0 : index
    %27 = vector.load %arg2[%c0_57, %c0_58] : memref<36x32xbf16, #tpu.memory_space<vmem>>, vector<36x32xbf16>
    %cst_59 = arith.constant dense<0.000000e+00> : vector<256x32xf32>
    %28 = tpu.matmul %26, %27, %cst_59 {dimension_numbers = #tpu.dot_dimension_numbers<[1], [0], [0], [1], [0, 0, 1, 1], [], []>} : vector<256x36xbf16>, vector<36x32xbf16>, vector<256x32xf32> -> vector<256x32xf32>
    %c0_60 = arith.constant 0 : index
    %c0_61 = arith.constant 0 : index
    %29 = vector.load %arg3[%c0_60, %c0_61] : memref<1x32xf32, #tpu.memory_space<vmem>>, vector<1x32xf32>
    %30 = vector.broadcast %29 : vector<1x32xf32> to vector<256x32xf32>
    %31 = arith.addf %28, %30 : vector<256x32xf32>
    %cst_62 = arith.constant 0.000000e+00 : f32
    %32 = vector.broadcast %cst_62 : f32 to vector<256x32xf32>
    %33 = arith.maximumf %31, %32 : vector<256x32xf32>
    %34 = vector.shape_cast %33 : vector<256x32xf32> to vector<16x16x32xf32>
    %c1_63 = arith.constant 1 : index
    %c1_64 = arith.constant 1 : index
    %c0_65 = arith.constant 0 : index
    %35 = vector.load %arg16[%c1_63, %c1_64, %c0_65] : memref<18x18x32xf32, #tpu.memory_space<vmem>>, vector<16x16x32xf32>
    tpu.vector_store %arg16[%c1_63, %c1_64, %c0_65], %34 {strides = array<i32>} : memref<18x18x32xf32, #tpu.memory_space<vmem>>, vector<16x16x32xf32>,
    %c0_66 = arith.constant 0 : index
    %c0_67 = arith.constant 0 : index
    %c0_68 = arith.constant 0 : index
    %36 = vector.load %arg16[%c0_66, %c0_67, %c0_68] : memref<18x18x32xf32, #tpu.memory_space<vmem>>, vector<16x16x32xf32>
    %c0_69 = arith.constant 0 : index
    %c1_70 = arith.constant 1 : index
    %c0_71 = arith.constant 0 : index
    %37 = vector.load %arg16[%c0_69, %c1_70, %c0_71] : memref<18x18x32xf32, #tpu.memory_space<vmem>>, vector<16x16x32xf32>
    %c0_72 = arith.constant 0 : index
    %c2_73 = arith.constant 2 : index
    %c0_74 = arith.constant 0 : index
    %38 = vector.load %arg16[%c0_72, %c2_73, %c0_74] : memref<18x18x32xf32, #tpu.memory_space<vmem>>, vector<16x16x32xf32>
    %c1_75 = arith.constant 1 : index
    %c0_76 = arith.constant 0 : index
    %c0_77 = arith.constant 0 : index
    %39 = vector.load %arg16[%c1_75, %c0_76, %c0_77] : memref<18x18x32xf32, #tpu.memory_space<vmem>>, vector<16x16x32xf32>
    %c1_78 = arith.constant 1 : index
    %c1_79 = arith.constant 1 : index
    %c0_80 = arith.constant 0 : index
    %40 = vector.load %arg16[%c1_78, %c1_79, %c0_80] : memref<18x18x32xf32, #tpu.memory_space<vmem>>, vector<16x16x32xf32>
    %c1_81 = arith.constant 1 : index
    %c2_82 = arith.constant 2 : index
    %c0_83 = arith.constant 0 : index
    %41 = vector.load %arg16[%c1_81, %c2_82, %c0_83] : memref<18x18x32xf32, #tpu.memory_space<vmem>>, vector<16x16x32xf32>
    %c2_84 = arith.constant 2 : index
    %c0_85 = arith.constant 0 : index
    %c0_86 = arith.constant 0 : index
    %42 = vector.load %arg16[%c2_84, %c0_85, %c0_86] : memref<18x18x32xf32, #tpu.memory_space<vmem>>, vector<16x16x32xf32>
    %c2_87 = arith.constant 2 : index
    %c1_88 = arith.constant 1 : index
    %c0_89 = arith.constant 0 : index
    %43 = vector.load %arg16[%c2_87, %c1_88, %c0_89] : memref<18x18x32xf32, #tpu.memory_space<vmem>>, vector<16x16x32xf32>
    %c2_90 = arith.constant 2 : index
    %c2_91 = arith.constant 2 : index
    %c0_92 = arith.constant 0 : index
    %44 = vector.load %arg16[%c2_90, %c2_91, %c0_92] : memref<18x18x32xf32, #tpu.memory_space<vmem>>, vector<16x16x32xf32>
    %45 = tpu.concatenate %36, %37, %38, %39, %40, %41, %42, %43, %44 in 2 : vector<16x16x32xf32>, vector<16x16x32xf32>, vector<16x16x32xf32>, vector<16x16x32xf32>, vector<16x16x32xf32>, vector<16x16x32xf32>, vector<16x16x32xf32>, vector<16x16x32xf32>, vector<16x16x32xf32> -> vector<16x16x288xf32>
    %46 = vector.shape_cast %45 : vector<16x16x288xf32> to vector<256x288xf32>
    %47 = arith.truncf %46 : vector<256x288xf32> to vector<256x288xbf16>
    %c0_93 = arith.constant 0 : index
    %c0_94 = arith.constant 0 : index
    %48 = vector.load %arg4[%c0_93, %c0_94] : memref<288x32xbf16, #tpu.memory_space<vmem>>, vector<288x32xbf16>
    %cst_95 = arith.constant dense<0.000000e+00> : vector<256x32xf32>
    %49 = tpu.matmul %47, %48, %cst_95 {dimension_numbers = #tpu.dot_dimension_numbers<[1], [0], [0], [1], [0, 0, 1, 1], [], []>} : vector<256x288xbf16>, vector<288x32xbf16>, vector<256x32xf32> -> vector<256x32xf32>
    %c0_96 = arith.constant 0 : index
    %c0_97 = arith.constant 0 : index
    %50 = vector.load %arg5[%c0_96, %c0_97] : memref<1x32xf32, #tpu.memory_space<vmem>>, vector<1x32xf32>
    %51 = vector.broadcast %50 : vector<1x32xf32> to vector<256x32xf32>
    %52 = arith.addf %49, %51 : vector<256x32xf32>
    %cst_98 = arith.constant 0.000000e+00 : f32
    %53 = vector.broadcast %cst_98 : f32 to vector<256x32xf32>
    %54 = arith.maximumf %52, %53 : vector<256x32xf32>
    %55 = vector.shape_cast %54 : vector<256x32xf32> to vector<16x16x32xf32>
    %c1_99 = arith.constant 1 : index
    %c1_100 = arith.constant 1 : index
    %c0_101 = arith.constant 0 : index
    %56 = vector.load %arg16[%c1_99, %c1_100, %c0_101] : memref<18x18x32xf32, #tpu.memory_space<vmem>>, vector<16x16x32xf32>
    tpu.vector_store %arg16[%c1_99, %c1_100, %c0_101], %55 {strides = array<i32>} : memref<18x18x32xf32, #tpu.memory_space<vmem>>, vector<16x16x32xf32>,
    %c0_102 = arith.constant 0 : index
    %c0_103 = arith.constant 0 : index
    %c0_104 = arith.constant 0 : index
    %57 = vector.load %arg16[%c0_102, %c0_103, %c0_104] : memref<18x18x32xf32, #tpu.memory_space<vmem>>, vector<16x16x32xf32>
    %c0_105 = arith.constant 0 : index
    %c1_106 = arith.constant 1 : index
    %c0_107 = arith.constant 0 : index
    %58 = vector.load %arg16[%c0_105, %c1_106, %c0_107] : memref<18x18x32xf32, #tpu.memory_space<vmem>>, vector<16x16x32xf32>
    %c0_108 = arith.constant 0 : index
    %c2_109 = arith.constant 2 : index
    %c0_110 = arith.constant 0 : index
    %59 = vector.load %arg16[%c0_108, %c2_109, %c0_110] : memref<18x18x32xf32, #tpu.memory_space<vmem>>, vector<16x16x32xf32>
    %c1_111 = arith.constant 1 : index
    %c0_112 = arith.constant 0 : index
    %c0_113 = arith.constant 0 : index
    %60 = vector.load %arg16[%c1_111, %c0_112, %c0_113] : memref<18x18x32xf32, #tpu.memory_space<vmem>>, vector<16x16x32xf32>
    %c1_114 = arith.constant 1 : index
    %c1_115 = arith.constant 1 : index
    %c0_116 = arith.constant 0 : index
    %61 = vector.load %arg16[%c1_114, %c1_115, %c0_116] : memref<18x18x32xf32, #tpu.memory_space<vmem>>, vector<16x16x32xf32>
    %c1_117 = arith.constant 1 : index
    %c2_118 = arith.constant 2 : index
    %c0_119 = arith.constant 0 : index
    %62 = vector.load %arg16[%c1_117, %c2_118, %c0_119] : memref<18x18x32xf32, #tpu.memory_space<vmem>>, vector<16x16x32xf32>
    %c2_120 = arith.constant 2 : index
    %c0_121 = arith.constant 0 : index
    %c0_122 = arith.constant 0 : index
    %63 = vector.load %arg16[%c2_120, %c0_121, %c0_122] : memref<18x18x32xf32, #tpu.memory_space<vmem>>, vector<16x16x32xf32>
    %c2_123 = arith.constant 2 : index
    %c1_124 = arith.constant 1 : index
    %c0_125 = arith.constant 0 : index
    %64 = vector.load %arg16[%c2_123, %c1_124, %c0_125] : memref<18x18x32xf32, #tpu.memory_space<vmem>>, vector<16x16x32xf32>
    %c2_126 = arith.constant 2 : index
    %c2_127 = arith.constant 2 : index
    %c0_128 = arith.constant 0 : index
    %65 = vector.load %arg16[%c2_126, %c2_127, %c0_128] : memref<18x18x32xf32, #tpu.memory_space<vmem>>, vector<16x16x32xf32>
    %66 = tpu.concatenate %57, %58, %59, %60, %61, %62, %63, %64, %65 in 2 : vector<16x16x32xf32>, vector<16x16x32xf32>, vector<16x16x32xf32>, vector<16x16x32xf32>, vector<16x16x32xf32>, vector<16x16x32xf32>, vector<16x16x32xf32>, vector<16x16x32xf32>, vector<16x16x32xf32> -> vector<16x16x288xf32>
    %67 = vector.shape_cast %66 : vector<16x16x288xf32> to vector<256x288xf32>
    %68 = arith.truncf %67 : vector<256x288xf32> to vector<256x288xbf16>
    %c0_129 = arith.constant 0 : index
    %c0_130 = arith.constant 0 : index
    %69 = vector.load %arg6[%c0_129, %c0_130] : memref<288x32xbf16, #tpu.memory_space<vmem>>, vector<288x32xbf16>
    %cst_131 = arith.constant dense<0.000000e+00> : vector<256x32xf32>
    %70 = tpu.matmul %68, %69, %cst_131 {dimension_numbers = #tpu.dot_dimension_numbers<[1], [0], [0], [1], [0, 0, 1, 1], [], []>} : vector<256x288xbf16>, vector<288x32xbf16>, vector<256x32xf32> -> vector<256x32xf32>
    %c0_132 = arith.constant 0 : index
    %c0_133 = arith.constant 0 : index
    %71 = vector.load %arg7[%c0_132, %c0_133] : memref<1x32xf32, #tpu.memory_space<vmem>>, vector<1x32xf32>
    %72 = vector.broadcast %71 : vector<1x32xf32> to vector<256x32xf32>
    %73 = arith.addf %70, %72 : vector<256x32xf32>
    %cst_134 = arith.constant 0.000000e+00 : f32
    %74 = vector.broadcast %cst_134 : f32 to vector<256x32xf32>
    %75 = arith.maximumf %73, %74 : vector<256x32xf32>
    %76 = vector.shape_cast %75 : vector<256x32xf32> to vector<16x16x32xf32>
    %c1_135 = arith.constant 1 : index
    %c1_136 = arith.constant 1 : index
    %c0_137 = arith.constant 0 : index
    %77 = vector.load %arg16[%c1_135, %c1_136, %c0_137] : memref<18x18x32xf32, #tpu.memory_space<vmem>>, vector<16x16x32xf32>
    tpu.vector_store %arg16[%c1_135, %c1_136, %c0_137], %76 {strides = array<i32>} : memref<18x18x32xf32, #tpu.memory_space<vmem>>, vector<16x16x32xf32>,
    %c0_138 = arith.constant 0 : index
    %c0_139 = arith.constant 0 : index
    %c0_140 = arith.constant 0 : index
    %78 = vector.load %arg16[%c0_138, %c0_139, %c0_140] : memref<18x18x32xf32, #tpu.memory_space<vmem>>, vector<16x16x32xf32>
    %c0_141 = arith.constant 0 : index
    %c1_142 = arith.constant 1 : index
    %c0_143 = arith.constant 0 : index
    %79 = vector.load %arg16[%c0_141, %c1_142, %c0_143] : memref<18x18x32xf32, #tpu.memory_space<vmem>>, vector<16x16x32xf32>
    %c0_144 = arith.constant 0 : index
    %c2_145 = arith.constant 2 : index
    %c0_146 = arith.constant 0 : index
    %80 = vector.load %arg16[%c0_144, %c2_145, %c0_146] : memref<18x18x32xf32, #tpu.memory_space<vmem>>, vector<16x16x32xf32>
    %c1_147 = arith.constant 1 : index
    %c0_148 = arith.constant 0 : index
    %c0_149 = arith.constant 0 : index
    %81 = vector.load %arg16[%c1_147, %c0_148, %c0_149] : memref<18x18x32xf32, #tpu.memory_space<vmem>>, vector<16x16x32xf32>
    %c1_150 = arith.constant 1 : index
    %c1_151 = arith.constant 1 : index
    %c0_152 = arith.constant 0 : index
    %82 = vector.load %arg16[%c1_150, %c1_151, %c0_152] : memref<18x18x32xf32, #tpu.memory_space<vmem>>, vector<16x16x32xf32>
    %c1_153 = arith.constant 1 : index
    %c2_154 = arith.constant 2 : index
    %c0_155 = arith.constant 0 : index
    %83 = vector.load %arg16[%c1_153, %c2_154, %c0_155] : memref<18x18x32xf32, #tpu.memory_space<vmem>>, vector<16x16x32xf32>
    %c2_156 = arith.constant 2 : index
    %c0_157 = arith.constant 0 : index
    %c0_158 = arith.constant 0 : index
    %84 = vector.load %arg16[%c2_156, %c0_157, %c0_158] : memref<18x18x32xf32, #tpu.memory_space<vmem>>, vector<16x16x32xf32>
    %c2_159 = arith.constant 2 : index
    %c1_160 = arith.constant 1 : index
    %c0_161 = arith.constant 0 : index
    %85 = vector.load %arg16[%c2_159, %c1_160, %c0_161] : memref<18x18x32xf32, #tpu.memory_space<vmem>>, vector<16x16x32xf32>
    %c2_162 = arith.constant 2 : index
    %c2_163 = arith.constant 2 : index
    %c0_164 = arith.constant 0 : index
    %86 = vector.load %arg16[%c2_162, %c2_163, %c0_164] : memref<18x18x32xf32, #tpu.memory_space<vmem>>, vector<16x16x32xf32>
    %87 = tpu.concatenate %78, %79, %80, %81, %82, %83, %84, %85, %86 in 2 : vector<16x16x32xf32>, vector<16x16x32xf32>, vector<16x16x32xf32>, vector<16x16x32xf32>, vector<16x16x32xf32>, vector<16x16x32xf32>, vector<16x16x32xf32>, vector<16x16x32xf32>, vector<16x16x32xf32> -> vector<16x16x288xf32>
    %88 = vector.shape_cast %87 : vector<16x16x288xf32> to vector<256x288xf32>
    %89 = arith.truncf %88 : vector<256x288xf32> to vector<256x288xbf16>
    %c0_165 = arith.constant 0 : index
    %c0_166 = arith.constant 0 : index
    %90 = vector.load %arg8[%c0_165, %c0_166] : memref<288x32xbf16, #tpu.memory_space<vmem>>, vector<288x32xbf16>
    %cst_167 = arith.constant dense<0.000000e+00> : vector<256x32xf32>
    %91 = tpu.matmul %89, %90, %cst_167 {dimension_numbers = #tpu.dot_dimension_numbers<[1], [0], [0], [1], [0, 0, 1, 1], [], []>} : vector<256x288xbf16>, vector<288x32xbf16>, vector<256x32xf32> -> vector<256x32xf32>
    %c0_168 = arith.constant 0 : index
    %c0_169 = arith.constant 0 : index
    %92 = vector.load %arg9[%c0_168, %c0_169] : memref<1x32xf32, #tpu.memory_space<vmem>>, vector<1x32xf32>
    %93 = vector.broadcast %92 : vector<1x32xf32> to vector<256x32xf32>
    %94 = arith.addf %91, %93 : vector<256x32xf32>
    %cst_170 = arith.constant 0.000000e+00 : f32
    %95 = vector.broadcast %cst_170 : f32 to vector<256x32xf32>
    %96 = arith.maximumf %94, %95 : vector<256x32xf32>
    %97 = vector.shape_cast %96 : vector<256x32xf32> to vector<16x16x32xf32>
    %c1_171 = arith.constant 1 : index
    %c1_172 = arith.constant 1 : index
    %c0_173 = arith.constant 0 : index
    %98 = vector.load %arg16[%c1_171, %c1_172, %c0_173] : memref<18x18x32xf32, #tpu.memory_space<vmem>>, vector<16x16x32xf32>
    tpu.vector_store %arg16[%c1_171, %c1_172, %c0_173], %97 {strides = array<i32>} : memref<18x18x32xf32, #tpu.memory_space<vmem>>, vector<16x16x32xf32>,
    %c0_174 = arith.constant 0 : index
    %c0_175 = arith.constant 0 : index
    %c0_176 = arith.constant 0 : index
    %99 = vector.load %arg16[%c0_174, %c0_175, %c0_176] : memref<18x18x32xf32, #tpu.memory_space<vmem>>, vector<16x16x32xf32>
    %c0_177 = arith.constant 0 : index
    %c1_178 = arith.constant 1 : index
    %c0_179 = arith.constant 0 : index
    %100 = vector.load %arg16[%c0_177, %c1_178, %c0_179] : memref<18x18x32xf32, #tpu.memory_space<vmem>>, vector<16x16x32xf32>
    %c0_180 = arith.constant 0 : index
    %c2_181 = arith.constant 2 : index
    %c0_182 = arith.constant 0 : index
    %101 = vector.load %arg16[%c0_180, %c2_181, %c0_182] : memref<18x18x32xf32, #tpu.memory_space<vmem>>, vector<16x16x32xf32>
    %c1_183 = arith.constant 1 : index
    %c0_184 = arith.constant 0 : index
    %c0_185 = arith.constant 0 : index
    %102 = vector.load %arg16[%c1_183, %c0_184, %c0_185] : memref<18x18x32xf32, #tpu.memory_space<vmem>>, vector<16x16x32xf32>
    %c1_186 = arith.constant 1 : index
    %c1_187 = arith.constant 1 : index
    %c0_188 = arith.constant 0 : index
    %103 = vector.load %arg16[%c1_186, %c1_187, %c0_188] : memref<18x18x32xf32, #tpu.memory_space<vmem>>, vector<16x16x32xf32>
    %c1_189 = arith.constant 1 : index
    %c2_190 = arith.constant 2 : index
    %c0_191 = arith.constant 0 : index
    %104 = vector.load %arg16[%c1_189, %c2_190, %c0_191] : memref<18x18x32xf32, #tpu.memory_space<vmem>>, vector<16x16x32xf32>
    %c2_192 = arith.constant 2 : index
    %c0_193 = arith.constant 0 : index
    %c0_194 = arith.constant 0 : index
    %105 = vector.load %arg16[%c2_192, %c0_193, %c0_194] : memref<18x18x32xf32, #tpu.memory_space<vmem>>, vector<16x16x32xf32>
    %c2_195 = arith.constant 2 : index
    %c1_196 = arith.constant 1 : index
    %c0_197 = arith.constant 0 : index
    %106 = vector.load %arg16[%c2_195, %c1_196, %c0_197] : memref<18x18x32xf32, #tpu.memory_space<vmem>>, vector<16x16x32xf32>
    %c2_198 = arith.constant 2 : index
    %c2_199 = arith.constant 2 : index
    %c0_200 = arith.constant 0 : index
    %107 = vector.load %arg16[%c2_198, %c2_199, %c0_200] : memref<18x18x32xf32, #tpu.memory_space<vmem>>, vector<16x16x32xf32>
    %108 = tpu.concatenate %99, %100, %101, %102, %103, %104, %105, %106, %107 in 2 : vector<16x16x32xf32>, vector<16x16x32xf32>, vector<16x16x32xf32>, vector<16x16x32xf32>, vector<16x16x32xf32>, vector<16x16x32xf32>, vector<16x16x32xf32>, vector<16x16x32xf32>, vector<16x16x32xf32> -> vector<16x16x288xf32>
    %109 = vector.shape_cast %108 : vector<16x16x288xf32> to vector<256x288xf32>
    %110 = arith.truncf %109 : vector<256x288xf32> to vector<256x288xbf16>
    %c0_201 = arith.constant 0 : index
    %c0_202 = arith.constant 0 : index
    %111 = vector.load %arg10[%c0_201, %c0_202] : memref<288x32xbf16, #tpu.memory_space<vmem>>, vector<288x32xbf16>
    %cst_203 = arith.constant dense<0.000000e+00> : vector<256x32xf32>
    %112 = tpu.matmul %110, %111, %cst_203 {dimension_numbers = #tpu.dot_dimension_numbers<[1], [0], [0], [1], [0, 0, 1, 1], [], []>} : vector<256x288xbf16>, vector<288x32xbf16>, vector<256x32xf32> -> vector<256x32xf32>
    %c0_204 = arith.constant 0 : index
    %c0_205 = arith.constant 0 : index
    %113 = vector.load %arg11[%c0_204, %c0_205] : memref<1x32xf32, #tpu.memory_space<vmem>>, vector<1x32xf32>
    %114 = vector.broadcast %113 : vector<1x32xf32> to vector<256x32xf32>
    %115 = arith.addf %112, %114 : vector<256x32xf32>
    %cst_206 = arith.constant 0.000000e+00 : f32
    %116 = vector.broadcast %cst_206 : f32 to vector<256x32xf32>
    %117 = arith.maximumf %115, %116 : vector<256x32xf32>
    %c0_207 = arith.constant 0 : index
    %c0_208 = arith.constant 0 : index
    %118 = vector.load %arg12[%c0_207, %c0_208] : memref<3x32xbf16, #tpu.memory_space<vmem>>, vector<3x32xbf16>
    %119 = arith.truncf %117 : vector<256x32xf32> to vector<256x32xbf16>
    %cst_209 = arith.constant dense<0.000000e+00> : vector<3x256xf32>
    %120 = tpu.matmul %118, %119, %cst_209 {dimension_numbers = #tpu.dot_dimension_numbers<[1], [1], [0], [0], [0, 0, 1, 0], [], []>} : vector<3x32xbf16>, vector<256x32xbf16>, vector<3x256xf32> -> vector<3x256xf32>
    %c0_210 = arith.constant 0 : index
    %c0_211 = arith.constant 0 : index
    %121 = vector.load %arg13[%c0_210, %c0_211] : memref<3x1xf32, #tpu.memory_space<vmem>>, vector<3x1xf32>
    %122 = vector.broadcast %121 : vector<3x1xf32> to vector<3x256xf32>
    %123 = arith.addf %120, %122 : vector<3x256xf32>
    %c0_212 = arith.constant 0 : index
    %c0_213 = arith.constant 0 : index
    %c0_214 = arith.constant 0 : index
    %124 = vector.load %arg14[%c0_212, %c0_213, %c0_214] : memref<1x3x256xf32, #tpu.memory_space<vmem>>, vector<1x3x256xf32>
    %125 = vector.shape_cast %124 : vector<1x3x256xf32> to vector<3x256xf32>
    %126 = vector.shape_cast %123 : vector<3x256xf32> to vector<1x3x256xf32>
    tpu.vector_store %arg14[%c0_212, %c0_213, %c0_214], %126 {strides = array<i32>} : memref<1x3x256xf32, #tpu.memory_space<vmem>>, vector<1x3x256xf32>,
    return
  }
  func.func @transform_0(%arg0: i32) -> (i32, i32, i32, i32) {
    %c0_i32 = arith.constant 0 : i32
    %c0_i32_0 = arith.constant 0 : i32
    %c0_i32_1 = arith.constant 0 : i32
    %c0_i32_2 = arith.constant 0 : i32
    return %arg0, %c0_i32, %c0_i32_0, %c0_i32_1 : i32, i32, i32, i32
  }
  func.func @transform_1(%arg0: i32) -> (i32, i32) {
    %c0_i32 = arith.constant 0 : i32
    %c0_i32_0 = arith.constant 0 : i32
    %c0_i32_1 = arith.constant 0 : i32
    return %c0_i32, %c0_i32_0 : i32, i32
  }
  func.func @transform_2(%arg0: i32) -> (i32, i32) {
    %c0_i32 = arith.constant 0 : i32
    %c0_i32_0 = arith.constant 0 : i32
    %c0_i32_1 = arith.constant 0 : i32
    return %c0_i32, %c0_i32_0 : i32, i32
  }
  func.func @transform_3(%arg0: i32) -> (i32, i32) {
    %c0_i32 = arith.constant 0 : i32
    %c0_i32_0 = arith.constant 0 : i32
    %c0_i32_1 = arith.constant 0 : i32
    return %c0_i32, %c0_i32_0 : i32, i32
  }
  func.func @transform_4(%arg0: i32) -> (i32, i32) {
    %c0_i32 = arith.constant 0 : i32
    %c0_i32_0 = arith.constant 0 : i32
    %c0_i32_1 = arith.constant 0 : i32
    return %c0_i32, %c0_i32_0 : i32, i32
  }
  func.func @transform_5(%arg0: i32) -> (i32, i32) {
    %c0_i32 = arith.constant 0 : i32
    %c0_i32_0 = arith.constant 0 : i32
    %c0_i32_1 = arith.constant 0 : i32
    return %c0_i32, %c0_i32_0 : i32, i32
  }
  func.func @transform_6(%arg0: i32) -> (i32, i32) {
    %c0_i32 = arith.constant 0 : i32
    %c0_i32_0 = arith.constant 0 : i32
    %c0_i32_1 = arith.constant 0 : i32
    return %c0_i32, %c0_i32_0 : i32, i32
  }
  func.func @transform_7(%arg0: i32) -> (i32, i32) {
    %c0_i32 = arith.constant 0 : i32
    %c0_i32_0 = arith.constant 0 : i32
    %c0_i32_1 = arith.constant 0 : i32
    return %c0_i32, %c0_i32_0 : i32, i32
  }
  func.func @transform_8(%arg0: i32) -> (i32, i32) {
    %c0_i32 = arith.constant 0 : i32
    %c0_i32_0 = arith.constant 0 : i32
    %c0_i32_1 = arith.constant 0 : i32
    return %c0_i32, %c0_i32_0 : i32, i32
  }
  func.func @transform_9(%arg0: i32) -> (i32, i32) {
    %c0_i32 = arith.constant 0 : i32
    %c0_i32_0 = arith.constant 0 : i32
    %c0_i32_1 = arith.constant 0 : i32
    return %c0_i32, %c0_i32_0 : i32, i32
  }
  func.func @transform_10(%arg0: i32) -> (i32, i32) {
    %c0_i32 = arith.constant 0 : i32
    %c0_i32_0 = arith.constant 0 : i32
    %c0_i32_1 = arith.constant 0 : i32
    return %c0_i32, %c0_i32_0 : i32, i32
  }
  func.func @transform_11(%arg0: i32) -> (i32, i32) {
    %c0_i32 = arith.constant 0 : i32
    %c0_i32_0 = arith.constant 0 : i32
    %c0_i32_1 = arith.constant 0 : i32
    return %c0_i32, %c0_i32_0 : i32, i32
  }
  func.func @transform_12(%arg0: i32) -> (i32, i32) {
    %c0_i32 = arith.constant 0 : i32
    %c0_i32_0 = arith.constant 0 : i32
    %c0_i32_1 = arith.constant 0 : i32
    return %c0_i32, %c0_i32_0 : i32, i32
  }
  func.func @transform_13(%arg0: i32) -> (i32, i32, i32) {
    %c0_i32 = arith.constant 0 : i32
    %c0_i32_0 = arith.constant 0 : i32
    %c0_i32_1 = arith.constant 0 : i32
    return %arg0, %c0_i32, %c0_i32_0 : i32, i32, i32
  }
}

</mosaic_0001>

<llo_original>
// kernel: tpu_custom_call.1
$region0: #{tpu_custom_call.1}
  #allocation0 [shape = 'u32[]', space=smem, size = 0x4, offset = 0x4, fixed_abs, tag = 'smem constant byte address 0x4 - core index']
  #allocation1 [shape = 'u32[144,128]{1,0:T(1,128)}', space=vmem, size = 0x12000, scoped, tag = 'internal scratch']
  #allocation2 [shape = 'f32[18,18,4]{2,1,0:T(8,128)}', space=vmem, size = 0x36000, scoped, tag = 'scratch operand']
  #allocation3 [shape = 'f32[18,18,32]{2,1,0:T(8,128)}', space=vmem, size = 0x36000, scoped, tag = 'scratch operand']
  %s0 = inlined_call_operand.vmem [shape: f32[2,16,16,4], index: 0, kind: input, shape index: {}]
  %s1 = inlined_call_operand.vmem [shape: bf16[36,32], index: 1, kind: input, shape index: {}]
  %s2 = inlined_call_operand.vmem [shape: f32[1,32], index: 2, kind: input, shape index: {}]
  %s3 = inlined_call_operand.vmem [shape: bf16[288,32], index: 3, kind: input, shape index: {}]
  %s4 = inlined_call_operand.vmem [shape: f32[1,32], index: 4, kind: input, shape index: {}]
  %s5 = inlined_call_operand.vmem [shape: bf16[288,32], index: 5, kind: input, shape index: {}]
  %s6 = inlined_call_operand.vmem [shape: f32[1,32], index: 6, kind: input, shape index: {}]
  %s7 = inlined_call_operand.vmem [shape: bf16[288,32], index: 7, kind: input, shape index: {}]
  %s8 = inlined_call_operand.vmem [shape: f32[1,32], index: 8, kind: input, shape index: {}]
  %s9 = inlined_call_operand.vmem [shape: bf16[288,32], index: 9, kind: input, shape index: {}]
  %s10 = inlined_call_operand.vmem [shape: f32[1,32], index: 10, kind: input, shape index: {}]
  %s11 = inlined_call_operand.vmem [shape: bf16[3,32], index: 11, kind: input, shape index: {}]
  %s12 = inlined_call_operand.vmem [shape: f32[3,1], index: 12, kind: input, shape index: {}]
  %s13 = inlined_call_operand.vmem [shape: f32[2,3,256], index: 13, kind: output, shape index: {}]
  %s14 = sld [smem:[#allocation0]]
  $region85: #{tpu_custom_call.1} parent=0
    _
  %s16 = ssub.s32 1, %s14
  %s17 = scalar_select 0, %s16, %s14
  loop: start=0, step=1, limit=4
  $region2: #{tpu_custom_call.1} parent=0 // loop_pre_header
    _
  $region3: #{tpu_custom_call.1} parent=0 // loop_header
    %s19 = sphi 0, %s23
    %p20 = scmp.ge.s32.totalorder %s19, 4
    %s29 = sphi 0, %s31
    %s32 = sphi 0, %s29
    %s33 = sphi 0, %s32
    %s49 = sphi 0, %s33
    %s53 = sphi 0, %s53
    %s55 = sphi 0, %s53
    %s56 = sphi 0, %s55
    %s70 = sphi 0, %s56
    %s74 = sphi 0, %s74
    %s76 = sphi 0, %s74
    %s77 = sphi 0, %s76
    %s91 = sphi 0, %s77
    %s95 = sphi 0, %s95
    %s97 = sphi 0, %s95
    %s98 = sphi 0, %s97
    %s112 = sphi 0, %s98
    %s116 = sphi 0, %s116
    %s118 = sphi 0, %s116
    %s119 = sphi 0, %s118
    %s133 = sphi 0, %s119
    %s137 = sphi 0, %s137
    %s139 = sphi 0, %s137
    %s140 = sphi 0, %s139
    %s154 = sphi 0, %s140
    %s158 = sphi 0, %s158
    %s160 = sphi 0, %s158
    %s161 = sphi 0, %s160
    %s175 = sphi 0, %s161
    %s179 = sphi 0, %s179
    %s181 = sphi 0, %s179
    %s182 = sphi 0, %s181
    %s196 = sphi 0, %s182
    %s200 = sphi 0, %s200
    %s202 = sphi 0, %s200
    %s203 = sphi 0, %s202
    %s217 = sphi 0, %s203
    %s221 = sphi 0, %s221
    %s223 = sphi 0, %s221
    %s224 = sphi 0, %s223
    %s238 = sphi 0, %s224
    %s242 = sphi 0, %s242
    %s244 = sphi 0, %s242
    %s245 = sphi 0, %s244
    %s259 = sphi 0, %s245
    %s263 = sphi 0, %s263
    %s265 = sphi 0, %s263
    %s266 = sphi 0, %s265
    %s280 = sphi 0, %s266
    %s284 = sphi 0, %s284
    %s286 = sphi 0, %s284
    %s287 = sphi 0, %s286
    %s301 = sphi 0, %s287
    %s307 = sphi 0, %s309
    %s310 = sphi 0, %s307
    %s311 = sphi 0, %s310
    %s327 = sphi 0, %s311
  $region4: #{tpu_custom_call.1} parent=0 // loop_header_branch
    %22 = sbr.rel (%p20) target = $region8
  $region5: #{tpu_custom_call.1} parent=0 // loop_body
    %s24 = ssub.s32 %s19, 1
    %s25 = ssub.s32 %s19, 2
    %s26 = sadd.s32 %s19, 1
    %s27 = ssub.s32 %s19, %s26
    %p28 = scmp.eq.s32.totalorder %s27, 0
    %s30 = sadd.s32 %s29, 1
    %s31 = scalar_select %p28, %s29, %s30
    %p34 = pneg %p28
    %p35 = scmp.eq.s32.totalorder %s19, 1
    %p36 = por %p34, %p35
    %p37 = scmp.ne.s32.totalorder %s29, %s32
    %p38 = scmp.eq.s32.totalorder %s19, 0
    %p39 = por %p37, %p38
    %p40 = scmp.ne.s32.totalorder %s29, %s32
    %p41 = scmp.eq.s32.totalorder %s24, 1
    %p42 = por %p40, %p41
    %p43 = scmp.ne.s32.totalorder %s32, %s33
    %p44 = scmp.eq.s32.totalorder %s24, 0
    %p45 = por %p43, %p44
    %p46 = scmp.ne.s32.totalorder %s32, %s33
    %p47 = scmp.eq.s32.totalorder %s25, 1
    %p48 = por %p46, %p47
    %p50 = scmp.ne.s32.totalorder %s33, %s49
    %p51 = scmp.eq.s32.totalorder %s25, 0
    %p52 = por %p50, %p51
    %s54 = sadd.s32 %s53, 1
    %p57 = scmp.eq.s32.totalorder %s19, 1
    %p58 = scmp.ne.s32.totalorder %s53, %s55
    %p59 = scmp.eq.s32.totalorder %s19, 0
    %p60 = por %p58, %p59
    %p61 = scmp.ne.s32.totalorder %s53, %s55
    %p62 = scmp.eq.s32.totalorder %s24, 1
    %p63 = por %p61, %p62
    %p64 = scmp.ne.s32.totalorder %s55, %s56
    %p65 = scmp.eq.s32.totalorder %s24, 0
    %p66 = por %p64, %p65
    %p67 = scmp.ne.s32.totalorder %s55, %s56
    %p68 = scmp.eq.s32.totalorder %s25, 1
    %p69 = por %p67, %p68
    %p71 = scmp.ne.s32.totalorder %s56, %s70
    %p72 = scmp.eq.s32.totalorder %s25, 0
    %p73 = por %p71, %p72
    %s75 = sadd.s32 %s74, 1
    %p78 = scmp.eq.s32.totalorder %s19, 1
    %p79 = scmp.ne.s32.totalorder %s74, %s76
    %p80 = scmp.eq.s32.totalorder %s19, 0
    %p81 = por %p79, %p80
    %p82 = scmp.ne.s32.totalorder %s74, %s76
    %p83 = scmp.eq.s32.totalorder %s24, 1
    %p84 = por %p82, %p83
    %p85 = scmp.ne.s32.totalorder %s76, %s77
    %p86 = scmp.eq.s32.totalorder %s24, 0
    %p87 = por %p85, %p86
    %p88 = scmp.ne.s32.totalorder %s76, %s77
    %p89 = scmp.eq.s32.totalorder %s25, 1
    %p90 = por %p88, %p89
    %p92 = scmp.ne.s32.totalorder %s77, %s91
    %p93 = scmp.eq.s32.totalorder %s25, 0
    %p94 = por %p92, %p93
    %s96 = sadd.s32 %s95, 1
    %p99 = scmp.eq.s32.totalorder %s19, 1
    %p100 = scmp.ne.s32.totalorder %s95, %s97
    %p101 = scmp.eq.s32.totalorder %s19, 0
    %p102 = por %p100, %p101
    %p103 = scmp.ne.s32.totalorder %s95, %s97
    %p104 = scmp.eq.s32.totalorder %s24, 1
    %p105 = por %p103, %p104
    %p106 = scmp.ne.s32.totalorder %s97, %s98
    %p107 = scmp.eq.s32.totalorder %s24, 0
    %p108 = por %p106, %p107
    %p109 = scmp.ne.s32.totalorder %s97, %s98
    %p110 = scmp.eq.s32.totalorder %s25, 1
    %p111 = por %p109, %p110
    %p113 = scmp.ne.s32.totalorder %s98, %s112
    %p114 = scmp.eq.s32.totalorder %s25, 0
    %p115 = por %p113, %p114
    %s117 = sadd.s32 %s116, 1
    %p120 = scmp.eq.s32.totalorder %s19, 1
    %p121 = scmp.ne.s32.totalorder %s116, %s118
    %p122 = scmp.eq.s32.totalorder %s19, 0
    %p123 = por %p121, %p122
    %p124 = scmp.ne.s32.totalorder %s116, %s118
    %p125 = scmp.eq.s32.totalorder %s24, 1
    %p126 = por %p124, %p125
    %p127 = scmp.ne.s32.totalorder %s118, %s119
    %p128 = scmp.eq.s32.totalorder %s24, 0
    %p129 = por %p127, %p128
    %p130 = scmp.ne.s32.totalorder %s118, %s119
    %p131 = scmp.eq.s32.totalorder %s25, 1
    %p132 = por %p130, %p131
    %p134 = scmp.ne.s32.totalorder %s119, %s133
    %p135 = scmp.eq.s32.totalorder %s25, 0
    %p136 = por %p134, %p135
    %s138 = sadd.s32 %s137, 1
    %p141 = scmp.eq.s32.totalorder %s19, 1
    %p142 = scmp.ne.s32.totalorder %s137, %s139
    %p143 = scmp.eq.s32.totalorder %s19, 0
    %p144 = por %p142, %p143
    %p145 = scmp.ne.s32.totalorder %s137, %s139
    %p146 = scmp.eq.s32.totalorder %s24, 1
    %p147 = por %p145, %p146
    %p148 = scmp.ne.s32.totalorder %s139, %s140
    %p149 = scmp.eq.s32.totalorder %s24, 0
    %p150 = por %p148, %p149
    %p151 = scmp.ne.s32.totalorder %s139, %s140
    %p152 = scmp.eq.s32.totalorder %s25, 1
    %p153 = por %p151, %p152
    %p155 = scmp.ne.s32.totalorder %s140, %s154
    %p156 = scmp.eq.s32.totalorder %s25, 0
    %p157 = por %p155, %p156
    %s159 = sadd.s32 %s158, 1
    %p162 = scmp.eq.s32.totalorder %s19, 1
    %p163 = scmp.ne.s32.totalorder %s158, %s160
    %p164 = scmp.eq.s32.totalorder %s19, 0
    %p165 = por %p163, %p164
    %p166 = scmp.ne.s32.totalorder %s158, %s160
    %p167 = scmp.eq.s32.totalorder %s24, 1
    %p168 = por %p166, %p167
    %p169 = scmp.ne.s32.totalorder %s160, %s161
    %p170 = scmp.eq.s32.totalorder %s24, 0
    %p171 = por %p169, %p170
    %p172 = scmp.ne.s32.totalorder %s160, %s161
    %p173 = scmp.eq.s32.totalorder %s25, 1
    %p174 = por %p172, %p173
    %p176 = scmp.ne.s32.totalorder %s161, %s175
    %p177 = scmp.eq.s32.totalorder %s25, 0
    %p178 = por %p176, %p177
    %s180 = sadd.s32 %s179, 1
    %p183 = scmp.eq.s32.totalorder %s19, 1
    %p184 = scmp.ne.s32.totalorder %s179, %s181
    %p185 = scmp.eq.s32.totalorder %s19, 0
    %p186 = por %p184, %p185
    %p187 = scmp.ne.s32.totalorder %s179, %s181
    %p188 = scmp.eq.s32.totalorder %s24, 1
    %p189 = por %p187, %p188
    %p190 = scmp.ne.s32.totalorder %s181, %s182
    %p191 = scmp.eq.s32.totalorder %s24, 0
    %p192 = por %p190, %p191
    %p193 = scmp.ne.s32.totalorder %s181, %s182
    %p194 = scmp.eq.s32.totalorder %s25, 1
    %p195 = por %p193, %p194
    %p197 = scmp.ne.s32.totalorder %s182, %s196
    %p198 = scmp.eq.s32.totalorder %s25, 0
    %p199 = por %p197, %p198
    %s201 = sadd.s32 %s200, 1
    %p204 = scmp.eq.s32.totalorder %s19, 1
    %p205 = scmp.ne.s32.totalorder %s200, %s202
    %p206 = scmp.eq.s32.totalorder %s19, 0
    %p207 = por %p205, %p206
    %p208 = scmp.ne.s32.totalorder %s200, %s202
    %p209 = scmp.eq.s32.totalorder %s24, 1
    %p210 = por %p208, %p209
    %p211 = scmp.ne.s32.totalorder %s202, %s203
    %p212 = scmp.eq.s32.totalorder %s24, 0
    %p213 = por %p211, %p212
    %p214 = scmp.ne.s32.totalorder %s202, %s203
    %p215 = scmp.eq.s32.totalorder %s25, 1
    %p216 = por %p214, %p215
    %p218 = scmp.ne.s32.totalorder %s203, %s217
    %p219 = scmp.eq.s32.totalorder %s25, 0
    %p220 = por %p218, %p219
    %s222 = sadd.s32 %s221, 1
    %p225 = scmp.eq.s32.totalorder %s19, 1
    %p226 = scmp.ne.s32.totalorder %s221, %s223
    %p227 = scmp.eq.s32.totalorder %s19, 0
    %p228 = por %p226, %p227
    %p229 = scmp.ne.s32.totalorder %s221, %s223
    %p230 = scmp.eq.s32.totalorder %s24, 1
    %p231 = por %p229, %p230
    %p232 = scmp.ne.s32.totalorder %s223, %s224
    %p233 = scmp.eq.s32.totalorder %s24, 0
    %p234 = por %p232, %p233
    %p235 = scmp.ne.s32.totalorder %s223, %s224
    %p236 = scmp.eq.s32.totalorder %s25, 1
    %p237 = por %p235, %p236
    %p239 = scmp.ne.s32.totalorder %s224, %s238
    %p240 = scmp.eq.s32.totalorder %s25, 0
    %p241 = por %p239, %p240
    %s243 = sadd.s32 %s242, 1
    %p246 = scmp.eq.s32.totalorder %s19, 1
    %p247 = scmp.ne.s32.totalorder %s242, %s244
    %p248 = scmp.eq.s32.totalorder %s19, 0
    %p249 = por %p247, %p248
    %p250 = scmp.ne.s32.totalorder %s242, %s244
    %p251 = scmp.eq.s32.totalorder %s24, 1
    %p252 = por %p250, %p251
    %p253 = scmp.ne.s32.totalorder %s244, %s245
    %p254 = scmp.eq.s32.totalorder %s24, 0
    %p255 = por %p253, %p254
    %p256 = scmp.ne.s32.totalorder %s244, %s245
    %p257 = scmp.eq.s32.totalorder %s25, 1
    %p258 = por %p256, %p257
    %p260 = scmp.ne.s32.totalorder %s245, %s259
    %p261 = scmp.eq.s32.totalorder %s25, 0
    %p262 = por %p260, %p261
    %s264 = sadd.s32 %s263, 1
    %p267 = scmp.eq.s32.totalorder %s19, 1
    %p268 = scmp.ne.s32.totalorder %s263, %s265
    %p269 = scmp.eq.s32.totalorder %s19, 0
    %p270 = por %p268, %p269
    %p271 = scmp.ne.s32.totalorder %s263, %s265
    %p272 = scmp.eq.s32.totalorder %s24, 1
    %p273 = por %p271, %p272
    %p274 = scmp.ne.s32.totalorder %s265, %s266
    %p275 = scmp.eq.s32.totalorder %s24, 0
    %p276 = por %p274, %p275
    %p277 = scmp.ne.s32.totalorder %s265, %s266
    %p278 = scmp.eq.s32.totalorder %s25, 1
    %p279 = por %p277, %p278
    %p281 = scmp.ne.s32.totalorder %s266, %s280
    %p282 = scmp.eq.s32.totalorder %s25, 0
    %p283 = por %p281, %p282
    %s285 = sadd.s32 %s284, 1
    %p288 = scmp.eq.s32.totalorder %s19, 1
    %p289 = scmp.ne.s32.totalorder %s284, %s286
    %p290 = scmp.eq.s32.totalorder %s19, 0
    %p291 = por %p289, %p290
    %p292 = scmp.ne.s32.totalorder %s284, %s286
    %p293 = scmp.eq.s32.totalorder %s24, 1
    %p294 = por %p292, %p293
    %p295 = scmp.ne.s32.totalorder %s286, %s287
    %p296 = scmp.eq.s32.totalorder %s24, 0
    %p297 = por %p295, %p296
    %p298 = scmp.ne.s32.totalorder %s286, %s287
    %p299 = scmp.eq.s32.totalorder %s25, 1
    %p300 = por %p298, %p299
    %p302 = scmp.ne.s32.totalorder %s287, %s301
    %p303 = scmp.eq.s32.totalorder %s25, 0
    %p304 = por %p302, %p303
    %s305 = ssub.s32 %s19, %s26
    %p306 = scmp.eq.s32.totalorder %s305, 0
    %s308 = sadd.s32 %s307, 1
    %s309 = scalar_select %p306, %s307, %s308
    %p312 = pneg %p306
    %p313 = scmp.eq.s32.totalorder %s19, 1
    %p314 = por %p312, %p313
    %p315 = scmp.ne.s32.totalorder %s307, %s310
    %p316 = scmp.eq.s32.totalorder %s19, 0
    %p317 = por %p315, %p316
    %p318 = scmp.ne.s32.totalorder %s307, %s310
    %p319 = scmp.eq.s32.totalorder %s24, 1
    %p320 = por %p318, %p319
    %p321 = scmp.ne.s32.totalorder %s310, %s311
    %p322 = scmp.eq.s32.totalorder %s24, 0
    %p323 = por %p321, %p322
    %p324 = scmp.ne.s32.totalorder %s310, %s311
    %p325 = scmp.eq.s32.totalorder %s25, 1
    %p326 = por %p324, %p325
    %p328 = scmp.ne.s32.totalorder %s311, %s327
    %p329 = scmp.eq.s32.totalorder %s25, 0
    %p330 = por %p328, %p329
    %p331 = scmp.le.s32.totalorder 1, %s19
    %p332 = scmp.lt.s32.totalorder %s19, 3
    %p333 = pnand %p331, %p332
    %p334 = pneg %p333
    // Predicated region
    $region9: #{tpu_custom_call.1} parent=5 // pred_check
      _
    $region10: #{tpu_custom_call.1} parent=5 // pred_check_branch
      %336 = sbr.rel (%p333) target = $region12
    $region11: #{tpu_custom_call.1} parent=5 // pred_region
      %s337 = ssub.s32 %s19, 1
      // Predicated region
      $region13: #{tpu_custom_call.1} parent=11 // pred_check
        %p338 = pneg %p66
      $region14: #{tpu_custom_call.1} parent=11 // pred_check_branch
        %340 = sbr.rel (%p338) target = $region16
      $region15: #{tpu_custom_call.1} parent=11 // pred_region
        _
      $region16: #{tpu_custom_call.1} parent=11 // pred_fallthru
        _
      // Predicated region
      $region17: #{tpu_custom_call.1} parent=11 // pred_check
        %p341 = pneg %p87
      $region18: #{tpu_custom_call.1} parent=11 // pred_check_branch
        %343 = sbr.rel (%p341) target = $region20
      $region19: #{tpu_custom_call.1} parent=11 // pred_region
        _
      $region20: #{tpu_custom_call.1} parent=11 // pred_fallthru
        _
      // Predicated region
      $region21: #{tpu_custom_call.1} parent=11 // pred_check
        %p344 = pneg %p108
      $region22: #{tpu_custom_call.1} parent=11 // pred_check_branch
        %346 = sbr.rel (%p344) target = $region24
      $region23: #{tpu_custom_call.1} parent=11 // pred_region
        _
      $region24: #{tpu_custom_call.1} parent=11 // pred_fallthru
        _
      // Predicated region
      $region25: #{tpu_custom_call.1} parent=11 // pred_check
        %p347 = pneg %p129
      $region26: #{tpu_custom_call.1} parent=11 // pred_check_branch
        %349 = sbr.rel (%p347) target = $region28
      $region27: #{tpu_custom_call.1} parent=11 // pred_region
        _
      $region28: #{tpu_custom_call.1} parent=11 // pred_fallthru
        _
      // Predicated region
      $region29: #{tpu_custom_call.1} parent=11 // pred_check
        %p350 = pneg %p150
      $region30: #{tpu_custom_call.1} parent=11 // pred_check_branch
        %352 = sbr.rel (%p350) target = $region32
      $region31: #{tpu_custom_call.1} parent=11 // pred_region
        _
      $region32: #{tpu_custom_call.1} parent=11 // pred_fallthru
        _
      // Predicated region
      $region33: #{tpu_custom_call.1} parent=11 // pred_check
        %p353 = pneg %p171
      $region34: #{tpu_custom_call.1} parent=11 // pred_check_branch
        %355 = sbr.rel (%p353) target = $region36
      $region35: #{tpu_custom_call.1} parent=11 // pred_region
        _
      $region36: #{tpu_custom_call.1} parent=11 // pred_fallthru
        _
      // Predicated region
      $region37: #{tpu_custom_call.1} parent=11 // pred_check
        %p356 = pneg %p192
      $region38: #{tpu_custom_call.1} parent=11 // pred_check_branch
        %358 = sbr.rel (%p356) target = $region40
      $region39: #{tpu_custom_call.1} parent=11 // pred_region
        _
      $region40: #{tpu_custom_call.1} parent=11 // pred_fallthru
        _
      // Predicated region
      $region41: #{tpu_custom_call.1} parent=11 // pred_check
        %p359 = pneg %p213
      $region42: #{tpu_custom_call.1} parent=11 // pred_check_branch
        %361 = sbr.rel (%p359) target = $region44
      $region43: #{tpu_custom_call.1} parent=11 // pred_region
        _
      $region44: #{tpu_custom_call.1} parent=11 // pred_fallthru
        _
      // Predicated region
      $region45: #{tpu_custom_call.1} parent=11 // pred_check
        %p362 = pneg %p234
      $region46: #{tpu_custom_call.1} parent=11 // pred_check_branch
        %364 = sbr.rel (%p362) target = $region48
      $region47: #{tpu_custom_call.1} parent=11 // pred_region
        _
      $region48: #{tpu_custom_call.1} parent=11 // pred_fallthru
        _
      // Predicated region
      $region49: #{tpu_custom_call.1} parent=11 // pred_check
        %p365 = pneg %p255
      $region50: #{tpu_custom_call.1} parent=11 // pred_check_branch
        %367 = sbr.rel (%p365) target = $region52
      $region51: #{tpu_custom_call.1} parent=11 // pred_region
        _
      $region52: #{tpu_custom_call.1} parent=11 // pred_fallthru
        _
      // Predicated region
      $region53: #{tpu_custom_call.1} parent=11 // pred_check
        %p368 = pneg %p276
      $region54: #{tpu_custom_call.1} parent=11 // pred_check_branch
        %370 = sbr.rel (%p368) target = $region56
      $region55: #{tpu_custom_call.1} parent=11 // pred_region
        _
      $region56: #{tpu_custom_call.1} parent=11 // pred_fallthru
        _
      // Predicated region
      $region57: #{tpu_custom_call.1} parent=11 // pred_check
        %p371 = pneg %p297
      $region58: #{tpu_custom_call.1} parent=11 // pred_check_branch
        %373 = sbr.rel (%p371) target = $region60
      $region59: #{tpu_custom_call.1} parent=11 // pred_region
        _
      $region60: #{tpu_custom_call.1} parent=11 // pred_fallthru
        _
    $region12: #{tpu_custom_call.1} parent=5 // pred_fallthru
      _
    %p374 = scmp.lt.s32.totalorder %s19, 2
    // Predicated region
    $region61: #{tpu_custom_call.1} parent=5 // pred_check
      %p375 = pneg %p374
    $region62: #{tpu_custom_call.1} parent=5 // pred_check_branch
      %377 = sbr.rel (%p375) target = $region64
    $region63: #{tpu_custom_call.1} parent=5 // pred_region
      // Predicated region
      $region65: #{tpu_custom_call.1} parent=63 // pred_check
        %p378 = pneg %p39
      $region66: #{tpu_custom_call.1} parent=63 // pred_check_branch
        %380 = sbr.rel (%p378) target = $region68
      $region67: #{tpu_custom_call.1} parent=63 // pred_region
        %p381 = scmp.lt.s32.totalorder %s19, 1
        %s382 = scalar_select %p381, %s19, 1
        %s383 = smul.addr %s382, 32
        %s384 = smul.addr %s383, 8
        %s385 = scalar_lea.vmem %s0, %s384
      $region68: #{tpu_custom_call.1} parent=63 // pred_fallthru
        _
    $region64: #{tpu_custom_call.1} parent=5 // pred_fallthru
      _
    %p386 = scmp.le.s32.totalorder 1, %s19
    %p387 = scmp.lt.s32.totalorder %s19, 3
    %p388 = pnand %p386, %p387
    %p389 = pneg %p388
    // Predicated region
    $region69: #{tpu_custom_call.1} parent=5 // pred_check
      _
    $region70: #{tpu_custom_call.1} parent=5 // pred_check_branch
      %391 = sbr.rel (%p388) target = $region72
    $region71: #{tpu_custom_call.1} parent=5 // pred_region
      %s392 = ssub.s32 %s19, 1
      %p393 = scmp.lt.s32.totalorder %s24, 1
      %s394 = scalar_select %p393, %s24, 1
      %s395 = smul.addr %s394, 32
      %s396 = smul.addr %s395, 8
      %s397 = scalar_lea.vmem %s0, %s396
      %p398 = pneg %p45
      %p399 = pneg %p42
      %p400 = pneg %p66
      %p401 = pneg %p63
      %p402 = pneg %p87
      %p403 = pneg %p84
      %p404 = pneg %p108
      %p405 = pneg %p105
      %p406 = pneg %p129
      %p407 = pneg %p126
      %p408 = pneg %p150
      %p409 = pneg %p147
      %p410 = pneg %p171
      %p411 = pneg %p168
      %p412 = pneg %p192
      %p413 = pneg %p189
      %p414 = pneg %p213
      %p415 = pneg %p210
      %p416 = pneg %p234
      %p417 = pneg %p231
      %p418 = pneg %p255
      %p419 = pneg %p252
      %p420 = pneg %p276
      %p421 = pneg %p273
      %p422 = pneg %p297
      %p423 = pneg %p294
      %p424 = pneg %p323
      %p425 = pneg %p320
      %p426 = scmp.lt.s32.totalorder %s24, 1
      %s427 = scalar_select %p426, %s24, 1
      %s428 = smul.addr %s427, 2
      %s429 = smul.addr %s428, 4
      %s430 = scalar_lea.vmem %s13, %s429
      %p431 = scmp.lt.s32.totalorder %s24, 1
      %s432 = scalar_select %p431, %s24, 1
      %s433 = smul.addr %s432, 32
      %s434 = smul.addr %s433, 8
      %s435 = scalar_lea.vmem %s0, %s434
      %p436 = scmp.lt.s32.totalorder %s24, 1
      %s437 = scalar_select %p436, %s24, 1
      %s438 = smul.addr %s437, 2
      %s439 = smul.addr %s438, 4
      %s440 = scalar_lea.vmem %s13, %s439
      %vm442 = vcmask 31744
      %443 = vst.msk [vmem:[#allocation2] sm:$0xff] %vm442, 0.0
      %444 = vst.msk [vmem:[#allocation2 + $0x8] sm:$0xff] %vm442, 0.0
      %vm445 = vcmask 25600
      %446 = vst.msk [vmem:[#allocation2 + $0x10] sm:$0x3] %vm445, 0.0
      %s447 = scalar_lea.vmem [#allocation2], 408
      %448 = vst.msk [vmem:[%s447] sm:$0xff] %vm442, 0.0
      %449 = vst.msk [vmem:[%s447 + $0x8] sm:$0xff] %vm442, 0.0
      %450 = vst.msk [vmem:[%s447 + $0x10] sm:$0x3] %vm445, 0.0
      %vm451 = vcmask 24576
      %452 = vst.msk [vmem:[#allocation2] sm:$0x1] %vm451, 0.0
      %453 = vst.msk [vmem:[#allocation2 + $0x18] sm:$0x1] %vm451, 0.0
      %454 = vst.msk [vmem:[#allocation2 + $0x30] sm:$0x1] %vm451, 0.0
      %455 = vst.msk [vmem:[#allocation2 + $0x48] sm:$0x1] %vm451, 0.0
      %456 = vst.msk [vmem:[#allocation2 + $0x60] sm:$0x1] %vm451, 0.0
      %457 = vst.msk [vmem:[#allocation2 + $0x78] sm:$0x1] %vm451, 0.0
      %458 = vst.msk [vmem:[#allocation2 + $0x90] sm:$0x1] %vm451, 0.0
      %459 = vst.msk [vmem:[#allocation2 + $0xa8] sm:$0x1] %vm451, 0.0
      %460 = vst.msk [vmem:[#allocation2 + $0xc0] sm:$0x1] %vm451, 0.0
      %461 = vst.msk [vmem:[#allocation2 + $0xd8] sm:$0x1] %vm451, 0.0
      %462 = vst.msk [vmem:[#allocation2 + $0xf0] sm:$0x1] %vm451, 0.0
      %463 = vst.msk [vmem:[#allocation2 + $0x108] sm:$0x1] %vm451, 0.0
      %464 = vst.msk [vmem:[#allocation2 + $0x120] sm:$0x1] %vm451, 0.0
      %465 = vst.msk [vmem:[#allocation2 + $0x138] sm:$0x1] %vm451, 0.0
      %466 = vst.msk [vmem:[#allocation2 + $0x150] sm:$0x1] %vm451, 0.0
      %467 = vst.msk [vmem:[#allocation2 + $0x168] sm:$0x1] %vm451, 0.0
      %468 = vst.msk [vmem:[#allocation2 + $0x180] sm:$0x1] %vm451, 0.0
      %469 = vst.msk [vmem:[#allocation2 + $0x198] sm:$0x1] %vm451, 0.0
      %470 = vst.msk [vmem:[#allocation2 + $0x11] sm:$0x1] %vm451, 0.0
      %471 = vst.msk [vmem:[#allocation2 + $0x29] sm:$0x1] %vm451, 0.0
      %472 = vst.msk [vmem:[#allocation2 + $0x41] sm:$0x1] %vm451, 0.0
      %473 = vst.msk [vmem:[#allocation2 + $0x59] sm:$0x1] %vm451, 0.0
      %474 = vst.msk [vmem:[#allocation2 + $0x71] sm:$0x1] %vm451, 0.0
      %475 = vst.msk [vmem:[#allocation2 + $0x89] sm:$0x1] %vm451, 0.0
      %476 = vst.msk [vmem:[#allocation2 + $0xa1] sm:$0x1] %vm451, 0.0
      %477 = vst.msk [vmem:[#allocation2 + $0xb9] sm:$0x1] %vm451, 0.0
      %478 = vst.msk [vmem:[#allocation2 + $0xd1] sm:$0x1] %vm451, 0.0
      %479 = vst.msk [vmem:[#allocation2 + $0xe9] sm:$0x1] %vm451, 0.0
      %480 = vst.msk [vmem:[#allocation2 + $0x101] sm:$0x1] %vm451, 0.0
      %481 = vst.msk [vmem:[#allocation2 + $0x119] sm:$0x1] %vm451, 0.0
      %482 = vst.msk [vmem:[#allocation2 + $0x131] sm:$0x1] %vm451, 0.0
      %483 = vst.msk [vmem:[#allocation2 + $0x149] sm:$0x1] %vm451, 0.0
      %484 = vst.msk [vmem:[#allocation2 + $0x161] sm:$0x1] %vm451, 0.0
      %485 = vst.msk [vmem:[#allocation2 + $0x179] sm:$0x1] %vm451, 0.0
      %486 = vst.msk [vmem:[#allocation2 + $0x191] sm:$0x1] %vm451, 0.0
      %487 = vst.msk [vmem:[#allocation2 + $0x1a9] sm:$0x1] %vm451, 0.0
      %vm488 = vcmask 261120
      %489 = vst.msk [vmem:[#allocation3] sm:$0xff] %vm488, 0.0
      %490 = vst.msk [vmem:[#allocation3 + $0x8] sm:$0xff] %vm488, 0.0
      %vm491 = vcmask 254976
      %492 = vst.msk [vmem:[#allocation3 + $0x10] sm:$0x3] %vm491, 0.0
      %s493 = scalar_lea.vmem [#allocation3], 408
      %494 = vst.msk [vmem:[%s493] sm:$0xff] %vm488, 0.0
      %495 = vst.msk [vmem:[%s493 + $0x8] sm:$0xff] %vm488, 0.0
      %496 = vst.msk [vmem:[%s493 + $0x10] sm:$0x3] %vm491, 0.0
      %vm497 = vcmask 253952
      %498 = vst.msk [vmem:[#allocation3] sm:$0x1] %vm497, 0.0
      %499 = vst.msk [vmem:[#allocation3 + $0x18] sm:$0x1] %vm497, 0.0
      %500 = vst.msk [vmem:[#allocation3 + $0x30] sm:$0x1] %vm497, 0.0
      %501 = vst.msk [vmem:[#allocation3 + $0x48] sm:$0x1] %vm497, 0.0
      %502 = vst.msk [vmem:[#allocation3 + $0x60] sm:$0x1] %vm497, 0.0
      %503 = vst.msk [vmem:[#allocation3 + $0x78] sm:$0x1] %vm497, 0.0
      %504 = vst.msk [vmem:[#allocation3 + $0x90] sm:$0x1] %vm497, 0.0
      %505 = vst.msk [vmem:[#allocation3 + $0xa8] sm:$0x1] %vm497, 0.0
      %506 = vst.msk [vmem:[#allocation3 + $0xc0] sm:$0x1] %vm497, 0.0
      %507 = vst.msk [vmem:[#allocation3 + $0xd8] sm:$0x1] %vm497, 0.0
      %508 = vst.msk [vmem:[#allocation3 + $0xf0] sm:$0x1] %vm497, 0.0
      %509 = vst.msk [vmem:[#allocation3 + $0x108] sm:$0x1] %vm497, 0.0
      %510 = vst.msk [vmem:[#allocation3 + $0x120] sm:$0x1] %vm497, 0.0
      %511 = vst.msk [vmem:[#allocation3 + $0x138] sm:$0x1] %vm497, 0.0
      %512 = vst.msk [vmem:[#allocation3 + $0x150] sm:$0x1] %vm497, 0.0
      %513 = vst.msk [vmem:[#allocation3 + $0x168] sm:$0x1] %vm497, 0.0
      %514 = vst.msk [vmem:[#allocation3 + $0x180] sm:$0x1] %vm497, 0.0
      %515 = vst.msk [vmem:[#allocation3 + $0x198] sm:$0x1] %vm497, 0.0
      %516 = vst.msk [vmem:[#allocation3 + $0x11] sm:$0x1] %vm497, 0.0
      %517 = vst.msk [vmem:[#allocation3 + $0x29] sm:$0x1] %vm497, 0.0
      %518 = vst.msk [vmem:[#allocation3 + $0x41] sm:$0x1] %vm497, 0.0
      %519 = vst.msk [vmem:[#allocation3 + $0x59] sm:$0x1] %vm497, 0.0
      %520 = vst.msk [vmem:[#allocation3 + $0x71] sm:$0x1] %vm497, 0.0
      %521 = vst.msk [vmem:[#allocation3 + $0x89] sm:$0x1] %vm497, 0.0
      %522 = vst.msk [vmem:[#allocation3 + $0xa1] sm:$0x1] %vm497, 0.0
      %523 = vst.msk [vmem:[#allocation3 + $0xb9] sm:$0x1] %vm497, 0.0
      %524 = vst.msk [vmem:[#allocation3 + $0xd1] sm:$0x1] %vm497, 0.0
      %525 = vst.msk [vmem:[#allocation3 + $0xe9] sm:$0x1] %vm497, 0.0
      %526 = vst.msk [vmem:[#allocation3 + $0x101] sm:$0x1] %vm497, 0.0
      %527 = vst.msk [vmem:[#allocation3 + $0x119] sm:$0x1] %vm497, 0.0
      %528 = vst.msk [vmem:[#allocation3 + $0x131] sm:$0x1] %vm497, 0.0
      %529 = vst.msk [vmem:[#allocation3 + $0x149] sm:$0x1] %vm497, 0.0
      %530 = vst.msk [vmem:[#allocation3 + $0x161] sm:$0x1] %vm497, 0.0
      %531 = vst.msk [vmem:[#allocation3 + $0x179] sm:$0x1] %vm497, 0.0
      %532 = vst.msk [vmem:[#allocation3 + $0x191] sm:$0x1] %vm497, 0.0
      %533 = vst.msk [vmem:[#allocation3 + $0x1a9] sm:$0x1] %vm497, 0.0
      %v534 = vld [vmem:[%s435] sm:$0xff]
      %v535 = vld [vmem:[%s435 + $0x8] sm:$0xff]
      %v536 = vld [vmem:[%s435 + $0x10] sm:$0xff]
      %v537 = vld [vmem:[%s435 + $0x18] sm:$0xff]
      %v538 = vld [vmem:[%s435 + $0x20] sm:$0xff]
      %v539 = vld [vmem:[%s435 + $0x28] sm:$0xff]
      %v540 = vld [vmem:[%s435 + $0x30] sm:$0xff]
      %v541 = vld [vmem:[%s435 + $0x38] sm:$0xff]
      %v542 = vld [vmem:[%s435 + $0x40] sm:$0xff]
      %v543 = vld [vmem:[%s435 + $0x48] sm:$0xff]
      %v544 = vld [vmem:[%s435 + $0x50] sm:$0xff]
      %v545 = vld [vmem:[%s435 + $0x58] sm:$0xff]
      %v546 = vld [vmem:[%s435 + $0x60] sm:$0xff]
      %v547 = vld [vmem:[%s435 + $0x68] sm:$0xff]
      %v548 = vld [vmem:[%s435 + $0x70] sm:$0xff]
      %v549 = vld [vmem:[%s435 + $0x78] sm:$0xff]
      %v550 = vld [vmem:[%s435 + $0x80] sm:$0xff]
      %v551 = vld [vmem:[%s435 + $0x88] sm:$0xff]
      %v552 = vld [vmem:[%s435 + $0x90] sm:$0xff]
      %v553 = vld [vmem:[%s435 + $0x98] sm:$0xff]
      %v554 = vld [vmem:[%s435 + $0xa0] sm:$0xff]
      %v555 = vld [vmem:[%s435 + $0xa8] sm:$0xff]
      %v556 = vld [vmem:[%s435 + $0xb0] sm:$0xff]
      %v557 = vld [vmem:[%s435 + $0xb8] sm:$0xff]
      %v558 = vld [vmem:[%s435 + $0xc0] sm:$0xff]
      %v559 = vld [vmem:[%s435 + $0xc8] sm:$0xff]
      %v560 = vld [vmem:[%s435 + $0xd0] sm:$0xff]
      %v561 = vld [vmem:[%s435 + $0xd8] sm:$0xff]
      %v562 = vld [vmem:[%s435 + $0xe0] sm:$0xff]
      %v563 = vld [vmem:[%s435 + $0xe8] sm:$0xff]
      %v564 = vld [vmem:[%s435 + $0xf0] sm:$0xff]
      %v565 = vld [vmem:[%s435 + $0xf8] sm:$0xff]
      %s566 = scalar_lea.vmem [#allocation2], 24
      %567 = vst.msk [vmem:[%s566 + $0x1] sm:$0xff] %vm442, %v534
      %568 = vst.msk [vmem:[%s566 + $0x9] sm:$0xff] %vm442, %v535
      %569 = vst.msk [vmem:[%s566 + $0x19] sm:$0xff] %vm442, %v536
      %570 = vst.msk [vmem:[%s566 + $0x21] sm:$0xff] %vm442, %v537
      %571 = vst.msk [vmem:[%s566 + $0x31] sm:$0xff] %vm442, %v538
      %572 = vst.msk [vmem:[%s566 + $0x39] sm:$0xff] %vm442, %v539
      %573 = vst.msk [vmem:[%s566 + $0x49] sm:$0xff] %vm442, %v540
      %574 = vst.msk [vmem:[%s566 + $0x51] sm:$0xff] %vm442, %v541
      %575 = vst.msk [vmem:[%s566 + $0x61] sm:$0xff] %vm442, %v542
      %576 = vst.msk [vmem:[%s566 + $0x69] sm:$0xff] %vm442, %v543
      %577 = vst.msk [vmem:[%s566 + $0x79] sm:$0xff] %vm442, %v544
      %578 = vst.msk [vmem:[%s566 + $0x81] sm:$0xff] %vm442, %v545
      %579 = vst.msk [vmem:[%s566 + $0x91] sm:$0xff] %vm442, %v546
      %580 = vst.msk [vmem:[%s566 + $0x99] sm:$0xff] %vm442, %v547
      %581 = vst.msk [vmem:[%s566 + $0xa9] sm:$0xff] %vm442, %v548
      %582 = vst.msk [vmem:[%s566 + $0xb1] sm:$0xff] %vm442, %v549
      %583 = vst.msk [vmem:[%s566 + $0xc1] sm:$0xff] %vm442, %v550
      %584 = vst.msk [vmem:[%s566 + $0xc9] sm:$0xff] %vm442, %v551
      %585 = vst.msk [vmem:[%s566 + $0xd9] sm:$0xff] %vm442, %v552
      %586 = vst.msk [vmem:[%s566 + $0xe1] sm:$0xff] %vm442, %v553
      %587 = vst.msk [vmem:[%s566 + $0xf1] sm:$0xff] %vm442, %v554
      %588 = vst.msk [vmem:[%s566 + $0xf9] sm:$0xff] %vm442, %v555
      %589 = vst.msk [vmem:[%s566 + $0x109] sm:$0xff] %vm442, %v556
      %590 = vst.msk [vmem:[%s566 + $0x111] sm:$0xff] %vm442, %v557
      %591 = vst.msk [vmem:[%s566 + $0x121] sm:$0xff] %vm442, %v558
      %592 = vst.msk [vmem:[%s566 + $0x129] sm:$0xff] %vm442, %v559
      %593 = vst.msk [vmem:[%s566 + $0x139] sm:$0xff] %vm442, %v560
      %594 = vst.msk [vmem:[%s566 + $0x141] sm:$0xff] %vm442, %v561
      %595 = vst.msk [vmem:[%s566 + $0x151] sm:$0xff] %vm442, %v562
      %596 = vst.msk [vmem:[%s566 + $0x159] sm:$0xff] %vm442, %v563
      %597 = vst.msk [vmem:[%s566 + $0x169] sm:$0xff] %vm442, %v564
      %598 = vst.msk [vmem:[%s566 + $0x171] sm:$0xff] %vm442, %v565
      %v599 = vld [vmem:[#allocation2] sm:$0xff]
      %v600 = vld [vmem:[#allocation2 + $0x8] sm:$0xff]
      %v601 = vld [vmem:[#allocation2 + $0x18] sm:$0xff]
      %v602 = vld [vmem:[#allocation2 + $0x20] sm:$0xff]
      %v603 = vld [vmem:[#allocation2 + $0x30] sm:$0xff]
      %v604 = vld [vmem:[#allocation2 + $0x38] sm:$0xff]
      %v605 = vld [vmem:[#allocation2 + $0x48] sm:$0xff]
      %v606 = vld [vmem:[#allocation2 + $0x50] sm:$0xff]
      %v607 = vld [vmem:[#allocation2 + $0x60] sm:$0xff]
      %v608 = vld [vmem:[#allocation2 + $0x68] sm:$0xff]
      %v609 = vld [vmem:[#allocation2 + $0x78] sm:$0xff]
      %v610 = vld [vmem:[#allocation2 + $0x80] sm:$0xff]
      %v611 = vld [vmem:[#allocation2 + $0x90] sm:$0xff]
      %v612 = vld [vmem:[#allocation2 + $0x98] sm:$0xff]
      %v613 = vld [vmem:[#allocation2 + $0xa8] sm:$0xff]
      %v614 = vld [vmem:[#allocation2 + $0xb0] sm:$0xff]
      %v615 = vld [vmem:[#allocation2 + $0xc0] sm:$0xff]
      %v616 = vld [vmem:[#allocation2 + $0xc8] sm:$0xff]
      %v617 = vld [vmem:[#allocation2 + $0xd8] sm:$0xff]
      %v618 = vld [vmem:[#allocation2 + $0xe0] sm:$0xff]
      %v619 = vld [vmem:[#allocation2 + $0xf0] sm:$0xff]
      %v620 = vld [vmem:[#allocation2 + $0xf8] sm:$0xff]
      %v621 = vld [vmem:[#allocation2 + $0x108] sm:$0xff]
      %v622 = vld [vmem:[#allocation2 + $0x110] sm:$0xff]
      %v623 = vld [vmem:[#allocation2 + $0x120] sm:$0xff]
      %v624 = vld [vmem:[#allocation2 + $0x128] sm:$0xff]
      %v625 = vld [vmem:[#allocation2 + $0x138] sm:$0xff]
      %v626 = vld [vmem:[#allocation2 + $0x140] sm:$0xff]
      %v627 = vld [vmem:[#allocation2 + $0x150] sm:$0xff]
      %v628 = vld [vmem:[#allocation2 + $0x158] sm:$0xff]
      %v629 = vld [vmem:[#allocation2 + $0x168] sm:$0xff]
      %v630 = vld [vmem:[#allocation2 + $0x170] sm:$0xff]
      %v631 = vld [vmem:[#allocation2 + $0x1] sm:$0xff]
      %v632 = vld [vmem:[#allocation2 + $0x9] sm:$0xff]
      %v633 = vld [vmem:[#allocation2 + $0x19] sm:$0xff]
      %v634 = vld [vmem:[#allocation2 + $0x21] sm:$0xff]
      %v635 = vld [vmem:[#allocation2 + $0x31] sm:$0xff]
      %v636 = vld [vmem:[#allocation2 + $0x39] sm:$0xff]
      %v637 = vld [vmem:[#allocation2 + $0x49] sm:$0xff]
      %v638 = vld [vmem:[#allocation2 + $0x51] sm:$0xff]
      %v639 = vld [vmem:[#allocation2 + $0x61] sm:$0xff]
      %v640 = vld [vmem:[#allocation2 + $0x69] sm:$0xff]
      %v641 = vld [vmem:[#allocation2 + $0x79] sm:$0xff]
      %v642 = vld [vmem:[#allocation2 + $0x81] sm:$0xff]
      %v643 = vld [vmem:[#allocation2 + $0x91] sm:$0xff]
      %v644 = vld [vmem:[#allocation2 + $0x99] sm:$0xff]
      %v645 = vld [vmem:[#allocation2 + $0xa9] sm:$0xff]
      %v646 = vld [vmem:[#allocation2 + $0xb1] sm:$0xff]
      %v647 = vld [vmem:[#allocation2 + $0xc1] sm:$0xff]
      %v648 = vld [vmem:[#allocation2 + $0xc9] sm:$0xff]
      %v649 = vld [vmem:[#allocation2 + $0xd9] sm:$0xff]
      %v650 = vld [vmem:[#allocation2 + $0xe1] sm:$0xff]
      %v651 = vld [vmem:[#allocation2 + $0xf1] sm:$0xff]
      %v652 = vld [vmem:[#allocation2 + $0xf9] sm:$0xff]
      %v653 = vld [vmem:[#allocation2 + $0x109] sm:$0xff]
      %v654 = vld [vmem:[#allocation2 + $0x111] sm:$0xff]
      %v655 = vld [vmem:[#allocation2 + $0x121] sm:$0xff]
      %v656 = vld [vmem:[#allocation2 + $0x129] sm:$0xff]
      %v657 = vld [vmem:[#allocation2 + $0x139] sm:$0xff]
      %v658 = vld [vmem:[#allocation2 + $0x141] sm:$0xff]
      %v659 = vld [vmem:[#allocation2 + $0x151] sm:$0xff]
      %v660 = vld [vmem:[#allocation2 + $0x159] sm:$0xff]
      %v661 = vld [vmem:[#allocation2 + $0x169] sm:$0xff]
      %v662 = vld [vmem:[#allocation2 + $0x171] sm:$0xff]
      %v663 = vld [vmem:[#allocation2 + $0x2] sm:$0xff]
      %v664 = vld [vmem:[#allocation2 + $0xa] sm:$0xff]
      %v665 = vld [vmem:[#allocation2 + $0x1a] sm:$0xff]
      %v666 = vld [vmem:[#allocation2 + $0x22] sm:$0xff]
      %v667 = vld [vmem:[#allocation2 + $0x32] sm:$0xff]
      %v668 = vld [vmem:[#allocation2 + $0x3a] sm:$0xff]
      %v669 = vld [vmem:[#allocation2 + $0x4a] sm:$0xff]
      %v670 = vld [vmem:[#allocation2 + $0x52] sm:$0xff]
      %v671 = vld [vmem:[#allocation2 + $0x62] sm:$0xff]
      %v672 = vld [vmem:[#allocation2 + $0x6a] sm:$0xff]
      %v673 = vld [vmem:[#allocation2 + $0x7a] sm:$0xff]
      %v674 = vld [vmem:[#allocation2 + $0x82] sm:$0xff]
      %v675 = vld [vmem:[#allocation2 + $0x92] sm:$0xff]
      %v676 = vld [vmem:[#allocation2 + $0x9a] sm:$0xff]
      %v677 = vld [vmem:[#allocation2 + $0xaa] sm:$0xff]
      %v678 = vld [vmem:[#allocation2 + $0xb2] sm:$0xff]
      %v679 = vld [vmem:[#allocation2 + $0xc2] sm:$0xff]
      %v680 = vld [vmem:[#allocation2 + $0xca] sm:$0xff]
      %v681 = vld [vmem:[#allocation2 + $0xda] sm:$0xff]
      %v682 = vld [vmem:[#allocation2 + $0xe2] sm:$0xff]
      %v683 = vld [vmem:[#allocation2 + $0xf2] sm:$0xff]
      %v684 = vld [vmem:[#allocation2 + $0xfa] sm:$0xff]
      %v685 = vld [vmem:[#allocation2 + $0x10a] sm:$0xff]
      %v686 = vld [vmem:[#allocation2 + $0x112] sm:$0xff]
      %v687 = vld [vmem:[#allocation2 + $0x122] sm:$0xff]
      %v688 = vld [vmem:[#allocation2 + $0x12a] sm:$0xff]
      %v689 = vld [vmem:[#allocation2 + $0x13a] sm:$0xff]
      %v690 = vld [vmem:[#allocation2 + $0x142] sm:$0xff]
      %v691 = vld [vmem:[#allocation2 + $0x152] sm:$0xff]
      %v692 = vld [vmem:[#allocation2 + $0x15a] sm:$0xff]
      %v693 = vld [vmem:[#allocation2 + $0x16a] sm:$0xff]
      %v694 = vld [vmem:[#allocation2 + $0x172] sm:$0xff]
      %v695 = vld [vmem:[%s566] sm:$0xff]
      %v696 = vld [vmem:[%s566 + $0x8] sm:$0xff]
      %v697 = vld [vmem:[%s566 + $0x18] sm:$0xff]
      %v698 = vld [vmem:[%s566 + $0x20] sm:$0xff]
      %v699 = vld [vmem:[%s566 + $0x30] sm:$0xff]
      %v700 = vld [vmem:[%s566 + $0x38] sm:$0xff]
      %v701 = vld [vmem:[%s566 + $0x48] sm:$0xff]
      %v702 = vld [vmem:[%s566 + $0x50] sm:$0xff]
      %v703 = vld [vmem:[%s566 + $0x60] sm:$0xff]
      %v704 = vld [vmem:[%s566 + $0x68] sm:$0xff]
      %v705 = vld [vmem:[%s566 + $0x78] sm:$0xff]
      %v706 = vld [vmem:[%s566 + $0x80] sm:$0xff]
      %v707 = vld [vmem:[%s566 + $0x90] sm:$0xff]
      %v708 = vld [vmem:[%s566 + $0x98] sm:$0xff]
      %v709 = vld [vmem:[%s566 + $0xa8] sm:$0xff]
      %v710 = vld [vmem:[%s566 + $0xb0] sm:$0xff]
      %v711 = vld [vmem:[%s566 + $0xc0] sm:$0xff]
      %v712 = vld [vmem:[%s566 + $0xc8] sm:$0xff]
      %v713 = vld [vmem:[%s566 + $0xd8] sm:$0xff]
      %v714 = vld [vmem:[%s566 + $0xe0] sm:$0xff]
      %v715 = vld [vmem:[%s566 + $0xf0] sm:$0xff]
      %v716 = vld [vmem:[%s566 + $0xf8] sm:$0xff]
      %v717 = vld [vmem:[%s566 + $0x108] sm:$0xff]
      %v718 = vld [vmem:[%s566 + $0x110] sm:$0xff]
      %v719 = vld [vmem:[%s566 + $0x120] sm:$0xff]
      %v720 = vld [vmem:[%s566 + $0x128] sm:$0xff]
      %v721 = vld [vmem:[%s566 + $0x138] sm:$0xff]
      %v722 = vld [vmem:[%s566 + $0x140] sm:$0xff]
      %v723 = vld [vmem:[%s566 + $0x150] sm:$0xff]
      %v724 = vld [vmem:[%s566 + $0x158] sm:$0xff]
      %v725 = vld [vmem:[%s566 + $0x168] sm:$0xff]
      %v726 = vld [vmem:[%s566 + $0x170] sm:$0xff]
      %v727 = vld [vmem:[%s566 + $0x1] sm:$0xff]
      %v728 = vld [vmem:[%s566 + $0x9] sm:$0xff]
      %v729 = vld [vmem:[%s566 + $0x19] sm:$0xff]
      %v730 = vld [vmem:[%s566 + $0x21] sm:$0xff]
      %v731 = vld [vmem:[%s566 + $0x31] sm:$0xff]
      %v732 = vld [vmem:[%s566 + $0x39] sm:$0xff]
      %v733 = vld [vmem:[%s566 + $0x49] sm:$0xff]
      %v734 = vld [vmem:[%s566 + $0x51] sm:$0xff]
      %v735 = vld [vmem:[%s566 + $0x61] sm:$0xff]
      %v736 = vld [vmem:[%s566 + $0x69] sm:$0xff]
      %v737 = vld [vmem:[%s566 + $0x79] sm:$0xff]
      %v738 = vld [vmem:[%s566 + $0x81] sm:$0xff]
      %v739 = vld [vmem:[%s566 + $0x91] sm:$0xff]
      %v740 = vld [vmem:[%s566 + $0x99] sm:$0xff]
      %v741 = vld [vmem:[%s566 + $0xa9] sm:$0xff]
      %v742 = vld [vmem:[%s566 + $0xb1] sm:$0xff]
      %v743 = vld [vmem:[%s566 + $0xc1] sm:$0xff]
      %v744 = vld [vmem:[%s566 + $0xc9] sm:$0xff]
      %v745 = vld [vmem:[%s566 + $0xd9] sm:$0xff]
      %v746 = vld [vmem:[%s566 + $0xe1] sm:$0xff]
      %v747 = vld [vmem:[%s566 + $0xf1] sm:$0xff]
      %v748 = vld [vmem:[%s566 + $0xf9] sm:$0xff]
      %v749 = vld [vmem:[%s566 + $0x109] sm:$0xff]
      %v750 = vld [vmem:[%s566 + $0x111] sm:$0xff]
      %v751 = vld [vmem:[%s566 + $0x121] sm:$0xff]
      %v752 = vld [vmem:[%s566 + $0x129] sm:$0xff]
      %v753 = vld [vmem:[%s566 + $0x139] sm:$0xff]
      %v754 = vld [vmem:[%s566 + $0x141] sm:$0xff]
      %v755 = vld [vmem:[%s566 + $0x151] sm:$0xff]
      %v756 = vld [vmem:[%s566 + $0x159] sm:$0xff]
      %v757 = vld [vmem:[%s566 + $0x169] sm:$0xff]
      %v758 = vld [vmem:[%s566 + $0x171] sm:$0xff]
      %v759 = vld [vmem:[%s566 + $0x2] sm:$0xff]
      %v760 = vld [vmem:[%s566 + $0xa] sm:$0xff]
      %v761 = vld [vmem:[%s566 + $0x1a] sm:$0xff]
      %v762 = vld [vmem:[%s566 + $0x22] sm:$0xff]
      %v763 = vld [vmem:[%s566 + $0x32] sm:$0xff]
      %v764 = vld [vmem:[%s566 + $0x3a] sm:$0xff]
      %v765 = vld [vmem:[%s566 + $0x4a] sm:$0xff]
      %v766 = vld [vmem:[%s566 + $0x52] sm:$0xff]
      %v767 = vld [vmem:[%s566 + $0x62] sm:$0xff]
      %v768 = vld [vmem:[%s566 + $0x6a] sm:$0xff]
      %v769 = vld [vmem:[%s566 + $0x7a] sm:$0xff]
      %v770 = vld [vmem:[%s566 + $0x82] sm:$0xff]
      %v771 = vld [vmem:[%s566 + $0x92] sm:$0xff]
      %v772 = vld [vmem:[%s566 + $0x9a] sm:$0xff]
      %v773 = vld [vmem:[%s566 + $0xaa] sm:$0xff]
      %v774 = vld [vmem:[%s566 + $0xb2] sm:$0xff]
      %v775 = vld [vmem:[%s566 + $0xc2] sm:$0xff]
      %v776 = vld [vmem:[%s566 + $0xca] sm:$0xff]
      %v777 = vld [vmem:[%s566 + $0xda] sm:$0xff]
      %v778 = vld [vmem:[%s566 + $0xe2] sm:$0xff]
      %v779 = vld [vmem:[%s566 + $0xf2] sm:$0xff]
      %v780 = vld [vmem:[%s566 + $0xfa] sm:$0xff]
      %v781 = vld [vmem:[%s566 + $0x10a] sm:$0xff]
      %v782 = vld [vmem:[%s566 + $0x112] sm:$0xff]
      %v783 = vld [vmem:[%s566 + $0x122] sm:$0xff]
      %v784 = vld [vmem:[%s566 + $0x12a] sm:$0xff]
      %v785 = vld [vmem:[%s566 + $0x13a] sm:$0xff]
      %v786 = vld [vmem:[%s566 + $0x142] sm:$0xff]
      %v787 = vld [vmem:[%s566 + $0x152] sm:$0xff]
      %v788 = vld [vmem:[%s566 + $0x15a] sm:$0xff]
      %v789 = vld [vmem:[%s566 + $0x16a] sm:$0xff]
      %v790 = vld [vmem:[%s566 + $0x172] sm:$0xff]
      %s791 = scalar_lea.vmem [#allocation2], 48
      %v792 = vld [vmem:[%s791] sm:$0xff]
      %v793 = vld [vmem:[%s791 + $0x8] sm:$0xff]
      %v794 = vld [vmem:[%s791 + $0x18] sm:$0xff]
      %v795 = vld [vmem:[%s791 + $0x20] sm:$0xff]
      %v796 = vld [vmem:[%s791 + $0x30] sm:$0xff]
      %v797 = vld [vmem:[%s791 + $0x38] sm:$0xff]
      %v798 = vld [vmem:[%s791 + $0x48] sm:$0xff]
      %v799 = vld [vmem:[%s791 + $0x50] sm:$0xff]
      %v800 = vld [vmem:[%s791 + $0x60] sm:$0xff]
      %v801 = vld [vmem:[%s791 + $0x68] sm:$0xff]
      %v802 = vld [vmem:[%s791 + $0x78] sm:$0xff]
      %v803 = vld [vmem:[%s791 + $0x80] sm:$0xff]
      %v804 = vld [vmem:[%s791 + $0x90] sm:$0xff]
      %v805 = vld [vmem:[%s791 + $0x98] sm:$0xff]
      %v806 = vld [vmem:[%s791 + $0xa8] sm:$0xff]
      %v807 = vld [vmem:[%s791 + $0xb0] sm:$0xff]
      %v808 = vld [vmem:[%s791 + $0xc0] sm:$0xff]
      %v809 = vld [vmem:[%s791 + $0xc8] sm:$0xff]
      %v810 = vld [vmem:[%s791 + $0xd8] sm:$0xff]
      %v811 = vld [vmem:[%s791 + $0xe0] sm:$0xff]
      %v812 = vld [vmem:[%s791 + $0xf0] sm:$0xff]
      %v813 = vld [vmem:[%s791 + $0xf8] sm:$0xff]
      %v814 = vld [vmem:[%s791 + $0x108] sm:$0xff]
      %v815 = vld [vmem:[%s791 + $0x110] sm:$0xff]
      %v816 = vld [vmem:[%s791 + $0x120] sm:$0xff]
      %v817 = vld [vmem:[%s791 + $0x128] sm:$0xff]
      %v818 = vld [vmem:[%s791 + $0x138] sm:$0xff]
      %v819 = vld [vmem:[%s791 + $0x140] sm:$0xff]
      %v820 = vld [vmem:[%s791 + $0x150] sm:$0xff]
      %v821 = vld [vmem:[%s791 + $0x158] sm:$0xff]
      %v822 = vld [vmem:[%s791 + $0x168] sm:$0xff]
      %v823 = vld [vmem:[%s791 + $0x170] sm:$0xff]
      %v824 = vld [vmem:[%s791 + $0x1] sm:$0xff]
      %v825 = vld [vmem:[%s791 + $0x9] sm:$0xff]
      %v826 = vld [vmem:[%s791 + $0x19] sm:$0xff]
      %v827 = vld [vmem:[%s791 + $0x21] sm:$0xff]
      %v828 = vld [vmem:[%s791 + $0x31] sm:$0xff]
      %v829 = vld [vmem:[%s791 + $0x39] sm:$0xff]
      %v830 = vld [vmem:[%s791 + $0x49] sm:$0xff]
      %v831 = vld [vmem:[%s791 + $0x51] sm:$0xff]
      %v832 = vld [vmem:[%s791 + $0x61] sm:$0xff]
      %v833 = vld [vmem:[%s791 + $0x69] sm:$0xff]
      %v834 = vld [vmem:[%s791 + $0x79] sm:$0xff]
      %v835 = vld [vmem:[%s791 + $0x81] sm:$0xff]
      %v836 = vld [vmem:[%s791 + $0x91] sm:$0xff]
      %v837 = vld [vmem:[%s791 + $0x99] sm:$0xff]
      %v838 = vld [vmem:[%s791 + $0xa9] sm:$0xff]
      %v839 = vld [vmem:[%s791 + $0xb1] sm:$0xff]
      %v840 = vld [vmem:[%s791 + $0xc1] sm:$0xff]
      %v841 = vld [vmem:[%s791 + $0xc9] sm:$0xff]
      %v842 = vld [vmem:[%s791 + $0xd9] sm:$0xff]
      %v843 = vld [vmem:[%s791 + $0xe1] sm:$0xff]
      %v844 = vld [vmem:[%s791 + $0xf1] sm:$0xff]
      %v845 = vld [vmem:[%s791 + $0xf9] sm:$0xff]
      %v846 = vld [vmem:[%s791 + $0x109] sm:$0xff]
      %v847 = vld [vmem:[%s791 + $0x111] sm:$0xff]
      %v848 = vld [vmem:[%s791 + $0x121] sm:$0xff]
      %v849 = vld [vmem:[%s791 + $0x129] sm:$0xff]
      %v850 = vld [vmem:[%s791 + $0x139] sm:$0xff]
      %v851 = vld [vmem:[%s791 + $0x141] sm:$0xff]
      %v852 = vld [vmem:[%s791 + $0x151] sm:$0xff]
      %v853 = vld [vmem:[%s791 + $0x159] sm:$0xff]
      %v854 = vld [vmem:[%s791 + $0x169] sm:$0xff]
      %v855 = vld [vmem:[%s791 + $0x171] sm:$0xff]
      %v856 = vld [vmem:[%s791 + $0x2] sm:$0xff]
      %v857 = vld [vmem:[%s791 + $0xa] sm:$0xff]
      %v858 = vld [vmem:[%s791 + $0x1a] sm:$0xff]
      %v859 = vld [vmem:[%s791 + $0x22] sm:$0xff]
      %v860 = vld [vmem:[%s791 + $0x32] sm:$0xff]
      %v861 = vld [vmem:[%s791 + $0x3a] sm:$0xff]
      %v862 = vld [vmem:[%s791 + $0x4a] sm:$0xff]
      %v863 = vld [vmem:[%s791 + $0x52] sm:$0xff]
      %v864 = vld [vmem:[%s791 + $0x62] sm:$0xff]
      %v865 = vld [vmem:[%s791 + $0x6a] sm:$0xff]
      %v866 = vld [vmem:[%s791 + $0x7a] sm:$0xff]
      %v867 = vld [vmem:[%s791 + $0x82] sm:$0xff]
      %v868 = vld [vmem:[%s791 + $0x92] sm:$0xff]
      %v869 = vld [vmem:[%s791 + $0x9a] sm:$0xff]
      %v870 = vld [vmem:[%s791 + $0xaa] sm:$0xff]
      %v871 = vld [vmem:[%s791 + $0xb2] sm:$0xff]
      %v872 = vld [vmem:[%s791 + $0xc2] sm:$0xff]
      %v873 = vld [vmem:[%s791 + $0xca] sm:$0xff]
      %v874 = vld [vmem:[%s791 + $0xda] sm:$0xff]
      %v875 = vld [vmem:[%s791 + $0xe2] sm:$0xff]
      %v876 = vld [vmem:[%s791 + $0xf2] sm:$0xff]
      %v877 = vld [vmem:[%s791 + $0xfa] sm:$0xff]
      %v878 = vld [vmem:[%s791 + $0x10a] sm:$0xff]
      %v879 = vld [vmem:[%s791 + $0x112] sm:$0xff]
      %v880 = vld [vmem:[%s791 + $0x122] sm:$0xff]
      %v881 = vld [vmem:[%s791 + $0x12a] sm:$0xff]
      %v882 = vld [vmem:[%s791 + $0x13a] sm:$0xff]
      %v883 = vld [vmem:[%s791 + $0x142] sm:$0xff]
      %v884 = vld [vmem:[%s791 + $0x152] sm:$0xff]
      %v885 = vld [vmem:[%s791 + $0x15a] sm:$0xff]
      %v886 = vld [vmem:[%s791 + $0x16a] sm:$0xff]
      %v887 = vld [vmem:[%s791 + $0x172] sm:$0xff]
      %920 = vrot.lane.b32.xlu0 %v631, 4
      %v921 = vpop.permute.xlu0 %920
      %922 = vrot.lane.b32.xlu0 %v632, 4
      %v923 = vpop.permute.xlu0 %922
      %924 = vrot.lane.b32.xlu0 %v633, 4
      %v925 = vpop.permute.xlu0 %924
      %926 = vrot.lane.b32.xlu0 %v634, 4
      %v927 = vpop.permute.xlu0 %926
      %928 = vrot.lane.b32.xlu0 %v635, 4
      %v929 = vpop.permute.xlu0 %928
      %930 = vrot.lane.b32.xlu0 %v636, 4
      %v931 = vpop.permute.xlu0 %930
      %932 = vrot.lane.b32.xlu0 %v637, 4
      %v933 = vpop.permute.xlu0 %932
      %934 = vrot.lane.b32.xlu0 %v638, 4
      %v935 = vpop.permute.xlu0 %934
      %936 = vrot.lane.b32.xlu0 %v639, 4
      %v937 = vpop.permute.xlu0 %936
      %938 = vrot.lane.b32.xlu0 %v640, 4
      %v939 = vpop.permute.xlu0 %938
      %940 = vrot.lane.b32.xlu0 %v641, 4
      %v941 = vpop.permute.xlu0 %940
      %942 = vrot.lane.b32.xlu0 %v642, 4
      %v943 = vpop.permute.xlu0 %942
      %944 = vrot.lane.b32.xlu0 %v643, 4
      %v945 = vpop.permute.xlu0 %944
      %946 = vrot.lane.b32.xlu0 %v644, 4
      %v947 = vpop.permute.xlu0 %946
      %948 = vrot.lane.b32.xlu0 %v645, 4
      %v949 = vpop.permute.xlu0 %948
      %950 = vrot.lane.b32.xlu0 %v646, 4
      %v951 = vpop.permute.xlu0 %950
      %952 = vrot.lane.b32.xlu0 %v647, 4
      %v953 = vpop.permute.xlu0 %952
      %954 = vrot.lane.b32.xlu0 %v648, 4
      %v955 = vpop.permute.xlu0 %954
      %956 = vrot.lane.b32.xlu0 %v649, 4
      %v957 = vpop.permute.xlu0 %956
      %958 = vrot.lane.b32.xlu0 %v650, 4
      %v959 = vpop.permute.xlu0 %958
      %960 = vrot.lane.b32.xlu0 %v651, 4
      %v961 = vpop.permute.xlu0 %960
      %962 = vrot.lane.b32.xlu0 %v652, 4
      %v963 = vpop.permute.xlu0 %962
      %964 = vrot.lane.b32.xlu0 %v653, 4
      %v965 = vpop.permute.xlu0 %964
      %966 = vrot.lane.b32.xlu0 %v654, 4
      %v967 = vpop.permute.xlu0 %966
      %968 = vrot.lane.b32.xlu0 %v655, 4
      %v969 = vpop.permute.xlu0 %968
      %970 = vrot.lane.b32.xlu0 %v656, 4
      %v971 = vpop.permute.xlu0 %970
      %972 = vrot.lane.b32.xlu0 %v657, 4
      %v973 = vpop.permute.xlu0 %972
      %974 = vrot.lane.b32.xlu0 %v658, 4
      %v975 = vpop.permute.xlu0 %974
      %976 = vrot.lane.b32.xlu0 %v659, 4
      %v977 = vpop.permute.xlu0 %976
      %978 = vrot.lane.b32.xlu0 %v660, 4
      %v979 = vpop.permute.xlu0 %978
      %980 = vrot.lane.b32.xlu0 %v661, 4
      %v981 = vpop.permute.xlu0 %980
      %982 = vrot.lane.b32.xlu0 %v662, 4
      %v983 = vpop.permute.xlu0 %982
      %1048 = vrot.lane.b32.xlu0 %v663, 8
      %v1049 = vpop.permute.xlu0 %1048
      %1050 = vrot.lane.b32.xlu0 %v664, 8
      %v1051 = vpop.permute.xlu0 %1050
      %1052 = vrot.lane.b32.xlu0 %v665, 8
      %v1053 = vpop.permute.xlu0 %1052
      %1054 = vrot.lane.b32.xlu0 %v666, 8
      %v1055 = vpop.permute.xlu0 %1054
      %1056 = vrot.lane.b32.xlu0 %v667, 8
      %v1057 = vpop.permute.xlu0 %1056
      %1058 = vrot.lane.b32.xlu0 %v668, 8
      %v1059 = vpop.permute.xlu0 %1058
      %1060 = vrot.lane.b32.xlu0 %v669, 8
      %v1061 = vpop.permute.xlu0 %1060
      %1062 = vrot.lane.b32.xlu0 %v670, 8
      %v1063 = vpop.permute.xlu0 %1062
      %1064 = vrot.lane.b32.xlu0 %v671, 8
      %v1065 = vpop.permute.xlu0 %1064
      %1066 = vrot.lane.b32.xlu0 %v672, 8
      %v1067 = vpop.permute.xlu0 %1066
      %1068 = vrot.lane.b32.xlu0 %v673, 8
      %v1069 = vpop.permute.xlu0 %1068
      %1070 = vrot.lane.b32.xlu0 %v674, 8
      %v1071 = vpop.permute.xlu0 %1070
      %1072 = vrot.lane.b32.xlu0 %v675, 8
      %v1073 = vpop.permute.xlu0 %1072
      %1074 = vrot.lane.b32.xlu0 %v676, 8
      %v1075 = vpop.permute.xlu0 %1074
      %1076 = vrot.lane.b32.xlu0 %v677, 8
      %v1077 = vpop.permute.xlu0 %1076
      %1078 = vrot.lane.b32.xlu0 %v678, 8
      %v1079 = vpop.permute.xlu0 %1078
      %1080 = vrot.lane.b32.xlu0 %v679, 8
      %v1081 = vpop.permute.xlu0 %1080
      %1082 = vrot.lane.b32.xlu0 %v680, 8
      %v1083 = vpop.permute.xlu0 %1082
      %1084 = vrot.lane.b32.xlu0 %v681, 8
      %v1085 = vpop.permute.xlu0 %1084
      %1086 = vrot.lane.b32.xlu0 %v682, 8
      %v1087 = vpop.permute.xlu0 %1086
      %1088 = vrot.lane.b32.xlu0 %v683, 8
      %v1089 = vpop.permute.xlu0 %1088
      %1090 = vrot.lane.b32.xlu0 %v684, 8
      %v1091 = vpop.permute.xlu0 %1090
      %1092 = vrot.lane.b32.xlu0 %v685, 8
      %v1093 = vpop.permute.xlu0 %1092
      %1094 = vrot.lane.b32.xlu0 %v686, 8
      %v1095 = vpop.permute.xlu0 %1094
      %1096 = vrot.lane.b32.xlu0 %v687, 8
      %v1097 = vpop.permute.xlu0 %1096
      %1098 = vrot.lane.b32.xlu0 %v688, 8
      %v1099 = vpop.permute.xlu0 %1098
      %1100 = vrot.lane.b32.xlu0 %v689, 8
      %v1101 = vpop.permute.xlu0 %1100
      %1102 = vrot.lane.b32.xlu0 %v690, 8
      %v1103 = vpop.permute.xlu0 %1102
      %1104 = vrot.lane.b32.xlu0 %v691, 8
      %v1105 = vpop.permute.xlu0 %1104
      %1106 = vrot.lane.b32.xlu0 %v692, 8
      %v1107 = vpop.permute.xlu0 %1106
      %1108 = vrot.lane.b32.xlu0 %v693, 8
      %v1109 = vpop.permute.xlu0 %1108
      %1110 = vrot.lane.b32.xlu0 %v694, 8
      %v1111 = vpop.permute.xlu0 %1110
      %1176 = vrot.lane.b32.xlu0 %v695, 12
      %v1177 = vpop.permute.xlu0 %1176
      %1178 = vrot.lane.b32.xlu0 %v696, 12
      %v1179 = vpop.permute.xlu0 %1178
      %1180 = vrot.lane.b32.xlu0 %v697, 12
      %v1181 = vpop.permute.xlu0 %1180
      %1182 = vrot.lane.b32.xlu0 %v698, 12
      %v1183 = vpop.permute.xlu0 %1182
      %1184 = vrot.lane.b32.xlu0 %v699, 12
      %v1185 = vpop.permute.xlu0 %1184
      %1186 = vrot.lane.b32.xlu0 %v700, 12
      %v1187 = vpop.permute.xlu0 %1186
      %1188 = vrot.lane.b32.xlu0 %v701, 12
      %v1189 = vpop.permute.xlu0 %1188
      %1190 = vrot.lane.b32.xlu0 %v702, 12
      %v1191 = vpop.permute.xlu0 %1190
      %1192 = vrot.lane.b32.xlu0 %v703, 12
      %v1193 = vpop.permute.xlu0 %1192
      %1194 = vrot.lane.b32.xlu0 %v704, 12
      %v1195 = vpop.permute.xlu0 %1194
      %1196 = vrot.lane.b32.xlu0 %v705, 12
      %v1197 = vpop.permute.xlu0 %1196
      %1198 = vrot.lane.b32.xlu0 %v706, 12
      %v1199 = vpop.permute.xlu0 %1198
      %1200 = vrot.lane.b32.xlu0 %v707, 12
      %v1201 = vpop.permute.xlu0 %1200
      %1202 = vrot.lane.b32.xlu0 %v708, 12
      %v1203 = vpop.permute.xlu0 %1202
      %1204 = vrot.lane.b32.xlu0 %v709, 12
      %v1205 = vpop.permute.xlu0 %1204
      %1206 = vrot.lane.b32.xlu0 %v710, 12
      %v1207 = vpop.permute.xlu0 %1206
      %1208 = vrot.lane.b32.xlu0 %v711, 12
      %v1209 = vpop.permute.xlu0 %1208
      %1210 = vrot.lane.b32.xlu0 %v712, 12
      %v1211 = vpop.permute.xlu0 %1210
      %1212 = vrot.lane.b32.xlu0 %v713, 12
      %v1213 = vpop.permute.xlu0 %1212
      %1214 = vrot.lane.b32.xlu0 %v714, 12
      %v1215 = vpop.permute.xlu0 %1214
      %1216 = vrot.lane.b32.xlu0 %v715, 12
      %v1217 = vpop.permute.xlu0 %1216
      %1218 = vrot.lane.b32.xlu0 %v716, 12
      %v1219 = vpop.permute.xlu0 %1218
      %1220 = vrot.lane.b32.xlu0 %v717, 12
      %v1221 = vpop.permute.xlu0 %1220
      %1222 = vrot.lane.b32.xlu0 %v718, 12
      %v1223 = vpop.permute.xlu0 %1222
      %1224 = vrot.lane.b32.xlu0 %v719, 12
      %v1225 = vpop.permute.xlu0 %1224
      %1226 = vrot.lane.b32.xlu0 %v720, 12
      %v1227 = vpop.permute.xlu0 %1226
      %1228 = vrot.lane.b32.xlu0 %v721, 12
      %v1229 = vpop.permute.xlu0 %1228
      %1230 = vrot.lane.b32.xlu0 %v722, 12
      %v1231 = vpop.permute.xlu0 %1230
      %1232 = vrot.lane.b32.xlu0 %v723, 12
      %v1233 = vpop.permute.xlu0 %1232
      %1234 = vrot.lane.b32.xlu0 %v724, 12
      %v1235 = vpop.permute.xlu0 %1234
      %1236 = vrot.lane.b32.xlu0 %v725, 12
      %v1237 = vpop.permute.xlu0 %1236
      %1238 = vrot.lane.b32.xlu0 %v726, 12
      %v1239 = vpop.permute.xlu0 %1238
      %1304 = vrot.lane.b32.xlu0 %v727, 16
      %v1305 = vpop.permute.xlu0 %1304
      %1306 = vrot.lane.b32.xlu0 %v728, 16
      %v1307 = vpop.permute.xlu0 %1306
      %1308 = vrot.lane.b32.xlu0 %v729, 16
      %v1309 = vpop.permute.xlu0 %1308
      %1310 = vrot.lane.b32.xlu0 %v730, 16
      %v1311 = vpop.permute.xlu0 %1310
      %1312 = vrot.lane.b32.xlu0 %v731, 16
      %v1313 = vpop.permute.xlu0 %1312
      %1314 = vrot.lane.b32.xlu0 %v732, 16
      %v1315 = vpop.permute.xlu0 %1314
      %1316 = vrot.lane.b32.xlu0 %v733, 16
      %v1317 = vpop.permute.xlu0 %1316
      %1318 = vrot.lane.b32.xlu0 %v734, 16
      %v1319 = vpop.permute.xlu0 %1318
      %1320 = vrot.lane.b32.xlu0 %v735, 16
      %v1321 = vpop.permute.xlu0 %1320
      %1322 = vrot.lane.b32.xlu0 %v736, 16
      %v1323 = vpop.permute.xlu0 %1322
      %1324 = vrot.lane.b32.xlu0 %v737, 16
      %v1325 = vpop.permute.xlu0 %1324
      %1326 = vrot.lane.b32.xlu0 %v738, 16
      %v1327 = vpop.permute.xlu0 %1326
      %1328 = vrot.lane.b32.xlu0 %v739, 16
      %v1329 = vpop.permute.xlu0 %1328
      %1330 = vrot.lane.b32.xlu0 %v740, 16
      %v1331 = vpop.permute.xlu0 %1330
      %1332 = vrot.lane.b32.xlu0 %v741, 16
      %v1333 = vpop.permute.xlu0 %1332
      %1334 = vrot.lane.b32.xlu0 %v742, 16
      %v1335 = vpop.permute.xlu0 %1334
      %1336 = vrot.lane.b32.xlu0 %v743, 16
      %v1337 = vpop.permute.xlu0 %1336
      %1338 = vrot.lane.b32.xlu0 %v744, 16
      %v1339 = vpop.permute.xlu0 %1338
      %1340 = vrot.lane.b32.xlu0 %v745, 16
      %v1341 = vpop.permute.xlu0 %1340
      %1342 = vrot.lane.b32.xlu0 %v746, 16
      %v1343 = vpop.permute.xlu0 %1342
      %1344 = vrot.lane.b32.xlu0 %v747, 16
      %v1345 = vpop.permute.xlu0 %1344
      %1346 = vrot.lane.b32.xlu0 %v748, 16
      %v1347 = vpop.permute.xlu0 %1346
      %1348 = vrot.lane.b32.xlu0 %v749, 16
      %v1349 = vpop.permute.xlu0 %1348
      %1350 = vrot.lane.b32.xlu0 %v750, 16
      %v1351 = vpop.permute.xlu0 %1350
      %1352 = vrot.lane.b32.xlu0 %v751, 16
      %v1353 = vpop.permute.xlu0 %1352
      %1354 = vrot.lane.b32.xlu0 %v752, 16
      %v1355 = vpop.permute.xlu0 %1354
      %1356 = vrot.lane.b32.xlu0 %v753, 16
      %v1357 = vpop.permute.xlu0 %1356
      %1358 = vrot.lane.b32.xlu0 %v754, 16
      %v1359 = vpop.permute.xlu0 %1358
      %1360 = vrot.lane.b32.xlu0 %v755, 16
      %v1361 = vpop.permute.xlu0 %1360
      %1362 = vrot.lane.b32.xlu0 %v756, 16
      %v1363 = vpop.permute.xlu0 %1362
      %1364 = vrot.lane.b32.xlu0 %v757, 16
      %v1365 = vpop.permute.xlu0 %1364
      %1366 = vrot.lane.b32.xlu0 %v758, 16
      %v1367 = vpop.permute.xlu0 %1366
      %1432 = vrot.lane.b32.xlu0 %v759, 20
      %v1433 = vpop.permute.xlu0 %1432
      %1434 = vrot.lane.b32.xlu0 %v760, 20
      %v1435 = vpop.permute.xlu0 %1434
      %1436 = vrot.lane.b32.xlu0 %v761, 20
      %v1437 = vpop.permute.xlu0 %1436
      %1438 = vrot.lane.b32.xlu0 %v762, 20
      %v1439 = vpop.permute.xlu0 %1438
      %1440 = vrot.lane.b32.xlu0 %v763, 20
      %v1441 = vpop.permute.xlu0 %1440
      %1442 = vrot.lane.b32.xlu0 %v764, 20
      %v1443 = vpop.permute.xlu0 %1442
      %1444 = vrot.lane.b32.xlu0 %v765, 20
      %v1445 = vpop.permute.xlu0 %1444
      %1446 = vrot.lane.b32.xlu0 %v766, 20
      %v1447 = vpop.permute.xlu0 %1446
      %1448 = vrot.lane.b32.xlu0 %v767, 20
      %v1449 = vpop.permute.xlu0 %1448
      %1450 = vrot.lane.b32.xlu0 %v768, 20
      %v1451 = vpop.permute.xlu0 %1450
      %1452 = vrot.lane.b32.xlu0 %v769, 20
      %v1453 = vpop.permute.xlu0 %1452
      %1454 = vrot.lane.b32.xlu0 %v770, 20
      %v1455 = vpop.permute.xlu0 %1454
      %1456 = vrot.lane.b32.xlu0 %v771, 20
      %v1457 = vpop.permute.xlu0 %1456
      %1458 = vrot.lane.b32.xlu0 %v772, 20
      %v1459 = vpop.permute.xlu0 %1458
      %1460 = vrot.lane.b32.xlu0 %v773, 20
      %v1461 = vpop.permute.xlu0 %1460
      %1462 = vrot.lane.b32.xlu0 %v774, 20
      %v1463 = vpop.permute.xlu0 %1462
      %1464 = vrot.lane.b32.xlu0 %v775, 20
      %v1465 = vpop.permute.xlu0 %1464
      %1466 = vrot.lane.b32.xlu0 %v776, 20
      %v1467 = vpop.permute.xlu0 %1466
      %1468 = vrot.lane.b32.xlu0 %v777, 20
      %v1469 = vpop.permute.xlu0 %1468
      %1470 = vrot.lane.b32.xlu0 %v778, 20
      %v1471 = vpop.permute.xlu0 %1470
      %1472 = vrot.lane.b32.xlu0 %v779, 20
      %v1473 = vpop.permute.xlu0 %1472
      %1474 = vrot.lane.b32.xlu0 %v780, 20
      %v1475 = vpop.permute.xlu0 %1474
      %1476 = vrot.lane.b32.xlu0 %v781, 20
      %v1477 = vpop.permute.xlu0 %1476
      %1478 = vrot.lane.b32.xlu0 %v782, 20
      %v1479 = vpop.permute.xlu0 %1478
      %1480 = vrot.lane.b32.xlu0 %v783, 20
      %v1481 = vpop.permute.xlu0 %1480
      %1482 = vrot.lane.b32.xlu0 %v784, 20
      %v1483 = vpop.permute.xlu0 %1482
      %1484 = vrot.lane.b32.xlu0 %v785, 20
      %v1485 = vpop.permute.xlu0 %1484
      %1486 = vrot.lane.b32.xlu0 %v786, 20
      %v1487 = vpop.permute.xlu0 %1486
      %1488 = vrot.lane.b32.xlu0 %v787, 20
      %v1489 = vpop.permute.xlu0 %1488
      %1490 = vrot.lane.b32.xlu0 %v788, 20
      %v1491 = vpop.permute.xlu0 %1490
      %1492 = vrot.lane.b32.xlu0 %v789, 20
      %v1493 = vpop.permute.xlu0 %1492
      %1494 = vrot.lane.b32.xlu0 %v790, 20
      %v1495 = vpop.permute.xlu0 %1494
      %1560 = vrot.lane.b32.xlu0 %v792, 24
      %v1561 = vpop.permute.xlu0 %1560
      %1562 = vrot.lane.b32.xlu0 %v793, 24
      %v1563 = vpop.permute.xlu0 %1562
      %1564 = vrot.lane.b32.xlu0 %v794, 24
      %v1565 = vpop.permute.xlu0 %1564
      %1566 = vrot.lane.b32.xlu0 %v795, 24
      %v1567 = vpop.permute.xlu0 %1566
      %1568 = vrot.lane.b32.xlu0 %v796, 24
      %v1569 = vpop.permute.xlu0 %1568
      %1570 = vrot.lane.b32.xlu0 %v797, 24
      %v1571 = vpop.permute.xlu0 %1570
      %1572 = vrot.lane.b32.xlu0 %v798, 24
      %v1573 = vpop.permute.xlu0 %1572
      %1574 = vrot.lane.b32.xlu0 %v799, 24
      %v1575 = vpop.permute.xlu0 %1574
      %1576 = vrot.lane.b32.xlu0 %v800, 24
      %v1577 = vpop.permute.xlu0 %1576
      %1578 = vrot.lane.b32.xlu0 %v801, 24
      %v1579 = vpop.permute.xlu0 %1578
      %1580 = vrot.lane.b32.xlu0 %v802, 24
      %v1581 = vpop.permute.xlu0 %1580
      %1582 = vrot.lane.b32.xlu0 %v803, 24
      %v1583 = vpop.permute.xlu0 %1582
      %1584 = vrot.lane.b32.xlu0 %v804, 24
      %v1585 = vpop.permute.xlu0 %1584
      %1586 = vrot.lane.b32.xlu0 %v805, 24
      %v1587 = vpop.permute.xlu0 %1586
      %1588 = vrot.lane.b32.xlu0 %v806, 24
      %v1589 = vpop.permute.xlu0 %1588
      %1590 = vrot.lane.b32.xlu0 %v807, 24
      %v1591 = vpop.permute.xlu0 %1590
      %1592 = vrot.lane.b32.xlu0 %v808, 24
      %v1593 = vpop.permute.xlu0 %1592
      %1594 = vrot.lane.b32.xlu0 %v809, 24
      %v1595 = vpop.permute.xlu0 %1594
      %1596 = vrot.lane.b32.xlu0 %v810, 24
      %v1597 = vpop.permute.xlu0 %1596
      %1598 = vrot.lane.b32.xlu0 %v811, 24
      %v1599 = vpop.permute.xlu0 %1598
      %1600 = vrot.lane.b32.xlu0 %v812, 24
      %v1601 = vpop.permute.xlu0 %1600
      %1602 = vrot.lane.b32.xlu0 %v813, 24
      %v1603 = vpop.permute.xlu0 %1602
      %1604 = vrot.lane.b32.xlu0 %v814, 24
      %v1605 = vpop.permute.xlu0 %1604
      %1606 = vrot.lane.b32.xlu0 %v815, 24
      %v1607 = vpop.permute.xlu0 %1606
      %1608 = vrot.lane.b32.xlu0 %v816, 24
      %v1609 = vpop.permute.xlu0 %1608
      %1610 = vrot.lane.b32.xlu0 %v817, 24
      %v1611 = vpop.permute.xlu0 %1610
      %1612 = vrot.lane.b32.xlu0 %v818, 24
      %v1613 = vpop.permute.xlu0 %1612
      %1614 = vrot.lane.b32.xlu0 %v819, 24
      %v1615 = vpop.permute.xlu0 %1614
      %1616 = vrot.lane.b32.xlu0 %v820, 24
      %v1617 = vpop.permute.xlu0 %1616
      %1618 = vrot.lane.b32.xlu0 %v821, 24
      %v1619 = vpop.permute.xlu0 %1618
      %1620 = vrot.lane.b32.xlu0 %v822, 24
      %v1621 = vpop.permute.xlu0 %1620
      %1622 = vrot.lane.b32.xlu0 %v823, 24
      %v1623 = vpop.permute.xlu0 %1622
      %1688 = vrot.lane.b32.xlu0 %v824, 28
      %v1689 = vpop.permute.xlu0 %1688
      %1690 = vrot.lane.b32.xlu0 %v825, 28
      %v1691 = vpop.permute.xlu0 %1690
      %1692 = vrot.lane.b32.xlu0 %v826, 28
      %v1693 = vpop.permute.xlu0 %1692
      %1694 = vrot.lane.b32.xlu0 %v827, 28
      %v1695 = vpop.permute.xlu0 %1694
      %1696 = vrot.lane.b32.xlu0 %v828, 28
      %v1697 = vpop.permute.xlu0 %1696
      %1698 = vrot.lane.b32.xlu0 %v829, 28
      %v1699 = vpop.permute.xlu0 %1698
      %1700 = vrot.lane.b32.xlu0 %v830, 28
      %v1701 = vpop.permute.xlu0 %1700
      %1702 = vrot.lane.b32.xlu0 %v831, 28
      %v1703 = vpop.permute.xlu0 %1702
      %1704 = vrot.lane.b32.xlu0 %v832, 28
      %v1705 = vpop.permute.xlu0 %1704
      %1706 = vrot.lane.b32.xlu0 %v833, 28
      %v1707 = vpop.permute.xlu0 %1706
      %1708 = vrot.lane.b32.xlu0 %v834, 28
      %v1709 = vpop.permute.xlu0 %1708
      %1710 = vrot.lane.b32.xlu0 %v835, 28
      %v1711 = vpop.permute.xlu0 %1710
      %1712 = vrot.lane.b32.xlu0 %v836, 28
      %v1713 = vpop.permute.xlu0 %1712
      %1714 = vrot.lane.b32.xlu0 %v837, 28
      %v1715 = vpop.permute.xlu0 %1714
      %1716 = vrot.lane.b32.xlu0 %v838, 28
      %v1717 = vpop.permute.xlu0 %1716
      %1718 = vrot.lane.b32.xlu0 %v839, 28
      %v1719 = vpop.permute.xlu0 %1718
      %1720 = vrot.lane.b32.xlu0 %v840, 28
      %v1721 = vpop.permute.xlu0 %1720
      %1722 = vrot.lane.b32.xlu0 %v841, 28
      %v1723 = vpop.permute.xlu0 %1722
      %1724 = vrot.lane.b32.xlu0 %v842, 28
      %v1725 = vpop.permute.xlu0 %1724
      %1726 = vrot.lane.b32.xlu0 %v843, 28
      %v1727 = vpop.permute.xlu0 %1726
      %1728 = vrot.lane.b32.xlu0 %v844, 28
      %v1729 = vpop.permute.xlu0 %1728
      %1730 = vrot.lane.b32.xlu0 %v845, 28
      %v1731 = vpop.permute.xlu0 %1730
      %1732 = vrot.lane.b32.xlu0 %v846, 28
      %v1733 = vpop.permute.xlu0 %1732
      %1734 = vrot.lane.b32.xlu0 %v847, 28
      %v1735 = vpop.permute.xlu0 %1734
      %1736 = vrot.lane.b32.xlu0 %v848, 28
      %v1737 = vpop.permute.xlu0 %1736
      %1738 = vrot.lane.b32.xlu0 %v849, 28
      %v1739 = vpop.permute.xlu0 %1738
      %1740 = vrot.lane.b32.xlu0 %v850, 28
      %v1741 = vpop.permute.xlu0 %1740
      %1742 = vrot.lane.b32.xlu0 %v851, 28
      %v1743 = vpop.permute.xlu0 %1742
      %1744 = vrot.lane.b32.xlu0 %v852, 28
      %v1745 = vpop.permute.xlu0 %1744
      %1746 = vrot.lane.b32.xlu0 %v853, 28
      %v1747 = vpop.permute.xlu0 %1746
      %1748 = vrot.lane.b32.xlu0 %v854, 28
      %v1749 = vpop.permute.xlu0 %1748
      %1750 = vrot.lane.b32.xlu0 %v855, 28
      %v1751 = vpop.permute.xlu0 %1750
      %1816 = vrot.lane.b32.xlu0 %v856, 32
      %v1817 = vpop.permute.xlu0 %1816
      %1818 = vrot.lane.b32.xlu0 %v857, 32
      %v1819 = vpop.permute.xlu0 %1818
      %1820 = vrot.lane.b32.xlu0 %v858, 32
      %v1821 = vpop.permute.xlu0 %1820
      %1822 = vrot.lane.b32.xlu0 %v859, 32
      %v1823 = vpop.permute.xlu0 %1822
      %1824 = vrot.lane.b32.xlu0 %v860, 32
      %v1825 = vpop.permute.xlu0 %1824
      %1826 = vrot.lane.b32.xlu0 %v861, 32
      %v1827 = vpop.permute.xlu0 %1826
      %1828 = vrot.lane.b32.xlu0 %v862, 32
      %v1829 = vpop.permute.xlu0 %1828
      %1830 = vrot.lane.b32.xlu0 %v863, 32
      %v1831 = vpop.permute.xlu0 %1830
      %1832 = vrot.lane.b32.xlu0 %v864, 32
      %v1833 = vpop.permute.xlu0 %1832
      %1834 = vrot.lane.b32.xlu0 %v865, 32
      %v1835 = vpop.permute.xlu0 %1834
      %1836 = vrot.lane.b32.xlu0 %v866, 32
      %v1837 = vpop.permute.xlu0 %1836
      %1838 = vrot.lane.b32.xlu0 %v867, 32
      %v1839 = vpop.permute.xlu0 %1838
      %1840 = vrot.lane.b32.xlu0 %v868, 32
      %v1841 = vpop.permute.xlu0 %1840
      %1842 = vrot.lane.b32.xlu0 %v869, 32
      %v1843 = vpop.permute.xlu0 %1842
      %1844 = vrot.lane.b32.xlu0 %v870, 32
      %v1845 = vpop.permute.xlu0 %1844
      %1846 = vrot.lane.b32.xlu0 %v871, 32
      %v1847 = vpop.permute.xlu0 %1846
      %1848 = vrot.lane.b32.xlu0 %v872, 32
      %v1849 = vpop.permute.xlu0 %1848
      %1850 = vrot.lane.b32.xlu0 %v873, 32
      %v1851 = vpop.permute.xlu0 %1850
      %1852 = vrot.lane.b32.xlu0 %v874, 32
      %v1853 = vpop.permute.xlu0 %1852
      %1854 = vrot.lane.b32.xlu0 %v875, 32
      %v1855 = vpop.permute.xlu0 %1854
      %1856 = vrot.lane.b32.xlu0 %v876, 32
      %v1857 = vpop.permute.xlu0 %1856
      %1858 = vrot.lane.b32.xlu0 %v877, 32
      %v1859 = vpop.permute.xlu0 %1858
      %1860 = vrot.lane.b32.xlu0 %v878, 32
      %v1861 = vpop.permute.xlu0 %1860
      %1862 = vrot.lane.b32.xlu0 %v879, 32
      %v1863 = vpop.permute.xlu0 %1862
      %1864 = vrot.lane.b32.xlu0 %v880, 32
      %v1865 = vpop.permute.xlu0 %1864
      %1866 = vrot.lane.b32.xlu0 %v881, 32
      %v1867 = vpop.permute.xlu0 %1866
      %1868 = vrot.lane.b32.xlu0 %v882, 32
      %v1869 = vpop.permute.xlu0 %1868
      %1870 = vrot.lane.b32.xlu0 %v883, 32
      %v1871 = vpop.permute.xlu0 %1870
      %1872 = vrot.lane.b32.xlu0 %v884, 32
      %v1873 = vpop.permute.xlu0 %1872
      %1874 = vrot.lane.b32.xlu0 %v885, 32
      %v1875 = vpop.permute.xlu0 %1874
      %1876 = vrot.lane.b32.xlu0 %v886, 32
      %v1877 = vpop.permute.xlu0 %1876
      %1878 = vrot.lane.b32.xlu0 %v887, 32
      %v1879 = vpop.permute.xlu0 %1878
      %v1912 = vsel %vm442, %v599, %v921
      %v1913 = vsel %vm442, %v600, %v923
      %v1914 = vsel %vm442, %v601, %v925
      %v1915 = vsel %vm442, %v602, %v927
      %v1916 = vsel %vm442, %v603, %v929
      %v1917 = vsel %vm442, %v604, %v931
      %v1918 = vsel %vm442, %v605, %v933
      %v1919 = vsel %vm442, %v606, %v935
      %v1920 = vsel %vm442, %v607, %v937
      %v1921 = vsel %vm442, %v608, %v939
      %v1922 = vsel %vm442, %v609, %v941
      %v1923 = vsel %vm442, %v610, %v943
      %v1924 = vsel %vm442, %v611, %v945
      %v1925 = vsel %vm442, %v612, %v947
      %v1926 = vsel %vm442, %v613, %v949
      %v1927 = vsel %vm442, %v614, %v951
      %v1928 = vsel %vm442, %v615, %v953
      %v1929 = vsel %vm442, %v616, %v955
      %v1930 = vsel %vm442, %v617, %v957
      %v1931 = vsel %vm442, %v618, %v959
      %v1932 = vsel %vm442, %v619, %v961
      %v1933 = vsel %vm442, %v620, %v963
      %v1934 = vsel %vm442, %v621, %v965
      %v1935 = vsel %vm442, %v622, %v967
      %v1936 = vsel %vm442, %v623, %v969
      %v1937 = vsel %vm442, %v624, %v971
      %v1938 = vsel %vm442, %v625, %v973
      %v1939 = vsel %vm442, %v626, %v975
      %v1940 = vsel %vm442, %v627, %v977
      %v1941 = vsel %vm442, %v628, %v979
      %v1942 = vsel %vm442, %v629, %v981
      %v1943 = vsel %vm442, %v630, %v983
      %vm1944 = vcmask 64512
      %v1945 = vsel %vm1944, %v1912, %v1049
      %v1946 = vsel %vm1944, %v1913, %v1051
      %v1947 = vsel %vm1944, %v1914, %v1053
      %v1948 = vsel %vm1944, %v1915, %v1055
      %v1949 = vsel %vm1944, %v1916, %v1057
      %v1950 = vsel %vm1944, %v1917, %v1059
      %v1951 = vsel %vm1944, %v1918, %v1061
      %v1952 = vsel %vm1944, %v1919, %v1063
      %v1953 = vsel %vm1944, %v1920, %v1065
      %v1954 = vsel %vm1944, %v1921, %v1067
      %v1955 = vsel %vm1944, %v1922, %v1069
      %v1956 = vsel %vm1944, %v1923, %v1071
      %v1957 = vsel %vm1944, %v1924, %v1073
      %v1958 = vsel %vm1944, %v1925, %v1075
      %v1959 = vsel %vm1944, %v1926, %v1077
      %v1960 = vsel %vm1944, %v1927, %v1079
      %v1961 = vsel %vm1944, %v1928, %v1081
      %v1962 = vsel %vm1944, %v1929, %v1083
      %v1963 = vsel %vm1944, %v1930, %v1085
      %v1964 = vsel %vm1944, %v1931, %v1087
      %v1965 = vsel %vm1944, %v1932, %v1089
      %v1966 = vsel %vm1944, %v1933, %v1091
      %v1967 = vsel %vm1944, %v1934, %v1093
      %v1968 = vsel %vm1944, %v1935, %v1095
      %v1969 = vsel %vm1944, %v1936, %v1097
      %v1970 = vsel %vm1944, %v1937, %v1099
      %v1971 = vsel %vm1944, %v1938, %v1101
      %v1972 = vsel %vm1944, %v1939, %v1103
      %v1973 = vsel %vm1944, %v1940, %v1105
      %v1974 = vsel %vm1944, %v1941, %v1107
      %v1975 = vsel %vm1944, %v1942, %v1109
      %v1976 = vsel %vm1944, %v1943, %v1111
      %vm1977 = vcmask 97280
      %v1978 = vsel %vm1977, %v1945, %v1177
      %v1979 = vsel %vm1977, %v1946, %v1179
      %v1980 = vsel %vm1977, %v1947, %v1181
      %v1981 = vsel %vm1977, %v1948, %v1183
      %v1982 = vsel %vm1977, %v1949, %v1185
      %v1983 = vsel %vm1977, %v1950, %v1187
      %v1984 = vsel %vm1977, %v1951, %v1189
      %v1985 = vsel %vm1977, %v1952, %v1191
      %v1986 = vsel %vm1977, %v1953, %v1193
      %v1987 = vsel %vm1977, %v1954, %v1195
      %v1988 = vsel %vm1977, %v1955, %v1197
      %v1989 = vsel %vm1977, %v1956, %v1199
      %v1990 = vsel %vm1977, %v1957, %v1201
      %v1991 = vsel %vm1977, %v1958, %v1203
      %v1992 = vsel %vm1977, %v1959, %v1205
      %v1993 = vsel %vm1977, %v1960, %v1207
      %v1994 = vsel %vm1977, %v1961, %v1209
      %v1995 = vsel %vm1977, %v1962, %v1211
      %v1996 = vsel %vm1977, %v1963, %v1213
      %v1997 = vsel %vm1977, %v1964, %v1215
      %v1998 = vsel %vm1977, %v1965, %v1217
      %v1999 = vsel %vm1977, %v1966, %v1219
      %v2000 = vsel %vm1977, %v1967, %v1221
      %v2001 = vsel %vm1977, %v1968, %v1223
      %v2002 = vsel %vm1977, %v1969, %v1225
      %v2003 = vsel %vm1977, %v1970, %v1227
      %v2004 = vsel %vm1977, %v1971, %v1229
      %v2005 = vsel %vm1977, %v1972, %v1231
      %v2006 = vsel %vm1977, %v1973, %v1233
      %v2007 = vsel %vm1977, %v1974, %v1235
      %v2008 = vsel %vm1977, %v1975, %v1237
      %v2009 = vsel %vm1977, %v1976, %v1239
      %vm2010 = vcmask 130048
      %v2011 = vsel %vm2010, %v1978, %v1305
      %v2012 = vsel %vm2010, %v1979, %v1307
      %v2013 = vsel %vm2010, %v1980, %v1309
      %v2014 = vsel %vm2010, %v1981, %v1311
      %v2015 = vsel %vm2010, %v1982, %v1313
      %v2016 = vsel %vm2010, %v1983, %v1315
      %v2017 = vsel %vm2010, %v1984, %v1317
      %v2018 = vsel %vm2010, %v1985, %v1319
      %v2019 = vsel %vm2010, %v1986, %v1321
      %v2020 = vsel %vm2010, %v1987, %v1323
      %v2021 = vsel %vm2010, %v1988, %v1325
      %v2022 = vsel %vm2010, %v1989, %v1327
      %v2023 = vsel %vm2010, %v1990, %v1329
      %v2024 = vsel %vm2010, %v1991, %v1331
      %v2025 = vsel %vm2010, %v1992, %v1333
      %v2026 = vsel %vm2010, %v1993, %v1335
      %v2027 = vsel %vm2010, %v1994, %v1337
      %v2028 = vsel %vm2010, %v1995, %v1339
      %v2029 = vsel %vm2010, %v1996, %v1341
      %v2030 = vsel %vm2010, %v1997, %v1343
      %v2031 = vsel %vm2010, %v1998, %v1345
      %v2032 = vsel %vm2010, %v1999, %v1347
      %v2033 = vsel %vm2010, %v2000, %v1349
      %v2034 = vsel %vm2010, %v2001, %v1351
      %v2035 = vsel %vm2010, %v2002, %v1353
      %v2036 = vsel %vm2010, %v2003, %v1355
      %v2037 = vsel %vm2010, %v2004, %v1357
      %v2038 = vsel %vm2010, %v2005, %v1359
      %v2039 = vsel %vm2010, %v2006, %v1361
      %v2040 = vsel %vm2010, %v2007, %v1363
      %v2041 = vsel %vm2010, %v2008, %v1365
      %v2042 = vsel %vm2010, %v2009, %v1367
      %vm2043 = vcmask 162816
      %v2044 = vsel %vm2043, %v2011, %v1433
      %v2045 = vsel %vm2043, %v2012, %v1435
      %v2046 = vsel %vm2043, %v2013, %v1437
      %v2047 = vsel %vm2043, %v2014, %v1439
      %v2048 = vsel %vm2043, %v2015, %v1441
      %v2049 = vsel %vm2043, %v2016, %v1443
      %v2050 = vsel %vm2043, %v2017, %v1445
      %v2051 = vsel %vm2043, %v2018, %v1447
      %v2052 = vsel %vm2043, %v2019, %v1449
      %v2053 = vsel %vm2043, %v2020, %v1451
      %v2054 = vsel %vm2043, %v2021, %v1453
      %v2055 = vsel %vm2043, %v2022, %v1455
      %v2056 = vsel %vm2043, %v2023, %v1457
      %v2057 = vsel %vm2043, %v2024, %v1459
      %v2058 = vsel %vm2043, %v2025, %v1461
      %v2059 = vsel %vm2043, %v2026, %v1463
      %v2060 = vsel %vm2043, %v2027, %v1465
      %v2061 = vsel %vm2043, %v2028, %v1467
      %v2062 = vsel %vm2043, %v2029, %v1469
      %v2063 = vsel %vm2043, %v2030, %v1471
      %v2064 = vsel %vm2043, %v2031, %v1473
      %v2065 = vsel %vm2043, %v2032, %v1475
      %v2066 = vsel %vm2043, %v2033, %v1477
      %v2067 = vsel %vm2043, %v2034, %v1479
      %v2068 = vsel %vm2043, %v2035, %v1481
      %v2069 = vsel %vm2043, %v2036, %v1483
      %v2070 = vsel %vm2043, %v2037, %v1485
      %v2071 = vsel %vm2043, %v2038, %v1487
      %v2072 = vsel %vm2043, %v2039, %v1489
      %v2073 = vsel %vm2043, %v2040, %v1491
      %v2074 = vsel %vm2043, %v2041, %v1493
      %v2075 = vsel %vm2043, %v2042, %v1495
      %vm2076 = vcmask 195584
      %v2077 = vsel %vm2076, %v2044, %v1561
      %v2078 = vsel %vm2076, %v2045, %v1563
      %v2079 = vsel %vm2076, %v2046, %v1565
      %v2080 = vsel %vm2076, %v2047, %v1567
      %v2081 = vsel %vm2076, %v2048, %v1569
      %v2082 = vsel %vm2076, %v2049, %v1571
      %v2083 = vsel %vm2076, %v2050, %v1573
      %v2084 = vsel %vm2076, %v2051, %v1575
      %v2085 = vsel %vm2076, %v2052, %v1577
      %v2086 = vsel %vm2076, %v2053, %v1579
      %v2087 = vsel %vm2076, %v2054, %v1581
      %v2088 = vsel %vm2076, %v2055, %v1583
      %v2089 = vsel %vm2076, %v2056, %v1585
      %v2090 = vsel %vm2076, %v2057, %v1587
      %v2091 = vsel %vm2076, %v2058, %v1589
      %v2092 = vsel %vm2076, %v2059, %v1591
      %v2093 = vsel %vm2076, %v2060, %v1593
      %v2094 = vsel %vm2076, %v2061, %v1595
      %v2095 = vsel %vm2076, %v2062, %v1597
      %v2096 = vsel %vm2076, %v2063, %v1599
      %v2097 = vsel %vm2076, %v2064, %v1601
      %v2098 = vsel %vm2076, %v2065, %v1603
      %v2099 = vsel %vm2076, %v2066, %v1605
      %v2100 = vsel %vm2076, %v2067, %v1607
      %v2101 = vsel %vm2076, %v2068, %v1609
      %v2102 = vsel %vm2076, %v2069, %v1611
      %v2103 = vsel %vm2076, %v2070, %v1613
      %v2104 = vsel %vm2076, %v2071, %v1615
      %v2105 = vsel %vm2076, %v2072, %v1617
      %v2106 = vsel %vm2076, %v2073, %v1619
      %v2107 = vsel %vm2076, %v2074, %v1621
      %v2108 = vsel %vm2076, %v2075, %v1623
      %vm2109 = vcmask 228352
      %v2110 = vsel %vm2109, %v2077, %v1689
      %v2111 = vsel %vm2109, %v2078, %v1691
      %v2112 = vsel %vm2109, %v2079, %v1693
      %v2113 = vsel %vm2109, %v2080, %v1695
      %v2114 = vsel %vm2109, %v2081, %v1697
      %v2115 = vsel %vm2109, %v2082, %v1699
      %v2116 = vsel %vm2109, %v2083, %v1701
      %v2117 = vsel %vm2109, %v2084, %v1703
      %v2118 = vsel %vm2109, %v2085, %v1705
      %v2119 = vsel %vm2109, %v2086, %v1707
      %v2120 = vsel %vm2109, %v2087, %v1709
      %v2121 = vsel %vm2109, %v2088, %v1711
      %v2122 = vsel %vm2109, %v2089, %v1713
      %v2123 = vsel %vm2109, %v2090, %v1715
      %v2124 = vsel %vm2109, %v2091, %v1717
      %v2125 = vsel %vm2109, %v2092, %v1719
      %v2126 = vsel %vm2109, %v2093, %v1721
      %v2127 = vsel %vm2109, %v2094, %v1723
      %v2128 = vsel %vm2109, %v2095, %v1725
      %v2129 = vsel %vm2109, %v2096, %v1727
      %v2130 = vsel %vm2109, %v2097, %v1729
      %v2131 = vsel %vm2109, %v2098, %v1731
      %v2132 = vsel %vm2109, %v2099, %v1733
      %v2133 = vsel %vm2109, %v2100, %v1735
      %v2134 = vsel %vm2109, %v2101, %v1737
      %v2135 = vsel %vm2109, %v2102, %v1739
      %v2136 = vsel %vm2109, %v2103, %v1741
      %v2137 = vsel %vm2109, %v2104, %v1743
      %v2138 = vsel %vm2109, %v2105, %v1745
      %v2139 = vsel %vm2109, %v2106, %v1747
      %v2140 = vsel %vm2109, %v2107, %v1749
      %v2141 = vsel %vm2109, %v2108, %v1751
      %v2142 = vsel %vm488, %v2110, %v1817
      %v2143 = vsel %vm488, %v2111, %v1819
      %v2144 = vsel %vm488, %v2112, %v1821
      %v2145 = vsel %vm488, %v2113, %v1823
      %v2146 = vsel %vm488, %v2114, %v1825
      %v2147 = vsel %vm488, %v2115, %v1827
      %v2148 = vsel %vm488, %v2116, %v1829
      %v2149 = vsel %vm488, %v2117, %v1831
      %v2150 = vsel %vm488, %v2118, %v1833
      %v2151 = vsel %vm488, %v2119, %v1835
      %v2152 = vsel %vm488, %v2120, %v1837
      %v2153 = vsel %vm488, %v2121, %v1839
      %v2154 = vsel %vm488, %v2122, %v1841
      %v2155 = vsel %vm488, %v2123, %v1843
      %v2156 = vsel %vm488, %v2124, %v1845
      %v2157 = vsel %vm488, %v2125, %v1847
      %v2158 = vsel %vm488, %v2126, %v1849
      %v2159 = vsel %vm488, %v2127, %v1851
      %v2160 = vsel %vm488, %v2128, %v1853
      %v2161 = vsel %vm488, %v2129, %v1855
      %v2162 = vsel %vm488, %v2130, %v1857
      %v2163 = vsel %vm488, %v2131, %v1859
      %v2164 = vsel %vm488, %v2132, %v1861
      %v2165 = vsel %vm488, %v2133, %v1863
      %v2166 = vsel %vm488, %v2134, %v1865
      %v2167 = vsel %vm488, %v2135, %v1867
      %v2168 = vsel %vm488, %v2136, %v1869
      %v2169 = vsel %vm488, %v2137, %v1871
      %v2170 = vsel %vm488, %v2138, %v1873
      %v2171 = vsel %vm488, %v2139, %v1875
      %v2172 = vsel %vm488, %v2140, %v1877
      %v2173 = vsel %vm488, %v2141, %v1879
      %v2174 = vpack.c.bf16 %v2143, %v2142
      %v2175 = vpack.c.bf16 %v2145, %v2144
      %v2176 = vpack.c.bf16 %v2147, %v2146
      %v2177 = vpack.c.bf16 %v2149, %v2148
      %v2178 = vpack.c.bf16 %v2151, %v2150
      %v2179 = vpack.c.bf16 %v2153, %v2152
      %v2180 = vpack.c.bf16 %v2155, %v2154
      %v2181 = vpack.c.bf16 %v2157, %v2156
      %v2182 = vpack.c.bf16 %v2159, %v2158
      %v2183 = vpack.c.bf16 %v2161, %v2160
      %v2184 = vpack.c.bf16 %v2163, %v2162
      %v2185 = vpack.c.bf16 %v2165, %v2164
      %v2186 = vpack.c.bf16 %v2167, %v2166
      %v2187 = vpack.c.bf16 %v2169, %v2168
      %v2188 = vpack.c.bf16 %v2171, %v2170
      %v2189 = vpack.c.bf16 %v2173, %v2172
      %v2190 = vld [vmem:[%s1] sm:$0xf]
      %v2191 = vld [vmem:[%s1 + $0x4] sm:$0xf]
      %v2192 = vld [vmem:[%s1 + $0x8] sm:$0xf]
      %v2193 = vld [vmem:[%s1 + $0xc] sm:$0xf]
      %v2194 = vld [vmem:[%s1 + $0x10] sm:$0x3]
      %v2195 = vld [vmem:[%s2] sm:$0x1]
      %v2197 = vlaneseq
      %v2198 = vshrl.u32 %v2197, 7
      %v2199 = vsub.s32 0, %v2198
      %v2200 = vrot.slane %v2195, %v2199
      %v2207 = vunpack.c.l.b16 %v2190
      %v2208 = vunpack.c.l.b16 %v2191
      %v2209 = vunpack.c.l.b16 %v2192
      %v2210 = vunpack.c.l.b16 %v2193
      %v2211 = vunpack.c.l.b16 %v2194
      %v2212 = vpack.c.b16 %v2208, %v2207
      %v2213 = vpack.c.b16 %v2210, %v2209
      %v2214 = vpack.c.b16 %v2211, %v2211
      %vm2217 = vcmask 293888
      %v2219 = vsel %vm2217, %v2174, 0
      %v2222 = vsel %vm2217, %v2175, 0
      %v2225 = vsel %vm2217, %v2176, 0
      %v2228 = vsel %vm2217, %v2177, 0
      %v2231 = vsel %vm2217, %v2178, 0
      %v2234 = vsel %vm2217, %v2179, 0
      %v2237 = vsel %vm2217, %v2180, 0
      %v2240 = vsel %vm2217, %v2181, 0
      %v2243 = vsel %vm2217, %v2182, 0
      %v2246 = vsel %vm2217, %v2183, 0
      %v2249 = vsel %vm2217, %v2184, 0
      %v2252 = vsel %vm2217, %v2185, 0
      %v2255 = vsel %vm2217, %v2186, 0
      %v2258 = vsel %vm2217, %v2187, 0
      %v2261 = vsel %vm2217, %v2188, 0
      %v2264 = vsel %vm2217, %v2189, 0
      %vm2266 = vcmask 1041408
      %v2268 = vsel %vm2266, %v2214, 0
      %2270 = vmatprep.subr.bf16.mxu0 0
      %2271 = vmatpush1.bf16.msra.mxu0 %v2212
      %2272 = vmatprep.subr.bf16.mxu0 0
      %2273 = vmatpush1.bf16.msra.mxu0 %v2213
      %2274 = vmatprep.subr.bf16.mxu0 0
      %2275 = vmatpush1.bf16.msra.mxu0 %v2268
      %2276 = vmatprep.subr.bf16.mxu0 0
      %2277 = vmatpush1.bf16.msra.mxu0 0
      %2278 = vmatprep.subr.bf16.mxu0 0
      %2279 = vmatpush1.bf16.msra.mxu0 0
      %2280 = vmatprep.subr.bf16.mxu0 0
      %2281 = vmatpush1.bf16.msra.mxu0 0
      %2282 = vmatprep.subr.bf16.mxu0 0
      %2283 = vmatpush1.bf16.msra.mxu0 0
      %2284 = vmatprep.subr.bf16.mxu0 0
      %2285 = vmatpush1.bf16.msra.mxu0 0
      %2286 = vmatprep.subr.bf16.mxu0 0
      %2287 = vmatpush1.bf16.msra.mxu0 0
      %2288 = vmatprep.subr.bf16.mxu0 0
      %2289 = vmatpush1.bf16.msra.mxu0 0
      %2290 = vmatprep.subr.bf16.mxu0 0
      %2291 = vmatpush1.bf16.msra.mxu0 0
      %2292 = vmatprep.subr.bf16.mxu0 0
      %2293 = vmatpush1.bf16.msra.mxu0 0
      %2294 = vmatprep.subr.bf16.mxu0 0
      %2295 = vmatpush1.bf16.msra.mxu0 0
      %2296 = vmatprep.subr.bf16.mxu0 0
      %2297 = vmatpush1.bf16.msra.mxu0 0
      %2298 = vmatprep.subr.bf16.mxu0 0
      %2299 = vmatpush1.bf16.msra.mxu0 0
      %2300 = vmatprep.subr.bf16.mxu0 0
      %2301 = vmatpush1.bf16.msra.mxu0 0
      %2302 = vmatprep.mubr.bf16.mxu0 0
      %2303 = vmatmul.mubr.bf16.gmra.mrb[0].mxu0 %v2219
      %v2304 = vpop.f32.mrb[0].mxu0
      %v2305 = vadd.f32 %v2200, %v2304
      %v2306 = vpop.f32.mrb[0].mxu0
      %v2307 = vpop.f32.mrb[0].mxu0
      %v2308 = vadd.f32 %v2200, %v2307
      %v2309 = vpop.f32.mrb[0].mxu0
      %2310 = vmatprep.mubr.bf16.mxu0 0
      %2311 = vmatmul.mubr.bf16.gmra.mrb[0].mxu0 %v2222
      %v2312 = vpop.f32.mrb[0].mxu0
      %v2313 = vadd.f32 %v2200, %v2312
      %v2314 = vpop.f32.mrb[0].mxu0
      %v2315 = vpop.f32.mrb[0].mxu0
      %v2316 = vadd.f32 %v2200, %v2315
      %v2317 = vpop.f32.mrb[0].mxu0
      %2318 = vmatprep.mubr.bf16.mxu0 0
      %2319 = vmatmul.mubr.bf16.gmra.mrb[0].mxu0 %v2225
      %v2320 = vpop.f32.mrb[0].mxu0
      %v2321 = vadd.f32 %v2200, %v2320
      %v2322 = vpop.f32.mrb[0].mxu0
      %v2323 = vpop.f32.mrb[0].mxu0
      %v2324 = vadd.f32 %v2200, %v2323
      %v2325 = vpop.f32.mrb[0].mxu0
      %2326 = vmatprep.mubr.bf16.mxu0 0
      %2327 = vmatmul.mubr.bf16.gmra.mrb[0].mxu0 %v2228
      %v2328 = vpop.f32.mrb[0].mxu0
      %v2329 = vadd.f32 %v2200, %v2328
      %v2330 = vpop.f32.mrb[0].mxu0
      %v2331 = vpop.f32.mrb[0].mxu0
      %v2332 = vadd.f32 %v2200, %v2331
      %v2333 = vpop.f32.mrb[0].mxu0
      %2334 = vmatprep.mubr.bf16.mxu0 0
      %2335 = vmatmul.mubr.bf16.gmra.mrb[0].mxu0 %v2231
      %v2336 = vpop.f32.mrb[0].mxu0
      %v2337 = vadd.f32 %v2200, %v2336
      %v2338 = vpop.f32.mrb[0].mxu0
      %v2339 = vpop.f32.mrb[0].mxu0
      %v2340 = vadd.f32 %v2200, %v2339
      %v2341 = vpop.f32.mrb[0].mxu0
      %2342 = vmatprep.mubr.bf16.mxu0 0
      %2343 = vmatmul.mubr.bf16.gmra.mrb[0].mxu0 %v2234
      %v2344 = vpop.f32.mrb[0].mxu0
      %v2345 = vadd.f32 %v2200, %v2344
      %v2346 = vpop.f32.mrb[0].mxu0
      %v2347 = vpop.f32.mrb[0].mxu0
      %v2348 = vadd.f32 %v2200, %v2347
      %v2349 = vpop.f32.mrb[0].mxu0
      %2350 = vmatprep.mubr.bf16.mxu0 0
      %2351 = vmatmul.mubr.bf16.gmra.mrb[0].mxu0 %v2237
      %v2352 = vpop.f32.mrb[0].mxu0
      %v2353 = vadd.f32 %v2200, %v2352
      %v2354 = vpop.f32.mrb[0].mxu0
      %v2355 = vpop.f32.mrb[0].mxu0
      %v2356 = vadd.f32 %v2200, %v2355
      %v2357 = vpop.f32.mrb[0].mxu0
      %2358 = vmatprep.mubr.bf16.mxu0 0
      %2359 = vmatmul.mubr.bf16.gmra.mrb[0].mxu0 %v2240
      %v2360 = vpop.f32.mrb[0].mxu0
      %v2361 = vadd.f32 %v2200, %v2360
      %v2362 = vpop.f32.mrb[0].mxu0
      %v2363 = vpop.f32.mrb[0].mxu0
      %v2364 = vadd.f32 %v2200, %v2363
      %v2365 = vpop.f32.mrb[0].mxu0
      %2366 = vmatprep.mubr.bf16.mxu0 0
      %2367 = vmatmul.mubr.bf16.gmra.mrb[0].mxu0 %v2243
      %v2368 = vpop.f32.mrb[0].mxu0
      %v2369 = vadd.f32 %v2200, %v2368
      %v2370 = vpop.f32.mrb[0].mxu0
      %v2371 = vpop.f32.mrb[0].mxu0
      %v2372 = vadd.f32 %v2200, %v2371
      %v2373 = vpop.f32.mrb[0].mxu0
      %2374 = vmatprep.mubr.bf16.mxu0 0
      %2375 = vmatmul.mubr.bf16.gmra.mrb[0].mxu0 %v2246
      %v2376 = vpop.f32.mrb[0].mxu0
      %v2377 = vadd.f32 %v2200, %v2376
      %v2378 = vpop.f32.mrb[0].mxu0
      %v2379 = vpop.f32.mrb[0].mxu0
      %v2380 = vadd.f32 %v2200, %v2379
      %v2381 = vpop.f32.mrb[0].mxu0
      %2382 = vmatprep.mubr.bf16.mxu0 0
      %2383 = vmatmul.mubr.bf16.gmra.mrb[0].mxu0 %v2249
      %v2384 = vpop.f32.mrb[0].mxu0
      %v2385 = vadd.f32 %v2200, %v2384
      %v2386 = vpop.f32.mrb[0].mxu0
      %v2387 = vpop.f32.mrb[0].mxu0
      %v2388 = vadd.f32 %v2200, %v2387
      %v2389 = vpop.f32.mrb[0].mxu0
      %2390 = vmatprep.mubr.bf16.mxu0 0
      %2391 = vmatmul.mubr.bf16.gmra.mrb[0].mxu0 %v2252
      %v2392 = vpop.f32.mrb[0].mxu0
      %v2393 = vadd.f32 %v2200, %v2392
      %v2394 = vpop.f32.mrb[0].mxu0
      %v2395 = vpop.f32.mrb[0].mxu0
      %v2396 = vadd.f32 %v2200, %v2395
      %v2397 = vpop.f32.mrb[0].mxu0
      %2398 = vmatprep.mubr.bf16.mxu0 0
      %2399 = vmatmul.mubr.bf16.gmra.mrb[0].mxu0 %v2255
      %v2400 = vpop.f32.mrb[0].mxu0
      %v2401 = vadd.f32 %v2200, %v2400
      %v2402 = vpop.f32.mrb[0].mxu0
      %v2403 = vpop.f32.mrb[0].mxu0
      %v2404 = vadd.f32 %v2200, %v2403
      %v2405 = vpop.f32.mrb[0].mxu0
      %2406 = vmatprep.mubr.bf16.mxu0 0
      %2407 = vmatmul.mubr.bf16.gmra.mrb[0].mxu0 %v2258
      %v2408 = vpop.f32.mrb[0].mxu0
      %v2409 = vadd.f32 %v2200, %v2408
      %v2410 = vpop.f32.mrb[0].mxu0
      %v2411 = vpop.f32.mrb[0].mxu0
      %v2412 = vadd.f32 %v2200, %v2411
      %v2413 = vpop.f32.mrb[0].mxu0
      %2414 = vmatprep.mubr.bf16.mxu0 0
      %2415 = vmatmul.mubr.bf16.gmra.mrb[0].mxu0 %v2261
      %v2416 = vpop.f32.mrb[0].mxu0
      %v2417 = vadd.f32 %v2200, %v2416
      %v2418 = vpop.f32.mrb[0].mxu0
      %v2419 = vpop.f32.mrb[0].mxu0
      %v2420 = vadd.f32 %v2200, %v2419
      %v2421 = vpop.f32.mrb[0].mxu0
      %2422 = vmatprep.mubr.bf16.mxu0 0
      %2423 = vmatmul.mubr.bf16.gmra.mrb[0].mxu0 %v2264
      %v2424 = vpop.f32.mrb[0].mxu0
      %v2425 = vadd.f32 %v2200, %v2424
      %v2426 = vpop.f32.mrb[0].mxu0
      %v2427 = vpop.f32.mrb[0].mxu0
      %v2428 = vadd.f32 %v2200, %v2427
      %v2429 = vpop.f32.mrb[0].mxu0
      %2430 = vdwg.mxu0
      %v2431 = vmax.f32 %v2305, 0.0
      %v2432 = vmax.f32 %v2308, 0.0
      %v2433 = vmax.f32 %v2313, 0.0
      %v2434 = vmax.f32 %v2316, 0.0
      %v2435 = vmax.f32 %v2321, 0.0
      %v2436 = vmax.f32 %v2324, 0.0
      %v2437 = vmax.f32 %v2329, 0.0
      %v2438 = vmax.f32 %v2332, 0.0
      %v2439 = vmax.f32 %v2337, 0.0
      %v2440 = vmax.f32 %v2340, 0.0
      %v2441 = vmax.f32 %v2345, 0.0
      %v2442 = vmax.f32 %v2348, 0.0
      %v2443 = vmax.f32 %v2353, 0.0
      %v2444 = vmax.f32 %v2356, 0.0
      %v2445 = vmax.f32 %v2361, 0.0
      %v2446 = vmax.f32 %v2364, 0.0
      %v2447 = vmax.f32 %v2369, 0.0
      %v2448 = vmax.f32 %v2372, 0.0
      %v2449 = vmax.f32 %v2377, 0.0
      %v2450 = vmax.f32 %v2380, 0.0
      %v2451 = vmax.f32 %v2385, 0.0
      %v2452 = vmax.f32 %v2388, 0.0
      %v2453 = vmax.f32 %v2393, 0.0
      %v2454 = vmax.f32 %v2396, 0.0
      %v2455 = vmax.f32 %v2401, 0.0
      %v2456 = vmax.f32 %v2404, 0.0
      %v2457 = vmax.f32 %v2409, 0.0
      %v2458 = vmax.f32 %v2412, 0.0
      %v2459 = vmax.f32 %v2417, 0.0
      %v2460 = vmax.f32 %v2420, 0.0
      %v2461 = vmax.f32 %v2425, 0.0
      %v2462 = vmax.f32 %v2428, 0.0
      %s2463 = scalar_lea.vmem [#allocation3], 24
      %2464 = vst.msk [vmem:[%s2463 + $0x1] sm:$0xff] %vm488, %v2431
      %2465 = vst.msk [vmem:[%s2463 + $0x9] sm:$0xff] %vm488, %v2432
      %2466 = vst.msk [vmem:[%s2463 + $0x19] sm:$0xff] %vm488, %v2433
      %2467 = vst.msk [vmem:[%s2463 + $0x21] sm:$0xff] %vm488, %v2434
      %2468 = vst.msk [vmem:[%s2463 + $0x31] sm:$0xff] %vm488, %v2435
      %2469 = vst.msk [vmem:[%s2463 + $0x39] sm:$0xff] %vm488, %v2436
      %2470 = vst.msk [vmem:[%s2463 + $0x49] sm:$0xff] %vm488, %v2437
      %2471 = vst.msk [vmem:[%s2463 + $0x51] sm:$0xff] %vm488, %v2438
      %2472 = vst.msk [vmem:[%s2463 + $0x61] sm:$0xff] %vm488, %v2439
      %2473 = vst.msk [vmem:[%s2463 + $0x69] sm:$0xff] %vm488, %v2440
      %2474 = vst.msk [vmem:[%s2463 + $0x79] sm:$0xff] %vm488, %v2441
      %2475 = vst.msk [vmem:[%s2463 + $0x81] sm:$0xff] %vm488, %v2442
      %2476 = vst.msk [vmem:[%s2463 + $0x91] sm:$0xff] %vm488, %v2443
      %2477 = vst.msk [vmem:[%s2463 + $0x99] sm:$0xff] %vm488, %v2444
      %2478 = vst.msk [vmem:[%s2463 + $0xa9] sm:$0xff] %vm488, %v2445
      %2479 = vst.msk [vmem:[%s2463 + $0xb1] sm:$0xff] %vm488, %v2446
      %2480 = vst.msk [vmem:[%s2463 + $0xc1] sm:$0xff] %vm488, %v2447
      %2481 = vst.msk [vmem:[%s2463 + $0xc9] sm:$0xff] %vm488, %v2448
      %2482 = vst.msk [vmem:[%s2463 + $0xd9] sm:$0xff] %vm488, %v2449
      %2483 = vst.msk [vmem:[%s2463 + $0xe1] sm:$0xff] %vm488, %v2450
      %2484 = vst.msk [vmem:[%s2463 + $0xf1] sm:$0xff] %vm488, %v2451
      %2485 = vst.msk [vmem:[%s2463 + $0xf9] sm:$0xff] %vm488, %v2452
      %2486 = vst.msk [vmem:[%s2463 + $0x109] sm:$0xff] %vm488, %v2453
      %2487 = vst.msk [vmem:[%s2463 + $0x111] sm:$0xff] %vm488, %v2454
      %2488 = vst.msk [vmem:[%s2463 + $0x121] sm:$0xff] %vm488, %v2455
      %2489 = vst.msk [vmem:[%s2463 + $0x129] sm:$0xff] %vm488, %v2456
      %2490 = vst.msk [vmem:[%s2463 + $0x139] sm:$0xff] %vm488, %v2457
      %2491 = vst.msk [vmem:[%s2463 + $0x141] sm:$0xff] %vm488, %v2458
      %2492 = vst.msk [vmem:[%s2463 + $0x151] sm:$0xff] %vm488, %v2459
      %2493 = vst.msk [vmem:[%s2463 + $0x159] sm:$0xff] %vm488, %v2460
      %2494 = vst.msk [vmem:[%s2463 + $0x169] sm:$0xff] %vm488, %v2461
      %2495 = vst.msk [vmem:[%s2463 + $0x171] sm:$0xff] %vm488, %v2462
      %v2496 = vld [vmem:[#allocation3] sm:$0xff]
      %v2497 = vld [vmem:[#allocation3 + $0x8] sm:$0xff]
      %v2498 = vld [vmem:[#allocation3 + $0x18] sm:$0xff]
      %v2499 = vld [vmem:[#allocation3 + $0x20] sm:$0xff]
      %v2500 = vld [vmem:[#allocation3 + $0x30] sm:$0xff]
      %v2501 = vld [vmem:[#allocation3 + $0x38] sm:$0xff]
      %v2502 = vld [vmem:[#allocation3 + $0x48] sm:$0xff]
      %v2503 = vld [vmem:[#allocation3 + $0x50] sm:$0xff]
      %v2504 = vld [vmem:[#allocation3 + $0x60] sm:$0xff]
      %v2505 = vld [vmem:[#allocation3 + $0x68] sm:$0xff]
      %v2506 = vld [vmem:[#allocation3 + $0x78] sm:$0xff]
      %v2507 = vld [vmem:[#allocation3 + $0x80] sm:$0xff]
      %v2508 = vld [vmem:[#allocation3 + $0x90] sm:$0xff]
      %v2509 = vld [vmem:[#allocation3 + $0x98] sm:$0xff]
      %v2510 = vld [vmem:[#allocation3 + $0xa8] sm:$0xff]
      %v2511 = vld [vmem:[#allocation3 + $0xb0] sm:$0xff]
      %v2512 = vld [vmem:[#allocation3 + $0xc0] sm:$0xff]
      %v2513 = vld [vmem:[#allocation3 + $0xc8] sm:$0xff]
      %v2514 = vld [vmem:[#allocation3 + $0xd8] sm:$0xff]
      %v2515 = vld [vmem:[#allocation3 + $0xe0] sm:$0xff]
      %v2516 = vld [vmem:[#allocation3 + $0xf0] sm:$0xff]
      %v2517 = vld [vmem:[#allocation3 + $0xf8] sm:$0xff]
      %v2518 = vld [vmem:[#allocation3 + $0x108] sm:$0xff]
      %v2519 = vld [vmem:[#allocation3 + $0x110] sm:$0xff]
      %v2520 = vld [vmem:[#allocation3 + $0x120] sm:$0xff]
      %v2521 = vld [vmem:[#allocation3 + $0x128] sm:$0xff]
      %v2522 = vld [vmem:[#allocation3 + $0x138] sm:$0xff]
      %v2523 = vld [vmem:[#allocation3 + $0x140] sm:$0xff]
      %v2524 = vld [vmem:[#allocation3 + $0x150] sm:$0xff]
      %v2525 = vld [vmem:[#allocation3 + $0x158] sm:$0xff]
      %v2526 = vld [vmem:[#allocation3 + $0x168] sm:$0xff]
      %v2527 = vld [vmem:[#allocation3 + $0x170] sm:$0xff]
      %v2528 = vld [vmem:[#allocation3 + $0x1] sm:$0xff]
      %v2529 = vld [vmem:[#allocation3 + $0x9] sm:$0xff]
      %v2530 = vld [vmem:[#allocation3 + $0x19] sm:$0xff]
      %v2531 = vld [vmem:[#allocation3 + $0x21] sm:$0xff]
      %v2532 = vld [vmem:[#allocation3 + $0x31] sm:$0xff]
      %v2533 = vld [vmem:[#allocation3 + $0x39] sm:$0xff]
      %v2534 = vld [vmem:[#allocation3 + $0x49] sm:$0xff]
      %v2535 = vld [vmem:[#allocation3 + $0x51] sm:$0xff]
      %v2536 = vld [vmem:[#allocation3 + $0x61] sm:$0xff]
      %v2537 = vld [vmem:[#allocation3 + $0x69] sm:$0xff]
      %v2538 = vld [vmem:[#allocation3 + $0x79] sm:$0xff]
      %v2539 = vld [vmem:[#allocation3 + $0x81] sm:$0xff]
      %v2540 = vld [vmem:[#allocation3 + $0x91] sm:$0xff]
      %v2541 = vld [vmem:[#allocation3 + $0x99] sm:$0xff]
      %v2542 = vld [vmem:[#allocation3 + $0xa9] sm:$0xff]
      %v2543 = vld [vmem:[#allocation3 + $0xb1] sm:$0xff]
      %v2544 = vld [vmem:[#allocation3 + $0xc1] sm:$0xff]
      %v2545 = vld [vmem:[#allocation3 + $0xc9] sm:$0xff]
      %v2546 = vld [vmem:[#allocation3 + $0xd9] sm:$0xff]
      %v2547 = vld [vmem:[#allocation3 + $0xe1] sm:$0xff]
      %v2548 = vld [vmem:[#allocation3 + $0xf1] sm:$0xff]
      %v2549 = vld [vmem:[#allocation3 + $0xf9] sm:$0xff]
      %v2550 = vld [vmem:[#allocation3 + $0x109] sm:$0xff]
      %v2551 = vld [vmem:[#allocation3 + $0x111] sm:$0xff]
      %v2552 = vld [vmem:[#allocation3 + $0x121] sm:$0xff]
      %v2553 = vld [vmem:[#allocation3 + $0x129] sm:$0xff]
      %v2554 = vld [vmem:[#allocation3 + $0x139] sm:$0xff]
      %v2555 = vld [vmem:[#allocation3 + $0x141] sm:$0xff]
      %v2556 = vld [vmem:[#allocation3 + $0x151] sm:$0xff]
      %v2557 = vld [vmem:[#allocation3 + $0x159] sm:$0xff]
      %v2558 = vld [vmem:[#allocation3 + $0x169] sm:$0xff]
      %v2559 = vld [vmem:[#allocation3 + $0x171] sm:$0xff]
      %v2560 = vld [vmem:[#allocation3 + $0x2] sm:$0xff]
      %v2561 = vld [vmem:[#allocation3 + $0xa] sm:$0xff]
      %v2562 = vld [vmem:[#allocation3 + $0x1a] sm:$0xff]
      %v2563 = vld [vmem:[#allocation3 + $0x22] sm:$0xff]
      %v2564 = vld [vmem:[#allocation3 + $0x32] sm:$0xff]
      %v2565 = vld [vmem:[#allocation3 + $0x3a] sm:$0xff]
      %v2566 = vld [vmem:[#allocation3 + $0x4a] sm:$0xff]
      %v2567 = vld [vmem:[#allocation3 + $0x52] sm:$0xff]
      %v2568 = vld [vmem:[#allocation3 + $0x62] sm:$0xff]
      %v2569 = vld [vmem:[#allocation3 + $0x6a] sm:$0xff]
      %v2570 = vld [vmem:[#allocation3 + $0x7a] sm:$0xff]
      %v2571 = vld [vmem:[#allocation3 + $0x82] sm:$0xff]
      %v2572 = vld [vmem:[#allocation3 + $0x92] sm:$0xff]
      %v2573 = vld [vmem:[#allocation3 + $0x9a] sm:$0xff]
      %v2574 = vld [vmem:[#allocation3 + $0xaa] sm:$0xff]
      %v2575 = vld [vmem:[#allocation3 + $0xb2] sm:$0xff]
      %v2576 = vld [vmem:[#allocation3 + $0xc2] sm:$0xff]
      %v2577 = vld [vmem:[#allocation3 + $0xca] sm:$0xff]
      %v2578 = vld [vmem:[#allocation3 + $0xda] sm:$0xff]
      %v2579 = vld [vmem:[#allocation3 + $0xe2] sm:$0xff]
      %v2580 = vld [vmem:[#allocation3 + $0xf2] sm:$0xff]
      %v2581 = vld [vmem:[#allocation3 + $0xfa] sm:$0xff]
      %v2582 = vld [vmem:[#allocation3 + $0x10a] sm:$0xff]
      %v2583 = vld [vmem:[#allocation3 + $0x112] sm:$0xff]
      %v2584 = vld [vmem:[#allocation3 + $0x122] sm:$0xff]
      %v2585 = vld [vmem:[#allocation3 + $0x12a] sm:$0xff]
      %v2586 = vld [vmem:[#allocation3 + $0x13a] sm:$0xff]
      %v2587 = vld [vmem:[#allocation3 + $0x142] sm:$0xff]
      %v2588 = vld [vmem:[#allocation3 + $0x152] sm:$0xff]
      %v2589 = vld [vmem:[#allocation3 + $0x15a] sm:$0xff]
      %v2590 = vld [vmem:[#allocation3 + $0x16a] sm:$0xff]
      %v2591 = vld [vmem:[#allocation3 + $0x172] sm:$0xff]
      %v2592 = vld [vmem:[%s2463] sm:$0xff]
      %v2593 = vld [vmem:[%s2463 + $0x8] sm:$0xff]
      %v2594 = vld [vmem:[%s2463 + $0x18] sm:$0xff]
      %v2595 = vld [vmem:[%s2463 + $0x20] sm:$0xff]
      %v2596 = vld [vmem:[%s2463 + $0x30] sm:$0xff]
      %v2597 = vld [vmem:[%s2463 + $0x38] sm:$0xff]
      %v2598 = vld [vmem:[%s2463 + $0x48] sm:$0xff]
      %v2599 = vld [vmem:[%s2463 + $0x50] sm:$0xff]
      %v2600 = vld [vmem:[%s2463 + $0x60] sm:$0xff]
      %v2601 = vld [vmem:[%s2463 + $0x68] sm:$0xff]
      %v2602 = vld [vmem:[%s2463 + $0x78] sm:$0xff]
      %v2603 = vld [vmem:[%s2463 + $0x80] sm:$0xff]
      %v2604 = vld [vmem:[%s2463 + $0x90] sm:$0xff]
      %v2605 = vld [vmem:[%s2463 + $0x98] sm:$0xff]
      %v2606 = vld [vmem:[%s2463 + $0xa8] sm:$0xff]
      %v2607 = vld [vmem:[%s2463 + $0xb0] sm:$0xff]
      %v2608 = vld [vmem:[%s2463 + $0xc0] sm:$0xff]
      %v2609 = vld [vmem:[%s2463 + $0xc8] sm:$0xff]
      %v2610 = vld [vmem:[%s2463 + $0xd8] sm:$0xff]
      %v2611 = vld [vmem:[%s2463 + $0xe0] sm:$0xff]
      %v2612 = vld [vmem:[%s2463 + $0xf0] sm:$0xff]
      %v2613 = vld [vmem:[%s2463 + $0xf8] sm:$0xff]
      %v2614 = vld [vmem:[%s2463 + $0x108] sm:$0xff]
      %v2615 = vld [vmem:[%s2463 + $0x110] sm:$0xff]
      %v2616 = vld [vmem:[%s2463 + $0x120] sm:$0xff]
      %v2617 = vld [vmem:[%s2463 + $0x128] sm:$0xff]
      %v2618 = vld [vmem:[%s2463 + $0x138] sm:$0xff]
      %v2619 = vld [vmem:[%s2463 + $0x140] sm:$0xff]
      %v2620 = vld [vmem:[%s2463 + $0x150] sm:$0xff]
      %v2621 = vld [vmem:[%s2463 + $0x158] sm:$0xff]
      %v2622 = vld [vmem:[%s2463 + $0x168] sm:$0xff]
      %v2623 = vld [vmem:[%s2463 + $0x170] sm:$0xff]
      %v2624 = vld [vmem:[%s2463 + $0x1] sm:$0xff]
      %v2625 = vld [vmem:[%s2463 + $0x9] sm:$0xff]
      %v2626 = vld [vmem:[%s2463 + $0x19] sm:$0xff]
      %v2627 = vld [vmem:[%s2463 + $0x21] sm:$0xff]
      %v2628 = vld [vmem:[%s2463 + $0x31] sm:$0xff]
      %v2629 = vld [vmem:[%s2463 + $0x39] sm:$0xff]
      %v2630 = vld [vmem:[%s2463 + $0x49] sm:$0xff]
      %v2631 = vld [vmem:[%s2463 + $0x51] sm:$0xff]
      %v2632 = vld [vmem:[%s2463 + $0x61] sm:$0xff]
      %v2633 = vld [vmem:[%s2463 + $0x69] sm:$0xff]
      %v2634 = vld [vmem:[%s2463 + $0x79] sm:$0xff]
      %v2635 = vld [vmem:[%s2463 + $0x81] sm:$0xff]
      %v2636 = vld [vmem:[%s2463 + $0x91] sm:$0xff]
      %v2637 = vld [vmem:[%s2463 + $0x99] sm:$0xff]
      %v2638 = vld [vmem:[%s2463 + $0xa9] sm:$0xff]
      %v2639 = vld [vmem:[%s2463 + $0xb1] sm:$0xff]
      %v2640 = vld [vmem:[%s2463 + $0xc1] sm:$0xff]
      %v2641 = vld [vmem:[%s2463 + $0xc9] sm:$0xff]
      %v2642 = vld [vmem:[%s2463 + $0xd9] sm:$0xff]
      %v2643 = vld [vmem:[%s2463 + $0xe1] sm:$0xff]
      %v2644 = vld [vmem:[%s2463 + $0xf1] sm:$0xff]
      %v2645 = vld [vmem:[%s2463 + $0xf9] sm:$0xff]
      %v2646 = vld [vmem:[%s2463 + $0x109] sm:$0xff]
      %v2647 = vld [vmem:[%s2463 + $0x111] sm:$0xff]
      %v2648 = vld [vmem:[%s2463 + $0x121] sm:$0xff]
      %v2649 = vld [vmem:[%s2463 + $0x129] sm:$0xff]
      %v2650 = vld [vmem:[%s2463 + $0x139] sm:$0xff]
      %v2651 = vld [vmem:[%s2463 + $0x141] sm:$0xff]
      %v2652 = vld [vmem:[%s2463 + $0x151] sm:$0xff]
      %v2653 = vld [vmem:[%s2463 + $0x159] sm:$0xff]
      %v2654 = vld [vmem:[%s2463 + $0x169] sm:$0xff]
      %v2655 = vld [vmem:[%s2463 + $0x171] sm:$0xff]
      %v2656 = vld [vmem:[%s2463 + $0x2] sm:$0xff]
      %v2657 = vld [vmem:[%s2463 + $0xa] sm:$0xff]
      %v2658 = vld [vmem:[%s2463 + $0x1a] sm:$0xff]
      %v2659 = vld [vmem:[%s2463 + $0x22] sm:$0xff]
      %v2660 = vld [vmem:[%s2463 + $0x32] sm:$0xff]
      %v2661 = vld [vmem:[%s2463 + $0x3a] sm:$0xff]
      %v2662 = vld [vmem:[%s2463 + $0x4a] sm:$0xff]
      %v2663 = vld [vmem:[%s2463 + $0x52] sm:$0xff]
      %v2664 = vld [vmem:[%s2463 + $0x62] sm:$0xff]
      %v2665 = vld [vmem:[%s2463 + $0x6a] sm:$0xff]
      %v2666 = vld [vmem:[%s2463 + $0x7a] sm:$0xff]
      %v2667 = vld [vmem:[%s2463 + $0x82] sm:$0xff]
      %v2668 = vld [vmem:[%s2463 + $0x92] sm:$0xff]
      %v2669 = vld [vmem:[%s2463 + $0x9a] sm:$0xff]
      %v2670 = vld [vmem:[%s2463 + $0xaa] sm:$0xff]
      %v2671 = vld [vmem:[%s2463 + $0xb2] sm:$0xff]
      %v2672 = vld [vmem:[%s2463 + $0xc2] sm:$0xff]
      %v2673 = vld [vmem:[%s2463 + $0xca] sm:$0xff]
      %v2674 = vld [vmem:[%s2463 + $0xda] sm:$0xff]
      %v2675 = vld [vmem:[%s2463 + $0xe2] sm:$0xff]
      %v2676 = vld [vmem:[%s2463 + $0xf2] sm:$0xff]
      %v2677 = vld [vmem:[%s2463 + $0xfa] sm:$0xff]
      %v2678 = vld [vmem:[%s2463 + $0x10a] sm:$0xff]
      %v2679 = vld [vmem:[%s2463 + $0x112] sm:$0xff]
      %v2680 = vld [vmem:[%s2463 + $0x122] sm:$0xff]
      %v2681 = vld [vmem:[%s2463 + $0x12a] sm:$0xff]
      %v2682 = vld [vmem:[%s2463 + $0x13a] sm:$0xff]
      %v2683 = vld [vmem:[%s2463 + $0x142] sm:$0xff]
      %v2684 = vld [vmem:[%s2463 + $0x152] sm:$0xff]
      %v2685 = vld [vmem:[%s2463 + $0x15a] sm:$0xff]
      %v2686 = vld [vmem:[%s2463 + $0x16a] sm:$0xff]
      %v2687 = vld [vmem:[%s2463 + $0x172] sm:$0xff]
      %s2688 = scalar_lea.vmem [#allocation3], 48
      %v2689 = vld [vmem:[%s2688] sm:$0xff]
      %v2690 = vld [vmem:[%s2688 + $0x8] sm:$0xff]
      %v2691 = vld [vmem:[%s2688 + $0x18] sm:$0xff]
      %v2692 = vld [vmem:[%s2688 + $0x20] sm:$0xff]
      %v2693 = vld [vmem:[%s2688 + $0x30] sm:$0xff]
      %v2694 = vld [vmem:[%s2688 + $0x38] sm:$0xff]
      %v2695 = vld [vmem:[%s2688 + $0x48] sm:$0xff]
      %v2696 = vld [vmem:[%s2688 + $0x50] sm:$0xff]
      %v2697 = vld [vmem:[%s2688 + $0x60] sm:$0xff]
      %v2698 = vld [vmem:[%s2688 + $0x68] sm:$0xff]
      %v2699 = vld [vmem:[%s2688 + $0x78] sm:$0xff]
      %v2700 = vld [vmem:[%s2688 + $0x80] sm:$0xff]
      %v2701 = vld [vmem:[%s2688 + $0x90] sm:$0xff]
      %v2702 = vld [vmem:[%s2688 + $0x98] sm:$0xff]
      %v2703 = vld [vmem:[%s2688 + $0xa8] sm:$0xff]
      %v2704 = vld [vmem:[%s2688 + $0xb0] sm:$0xff]
      %v2705 = vld [vmem:[%s2688 + $0xc0] sm:$0xff]
      %v2706 = vld [vmem:[%s2688 + $0xc8] sm:$0xff]
      %v2707 = vld [vmem:[%s2688 + $0xd8] sm:$0xff]
      %v2708 = vld [vmem:[%s2688 + $0xe0] sm:$0xff]
      %v2709 = vld [vmem:[%s2688 + $0xf0] sm:$0xff]
      %v2710 = vld [vmem:[%s2688 + $0xf8] sm:$0xff]
      %v2711 = vld [vmem:[%s2688 + $0x108] sm:$0xff]
      %v2712 = vld [vmem:[%s2688 + $0x110] sm:$0xff]
      %v2713 = vld [vmem:[%s2688 + $0x120] sm:$0xff]
      %v2714 = vld [vmem:[%s2688 + $0x128] sm:$0xff]
      %v2715 = vld [vmem:[%s2688 + $0x138] sm:$0xff]
      %v2716 = vld [vmem:[%s2688 + $0x140] sm:$0xff]
      %v2717 = vld [vmem:[%s2688 + $0x150] sm:$0xff]
      %v2718 = vld [vmem:[%s2688 + $0x158] sm:$0xff]
      %v2719 = vld [vmem:[%s2688 + $0x168] sm:$0xff]
      %v2720 = vld [vmem:[%s2688 + $0x170] sm:$0xff]
      %v2721 = vld [vmem:[%s2688 + $0x1] sm:$0xff]
      %v2722 = vld [vmem:[%s2688 + $0x9] sm:$0xff]
      %v2723 = vld [vmem:[%s2688 + $0x19] sm:$0xff]
      %v2724 = vld [vmem:[%s2688 + $0x21] sm:$0xff]
      %v2725 = vld [vmem:[%s2688 + $0x31] sm:$0xff]
      %v2726 = vld [vmem:[%s2688 + $0x39] sm:$0xff]
      %v2727 = vld [vmem:[%s2688 + $0x49] sm:$0xff]
      %v2728 = vld [vmem:[%s2688 + $0x51] sm:$0xff]
      %v2729 = vld [vmem:[%s2688 + $0x61] sm:$0xff]
      %v2730 = vld [vmem:[%s2688 + $0x69] sm:$0xff]
      %v2731 = vld [vmem:[%s2688 + $0x79] sm:$0xff]
      %v2732 = vld [vmem:[%s2688 + $0x81] sm:$0xff]
      %v2733 = vld [vmem:[%s2688 + $0x91] sm:$0xff]
      %v2734 = vld [vmem:[%s2688 + $0x99] sm:$0xff]
      %v2735 = vld [vmem:[%s2688 + $0xa9] sm:$0xff]
      %v2736 = vld [vmem:[%s2688 + $0xb1] sm:$0xff]
      %v2737 = vld [vmem:[%s2688 + $0xc1] sm:$0xff]
      %v2738 = vld [vmem:[%s2688 + $0xc9] sm:$0xff]
      %v2739 = vld [vmem:[%s2688 + $0xd9] sm:$0xff]
      %v2740 = vld [vmem:[%s2688 + $0xe1] sm:$0xff]
      %v2741 = vld [vmem:[%s2688 + $0xf1] sm:$0xff]
      %v2742 = vld [vmem:[%s2688 + $0xf9] sm:$0xff]
      %v2743 = vld [vmem:[%s2688 + $0x109] sm:$0xff]
      %v2744 = vld [vmem:[%s2688 + $0x111] sm:$0xff]
      %v2745 = vld [vmem:[%s2688 + $0x121] sm:$0xff]
      %v2746 = vld [vmem:[%s2688 + $0x129] sm:$0xff]
      %v2747 = vld [vmem:[%s2688 + $0x139] sm:$0xff]
      %v2748 = vld [vmem:[%s2688 + $0x141] sm:$0xff]
      %v2749 = vld [vmem:[%s2688 + $0x151] sm:$0xff]
      %v2750 = vld [vmem:[%s2688 + $0x159] sm:$0xff]
      %v2751 = vld [vmem:[%s2688 + $0x169] sm:$0xff]
      %v2752 = vld [vmem:[%s2688 + $0x171] sm:$0xff]
      %v2753 = vld [vmem:[%s2688 + $0x2] sm:$0xff]
      %v2754 = vld [vmem:[%s2688 + $0xa] sm:$0xff]
      %v2755 = vld [vmem:[%s2688 + $0x1a] sm:$0xff]
      %v2756 = vld [vmem:[%s2688 + $0x22] sm:$0xff]
      %v2757 = vld [vmem:[%s2688 + $0x32] sm:$0xff]
      %v2758 = vld [vmem:[%s2688 + $0x3a] sm:$0xff]
      %v2759 = vld [vmem:[%s2688 + $0x4a] sm:$0xff]
      %v2760 = vld [vmem:[%s2688 + $0x52] sm:$0xff]
      %v2761 = vld [vmem:[%s2688 + $0x62] sm:$0xff]
      %v2762 = vld [vmem:[%s2688 + $0x6a] sm:$0xff]
      %v2763 = vld [vmem:[%s2688 + $0x7a] sm:$0xff]
      %v2764 = vld [vmem:[%s2688 + $0x82] sm:$0xff]
      %v2765 = vld [vmem:[%s2688 + $0x92] sm:$0xff]
      %v2766 = vld [vmem:[%s2688 + $0x9a] sm:$0xff]
      %v2767 = vld [vmem:[%s2688 + $0xaa] sm:$0xff]
      %v2768 = vld [vmem:[%s2688 + $0xb2] sm:$0xff]
      %v2769 = vld [vmem:[%s2688 + $0xc2] sm:$0xff]
      %v2770 = vld [vmem:[%s2688 + $0xca] sm:$0xff]
      %v2771 = vld [vmem:[%s2688 + $0xda] sm:$0xff]
      %v2772 = vld [vmem:[%s2688 + $0xe2] sm:$0xff]
      %v2773 = vld [vmem:[%s2688 + $0xf2] sm:$0xff]
      %v2774 = vld [vmem:[%s2688 + $0xfa] sm:$0xff]
      %v2775 = vld [vmem:[%s2688 + $0x10a] sm:$0xff]
      %v2776 = vld [vmem:[%s2688 + $0x112] sm:$0xff]
      %v2777 = vld [vmem:[%s2688 + $0x122] sm:$0xff]
      %v2778 = vld [vmem:[%s2688 + $0x12a] sm:$0xff]
      %v2779 = vld [vmem:[%s2688 + $0x13a] sm:$0xff]
      %v2780 = vld [vmem:[%s2688 + $0x142] sm:$0xff]
      %v2781 = vld [vmem:[%s2688 + $0x152] sm:$0xff]
      %v2782 = vld [vmem:[%s2688 + $0x15a] sm:$0xff]
      %v2783 = vld [vmem:[%s2688 + $0x16a] sm:$0xff]
      %v2784 = vld [vmem:[%s2688 + $0x172] sm:$0xff]
      %2817 = vrot.lane.b32.xlu0 %v2528, 32
      %v2818 = vpop.permute.xlu0 %2817
      %2819 = vrot.lane.b32.xlu0 %v2529, 32
      %v2820 = vpop.permute.xlu0 %2819
      %2821 = vrot.lane.b32.xlu0 %v2530, 32
      %v2822 = vpop.permute.xlu0 %2821
      %2823 = vrot.lane.b32.xlu0 %v2531, 32
      %v2824 = vpop.permute.xlu0 %2823
      %2825 = vrot.lane.b32.xlu0 %v2532, 32
      %v2826 = vpop.permute.xlu0 %2825
      %2827 = vrot.lane.b32.xlu0 %v2533, 32
      %v2828 = vpop.permute.xlu0 %2827
      %2829 = vrot.lane.b32.xlu0 %v2534, 32
      %v2830 = vpop.permute.xlu0 %2829
      %2831 = vrot.lane.b32.xlu0 %v2535, 32
      %v2832 = vpop.permute.xlu0 %2831
      %2833 = vrot.lane.b32.xlu0 %v2536, 32
      %v2834 = vpop.permute.xlu0 %2833
      %2835 = vrot.lane.b32.xlu0 %v2537, 32
      %v2836 = vpop.permute.xlu0 %2835
      %2837 = vrot.lane.b32.xlu0 %v2538, 32
      %v2838 = vpop.permute.xlu0 %2837
      %2839 = vrot.lane.b32.xlu0 %v2539, 32
      %v2840 = vpop.permute.xlu0 %2839
      %2841 = vrot.lane.b32.xlu0 %v2540, 32
      %v2842 = vpop.permute.xlu0 %2841
      %2843 = vrot.lane.b32.xlu0 %v2541, 32
      %v2844 = vpop.permute.xlu0 %2843
      %2845 = vrot.lane.b32.xlu0 %v2542, 32
      %v2846 = vpop.permute.xlu0 %2845
      %2847 = vrot.lane.b32.xlu0 %v2543, 32
      %v2848 = vpop.permute.xlu0 %2847
      %2849 = vrot.lane.b32.xlu0 %v2544, 32
      %v2850 = vpop.permute.xlu0 %2849
      %2851 = vrot.lane.b32.xlu0 %v2545, 32
      %v2852 = vpop.permute.xlu0 %2851
      %2853 = vrot.lane.b32.xlu0 %v2546, 32
      %v2854 = vpop.permute.xlu0 %2853
      %2855 = vrot.lane.b32.xlu0 %v2547, 32
      %v2856 = vpop.permute.xlu0 %2855
      %2857 = vrot.lane.b32.xlu0 %v2548, 32
      %v2858 = vpop.permute.xlu0 %2857
      %2859 = vrot.lane.b32.xlu0 %v2549, 32
      %v2860 = vpop.permute.xlu0 %2859
      %2861 = vrot.lane.b32.xlu0 %v2550, 32
      %v2862 = vpop.permute.xlu0 %2861
      %2863 = vrot.lane.b32.xlu0 %v2551, 32
      %v2864 = vpop.permute.xlu0 %2863
      %2865 = vrot.lane.b32.xlu0 %v2552, 32
      %v2866 = vpop.permute.xlu0 %2865
      %2867 = vrot.lane.b32.xlu0 %v2553, 32
      %v2868 = vpop.permute.xlu0 %2867
      %2869 = vrot.lane.b32.xlu0 %v2554, 32
      %v2870 = vpop.permute.xlu0 %2869
      %2871 = vrot.lane.b32.xlu0 %v2555, 32
      %v2872 = vpop.permute.xlu0 %2871
      %2873 = vrot.lane.b32.xlu0 %v2556, 32
      %v2874 = vpop.permute.xlu0 %2873
      %2875 = vrot.lane.b32.xlu0 %v2557, 32
      %v2876 = vpop.permute.xlu0 %2875
      %2877 = vrot.lane.b32.xlu0 %v2558, 32
      %v2878 = vpop.permute.xlu0 %2877
      %2879 = vrot.lane.b32.xlu0 %v2559, 32
      %v2880 = vpop.permute.xlu0 %2879
      %2945 = vrot.lane.b32.xlu0 %v2560, 64
      %v2946 = vpop.permute.xlu0 %2945
      %2947 = vrot.lane.b32.xlu0 %v2561, 64
      %v2948 = vpop.permute.xlu0 %2947
      %2949 = vrot.lane.b32.xlu0 %v2562, 64
      %v2950 = vpop.permute.xlu0 %2949
      %2951 = vrot.lane.b32.xlu0 %v2563, 64
      %v2952 = vpop.permute.xlu0 %2951
      %2953 = vrot.lane.b32.xlu0 %v2564, 64
      %v2954 = vpop.permute.xlu0 %2953
      %2955 = vrot.lane.b32.xlu0 %v2565, 64
      %v2956 = vpop.permute.xlu0 %2955
      %2957 = vrot.lane.b32.xlu0 %v2566, 64
      %v2958 = vpop.permute.xlu0 %2957
      %2959 = vrot.lane.b32.xlu0 %v2567, 64
      %v2960 = vpop.permute.xlu0 %2959
      %2961 = vrot.lane.b32.xlu0 %v2568, 64
      %v2962 = vpop.permute.xlu0 %2961
      %2963 = vrot.lane.b32.xlu0 %v2569, 64
      %v2964 = vpop.permute.xlu0 %2963
      %2965 = vrot.lane.b32.xlu0 %v2570, 64
      %v2966 = vpop.permute.xlu0 %2965
      %2967 = vrot.lane.b32.xlu0 %v2571, 64
      %v2968 = vpop.permute.xlu0 %2967
      %2969 = vrot.lane.b32.xlu0 %v2572, 64
      %v2970 = vpop.permute.xlu0 %2969
      %2971 = vrot.lane.b32.xlu0 %v2573, 64
      %v2972 = vpop.permute.xlu0 %2971
      %2973 = vrot.lane.b32.xlu0 %v2574, 64
      %v2974 = vpop.permute.xlu0 %2973
      %2975 = vrot.lane.b32.xlu0 %v2575, 64
      %v2976 = vpop.permute.xlu0 %2975
      %2977 = vrot.lane.b32.xlu0 %v2576, 64
      %v2978 = vpop.permute.xlu0 %2977
      %2979 = vrot.lane.b32.xlu0 %v2577, 64
      %v2980 = vpop.permute.xlu0 %2979
      %2981 = vrot.lane.b32.xlu0 %v2578, 64
      %v2982 = vpop.permute.xlu0 %2981
      %2983 = vrot.lane.b32.xlu0 %v2579, 64
      %v2984 = vpop.permute.xlu0 %2983
      %2985 = vrot.lane.b32.xlu0 %v2580, 64
      %v2986 = vpop.permute.xlu0 %2985
      %2987 = vrot.lane.b32.xlu0 %v2581, 64
      %v2988 = vpop.permute.xlu0 %2987
      %2989 = vrot.lane.b32.xlu0 %v2582, 64
      %v2990 = vpop.permute.xlu0 %2989
      %2991 = vrot.lane.b32.xlu0 %v2583, 64
      %v2992 = vpop.permute.xlu0 %2991
      %2993 = vrot.lane.b32.xlu0 %v2584, 64
      %v2994 = vpop.permute.xlu0 %2993
      %2995 = vrot.lane.b32.xlu0 %v2585, 64
      %v2996 = vpop.permute.xlu0 %2995
      %2997 = vrot.lane.b32.xlu0 %v2586, 64
      %v2998 = vpop.permute.xlu0 %2997
      %2999 = vrot.lane.b32.xlu0 %v2587, 64
      %v3000 = vpop.permute.xlu0 %2999
      %3001 = vrot.lane.b32.xlu0 %v2588, 64
      %v3002 = vpop.permute.xlu0 %3001
      %3003 = vrot.lane.b32.xlu0 %v2589, 64
      %v3004 = vpop.permute.xlu0 %3003
      %3005 = vrot.lane.b32.xlu0 %v2590, 64
      %v3006 = vpop.permute.xlu0 %3005
      %3007 = vrot.lane.b32.xlu0 %v2591, 64
      %v3008 = vpop.permute.xlu0 %3007
      %3073 = vrot.lane.b32.xlu0 %v2592, 96
      %v3074 = vpop.permute.xlu0 %3073
      %3075 = vrot.lane.b32.xlu0 %v2593, 96
      %v3076 = vpop.permute.xlu0 %3075
      %3077 = vrot.lane.b32.xlu0 %v2594, 96
      %v3078 = vpop.permute.xlu0 %3077
      %3079 = vrot.lane.b32.xlu0 %v2595, 96
      %v3080 = vpop.permute.xlu0 %3079
      %3081 = vrot.lane.b32.xlu0 %v2596, 96
      %v3082 = vpop.permute.xlu0 %3081
      %3083 = vrot.lane.b32.xlu0 %v2597, 96
      %v3084 = vpop.permute.xlu0 %3083
      %3085 = vrot.lane.b32.xlu0 %v2598, 96
      %v3086 = vpop.permute.xlu0 %3085
      %3087 = vrot.lane.b32.xlu0 %v2599, 96
      %v3088 = vpop.permute.xlu0 %3087
      %3089 = vrot.lane.b32.xlu0 %v2600, 96
      %v3090 = vpop.permute.xlu0 %3089
      %3091 = vrot.lane.b32.xlu0 %v2601, 96
      %v3092 = vpop.permute.xlu0 %3091
      %3093 = vrot.lane.b32.xlu0 %v2602, 96
      %v3094 = vpop.permute.xlu0 %3093
      %3095 = vrot.lane.b32.xlu0 %v2603, 96
      %v3096 = vpop.permute.xlu0 %3095
      %3097 = vrot.lane.b32.xlu0 %v2604, 96
      %v3098 = vpop.permute.xlu0 %3097
      %3099 = vrot.lane.b32.xlu0 %v2605, 96
      %v3100 = vpop.permute.xlu0 %3099
      %3101 = vrot.lane.b32.xlu0 %v2606, 96
      %v3102 = vpop.permute.xlu0 %3101
      %3103 = vrot.lane.b32.xlu0 %v2607, 96
      %v3104 = vpop.permute.xlu0 %3103
      %3105 = vrot.lane.b32.xlu0 %v2608, 96
      %v3106 = vpop.permute.xlu0 %3105
      %3107 = vrot.lane.b32.xlu0 %v2609, 96
      %v3108 = vpop.permute.xlu0 %3107
      %3109 = vrot.lane.b32.xlu0 %v2610, 96
      %v3110 = vpop.permute.xlu0 %3109
      %3111 = vrot.lane.b32.xlu0 %v2611, 96
      %v3112 = vpop.permute.xlu0 %3111
      %3113 = vrot.lane.b32.xlu0 %v2612, 96
      %v3114 = vpop.permute.xlu0 %3113
      %3115 = vrot.lane.b32.xlu0 %v2613, 96
      %v3116 = vpop.permute.xlu0 %3115
      %3117 = vrot.lane.b32.xlu0 %v2614, 96
      %v3118 = vpop.permute.xlu0 %3117
      %3119 = vrot.lane.b32.xlu0 %v2615, 96
      %v3120 = vpop.permute.xlu0 %3119
      %3121 = vrot.lane.b32.xlu0 %v2616, 96
      %v3122 = vpop.permute.xlu0 %3121
      %3123 = vrot.lane.b32.xlu0 %v2617, 96
      %v3124 = vpop.permute.xlu0 %3123
      %3125 = vrot.lane.b32.xlu0 %v2618, 96
      %v3126 = vpop.permute.xlu0 %3125
      %3127 = vrot.lane.b32.xlu0 %v2619, 96
      %v3128 = vpop.permute.xlu0 %3127
      %3129 = vrot.lane.b32.xlu0 %v2620, 96
      %v3130 = vpop.permute.xlu0 %3129
      %3131 = vrot.lane.b32.xlu0 %v2621, 96
      %v3132 = vpop.permute.xlu0 %3131
      %3133 = vrot.lane.b32.xlu0 %v2622, 96
      %v3134 = vpop.permute.xlu0 %3133
      %3135 = vrot.lane.b32.xlu0 %v2623, 96
      %v3136 = vpop.permute.xlu0 %3135
      %3201 = vrot.lane.b32.xlu0 %v2656, 32
      %v3202 = vpop.permute.xlu0 %3201
      %3203 = vrot.lane.b32.xlu0 %v2657, 32
      %v3204 = vpop.permute.xlu0 %3203
      %3205 = vrot.lane.b32.xlu0 %v2658, 32
      %v3206 = vpop.permute.xlu0 %3205
      %3207 = vrot.lane.b32.xlu0 %v2659, 32
      %v3208 = vpop.permute.xlu0 %3207
      %3209 = vrot.lane.b32.xlu0 %v2660, 32
      %v3210 = vpop.permute.xlu0 %3209
      %3211 = vrot.lane.b32.xlu0 %v2661, 32
      %v3212 = vpop.permute.xlu0 %3211
      %3213 = vrot.lane.b32.xlu0 %v2662, 32
      %v3214 = vpop.permute.xlu0 %3213
      %3215 = vrot.lane.b32.xlu0 %v2663, 32
      %v3216 = vpop.permute.xlu0 %3215
      %3217 = vrot.lane.b32.xlu0 %v2664, 32
      %v3218 = vpop.permute.xlu0 %3217
      %3219 = vrot.lane.b32.xlu0 %v2665, 32
      %v3220 = vpop.permute.xlu0 %3219
      %3221 = vrot.lane.b32.xlu0 %v2666, 32
      %v3222 = vpop.permute.xlu0 %3221
      %3223 = vrot.lane.b32.xlu0 %v2667, 32
      %v3224 = vpop.permute.xlu0 %3223
      %3225 = vrot.lane.b32.xlu0 %v2668, 32
      %v3226 = vpop.permute.xlu0 %3225
      %3227 = vrot.lane.b32.xlu0 %v2669, 32
      %v3228 = vpop.permute.xlu0 %3227
      %3229 = vrot.lane.b32.xlu0 %v2670, 32
      %v3230 = vpop.permute.xlu0 %3229
      %3231 = vrot.lane.b32.xlu0 %v2671, 32
      %v3232 = vpop.permute.xlu0 %3231
      %3233 = vrot.lane.b32.xlu0 %v2672, 32
      %v3234 = vpop.permute.xlu0 %3233
      %3235 = vrot.lane.b32.xlu0 %v2673, 32
      %v3236 = vpop.permute.xlu0 %3235
      %3237 = vrot.lane.b32.xlu0 %v2674, 32
      %v3238 = vpop.permute.xlu0 %3237
      %3239 = vrot.lane.b32.xlu0 %v2675, 32
      %v3240 = vpop.permute.xlu0 %3239
      %3241 = vrot.lane.b32.xlu0 %v2676, 32
      %v3242 = vpop.permute.xlu0 %3241
      %3243 = vrot.lane.b32.xlu0 %v2677, 32
      %v3244 = vpop.permute.xlu0 %3243
      %3245 = vrot.lane.b32.xlu0 %v2678, 32
      %v3246 = vpop.permute.xlu0 %3245
      %3247 = vrot.lane.b32.xlu0 %v2679, 32
      %v3248 = vpop.permute.xlu0 %3247
      %3249 = vrot.lane.b32.xlu0 %v2680, 32
      %v3250 = vpop.permute.xlu0 %3249
      %3251 = vrot.lane.b32.xlu0 %v2681, 32
      %v3252 = vpop.permute.xlu0 %3251
      %3253 = vrot.lane.b32.xlu0 %v2682, 32
      %v3254 = vpop.permute.xlu0 %3253
      %3255 = vrot.lane.b32.xlu0 %v2683, 32
      %v3256 = vpop.permute.xlu0 %3255
      %3257 = vrot.lane.b32.xlu0 %v2684, 32
      %v3258 = vpop.permute.xlu0 %3257
      %3259 = vrot.lane.b32.xlu0 %v2685, 32
      %v3260 = vpop.permute.xlu0 %3259
      %3261 = vrot.lane.b32.xlu0 %v2686, 32
      %v3262 = vpop.permute.xlu0 %3261
      %3263 = vrot.lane.b32.xlu0 %v2687, 32
      %v3264 = vpop.permute.xlu0 %3263
      %3329 = vrot.lane.b32.xlu0 %v2689, 64
      %v3330 = vpop.permute.xlu0 %3329
      %3331 = vrot.lane.b32.xlu0 %v2690, 64
      %v3332 = vpop.permute.xlu0 %3331
      %3333 = vrot.lane.b32.xlu0 %v2691, 64
      %v3334 = vpop.permute.xlu0 %3333
      %3335 = vrot.lane.b32.xlu0 %v2692, 64
      %v3336 = vpop.permute.xlu0 %3335
      %3337 = vrot.lane.b32.xlu0 %v2693, 64
      %v3338 = vpop.permute.xlu0 %3337
      %3339 = vrot.lane.b32.xlu0 %v2694, 64
      %v3340 = vpop.permute.xlu0 %3339
      %3341 = vrot.lane.b32.xlu0 %v2695, 64
      %v3342 = vpop.permute.xlu0 %3341
      %3343 = vrot.lane.b32.xlu0 %v2696, 64
      %v3344 = vpop.permute.xlu0 %3343
      %3345 = vrot.lane.b32.xlu0 %v2697, 64
      %v3346 = vpop.permute.xlu0 %3345
      %3347 = vrot.lane.b32.xlu0 %v2698, 64
      %v3348 = vpop.permute.xlu0 %3347
      %3349 = vrot.lane.b32.xlu0 %v2699, 64
      %v3350 = vpop.permute.xlu0 %3349
      %3351 = vrot.lane.b32.xlu0 %v2700, 64
      %v3352 = vpop.permute.xlu0 %3351
      %3353 = vrot.lane.b32.xlu0 %v2701, 64
      %v3354 = vpop.permute.xlu0 %3353
      %3355 = vrot.lane.b32.xlu0 %v2702, 64
      %v3356 = vpop.permute.xlu0 %3355
      %3357 = vrot.lane.b32.xlu0 %v2703, 64
      %v3358 = vpop.permute.xlu0 %3357
      %3359 = vrot.lane.b32.xlu0 %v2704, 64
      %v3360 = vpop.permute.xlu0 %3359
      %3361 = vrot.lane.b32.xlu0 %v2705, 64
      %v3362 = vpop.permute.xlu0 %3361
      %3363 = vrot.lane.b32.xlu0 %v2706, 64
      %v3364 = vpop.permute.xlu0 %3363
      %3365 = vrot.lane.b32.xlu0 %v2707, 64
      %v3366 = vpop.permute.xlu0 %3365
      %3367 = vrot.lane.b32.xlu0 %v2708, 64
      %v3368 = vpop.permute.xlu0 %3367
      %3369 = vrot.lane.b32.xlu0 %v2709, 64
      %v3370 = vpop.permute.xlu0 %3369
      %3371 = vrot.lane.b32.xlu0 %v2710, 64
      %v3372 = vpop.permute.xlu0 %3371
      %3373 = vrot.lane.b32.xlu0 %v2711, 64
      %v3374 = vpop.permute.xlu0 %3373
      %3375 = vrot.lane.b32.xlu0 %v2712, 64
      %v3376 = vpop.permute.xlu0 %3375
      %3377 = vrot.lane.b32.xlu0 %v2713, 64
      %v3378 = vpop.permute.xlu0 %3377
      %3379 = vrot.lane.b32.xlu0 %v2714, 64
      %v3380 = vpop.permute.xlu0 %3379
      %3381 = vrot.lane.b32.xlu0 %v2715, 64
      %v3382 = vpop.permute.xlu0 %3381
      %3383 = vrot.lane.b32.xlu0 %v2716, 64
      %v3384 = vpop.permute.xlu0 %3383
      %3385 = vrot.lane.b32.xlu0 %v2717, 64
      %v3386 = vpop.permute.xlu0 %3385
      %3387 = vrot.lane.b32.xlu0 %v2718, 64
      %v3388 = vpop.permute.xlu0 %3387
      %3389 = vrot.lane.b32.xlu0 %v2719, 64
      %v3390 = vpop.permute.xlu0 %3389
      %3391 = vrot.lane.b32.xlu0 %v2720, 64
      %v3392 = vpop.permute.xlu0 %3391
      %3457 = vrot.lane.b32.xlu0 %v2721, 96
      %v3458 = vpop.permute.xlu0 %3457
      %3459 = vrot.lane.b32.xlu0 %v2722, 96
      %v3460 = vpop.permute.xlu0 %3459
      %3461 = vrot.lane.b32.xlu0 %v2723, 96
      %v3462 = vpop.permute.xlu0 %3461
      %3463 = vrot.lane.b32.xlu0 %v2724, 96
      %v3464 = vpop.permute.xlu0 %3463
      %3465 = vrot.lane.b32.xlu0 %v2725, 96
      %v3466 = vpop.permute.xlu0 %3465
      %3467 = vrot.lane.b32.xlu0 %v2726, 96
      %v3468 = vpop.permute.xlu0 %3467
      %3469 = vrot.lane.b32.xlu0 %v2727, 96
      %v3470 = vpop.permute.xlu0 %3469
      %3471 = vrot.lane.b32.xlu0 %v2728, 96
      %v3472 = vpop.permute.xlu0 %3471
      %3473 = vrot.lane.b32.xlu0 %v2729, 96
      %v3474 = vpop.permute.xlu0 %3473
      %3475 = vrot.lane.b32.xlu0 %v2730, 96
      %v3476 = vpop.permute.xlu0 %3475
      %3477 = vrot.lane.b32.xlu0 %v2731, 96
      %v3478 = vpop.permute.xlu0 %3477
      %3479 = vrot.lane.b32.xlu0 %v2732, 96
      %v3480 = vpop.permute.xlu0 %3479
      %3481 = vrot.lane.b32.xlu0 %v2733, 96
      %v3482 = vpop.permute.xlu0 %3481
      %3483 = vrot.lane.b32.xlu0 %v2734, 96
      %v3484 = vpop.permute.xlu0 %3483
      %3485 = vrot.lane.b32.xlu0 %v2735, 96
      %v3486 = vpop.permute.xlu0 %3485
      %3487 = vrot.lane.b32.xlu0 %v2736, 96
      %v3488 = vpop.permute.xlu0 %3487
      %3489 = vrot.lane.b32.xlu0 %v2737, 96
      %v3490 = vpop.permute.xlu0 %3489
      %3491 = vrot.lane.b32.xlu0 %v2738, 96
      %v3492 = vpop.permute.xlu0 %3491
      %3493 = vrot.lane.b32.xlu0 %v2739, 96
      %v3494 = vpop.permute.xlu0 %3493
      %3495 = vrot.lane.b32.xlu0 %v2740, 96
      %v3496 = vpop.permute.xlu0 %3495
      %3497 = vrot.lane.b32.xlu0 %v2741, 96
      %v3498 = vpop.permute.xlu0 %3497
      %3499 = vrot.lane.b32.xlu0 %v2742, 96
      %v3500 = vpop.permute.xlu0 %3499
      %3501 = vrot.lane.b32.xlu0 %v2743, 96
      %v3502 = vpop.permute.xlu0 %3501
      %3503 = vrot.lane.b32.xlu0 %v2744, 96
      %v3504 = vpop.permute.xlu0 %3503
      %3505 = vrot.lane.b32.xlu0 %v2745, 96
      %v3506 = vpop.permute.xlu0 %3505
      %3507 = vrot.lane.b32.xlu0 %v2746, 96
      %v3508 = vpop.permute.xlu0 %3507
      %3509 = vrot.lane.b32.xlu0 %v2747, 96
      %v3510 = vpop.permute.xlu0 %3509
      %3511 = vrot.lane.b32.xlu0 %v2748, 96
      %v3512 = vpop.permute.xlu0 %3511
      %3513 = vrot.lane.b32.xlu0 %v2749, 96
      %v3514 = vpop.permute.xlu0 %3513
      %3515 = vrot.lane.b32.xlu0 %v2750, 96
      %v3516 = vpop.permute.xlu0 %3515
      %3517 = vrot.lane.b32.xlu0 %v2751, 96
      %v3518 = vpop.permute.xlu0 %3517
      %3519 = vrot.lane.b32.xlu0 %v2752, 96
      %v3520 = vpop.permute.xlu0 %3519
      %v3553 = vsel %vm488, %v2496, %v2818
      %v3554 = vsel %vm488, %v2497, %v2820
      %v3555 = vsel %vm488, %v2498, %v2822
      %v3556 = vsel %vm488, %v2499, %v2824
      %v3557 = vsel %vm488, %v2500, %v2826
      %v3558 = vsel %vm488, %v2501, %v2828
      %v3559 = vsel %vm488, %v2502, %v2830
      %v3560 = vsel %vm488, %v2503, %v2832
      %v3561 = vsel %vm488, %v2504, %v2834
      %v3562 = vsel %vm488, %v2505, %v2836
      %v3563 = vsel %vm488, %v2506, %v2838
      %v3564 = vsel %vm488, %v2507, %v2840
      %v3565 = vsel %vm488, %v2508, %v2842
      %v3566 = vsel %vm488, %v2509, %v2844
      %v3567 = vsel %vm488, %v2510, %v2846
      %v3568 = vsel %vm488, %v2511, %v2848
      %v3569 = vsel %vm488, %v2512, %v2850
      %v3570 = vsel %vm488, %v2513, %v2852
      %v3571 = vsel %vm488, %v2514, %v2854
      %v3572 = vsel %vm488, %v2515, %v2856
      %v3573 = vsel %vm488, %v2516, %v2858
      %v3574 = vsel %vm488, %v2517, %v2860
      %v3575 = vsel %vm488, %v2518, %v2862
      %v3576 = vsel %vm488, %v2519, %v2864
      %v3577 = vsel %vm488, %v2520, %v2866
      %v3578 = vsel %vm488, %v2521, %v2868
      %v3579 = vsel %vm488, %v2522, %v2870
      %v3580 = vsel %vm488, %v2523, %v2872
      %v3581 = vsel %vm488, %v2524, %v2874
      %v3582 = vsel %vm488, %v2525, %v2876
      %v3583 = vsel %vm488, %v2526, %v2878
      %v3584 = vsel %vm488, %v2527, %v2880
      %vm3585 = vcmask 523264
      %v3586 = vsel %vm3585, %v3553, %v2946
      %v3587 = vsel %vm3585, %v3554, %v2948
      %v3588 = vsel %vm3585, %v3555, %v2950
      %v3589 = vsel %vm3585, %v3556, %v2952
      %v3590 = vsel %vm3585, %v3557, %v2954
      %v3591 = vsel %vm3585, %v3558, %v2956
      %v3592 = vsel %vm3585, %v3559, %v2958
      %v3593 = vsel %vm3585, %v3560, %v2960
      %v3594 = vsel %vm3585, %v3561, %v2962
      %v3595 = vsel %vm3585, %v3562, %v2964
      %v3596 = vsel %vm3585, %v3563, %v2966
      %v3597 = vsel %vm3585, %v3564, %v2968
      %v3598 = vsel %vm3585, %v3565, %v2970
      %v3599 = vsel %vm3585, %v3566, %v2972
      %v3600 = vsel %vm3585, %v3567, %v2974
      %v3601 = vsel %vm3585, %v3568, %v2976
      %v3602 = vsel %vm3585, %v3569, %v2978
      %v3603 = vsel %vm3585, %v3570, %v2980
      %v3604 = vsel %vm3585, %v3571, %v2982
      %v3605 = vsel %vm3585, %v3572, %v2984
      %v3606 = vsel %vm3585, %v3573, %v2986
      %v3607 = vsel %vm3585, %v3574, %v2988
      %v3608 = vsel %vm3585, %v3575, %v2990
      %v3609 = vsel %vm3585, %v3576, %v2992
      %v3610 = vsel %vm3585, %v3577, %v2994
      %v3611 = vsel %vm3585, %v3578, %v2996
      %v3612 = vsel %vm3585, %v3579, %v2998
      %v3613 = vsel %vm3585, %v3580, %v3000
      %v3614 = vsel %vm3585, %v3581, %v3002
      %v3615 = vsel %vm3585, %v3582, %v3004
      %v3616 = vsel %vm3585, %v3583, %v3006
      %v3617 = vsel %vm3585, %v3584, %v3008
      %vm3618 = vcmask 785408
      %v3619 = vsel %vm3618, %v3586, %v3074
      %v3620 = vsel %vm3618, %v3587, %v3076
      %v3621 = vsel %vm3618, %v3588, %v3078
      %v3622 = vsel %vm3618, %v3589, %v3080
      %v3623 = vsel %vm3618, %v3590, %v3082
      %v3624 = vsel %vm3618, %v3591, %v3084
      %v3625 = vsel %vm3618, %v3592, %v3086
      %v3626 = vsel %vm3618, %v3593, %v3088
      %v3627 = vsel %vm3618, %v3594, %v3090
      %v3628 = vsel %vm3618, %v3595, %v3092
      %v3629 = vsel %vm3618, %v3596, %v3094
      %v3630 = vsel %vm3618, %v3597, %v3096
      %v3631 = vsel %vm3618, %v3598, %v3098
      %v3632 = vsel %vm3618, %v3599, %v3100
      %v3633 = vsel %vm3618, %v3600, %v3102
      %v3634 = vsel %vm3618, %v3601, %v3104
      %v3635 = vsel %vm3618, %v3602, %v3106
      %v3636 = vsel %vm3618, %v3603, %v3108
      %v3637 = vsel %vm3618, %v3604, %v3110
      %v3638 = vsel %vm3618, %v3605, %v3112
      %v3639 = vsel %vm3618, %v3606, %v3114
      %v3640 = vsel %vm3618, %v3607, %v3116
      %v3641 = vsel %vm3618, %v3608, %v3118
      %v3642 = vsel %vm3618, %v3609, %v3120
      %v3643 = vsel %vm3618, %v3610, %v3122
      %v3644 = vsel %vm3618, %v3611, %v3124
      %v3645 = vsel %vm3618, %v3612, %v3126
      %v3646 = vsel %vm3618, %v3613, %v3128
      %v3647 = vsel %vm3618, %v3614, %v3130
      %v3648 = vsel %vm3618, %v3615, %v3132
      %v3649 = vsel %vm3618, %v3616, %v3134
      %v3650 = vsel %vm3618, %v3617, %v3136
      %v3651 = vsel %vm488, %v2624, %v3202
      %v3652 = vsel %vm488, %v2625, %v3204
      %v3653 = vsel %vm488, %v2626, %v3206
      %v3654 = vsel %vm488, %v2627, %v3208
      %v3655 = vsel %vm488, %v2628, %v3210
      %v3656 = vsel %vm488, %v2629, %v3212
      %v3657 = vsel %vm488, %v2630, %v3214
      %v3658 = vsel %vm488, %v2631, %v3216
      %v3659 = vsel %vm488, %v2632, %v3218
      %v3660 = vsel %vm488, %v2633, %v3220
      %v3661 = vsel %vm488, %v2634, %v3222
      %v3662 = vsel %vm488, %v2635, %v3224
      %v3663 = vsel %vm488, %v2636, %v3226
      %v3664 = vsel %vm488, %v2637, %v3228
      %v3665 = vsel %vm488, %v2638, %v3230
      %v3666 = vsel %vm488, %v2639, %v3232
      %v3667 = vsel %vm488, %v2640, %v3234
      %v3668 = vsel %vm488, %v2641, %v3236
      %v3669 = vsel %vm488, %v2642, %v3238
      %v3670 = vsel %vm488, %v2643, %v3240
      %v3671 = vsel %vm488, %v2644, %v3242
      %v3672 = vsel %vm488, %v2645, %v3244
      %v3673 = vsel %vm488, %v2646, %v3246
      %v3674 = vsel %vm488, %v2647, %v3248
      %v3675 = vsel %vm488, %v2648, %v3250
      %v3676 = vsel %vm488, %v2649, %v3252
      %v3677 = vsel %vm488, %v2650, %v3254
      %v3678 = vsel %vm488, %v2651, %v3256
      %v3679 = vsel %vm488, %v2652, %v3258
      %v3680 = vsel %vm488, %v2653, %v3260
      %v3681 = vsel %vm488, %v2654, %v3262
      %v3682 = vsel %vm488, %v2655, %v3264
      %v3683 = vsel %vm3585, %v3651, %v3330
      %v3684 = vsel %vm3585, %v3652, %v3332
      %v3685 = vsel %vm3585, %v3653, %v3334
      %v3686 = vsel %vm3585, %v3654, %v3336
      %v3687 = vsel %vm3585, %v3655, %v3338
      %v3688 = vsel %vm3585, %v3656, %v3340
      %v3689 = vsel %vm3585, %v3657, %v3342
      %v3690 = vsel %vm3585, %v3658, %v3344
      %v3691 = vsel %vm3585, %v3659, %v3346
      %v3692 = vsel %vm3585, %v3660, %v3348
      %v3693 = vsel %vm3585, %v3661, %v3350
      %v3694 = vsel %vm3585, %v3662, %v3352
      %v3695 = vsel %vm3585, %v3663, %v3354
      %v3696 = vsel %vm3585, %v3664, %v3356
      %v3697 = vsel %vm3585, %v3665, %v3358
      %v3698 = vsel %vm3585, %v3666, %v3360
      %v3699 = vsel %vm3585, %v3667, %v3362
      %v3700 = vsel %vm3585, %v3668, %v3364
      %v3701 = vsel %vm3585, %v3669, %v3366
      %v3702 = vsel %vm3585, %v3670, %v3368
      %v3703 = vsel %vm3585, %v3671, %v3370
      %v3704 = vsel %vm3585, %v3672, %v3372
      %v3705 = vsel %vm3585, %v3673, %v3374
      %v3706 = vsel %vm3585, %v3674, %v3376
      %v3707 = vsel %vm3585, %v3675, %v3378
      %v3708 = vsel %vm3585, %v3676, %v3380
      %v3709 = vsel %vm3585, %v3677, %v3382
      %v3710 = vsel %vm3585, %v3678, %v3384
      %v3711 = vsel %vm3585, %v3679, %v3386
      %v3712 = vsel %vm3585, %v3680, %v3388
      %v3713 = vsel %vm3585, %v3681, %v3390
      %v3714 = vsel %vm3585, %v3682, %v3392
      %v3715 = vsel %vm3618, %v3683, %v3458
      %v3716 = vsel %vm3618, %v3684, %v3460
      %v3717 = vsel %vm3618, %v3685, %v3462
      %v3718 = vsel %vm3618, %v3686, %v3464
      %v3719 = vsel %vm3618, %v3687, %v3466
      %v3720 = vsel %vm3618, %v3688, %v3468
      %v3721 = vsel %vm3618, %v3689, %v3470
      %v3722 = vsel %vm3618, %v3690, %v3472
      %v3723 = vsel %vm3618, %v3691, %v3474
      %v3724 = vsel %vm3618, %v3692, %v3476
      %v3725 = vsel %vm3618, %v3693, %v3478
      %v3726 = vsel %vm3618, %v3694, %v3480
      %v3727 = vsel %vm3618, %v3695, %v3482
      %v3728 = vsel %vm3618, %v3696, %v3484
      %v3729 = vsel %vm3618, %v3697, %v3486
      %v3730 = vsel %vm3618, %v3698, %v3488
      %v3731 = vsel %vm3618, %v3699, %v3490
      %v3732 = vsel %vm3618, %v3700, %v3492
      %v3733 = vsel %vm3618, %v3701, %v3494
      %v3734 = vsel %vm3618, %v3702, %v3496
      %v3735 = vsel %vm3618, %v3703, %v3498
      %v3736 = vsel %vm3618, %v3704, %v3500
      %v3737 = vsel %vm3618, %v3705, %v3502
      %v3738 = vsel %vm3618, %v3706, %v3504
      %v3739 = vsel %vm3618, %v3707, %v3506
      %v3740 = vsel %vm3618, %v3708, %v3508
      %v3741 = vsel %vm3618, %v3709, %v3510
      %v3742 = vsel %vm3618, %v3710, %v3512
      %v3743 = vsel %vm3618, %v3711, %v3514
      %v3744 = vsel %vm3618, %v3712, %v3516
      %v3745 = vsel %vm3618, %v3713, %v3518
      %v3746 = vsel %vm3618, %v3714, %v3520
      %v3747 = vpack.c.bf16 %v3620, %v3619
      %v3748 = vpack.c.bf16 %v3716, %v3715
      %v3749 = vpack.c.bf16 %v2754, %v2753
      %v3750 = vpack.c.bf16 %v3622, %v3621
      %v3751 = vpack.c.bf16 %v3718, %v3717
      %v3752 = vpack.c.bf16 %v2756, %v2755
      %v3753 = vpack.c.bf16 %v3624, %v3623
      %v3754 = vpack.c.bf16 %v3720, %v3719
      %v3755 = vpack.c.bf16 %v2758, %v2757
      %v3756 = vpack.c.bf16 %v3626, %v3625
      %v3757 = vpack.c.bf16 %v3722, %v3721
      %v3758 = vpack.c.bf16 %v2760, %v2759
      %v3759 = vpack.c.bf16 %v3628, %v3627
      %v3760 = vpack.c.bf16 %v3724, %v3723
      %v3761 = vpack.c.bf16 %v2762, %v2761
      %v3762 = vpack.c.bf16 %v3630, %v3629
      %v3763 = vpack.c.bf16 %v3726, %v3725
      %v3764 = vpack.c.bf16 %v2764, %v2763
      %v3765 = vpack.c.bf16 %v3632, %v3631
      %v3766 = vpack.c.bf16 %v3728, %v3727
      %v3767 = vpack.c.bf16 %v2766, %v2765
      %v3768 = vpack.c.bf16 %v3634, %v3633
      %v3769 = vpack.c.bf16 %v3730, %v3729
      %v3770 = vpack.c.bf16 %v2768, %v2767
      %v3771 = vpack.c.bf16 %v3636, %v3635
      %v3772 = vpack.c.bf16 %v3732, %v3731
      %v3773 = vpack.c.bf16 %v2770, %v2769
      %v3774 = vpack.c.bf16 %v3638, %v3637
      %v3775 = vpack.c.bf16 %v3734, %v3733
      %v3776 = vpack.c.bf16 %v2772, %v2771
      %v3777 = vpack.c.bf16 %v3640, %v3639
      %v3778 = vpack.c.bf16 %v3736, %v3735
      %v3779 = vpack.c.bf16 %v2774, %v2773
      %v3780 = vpack.c.bf16 %v3642, %v3641
      %v3781 = vpack.c.bf16 %v3738, %v3737
      %v3782 = vpack.c.bf16 %v2776, %v2775
      %v3783 = vpack.c.bf16 %v3644, %v3643
      %v3784 = vpack.c.bf16 %v3740, %v3739
      %v3785 = vpack.c.bf16 %v2778, %v2777
      %v3786 = vpack.c.bf16 %v3646, %v3645
      %v3787 = vpack.c.bf16 %v3742, %v3741
      %v3788 = vpack.c.bf16 %v2780, %v2779
      %v3789 = vpack.c.bf16 %v3648, %v3647
      %v3790 = vpack.c.bf16 %v3744, %v3743
      %v3791 = vpack.c.bf16 %v2782, %v2781
      %v3792 = vpack.c.bf16 %v3650, %v3649
      %v3793 = vpack.c.bf16 %v3746, %v3745
      %v3794 = vpack.c.bf16 %v2784, %v2783
      %v3795 = vld [vmem:[%s3] sm:$0xf]
      %v3796 = vld [vmem:[%s3 + $0x4] sm:$0xf]
      %v3797 = vld [vmem:[%s3 + $0x8] sm:$0xf]
      %v3798 = vld [vmem:[%s3 + $0xc] sm:$0xf]
      %v3799 = vld [vmem:[%s3 + $0x10] sm:$0xf]
      %v3800 = vld [vmem:[%s3 + $0x14] sm:$0xf]
      %v3801 = vld [vmem:[%s3 + $0x18] sm:$0xf]
      %v3802 = vld [vmem:[%s3 + $0x1c] sm:$0xf]
      %v3803 = vld [vmem:[%s3 + $0x20] sm:$0xf]
      %v3804 = vld [vmem:[%s3 + $0x24] sm:$0xf]
      %v3805 = vld [vmem:[%s3 + $0x28] sm:$0xf]
      %v3806 = vld [vmem:[%s3 + $0x2c] sm:$0xf]
      %v3807 = vld [vmem:[%s3 + $0x30] sm:$0xf]
      %v3808 = vld [vmem:[%s3 + $0x34] sm:$0xf]
      %v3809 = vld [vmem:[%s3 + $0x38] sm:$0xf]
      %v3810 = vld [vmem:[%s3 + $0x3c] sm:$0xf]
      %v3811 = vld [vmem:[%s3 + $0x40] sm:$0xf]
      %v3812 = vld [vmem:[%s3 + $0x44] sm:$0xf]
      %v3813 = vld [vmem:[%s3 + $0x48] sm:$0xf]
      %v3814 = vld [vmem:[%s3 + $0x4c] sm:$0xf]
      %v3815 = vld [vmem:[%s3 + $0x50] sm:$0xf]
      %v3816 = vld [vmem:[%s3 + $0x54] sm:$0xf]
      %v3817 = vld [vmem:[%s3 + $0x58] sm:$0xf]
      %v3818 = vld [vmem:[%s3 + $0x5c] sm:$0xf]
      %v3819 = vld [vmem:[%s3 + $0x60] sm:$0xf]
      %v3820 = vld [vmem:[%s3 + $0x64] sm:$0xf]
      %v3821 = vld [vmem:[%s3 + $0x68] sm:$0xf]
      %v3822 = vld [vmem:[%s3 + $0x6c] sm:$0xf]
      %v3823 = vld [vmem:[%s3 + $0x70] sm:$0xf]
      %v3824 = vld [vmem:[%s3 + $0x74] sm:$0xf]
      %v3825 = vld [vmem:[%s3 + $0x78] sm:$0xf]
      %v3826 = vld [vmem:[%s3 + $0x7c] sm:$0xf]
      %v3827 = vld [vmem:[%s3 + $0x80] sm:$0xf]
      %v3828 = vld [vmem:[%s3 + $0x84] sm:$0xf]
      %v3829 = vld [vmem:[%s3 + $0x88] sm:$0xf]
      %v3830 = vld [vmem:[%s3 + $0x8c] sm:$0xf]
      %v3831 = vld [vmem:[%s4] sm:$0x1]
      %v3833 = vlaneseq
      %v3834 = vshrl.u32 %v3833, 7
      %v3835 = vsub.s32 0, %v3834
      %v3836 = vrot.slane %v3831, %v3835
      %v3874 = vunpack.c.l.b16 %v3795
      %v3875 = vunpack.c.l.b16 %v3796
      %v3876 = vunpack.c.l.b16 %v3797
      %v3877 = vunpack.c.l.b16 %v3798
      %v3878 = vunpack.c.l.b16 %v3799
      %v3879 = vunpack.c.l.b16 %v3800
      %v3880 = vunpack.c.l.b16 %v3801
      %v3881 = vunpack.c.l.b16 %v3802
      %v3882 = vunpack.c.l.b16 %v3803
      %v3883 = vunpack.c.l.b16 %v3804
      %v3884 = vunpack.c.l.b16 %v3805
      %v3885 = vunpack.c.l.b16 %v3806
      %v3886 = vunpack.c.l.b16 %v3807
      %v3887 = vunpack.c.l.b16 %v3808
      %v3888 = vunpack.c.l.b16 %v3809
      %v3889 = vunpack.c.l.b16 %v3810
      %v3890 = vunpack.c.l.b16 %v3811
      %v3891 = vunpack.c.l.b16 %v3812
      %v3892 = vunpack.c.l.b16 %v3813
      %v3893 = vunpack.c.l.b16 %v3814
      %v3894 = vunpack.c.l.b16 %v3815
      %v3895 = vunpack.c.l.b16 %v3816
      %v3896 = vunpack.c.l.b16 %v3817
      %v3897 = vunpack.c.l.b16 %v3818
      %v3898 = vunpack.c.l.b16 %v3819
      %v3899 = vunpack.c.l.b16 %v3820
      %v3900 = vunpack.c.l.b16 %v3821
      %v3901 = vunpack.c.l.b16 %v3822
      %v3902 = vunpack.c.l.b16 %v3823
      %v3903 = vunpack.c.l.b16 %v3824
      %v3904 = vunpack.c.l.b16 %v3825
      %v3905 = vunpack.c.l.b16 %v3826
      %v3906 = vunpack.c.l.b16 %v3827
      %v3907 = vunpack.c.l.b16 %v3828
      %v3908 = vunpack.c.l.b16 %v3829
      %v3909 = vunpack.c.l.b16 %v3830
      %v3910 = vpack.c.b16 %v3875, %v3874
      %v3911 = vpack.c.b16 %v3877, %v3876
      %v3912 = vpack.c.b16 %v3879, %v3878
      %v3913 = vpack.c.b16 %v3881, %v3880
      %v3914 = vpack.c.b16 %v3883, %v3882
      %v3915 = vpack.c.b16 %v3885, %v3884
      %v3916 = vpack.c.b16 %v3887, %v3886
      %v3917 = vpack.c.b16 %v3889, %v3888
      %v3918 = vpack.c.b16 %v3891, %v3890
      %v3919 = vpack.c.b16 %v3893, %v3892
      %v3920 = vpack.c.b16 %v3895, %v3894
      %v3921 = vpack.c.b16 %v3897, %v3896
      %v3922 = vpack.c.b16 %v3899, %v3898
      %v3923 = vpack.c.b16 %v3901, %v3900
      %v3924 = vpack.c.b16 %v3903, %v3902
      %v3925 = vpack.c.b16 %v3905, %v3904
      %v3926 = vpack.c.b16 %v3907, %v3906
      %v3927 = vpack.c.b16 %v3909, %v3908
      %v3947 = vsel %vm488, %v3749, 0
      %v3950 = vsel %vm488, %v3752, 0
      %v3953 = vsel %vm488, %v3755, 0
      %v3956 = vsel %vm488, %v3758, 0
      %v3959 = vsel %vm488, %v3761, 0
      %v3962 = vsel %vm488, %v3764, 0
      %v3965 = vsel %vm488, %v3767, 0
      %v3968 = vsel %vm488, %v3770, 0
      %v3971 = vsel %vm488, %v3773, 0
      %v3974 = vsel %vm488, %v3776, 0
      %v3977 = vsel %vm488, %v3779, 0
      %v3980 = vsel %vm488, %v3782, 0
      %v3983 = vsel %vm488, %v3785, 0
      %v3986 = vsel %vm488, %v3788, 0
      %v3989 = vsel %vm488, %v3791, 0
      %v3992 = vsel %vm488, %v3794, 0
      %3994 = vmatprep.subr.bf16.mxu0 0
      %3995 = vmatpush1.bf16.msra.mxu0 %v3910
      %3996 = vmatprep.subr.bf16.mxu0 0
      %3997 = vmatpush1.bf16.msra.mxu0 %v3911
      %3998 = vmatprep.subr.bf16.mxu0 0
      %3999 = vmatpush1.bf16.msra.mxu0 %v3912
      %4000 = vmatprep.subr.bf16.mxu0 0
      %4001 = vmatpush1.bf16.msra.mxu0 %v3913
      %4002 = vmatprep.subr.bf16.mxu0 0
      %4003 = vmatpush1.bf16.msra.mxu0 %v3914
      %4004 = vmatprep.subr.bf16.mxu0 0
      %4005 = vmatpush1.bf16.msra.mxu0 %v3915
      %4006 = vmatprep.subr.bf16.mxu0 0
      %4007 = vmatpush1.bf16.msra.mxu0 %v3916
      %4008 = vmatprep.subr.bf16.mxu0 0
      %4009 = vmatpush1.bf16.msra.mxu0 %v3917
      %4010 = vmatprep.subr.bf16.mxu0 0
      %4011 = vmatpush1.bf16.msra.mxu0 %v3918
      %4012 = vmatprep.subr.bf16.mxu0 0
      %4013 = vmatpush1.bf16.msra.mxu0 %v3919
      %4014 = vmatprep.subr.bf16.mxu0 0
      %4015 = vmatpush1.bf16.msra.mxu0 %v3920
      %4016 = vmatprep.subr.bf16.mxu0 0
      %4017 = vmatpush1.bf16.msra.mxu0 %v3921
      %4018 = vmatprep.subr.bf16.mxu0 0
      %4019 = vmatpush1.bf16.msra.mxu0 %v3922
      %4020 = vmatprep.subr.bf16.mxu0 0
      %4021 = vmatpush1.bf16.msra.mxu0 %v3923
      %4022 = vmatprep.subr.bf16.mxu0 0
      %4023 = vmatpush1.bf16.msra.mxu0 %v3924
      %4024 = vmatprep.subr.bf16.mxu0 0
      %4025 = vmatpush1.bf16.msra.mxu0 %v3925
      %4026 = vmatprep.mubr.bf16.mxu0 %v3748
      %4027 = vmatmul.mubr.bf16.gmra.mrb[0].mxu0 %v3747
      %v4028 = vpop.f32.mrb[0].mxu0
      %v4029 = vadd.f32 %v3836, %v4028
      %v4030 = vpop.f32.mrb[0].mxu0
      %v4031 = vpop.f32.mrb[0].mxu0
      %v4032 = vadd.f32 %v3836, %v4031
      %v4033 = vpop.f32.mrb[0].mxu0
      %4034 = vmatprep.mubr.bf16.mxu0 %v3751
      %4035 = vmatmul.mubr.bf16.gmra.mrb[0].mxu0 %v3750
      %v4036 = vpop.f32.mrb[0].mxu0
      %v4037 = vadd.f32 %v3836, %v4036
      %v4038 = vpop.f32.mrb[0].mxu0
      %v4039 = vpop.f32.mrb[0].mxu0
      %v4040 = vadd.f32 %v3836, %v4039
      %v4041 = vpop.f32.mrb[0].mxu0
      %4042 = vmatprep.mubr.bf16.mxu0 %v3754
      %4043 = vmatmul.mubr.bf16.gmra.mrb[0].mxu0 %v3753
      %v4044 = vpop.f32.mrb[0].mxu0
      %v4045 = vadd.f32 %v3836, %v4044
      %v4046 = vpop.f32.mrb[0].mxu0
      %v4047 = vpop.f32.mrb[0].mxu0
      %v4048 = vadd.f32 %v3836, %v4047
      %v4049 = vpop.f32.mrb[0].mxu0
      %4050 = vmatprep.mubr.bf16.mxu0 %v3757
      %4051 = vmatmul.mubr.bf16.gmra.mrb[0].mxu0 %v3756
      %v4052 = vpop.f32.mrb[0].mxu0
      %v4053 = vadd.f32 %v3836, %v4052
      %v4054 = vpop.f32.mrb[0].mxu0
      %v4055 = vpop.f32.mrb[0].mxu0
      %v4056 = vadd.f32 %v3836, %v4055
      %v4057 = vpop.f32.mrb[0].mxu0
      %4058 = vmatprep.mubr.bf16.mxu0 %v3760
      %4059 = vmatmul.mubr.bf16.gmra.mrb[0].mxu0 %v3759
      %v4060 = vpop.f32.mrb[0].mxu0
      %v4061 = vadd.f32 %v3836, %v4060
      %v4062 = vpop.f32.mrb[0].mxu0
      %v4063 = vpop.f32.mrb[0].mxu0
      %v4064 = vadd.f32 %v3836, %v4063
      %v4065 = vpop.f32.mrb[0].mxu0
      %4066 = vmatprep.mubr.bf16.mxu0 %v3763
      %4067 = vmatmul.mubr.bf16.gmra.mrb[0].mxu0 %v3762
      %v4068 = vpop.f32.mrb[0].mxu0
      %v4069 = vadd.f32 %v3836, %v4068
      %v4070 = vpop.f32.mrb[0].mxu0
      %v4071 = vpop.f32.mrb[0].mxu0
      %v4072 = vadd.f32 %v3836, %v4071
      %v4073 = vpop.f32.mrb[0].mxu0
      %4074 = vmatprep.mubr.bf16.mxu0 %v3766
      %4075 = vmatmul.mubr.bf16.gmra.mrb[0].mxu0 %v3765
      %v4076 = vpop.f32.mrb[0].mxu0
      %v4077 = vadd.f32 %v3836, %v4076
      %v4078 = vpop.f32.mrb[0].mxu0
      %v4079 = vpop.f32.mrb[0].mxu0
      %v4080 = vadd.f32 %v3836, %v4079
      %v4081 = vpop.f32.mrb[0].mxu0
      %4082 = vmatprep.mubr.bf16.mxu0 %v3769
      %4083 = vmatmul.mubr.bf16.gmra.mrb[0].mxu0 %v3768
      %v4084 = vpop.f32.mrb[0].mxu0
      %v4085 = vadd.f32 %v3836, %v4084
      %v4086 = vpop.f32.mrb[0].mxu0
      %v4087 = vpop.f32.mrb[0].mxu0
      %v4088 = vadd.f32 %v3836, %v4087
      %v4089 = vpop.f32.mrb[0].mxu0
      %4090 = vmatprep.mubr.bf16.mxu0 %v3772
      %4091 = vmatmul.mubr.bf16.gmra.mrb[0].mxu0 %v3771
      %v4092 = vpop.f32.mrb[0].mxu0
      %v4093 = vadd.f32 %v3836, %v4092
      %v4094 = vpop.f32.mrb[0].mxu0
      %v4095 = vpop.f32.mrb[0].mxu0
      %v4096 = vadd.f32 %v3836, %v4095
      %v4097 = vpop.f32.mrb[0].mxu0
      %4098 = vmatprep.mubr.bf16.mxu0 %v3775
      %4099 = vmatmul.mubr.bf16.gmra.mrb[0].mxu0 %v3774
      %v4100 = vpop.f32.mrb[0].mxu0
      %v4101 = vadd.f32 %v3836, %v4100
      %v4102 = vpop.f32.mrb[0].mxu0
      %v4103 = vpop.f32.mrb[0].mxu0
      %v4104 = vadd.f32 %v3836, %v4103
      %v4105 = vpop.f32.mrb[0].mxu0
      %4106 = vmatprep.mubr.bf16.mxu0 %v3778
      %4107 = vmatmul.mubr.bf16.gmra.mrb[0].mxu0 %v3777
      %v4108 = vpop.f32.mrb[0].mxu0
      %v4109 = vadd.f32 %v3836, %v4108
      %v4110 = vpop.f32.mrb[0].mxu0
      %v4111 = vpop.f32.mrb[0].mxu0
      %v4112 = vadd.f32 %v3836, %v4111
      %v4113 = vpop.f32.mrb[0].mxu0
      %4114 = vmatprep.mubr.bf16.mxu0 %v3781
      %4115 = vmatmul.mubr.bf16.gmra.mrb[0].mxu0 %v3780
      %v4116 = vpop.f32.mrb[0].mxu0
      %v4117 = vadd.f32 %v3836, %v4116
      %v4118 = vpop.f32.mrb[0].mxu0
      %v4119 = vpop.f32.mrb[0].mxu0
      %v4120 = vadd.f32 %v3836, %v4119
      %v4121 = vpop.f32.mrb[0].mxu0
      %4122 = vmatprep.mubr.bf16.mxu0 %v3784
      %4123 = vmatmul.mubr.bf16.gmra.mrb[0].mxu0 %v3783
      %v4124 = vpop.f32.mrb[0].mxu0
      %v4125 = vadd.f32 %v3836, %v4124
      %v4126 = vpop.f32.mrb[0].mxu0
      %v4127 = vpop.f32.mrb[0].mxu0
      %v4128 = vadd.f32 %v3836, %v4127
      %v4129 = vpop.f32.mrb[0].mxu0
      %4130 = vmatprep.mubr.bf16.mxu0 %v3787
      %4131 = vmatmul.mubr.bf16.gmra.mrb[0].mxu0 %v3786
      %v4132 = vpop.f32.mrb[0].mxu0
      %v4133 = vadd.f32 %v3836, %v4132
      %v4134 = vpop.f32.mrb[0].mxu0
      %v4135 = vpop.f32.mrb[0].mxu0
      %v4136 = vadd.f32 %v3836, %v4135
      %v4137 = vpop.f32.mrb[0].mxu0
      %4138 = vmatprep.mubr.bf16.mxu0 %v3790
      %4139 = vmatmul.mubr.bf16.gmra.mrb[0].mxu0 %v3789
      %v4140 = vpop.f32.mrb[0].mxu0
      %v4141 = vadd.f32 %v3836, %v4140
      %v4142 = vpop.f32.mrb[0].mxu0
      %v4143 = vpop.f32.mrb[0].mxu0
      %v4144 = vadd.f32 %v3836, %v4143
      %v4145 = vpop.f32.mrb[0].mxu0
      %4146 = vmatprep.mubr.bf16.mxu0 %v3793
      %4147 = vmatmul.mubr.bf16.gmra.mrb[0].mxu0 %v3792
      %v4148 = vpop.f32.mrb[0].mxu0
      %v4149 = vadd.f32 %v3836, %v4148
      %v4150 = vpop.f32.mrb[0].mxu0
      %v4151 = vpop.f32.mrb[0].mxu0
      %v4152 = vadd.f32 %v3836, %v4151
      %v4153 = vpop.f32.mrb[0].mxu0
      %4154 = vdwg.mxu0
      %4155 = vmatprep.subr.bf16.mxu0 0
      %4156 = vmatpush1.bf16.msra.mxu0 %v3926
      %4157 = vmatprep.subr.bf16.mxu0 0
      %4158 = vmatpush1.bf16.msra.mxu0 %v3927
      %4159 = vmatprep.subr.bf16.mxu0 0
      %4160 = vmatpush1.bf16.msra.mxu0 0
      %4161 = vmatprep.subr.bf16.mxu0 0
      %4162 = vmatpush1.bf16.msra.mxu0 0
      %4163 = vmatprep.subr.bf16.mxu0 0
      %4164 = vmatpush1.bf16.msra.mxu0 0
      %4165 = vmatprep.subr.bf16.mxu0 0
      %4166 = vmatpush1.bf16.msra.mxu0 0
      %4167 = vmatprep.subr.bf16.mxu0 0
      %4168 = vmatpush1.bf16.msra.mxu0 0
      %4169 = vmatprep.subr.bf16.mxu0 0
      %4170 = vmatpush1.bf16.msra.mxu0 0
      %4171 = vmatprep.subr.bf16.mxu0 0
      %4172 = vmatpush1.bf16.msra.mxu0 0
      %4173 = vmatprep.subr.bf16.mxu0 0
      %4174 = vmatpush1.bf16.msra.mxu0 0
      %4175 = vmatprep.subr.bf16.mxu0 0
      %4176 = vmatpush1.bf16.msra.mxu0 0
      %4177 = vmatprep.subr.bf16.mxu0 0
      %4178 = vmatpush1.bf16.msra.mxu0 0
      %4179 = vmatprep.subr.bf16.mxu0 0
      %4180 = vmatpush1.bf16.msra.mxu0 0
      %4181 = vmatprep.subr.bf16.mxu0 0
      %4182 = vmatpush1.bf16.msra.mxu0 0
      %4183 = vmatprep.subr.bf16.mxu0 0
      %4184 = vmatpush1.bf16.msra.mxu0 0
      %4185 = vmatprep.subr.bf16.mxu0 0
      %4186 = vmatpush1.bf16.msra.mxu0 0
      %4187 = vmatprep.mubr.bf16.mxu0 0
      %4188 = vmatmul.mubr.bf16.gmra.mrb[0].mxu0 %v3947
      %v4189 = vpop.f32.mrb[0].mxu0
      %v4190 = vadd.f32 %v4029, %v4189
      %v4191 = vpop.f32.mrb[0].mxu0
      %v4192 = vpop.f32.mrb[0].mxu0
      %v4193 = vadd.f32 %v4032, %v4192
      %v4194 = vpop.f32.mrb[0].mxu0
      %4195 = vmatprep.mubr.bf16.mxu0 0
      %4196 = vmatmul.mubr.bf16.gmra.mrb[0].mxu0 %v3950
      %v4197 = vpop.f32.mrb[0].mxu0
      %v4198 = vadd.f32 %v4037, %v4197
      %v4199 = vpop.f32.mrb[0].mxu0
      %v4200 = vpop.f32.mrb[0].mxu0
      %v4201 = vadd.f32 %v4040, %v4200
      %v4202 = vpop.f32.mrb[0].mxu0
      %4203 = vmatprep.mubr.bf16.mxu0 0
      %4204 = vmatmul.mubr.bf16.gmra.mrb[0].mxu0 %v3953
      %v4205 = vpop.f32.mrb[0].mxu0
      %v4206 = vadd.f32 %v4045, %v4205
      %v4207 = vpop.f32.mrb[0].mxu0
      %v4208 = vpop.f32.mrb[0].mxu0
      %v4209 = vadd.f32 %v4048, %v4208
      %v4210 = vpop.f32.mrb[0].mxu0
      %4211 = vmatprep.mubr.bf16.mxu0 0
      %4212 = vmatmul.mubr.bf16.gmra.mrb[0].mxu0 %v3956
      %v4213 = vpop.f32.mrb[0].mxu0
      %v4214 = vadd.f32 %v4053, %v4213
      %v4215 = vpop.f32.mrb[0].mxu0
      %v4216 = vpop.f32.mrb[0].mxu0
      %v4217 = vadd.f32 %v4056, %v4216
      %v4218 = vpop.f32.mrb[0].mxu0
      %4219 = vmatprep.mubr.bf16.mxu0 0
      %4220 = vmatmul.mubr.bf16.gmra.mrb[0].mxu0 %v3959
      %v4221 = vpop.f32.mrb[0].mxu0
      %v4222 = vadd.f32 %v4061, %v4221
      %v4223 = vpop.f32.mrb[0].mxu0
      %v4224 = vpop.f32.mrb[0].mxu0
      %v4225 = vadd.f32 %v4064, %v4224
      %v4226 = vpop.f32.mrb[0].mxu0
      %4227 = vmatprep.mubr.bf16.mxu0 0
      %4228 = vmatmul.mubr.bf16.gmra.mrb[0].mxu0 %v3962
      %v4229 = vpop.f32.mrb[0].mxu0
      %v4230 = vadd.f32 %v4069, %v4229
      %v4231 = vpop.f32.mrb[0].mxu0
      %v4232 = vpop.f32.mrb[0].mxu0
      %v4233 = vadd.f32 %v4072, %v4232
      %v4234 = vpop.f32.mrb[0].mxu0
      %4235 = vmatprep.mubr.bf16.mxu0 0
      %4236 = vmatmul.mubr.bf16.gmra.mrb[0].mxu0 %v3965
      %v4237 = vpop.f32.mrb[0].mxu0
      %v4238 = vadd.f32 %v4077, %v4237
      %v4239 = vpop.f32.mrb[0].mxu0
      %v4240 = vpop.f32.mrb[0].mxu0
      %v4241 = vadd.f32 %v4080, %v4240
      %v4242 = vpop.f32.mrb[0].mxu0
      %4243 = vmatprep.mubr.bf16.mxu0 0
      %4244 = vmatmul.mubr.bf16.gmra.mrb[0].mxu0 %v3968
      %v4245 = vpop.f32.mrb[0].mxu0
      %v4246 = vadd.f32 %v4085, %v4245
      %v4247 = vpop.f32.mrb[0].mxu0
      %v4248 = vpop.f32.mrb[0].mxu0
      %v4249 = vadd.f32 %v4088, %v4248
      %v4250 = vpop.f32.mrb[0].mxu0
      %4251 = vmatprep.mubr.bf16.mxu0 0
      %4252 = vmatmul.mubr.bf16.gmra.mrb[0].mxu0 %v3971
      %v4253 = vpop.f32.mrb[0].mxu0
      %v4254 = vadd.f32 %v4093, %v4253
      %v4255 = vpop.f32.mrb[0].mxu0
      %v4256 = vpop.f32.mrb[0].mxu0
      %v4257 = vadd.f32 %v4096, %v4256
      %v4258 = vpop.f32.mrb[0].mxu0
      %4259 = vmatprep.mubr.bf16.mxu0 0
      %4260 = vmatmul.mubr.bf16.gmra.mrb[0].mxu0 %v3974
      %v4261 = vpop.f32.mrb[0].mxu0
      %v4262 = vadd.f32 %v4101, %v4261
      %v4263 = vpop.f32.mrb[0].mxu0
      %v4264 = vpop.f32.mrb[0].mxu0
      %v4265 = vadd.f32 %v4104, %v4264
      %v4266 = vpop.f32.mrb[0].mxu0
      %4267 = vmatprep.mubr.bf16.mxu0 0
      %4268 = vmatmul.mubr.bf16.gmra.mrb[0].mxu0 %v3977
      %v4269 = vpop.f32.mrb[0].mxu0
      %v4270 = vadd.f32 %v4109, %v4269
      %v4271 = vpop.f32.mrb[0].mxu0
      %v4272 = vpop.f32.mrb[0].mxu0
      %v4273 = vadd.f32 %v4112, %v4272
      %v4274 = vpop.f32.mrb[0].mxu0
      %4275 = vmatprep.mubr.bf16.mxu0 0
      %4276 = vmatmul.mubr.bf16.gmra.mrb[0].mxu0 %v3980
      %v4277 = vpop.f32.mrb[0].mxu0
      %v4278 = vadd.f32 %v4117, %v4277
      %v4279 = vpop.f32.mrb[0].mxu0
      %v4280 = vpop.f32.mrb[0].mxu0
      %v4281 = vadd.f32 %v4120, %v4280
      %v4282 = vpop.f32.mrb[0].mxu0
      %4283 = vmatprep.mubr.bf16.mxu0 0
      %4284 = vmatmul.mubr.bf16.gmra.mrb[0].mxu0 %v3983
      %v4285 = vpop.f32.mrb[0].mxu0
      %v4286 = vadd.f32 %v4125, %v4285
      %v4287 = vpop.f32.mrb[0].mxu0
      %v4288 = vpop.f32.mrb[0].mxu0
      %v4289 = vadd.f32 %v4128, %v4288
      %v4290 = vpop.f32.mrb[0].mxu0
      %4291 = vmatprep.mubr.bf16.mxu0 0
      %4292 = vmatmul.mubr.bf16.gmra.mrb[0].mxu0 %v3986
      %v4293 = vpop.f32.mrb[0].mxu0
      %v4294 = vadd.f32 %v4133, %v4293
      %v4295 = vpop.f32.mrb[0].mxu0
      %v4296 = vpop.f32.mrb[0].mxu0
      %v4297 = vadd.f32 %v4136, %v4296
      %v4298 = vpop.f32.mrb[0].mxu0
      %4299 = vmatprep.mubr.bf16.mxu0 0
      %4300 = vmatmul.mubr.bf16.gmra.mrb[0].mxu0 %v3989
      %v4301 = vpop.f32.mrb[0].mxu0
      %v4302 = vadd.f32 %v4141, %v4301
      %v4303 = vpop.f32.mrb[0].mxu0
      %v4304 = vpop.f32.mrb[0].mxu0
      %v4305 = vadd.f32 %v4144, %v4304
      %v4306 = vpop.f32.mrb[0].mxu0
      %4307 = vmatprep.mubr.bf16.mxu0 0
      %4308 = vmatmul.mubr.bf16.gmra.mrb[0].mxu0 %v3992
      %v4309 = vpop.f32.mrb[0].mxu0
      %v4310 = vadd.f32 %v4149, %v4309
      %v4311 = vpop.f32.mrb[0].mxu0
      %v4312 = vpop.f32.mrb[0].mxu0
      %v4313 = vadd.f32 %v4152, %v4312
      %v4314 = vpop.f32.mrb[0].mxu0
      %4315 = vdwg.mxu0
      %v4316 = vmax.f32 %v4190, 0.0
      %v4317 = vmax.f32 %v4193, 0.0
      %v4318 = vmax.f32 %v4198, 0.0
      %v4319 = vmax.f32 %v4201, 0.0
      %v4320 = vmax.f32 %v4206, 0.0
      %v4321 = vmax.f32 %v4209, 0.0
      %v4322 = vmax.f32 %v4214, 0.0
      %v4323 = vmax.f32 %v4217, 0.0
      %v4324 = vmax.f32 %v4222, 0.0
      %v4325 = vmax.f32 %v4225, 0.0
      %v4326 = vmax.f32 %v4230, 0.0
      %v4327 = vmax.f32 %v4233, 0.0
      %v4328 = vmax.f32 %v4238, 0.0
      %v4329 = vmax.f32 %v4241, 0.0
      %v4330 = vmax.f32 %v4246, 0.0
      %v4331 = vmax.f32 %v4249, 0.0
      %v4332 = vmax.f32 %v4254, 0.0
      %v4333 = vmax.f32 %v4257, 0.0
      %v4334 = vmax.f32 %v4262, 0.0
      %v4335 = vmax.f32 %v4265, 0.0
      %v4336 = vmax.f32 %v4270, 0.0
      %v4337 = vmax.f32 %v4273, 0.0
      %v4338 = vmax.f32 %v4278, 0.0
      %v4339 = vmax.f32 %v4281, 0.0
      %v4340 = vmax.f32 %v4286, 0.0
      %v4341 = vmax.f32 %v4289, 0.0
      %v4342 = vmax.f32 %v4294, 0.0
      %v4343 = vmax.f32 %v4297, 0.0
      %v4344 = vmax.f32 %v4302, 0.0
      %v4345 = vmax.f32 %v4305, 0.0
      %v4346 = vmax.f32 %v4310, 0.0
      %v4347 = vmax.f32 %v4313, 0.0
      %4348 = vst.msk [vmem:[%s2463 + $0x1] sm:$0xff] %vm488, %v4316
      %4349 = vst.msk [vmem:[%s2463 + $0x9] sm:$0xff] %vm488, %v4317
      %4350 = vst.msk [vmem:[%s2463 + $0x19] sm:$0xff] %vm488, %v4318
      %4351 = vst.msk [vmem:[%s2463 + $0x21] sm:$0xff] %vm488, %v4319
      %4352 = vst.msk [vmem:[%s2463 + $0x31] sm:$0xff] %vm488, %v4320
      %4353 = vst.msk [vmem:[%s2463 + $0x39] sm:$0xff] %vm488, %v4321
      %4354 = vst.msk [vmem:[%s2463 + $0x49] sm:$0xff] %vm488, %v4322
      %4355 = vst.msk [vmem:[%s2463 + $0x51] sm:$0xff] %vm488, %v4323
      %4356 = vst.msk [vmem:[%s2463 + $0x61] sm:$0xff] %vm488, %v4324
      %4357 = vst.msk [vmem:[%s2463 + $0x69] sm:$0xff] %vm488, %v4325
      %4358 = vst.msk [vmem:[%s2463 + $0x79] sm:$0xff] %vm488, %v4326
      %4359 = vst.msk [vmem:[%s2463 + $0x81] sm:$0xff] %vm488, %v4327
      %4360 = vst.msk [vmem:[%s2463 + $0x91] sm:$0xff] %vm488, %v4328
      %4361 = vst.msk [vmem:[%s2463 + $0x99] sm:$0xff] %vm488, %v4329
      %4362 = vst.msk [vmem:[%s2463 + $0xa9] sm:$0xff] %vm488, %v4330
      %4363 = vst.msk [vmem:[%s2463 + $0xb1] sm:$0xff] %vm488, %v4331
      %4364 = vst.msk [vmem:[%s2463 + $0xc1] sm:$0xff] %vm488, %v4332
      %4365 = vst.msk [vmem:[%s2463 + $0xc9] sm:$0xff] %vm488, %v4333
      %4366 = vst.msk [vmem:[%s2463 + $0xd9] sm:$0xff] %vm488, %v4334
      %4367 = vst.msk [vmem:[%s2463 + $0xe1] sm:$0xff] %vm488, %v4335
      %4368 = vst.msk [vmem:[%s2463 + $0xf1] sm:$0xff] %vm488, %v4336
      %4369 = vst.msk [vmem:[%s2463 + $0xf9] sm:$0xff] %vm488, %v4337
      %4370 = vst.msk [vmem:[%s2463 + $0x109] sm:$0xff] %vm488, %v4338
      %4371 = vst.msk [vmem:[%s2463 + $0x111] sm:$0xff] %vm488, %v4339
      %4372 = vst.msk [vmem:[%s2463 + $0x121] sm:$0xff] %vm488, %v4340
      %4373 = vst.msk [vmem:[%s2463 + $0x129] sm:$0xff] %vm488, %v4341
      %4374 = vst.msk [vmem:[%s2463 + $0x139] sm:$0xff] %vm488, %v4342
      %4375 = vst.msk [vmem:[%s2463 + $0x141] sm:$0xff] %vm488, %v4343
      %4376 = vst.msk [vmem:[%s2463 + $0x151] sm:$0xff] %vm488, %v4344
      %4377 = vst.msk [vmem:[%s2463 + $0x159] sm:$0xff] %vm488, %v4345
      %4378 = vst.msk [vmem:[%s2463 + $0x169] sm:$0xff] %vm488, %v4346
      %4379 = vst.msk [vmem:[%s2463 + $0x171] sm:$0xff] %vm488, %v4347
      %v4380 = vld [vmem:[#allocation3] sm:$0xff]
      %v4381 = vld [vmem:[#allocation3 + $0x8] sm:$0xff]
      %v4382 = vld [vmem:[#allocation3 + $0x18] sm:$0xff]
      %v4383 = vld [vmem:[#allocation3 + $0x20] sm:$0xff]
      %v4384 = vld [vmem:[#allocation3 + $0x30] sm:$0xff]
      %v4385 = vld [vmem:[#allocation3 + $0x38] sm:$0xff]
      %v4386 = vld [vmem:[#allocation3 + $0x48] sm:$0xff]
      %v4387 = vld [vmem:[#allocation3 + $0x50] sm:$0xff]
      %v4388 = vld [vmem:[#allocation3 + $0x60] sm:$0xff]
      %v4389 = vld [vmem:[#allocation3 + $0x68] sm:$0xff]
      %v4390 = vld [vmem:[#allocation3 + $0x78] sm:$0xff]
      %v4391 = vld [vmem:[#allocation3 + $0x80] sm:$0xff]
      %v4392 = vld [vmem:[#allocation3 + $0x90] sm:$0xff]
      %v4393 = vld [vmem:[#allocation3 + $0x98] sm:$0xff]
      %v4394 = vld [vmem:[#allocation3 + $0xa8] sm:$0xff]
      %v4395 = vld [vmem:[#allocation3 + $0xb0] sm:$0xff]
      %v4396 = vld [vmem:[#allocation3 + $0xc0] sm:$0xff]
      %v4397 = vld [vmem:[#allocation3 + $0xc8] sm:$0xff]
      %v4398 = vld [vmem:[#allocation3 + $0xd8] sm:$0xff]
      %v4399 = vld [vmem:[#allocation3 + $0xe0] sm:$0xff]
      %v4400 = vld [vmem:[#allocation3 + $0xf0] sm:$0xff]
      %v4401 = vld [vmem:[#allocation3 + $0xf8] sm:$0xff]
      %v4402 = vld [vmem:[#allocation3 + $0x108] sm:$0xff]
      %v4403 = vld [vmem:[#allocation3 + $0x110] sm:$0xff]
      %v4404 = vld [vmem:[#allocation3 + $0x120] sm:$0xff]
      %v4405 = vld [vmem:[#allocation3 + $0x128] sm:$0xff]
      %v4406 = vld [vmem:[#allocation3 + $0x138] sm:$0xff]
      %v4407 = vld [vmem:[#allocation3 + $0x140] sm:$0xff]
      %v4408 = vld [vmem:[#allocation3 + $0x150] sm:$0xff]
      %v4409 = vld [vmem:[#allocation3 + $0x158] sm:$0xff]
      %v4410 = vld [vmem:[#allocation3 + $0x168] sm:$0xff]
      %v4411 = vld [vmem:[#allocation3 + $0x170] sm:$0xff]
      %v4412 = vld [vmem:[#allocation3 + $0x1] sm:$0xff]
      %v4413 = vld [vmem:[#allocation3 + $0x9] sm:$0xff]
      %v4414 = vld [vmem:[#allocation3 + $0x19] sm:$0xff]
      %v4415 = vld [vmem:[#allocation3 + $0x21] sm:$0xff]
      %v4416 = vld [vmem:[#allocation3 + $0x31] sm:$0xff]
      %v4417 = vld [vmem:[#allocation3 + $0x39] sm:$0xff]
      %v4418 = vld [vmem:[#allocation3 + $0x49] sm:$0xff]
      %v4419 = vld [vmem:[#allocation3 + $0x51] sm:$0xff]
      %v4420 = vld [vmem:[#allocation3 + $0x61] sm:$0xff]
      %v4421 = vld [vmem:[#allocation3 + $0x69] sm:$0xff]
      %v4422 = vld [vmem:[#allocation3 + $0x79] sm:$0xff]
      %v4423 = vld [vmem:[#allocation3 + $0x81] sm:$0xff]
      %v4424 = vld [vmem:[#allocation3 + $0x91] sm:$0xff]
      %v4425 = vld [vmem:[#allocation3 + $0x99] sm:$0xff]
      %v4426 = vld [vmem:[#allocation3 + $0xa9] sm:$0xff]
      %v4427 = vld [vmem:[#allocation3 + $0xb1] sm:$0xff]
      %v4428 = vld [vmem:[#allocation3 + $0xc1] sm:$0xff]
      %v4429 = vld [vmem:[#allocation3 + $0xc9] sm:$0xff]
      %v4430 = vld [vmem:[#allocation3 + $0xd9] sm:$0xff]
      %v4431 = vld [vmem:[#allocation3 + $0xe1] sm:$0xff]
      %v4432 = vld [vmem:[#allocation3 + $0xf1] sm:$0xff]
      %v4433 = vld [vmem:[#allocation3 + $0xf9] sm:$0xff]
      %v4434 = vld [vmem:[#allocation3 + $0x109] sm:$0xff]
      %v4435 = vld [vmem:[#allocation3 + $0x111] sm:$0xff]
      %v4436 = vld [vmem:[#allocation3 + $0x121] sm:$0xff]
      %v4437 = vld [vmem:[#allocation3 + $0x129] sm:$0xff]
      %v4438 = vld [vmem:[#allocation3 + $0x139] sm:$0xff]
      %v4439 = vld [vmem:[#allocation3 + $0x141] sm:$0xff]
      %v4440 = vld [vmem:[#allocation3 + $0x151] sm:$0xff]
      %v4441 = vld [vmem:[#allocation3 + $0x159] sm:$0xff]
      %v4442 = vld [vmem:[#allocation3 + $0x169] sm:$0xff]
      %v4443 = vld [vmem:[#allocation3 + $0x171] sm:$0xff]
      %v4444 = vld [vmem:[#allocation3 + $0x2] sm:$0xff]
      %v4445 = vld [vmem:[#allocation3 + $0xa] sm:$0xff]
      %v4446 = vld [vmem:[#allocation3 + $0x1a] sm:$0xff]
      %v4447 = vld [vmem:[#allocation3 + $0x22] sm:$0xff]
      %v4448 = vld [vmem:[#allocation3 + $0x32] sm:$0xff]
      %v4449 = vld [vmem:[#allocation3 + $0x3a] sm:$0xff]
      %v4450 = vld [vmem:[#allocation3 + $0x4a] sm:$0xff]
      %v4451 = vld [vmem:[#allocation3 + $0x52] sm:$0xff]
      %v4452 = vld [vmem:[#allocation3 + $0x62] sm:$0xff]
      %v4453 = vld [vmem:[#allocation3 + $0x6a] sm:$0xff]
      %v4454 = vld [vmem:[#allocation3 + $0x7a] sm:$0xff]
      %v4455 = vld [vmem:[#allocation3 + $0x82] sm:$0xff]
      %v4456 = vld [vmem:[#allocation3 + $0x92] sm:$0xff]
      %v4457 = vld [vmem:[#allocation3 + $0x9a] sm:$0xff]
      %v4458 = vld [vmem:[#allocation3 + $0xaa] sm:$0xff]
      %v4459 = vld [vmem:[#allocation3 + $0xb2] sm:$0xff]
      %v4460 = vld [vmem:[#allocation3 + $0xc2] sm:$0xff]
      %v4461 = vld [vmem:[#allocation3 + $0xca] sm:$0xff]
      %v4462 = vld [vmem:[#allocation3 + $0xda] sm:$0xff]
      %v4463 = vld [vmem:[#allocation3 + $0xe2] sm:$0xff]
      %v4464 = vld [vmem:[#allocation3 + $0xf2] sm:$0xff]
      %v4465 = vld [vmem:[#allocation3 + $0xfa] sm:$0xff]
      %v4466 = vld [vmem:[#allocation3 + $0x10a] sm:$0xff]
      %v4467 = vld [vmem:[#allocation3 + $0x112] sm:$0xff]
      %v4468 = vld [vmem:[#allocation3 + $0x122] sm:$0xff]
      %v4469 = vld [vmem:[#allocation3 + $0x12a] sm:$0xff]
      %v4470 = vld [vmem:[#allocation3 + $0x13a] sm:$0xff]
      %v4471 = vld [vmem:[#allocation3 + $0x142] sm:$0xff]
      %v4472 = vld [vmem:[#allocation3 + $0x152] sm:$0xff]
      %v4473 = vld [vmem:[#allocation3 + $0x15a] sm:$0xff]
      %v4474 = vld [vmem:[#allocation3 + $0x16a] sm:$0xff]
      %v4475 = vld [vmem:[#allocation3 + $0x172] sm:$0xff]
      %v4476 = vld [vmem:[%s2463] sm:$0xff]
      %v4477 = vld [vmem:[%s2463 + $0x8] sm:$0xff]
      %v4478 = vld [vmem:[%s2463 + $0x18] sm:$0xff]
      %v4479 = vld [vmem:[%s2463 + $0x20] sm:$0xff]
      %v4480 = vld [vmem:[%s2463 + $0x30] sm:$0xff]
      %v4481 = vld [vmem:[%s2463 + $0x38] sm:$0xff]
      %v4482 = vld [vmem:[%s2463 + $0x48] sm:$0xff]
      %v4483 = vld [vmem:[%s2463 + $0x50] sm:$0xff]
      %v4484 = vld [vmem:[%s2463 + $0x60] sm:$0xff]
      %v4485 = vld [vmem:[%s2463 + $0x68] sm:$0xff]
      %v4486 = vld [vmem:[%s2463 + $0x78] sm:$0xff]
      %v4487 = vld [vmem:[%s2463 + $0x80] sm:$0xff]
      %v4488 = vld [vmem:[%s2463 + $0x90] sm:$0xff]
      %v4489 = vld [vmem:[%s2463 + $0x98] sm:$0xff]
      %v4490 = vld [vmem:[%s2463 + $0xa8] sm:$0xff]
      %v4491 = vld [vmem:[%s2463 + $0xb0] sm:$0xff]
      %v4492 = vld [vmem:[%s2463 + $0xc0] sm:$0xff]
      %v4493 = vld [vmem:[%s2463 + $0xc8] sm:$0xff]
      %v4494 = vld [vmem:[%s2463 + $0xd8] sm:$0xff]
      %v4495 = vld [vmem:[%s2463 + $0xe0] sm:$0xff]
      %v4496 = vld [vmem:[%s2463 + $0xf0] sm:$0xff]
      %v4497 = vld [vmem:[%s2463 + $0xf8] sm:$0xff]
      %v4498 = vld [vmem:[%s2463 + $0x108] sm:$0xff]
      %v4499 = vld [vmem:[%s2463 + $0x110] sm:$0xff]
      %v4500 = vld [vmem:[%s2463 + $0x120] sm:$0xff]
      %v4501 = vld [vmem:[%s2463 + $0x128] sm:$0xff]
      %v4502 = vld [vmem:[%s2463 + $0x138] sm:$0xff]
      %v4503 = vld [vmem:[%s2463 + $0x140] sm:$0xff]
      %v4504 = vld [vmem:[%s2463 + $0x150] sm:$0xff]
      %v4505 = vld [vmem:[%s2463 + $0x158] sm:$0xff]
      %v4506 = vld [vmem:[%s2463 + $0x168] sm:$0xff]
      %v4507 = vld [vmem:[%s2463 + $0x170] sm:$0xff]
      %v4508 = vld [vmem:[%s2463 + $0x1] sm:$0xff]
      %v4509 = vld [vmem:[%s2463 + $0x9] sm:$0xff]
      %v4510 = vld [vmem:[%s2463 + $0x19] sm:$0xff]
      %v4511 = vld [vmem:[%s2463 + $0x21] sm:$0xff]
      %v4512 = vld [vmem:[%s2463 + $0x31] sm:$0xff]
      %v4513 = vld [vmem:[%s2463 + $0x39] sm:$0xff]
      %v4514 = vld [vmem:[%s2463 + $0x49] sm:$0xff]
      %v4515 = vld [vmem:[%s2463 + $0x51] sm:$0xff]
      %v4516 = vld [vmem:[%s2463 + $0x61] sm:$0xff]
      %v4517 = vld [vmem:[%s2463 + $0x69] sm:$0xff]
      %v4518 = vld [vmem:[%s2463 + $0x79] sm:$0xff]
      %v4519 = vld [vmem:[%s2463 + $0x81] sm:$0xff]
      %v4520 = vld [vmem:[%s2463 + $0x91] sm:$0xff]
      %v4521 = vld [vmem:[%s2463 + $0x99] sm:$0xff]
      %v4522 = vld [vmem:[%s2463 + $0xa9] sm:$0xff]
      %v4523 = vld [vmem:[%s2463 + $0xb1] sm:$0xff]
      %v4524 = vld [vmem:[%s2463 + $0xc1] sm:$0xff]
      %v4525 = vld [vmem:[%s2463 + $0xc9] sm:$0xff]
      %v4526 = vld [vmem:[%s2463 + $0xd9] sm:$0xff]
      %v4527 = vld [vmem:[%s2463 + $0xe1] sm:$0xff]
      %v4528 = vld [vmem:[%s2463 + $0xf1] sm:$0xff]
      %v4529 = vld [vmem:[%s2463 + $0xf9] sm:$0xff]
      %v4530 = vld [vmem:[%s2463 + $0x109] sm:$0xff]
      %v4531 = vld [vmem:[%s2463 + $0x111] sm:$0xff]
      %v4532 = vld [vmem:[%s2463 + $0x121] sm:$0xff]
      %v4533 = vld [vmem:[%s2463 + $0x129] sm:$0xff]
      %v4534 = vld [vmem:[%s2463 + $0x139] sm:$0xff]
      %v4535 = vld [vmem:[%s2463 + $0x141] sm:$0xff]
      %v4536 = vld [vmem:[%s2463 + $0x151] sm:$0xff]
      %v4537 = vld [vmem:[%s2463 + $0x159] sm:$0xff]
      %v4538 = vld [vmem:[%s2463 + $0x169] sm:$0xff]
      %v4539 = vld [vmem:[%s2463 + $0x171] sm:$0xff]
      %v4540 = vld [vmem:[%s2463 + $0x2] sm:$0xff]
      %v4541 = vld [vmem:[%s2463 + $0xa] sm:$0xff]
      %v4542 = vld [vmem:[%s2463 + $0x1a] sm:$0xff]
      %v4543 = vld [vmem:[%s2463 + $0x22] sm:$0xff]
      %v4544 = vld [vmem:[%s2463 + $0x32] sm:$0xff]
      %v4545 = vld [vmem:[%s2463 + $0x3a] sm:$0xff]
      %v4546 = vld [vmem:[%s2463 + $0x4a] sm:$0xff]
      %v4547 = vld [vmem:[%s2463 + $0x52] sm:$0xff]
      %v4548 = vld [vmem:[%s2463 + $0x62] sm:$0xff]
      %v4549 = vld [vmem:[%s2463 + $0x6a] sm:$0xff]
      %v4550 = vld [vmem:[%s2463 + $0x7a] sm:$0xff]
      %v4551 = vld [vmem:[%s2463 + $0x82] sm:$0xff]
      %v4552 = vld [vmem:[%s2463 + $0x92] sm:$0xff]
      %v4553 = vld [vmem:[%s2463 + $0x9a] sm:$0xff]
      %v4554 = vld [vmem:[%s2463 + $0xaa] sm:$0xff]
      %v4555 = vld [vmem:[%s2463 + $0xb2] sm:$0xff]
      %v4556 = vld [vmem:[%s2463 + $0xc2] sm:$0xff]
      %v4557 = vld [vmem:[%s2463 + $0xca] sm:$0xff]
      %v4558 = vld [vmem:[%s2463 + $0xda] sm:$0xff]
      %v4559 = vld [vmem:[%s2463 + $0xe2] sm:$0xff]
      %v4560 = vld [vmem:[%s2463 + $0xf2] sm:$0xff]
      %v4561 = vld [vmem:[%s2463 + $0xfa] sm:$0xff]
      %v4562 = vld [vmem:[%s2463 + $0x10a] sm:$0xff]
      %v4563 = vld [vmem:[%s2463 + $0x112] sm:$0xff]
      %v4564 = vld [vmem:[%s2463 + $0x122] sm:$0xff]
      %v4565 = vld [vmem:[%s2463 + $0x12a] sm:$0xff]
      %v4566 = vld [vmem:[%s2463 + $0x13a] sm:$0xff]
      %v4567 = vld [vmem:[%s2463 + $0x142] sm:$0xff]
      %v4568 = vld [vmem:[%s2463 + $0x152] sm:$0xff]
      %v4569 = vld [vmem:[%s2463 + $0x15a] sm:$0xff]
      %v4570 = vld [vmem:[%s2463 + $0x16a] sm:$0xff]
      %v4571 = vld [vmem:[%s2463 + $0x172] sm:$0xff]
      %v4572 = vld [vmem:[%s2688] sm:$0xff]
      %v4573 = vld [vmem:[%s2688 + $0x8] sm:$0xff]
      %v4574 = vld [vmem:[%s2688 + $0x18] sm:$0xff]
      %v4575 = vld [vmem:[%s2688 + $0x20] sm:$0xff]
      %v4576 = vld [vmem:[%s2688 + $0x30] sm:$0xff]
      %v4577 = vld [vmem:[%s2688 + $0x38] sm:$0xff]
      %v4578 = vld [vmem:[%s2688 + $0x48] sm:$0xff]
      %v4579 = vld [vmem:[%s2688 + $0x50] sm:$0xff]
      %v4580 = vld [vmem:[%s2688 + $0x60] sm:$0xff]
      %v4581 = vld [vmem:[%s2688 + $0x68] sm:$0xff]
      %v4582 = vld [vmem:[%s2688 + $0x78] sm:$0xff]
      %v4583 = vld [vmem:[%s2688 + $0x80] sm:$0xff]
      %v4584 = vld [vmem:[%s2688 + $0x90] sm:$0xff]
      %v4585 = vld [vmem:[%s2688 + $0x98] sm:$0xff]
      %v4586 = vld [vmem:[%s2688 + $0xa8] sm:$0xff]
      %v4587 = vld [vmem:[%s2688 + $0xb0] sm:$0xff]
      %v4588 = vld [vmem:[%s2688 + $0xc0] sm:$0xff]
      %v4589 = vld [vmem:[%s2688 + $0xc8] sm:$0xff]
      %v4590 = vld [vmem:[%s2688 + $0xd8] sm:$0xff]
      %v4591 = vld [vmem:[%s2688 + $0xe0] sm:$0xff]
      %v4592 = vld [vmem:[%s2688 + $0xf0] sm:$0xff]
      %v4593 = vld [vmem:[%s2688 + $0xf8] sm:$0xff]
      %v4594 = vld [vmem:[%s2688 + $0x108] sm:$0xff]
      %v4595 = vld [vmem:[%s2688 + $0x110] sm:$0xff]
      %v4596 = vld [vmem:[%s2688 + $0x120] sm:$0xff]
      %v4597 = vld [vmem:[%s2688 + $0x128] sm:$0xff]
      %v4598 = vld [vmem:[%s2688 + $0x138] sm:$0xff]
      %v4599 = vld [vmem:[%s2688 + $0x140] sm:$0xff]
      %v4600 = vld [vmem:[%s2688 + $0x150] sm:$0xff]
      %v4601 = vld [vmem:[%s2688 + $0x158] sm:$0xff]
      %v4602 = vld [vmem:[%s2688 + $0x168] sm:$0xff]
      %v4603 = vld [vmem:[%s2688 + $0x170] sm:$0xff]
      %v4604 = vld [vmem:[%s2688 + $0x1] sm:$0xff]
      %v4605 = vld [vmem:[%s2688 + $0x9] sm:$0xff]
      %v4606 = vld [vmem:[%s2688 + $0x19] sm:$0xff]
      %v4607 = vld [vmem:[%s2688 + $0x21] sm:$0xff]
      %v4608 = vld [vmem:[%s2688 + $0x31] sm:$0xff]
      %v4609 = vld [vmem:[%s2688 + $0x39] sm:$0xff]
      %v4610 = vld [vmem:[%s2688 + $0x49] sm:$0xff]
      %v4611 = vld [vmem:[%s2688 + $0x51] sm:$0xff]
      %v4612 = vld [vmem:[%s2688 + $0x61] sm:$0xff]
      %v4613 = vld [vmem:[%s2688 + $0x69] sm:$0xff]
      %v4614 = vld [vmem:[%s2688 + $0x79] sm:$0xff]
      %v4615 = vld [vmem:[%s2688 + $0x81] sm:$0xff]
      %v4616 = vld [vmem:[%s2688 + $0x91] sm:$0xff]
      %v4617 = vld [vmem:[%s2688 + $0x99] sm:$0xff]
      %v4618 = vld [vmem:[%s2688 + $0xa9] sm:$0xff]
      %v4619 = vld [vmem:[%s2688 + $0xb1] sm:$0xff]
      %v4620 = vld [vmem:[%s2688 + $0xc1] sm:$0xff]
      %v4621 = vld [vmem:[%s2688 + $0xc9] sm:$0xff]
      %v4622 = vld [vmem:[%s2688 + $0xd9] sm:$0xff]
      %v4623 = vld [vmem:[%s2688 + $0xe1] sm:$0xff]
      %v4624 = vld [vmem:[%s2688 + $0xf1] sm:$0xff]
      %v4625 = vld [vmem:[%s2688 + $0xf9] sm:$0xff]
      %v4626 = vld [vmem:[%s2688 + $0x109] sm:$0xff]
      %v4627 = vld [vmem:[%s2688 + $0x111] sm:$0xff]
      %v4628 = vld [vmem:[%s2688 + $0x121] sm:$0xff]
      %v4629 = vld [vmem:[%s2688 + $0x129] sm:$0xff]
      %v4630 = vld [vmem:[%s2688 + $0x139] sm:$0xff]
      %v4631 = vld [vmem:[%s2688 + $0x141] sm:$0xff]
      %v4632 = vld [vmem:[%s2688 + $0x151] sm:$0xff]
      %v4633 = vld [vmem:[%s2688 + $0x159] sm:$0xff]
      %v4634 = vld [vmem:[%s2688 + $0x169] sm:$0xff]
      %v4635 = vld [vmem:[%s2688 + $0x171] sm:$0xff]
      %v4636 = vld [vmem:[%s2688 + $0x2] sm:$0xff]
      %v4637 = vld [vmem:[%s2688 + $0xa] sm:$0xff]
      %v4638 = vld [vmem:[%s2688 + $0x1a] sm:$0xff]
      %v4639 = vld [vmem:[%s2688 + $0x22] sm:$0xff]
      %v4640 = vld [vmem:[%s2688 + $0x32] sm:$0xff]
      %v4641 = vld [vmem:[%s2688 + $0x3a] sm:$0xff]
      %v4642 = vld [vmem:[%s2688 + $0x4a] sm:$0xff]
      %v4643 = vld [vmem:[%s2688 + $0x52] sm:$0xff]
      %v4644 = vld [vmem:[%s2688 + $0x62] sm:$0xff]
      %v4645 = vld [vmem:[%s2688 + $0x6a] sm:$0xff]
      %v4646 = vld [vmem:[%s2688 + $0x7a] sm:$0xff]
      %v4647 = vld [vmem:[%s2688 + $0x82] sm:$0xff]
      %v4648 = vld [vmem:[%s2688 + $0x92] sm:$0xff]
      %v4649 = vld [vmem:[%s2688 + $0x9a] sm:$0xff]
      %v4650 = vld [vmem:[%s2688 + $0xaa] sm:$0xff]
      %v4651 = vld [vmem:[%s2688 + $0xb2] sm:$0xff]
      %v4652 = vld [vmem:[%s2688 + $0xc2] sm:$0xff]
      %v4653 = vld [vmem:[%s2688 + $0xca] sm:$0xff]
      %v4654 = vld [vmem:[%s2688 + $0xda] sm:$0xff]
      %v4655 = vld [vmem:[%s2688 + $0xe2] sm:$0xff]
      %v4656 = vld [vmem:[%s2688 + $0xf2] sm:$0xff]
      %v4657 = vld [vmem:[%s2688 + $0xfa] sm:$0xff]
      %v4658 = vld [vmem:[%s2688 + $0x10a] sm:$0xff]
      %v4659 = vld [vmem:[%s2688 + $0x112] sm:$0xff]
      %v4660 = vld [vmem:[%s2688 + $0x122] sm:$0xff]
      %v4661 = vld [vmem:[%s2688 + $0x12a] sm:$0xff]
      %v4662 = vld [vmem:[%s2688 + $0x13a] sm:$0xff]
      %v4663 = vld [vmem:[%s2688 + $0x142] sm:$0xff]
      %v4664 = vld [vmem:[%s2688 + $0x152] sm:$0xff]
      %v4665 = vld [vmem:[%s2688 + $0x15a] sm:$0xff]
      %v4666 = vld [vmem:[%s2688 + $0x16a] sm:$0xff]
      %v4667 = vld [vmem:[%s2688 + $0x172] sm:$0xff]
      %4700 = vrot.lane.b32.xlu0 %v4412, 32
      %v4701 = vpop.permute.xlu0 %4700
      %4702 = vrot.lane.b32.xlu0 %v4413, 32
      %v4703 = vpop.permute.xlu0 %4702
      %4704 = vrot.lane.b32.xlu0 %v4414, 32
      %v4705 = vpop.permute.xlu0 %4704
      %4706 = vrot.lane.b32.xlu0 %v4415, 32
      %v4707 = vpop.permute.xlu0 %4706
      %4708 = vrot.lane.b32.xlu0 %v4416, 32
      %v4709 = vpop.permute.xlu0 %4708
      %4710 = vrot.lane.b32.xlu0 %v4417, 32
      %v4711 = vpop.permute.xlu0 %4710
      %4712 = vrot.lane.b32.xlu0 %v4418, 32
      %v4713 = vpop.permute.xlu0 %4712
      %4714 = vrot.lane.b32.xlu0 %v4419, 32
      %v4715 = vpop.permute.xlu0 %4714
      %4716 = vrot.lane.b32.xlu0 %v4420, 32
      %v4717 = vpop.permute.xlu0 %4716
      %4718 = vrot.lane.b32.xlu0 %v4421, 32
      %v4719 = vpop.permute.xlu0 %4718
      %4720 = vrot.lane.b32.xlu0 %v4422, 32
      %v4721 = vpop.permute.xlu0 %4720
      %4722 = vrot.lane.b32.xlu0 %v4423, 32
      %v4723 = vpop.permute.xlu0 %4722
      %4724 = vrot.lane.b32.xlu0 %v4424, 32
      %v4725 = vpop.permute.xlu0 %4724
      %4726 = vrot.lane.b32.xlu0 %v4425, 32
      %v4727 = vpop.permute.xlu0 %4726
      %4728 = vrot.lane.b32.xlu0 %v4426, 32
      %v4729 = vpop.permute.xlu0 %4728
      %4730 = vrot.lane.b32.xlu0 %v4427, 32
      %v4731 = vpop.permute.xlu0 %4730
      %4732 = vrot.lane.b32.xlu0 %v4428, 32
      %v4733 = vpop.permute.xlu0 %4732
      %4734 = vrot.lane.b32.xlu0 %v4429, 32
      %v4735 = vpop.permute.xlu0 %4734
      %4736 = vrot.lane.b32.xlu0 %v4430, 32
      %v4737 = vpop.permute.xlu0 %4736
      %4738 = vrot.lane.b32.xlu0 %v4431, 32
      %v4739 = vpop.permute.xlu0 %4738
      %4740 = vrot.lane.b32.xlu0 %v4432, 32
      %v4741 = vpop.permute.xlu0 %4740
      %4742 = vrot.lane.b32.xlu0 %v4433, 32
      %v4743 = vpop.permute.xlu0 %4742
      %4744 = vrot.lane.b32.xlu0 %v4434, 32
      %v4745 = vpop.permute.xlu0 %4744
      %4746 = vrot.lane.b32.xlu0 %v4435, 32
      %v4747 = vpop.permute.xlu0 %4746
      %4748 = vrot.lane.b32.xlu0 %v4436, 32
      %v4749 = vpop.permute.xlu0 %4748
      %4750 = vrot.lane.b32.xlu0 %v4437, 32
      %v4751 = vpop.permute.xlu0 %4750
      %4752 = vrot.lane.b32.xlu0 %v4438, 32
      %v4753 = vpop.permute.xlu0 %4752
      %4754 = vrot.lane.b32.xlu0 %v4439, 32
      %v4755 = vpop.permute.xlu0 %4754
      %4756 = vrot.lane.b32.xlu0 %v4440, 32
      %v4757 = vpop.permute.xlu0 %4756
      %4758 = vrot.lane.b32.xlu0 %v4441, 32
      %v4759 = vpop.permute.xlu0 %4758
      %4760 = vrot.lane.b32.xlu0 %v4442, 32
      %v4761 = vpop.permute.xlu0 %4760
      %4762 = vrot.lane.b32.xlu0 %v4443, 32
      %v4763 = vpop.permute.xlu0 %4762
      %4828 = vrot.lane.b32.xlu0 %v4444, 64
      %v4829 = vpop.permute.xlu0 %4828
      %4830 = vrot.lane.b32.xlu0 %v4445, 64
      %v4831 = vpop.permute.xlu0 %4830
      %4832 = vrot.lane.b32.xlu0 %v4446, 64
      %v4833 = vpop.permute.xlu0 %4832
      %4834 = vrot.lane.b32.xlu0 %v4447, 64
      %v4835 = vpop.permute.xlu0 %4834
      %4836 = vrot.lane.b32.xlu0 %v4448, 64
      %v4837 = vpop.permute.xlu0 %4836
      %4838 = vrot.lane.b32.xlu0 %v4449, 64
      %v4839 = vpop.permute.xlu0 %4838
      %4840 = vrot.lane.b32.xlu0 %v4450, 64
      %v4841 = vpop.permute.xlu0 %4840
      %4842 = vrot.lane.b32.xlu0 %v4451, 64
      %v4843 = vpop.permute.xlu0 %4842
      %4844 = vrot.lane.b32.xlu0 %v4452, 64
      %v4845 = vpop.permute.xlu0 %4844
      %4846 = vrot.lane.b32.xlu0 %v4453, 64
      %v4847 = vpop.permute.xlu0 %4846
      %4848 = vrot.lane.b32.xlu0 %v4454, 64
      %v4849 = vpop.permute.xlu0 %4848
      %4850 = vrot.lane.b32.xlu0 %v4455, 64
      %v4851 = vpop.permute.xlu0 %4850
      %4852 = vrot.lane.b32.xlu0 %v4456, 64
      %v4853 = vpop.permute.xlu0 %4852
      %4854 = vrot.lane.b32.xlu0 %v4457, 64
      %v4855 = vpop.permute.xlu0 %4854
      %4856 = vrot.lane.b32.xlu0 %v4458, 64
      %v4857 = vpop.permute.xlu0 %4856
      %4858 = vrot.lane.b32.xlu0 %v4459, 64
      %v4859 = vpop.permute.xlu0 %4858
      %4860 = vrot.lane.b32.xlu0 %v4460, 64
      %v4861 = vpop.permute.xlu0 %4860
      %4862 = vrot.lane.b32.xlu0 %v4461, 64
      %v4863 = vpop.permute.xlu0 %4862
      %4864 = vrot.lane.b32.xlu0 %v4462, 64
      %v4865 = vpop.permute.xlu0 %4864
      %4866 = vrot.lane.b32.xlu0 %v4463, 64
      %v4867 = vpop.permute.xlu0 %4866
      %4868 = vrot.lane.b32.xlu0 %v4464, 64
      %v4869 = vpop.permute.xlu0 %4868
      %4870 = vrot.lane.b32.xlu0 %v4465, 64
      %v4871 = vpop.permute.xlu0 %4870
      %4872 = vrot.lane.b32.xlu0 %v4466, 64
      %v4873 = vpop.permute.xlu0 %4872
      %4874 = vrot.lane.b32.xlu0 %v4467, 64
      %v4875 = vpop.permute.xlu0 %4874
      %4876 = vrot.lane.b32.xlu0 %v4468, 64
      %v4877 = vpop.permute.xlu0 %4876
      %4878 = vrot.lane.b32.xlu0 %v4469, 64
      %v4879 = vpop.permute.xlu0 %4878
      %4880 = vrot.lane.b32.xlu0 %v4470, 64
      %v4881 = vpop.permute.xlu0 %4880
      %4882 = vrot.lane.b32.xlu0 %v4471, 64
      %v4883 = vpop.permute.xlu0 %4882
      %4884 = vrot.lane.b32.xlu0 %v4472, 64
      %v4885 = vpop.permute.xlu0 %4884
      %4886 = vrot.lane.b32.xlu0 %v4473, 64
      %v4887 = vpop.permute.xlu0 %4886
      %4888 = vrot.lane.b32.xlu0 %v4474, 64
      %v4889 = vpop.permute.xlu0 %4888
      %4890 = vrot.lane.b32.xlu0 %v4475, 64
      %v4891 = vpop.permute.xlu0 %4890
      %4956 = vrot.lane.b32.xlu0 %v4476, 96
      %v4957 = vpop.permute.xlu0 %4956
      %4958 = vrot.lane.b32.xlu0 %v4477, 96
      %v4959 = vpop.permute.xlu0 %4958
      %4960 = vrot.lane.b32.xlu0 %v4478, 96
      %v4961 = vpop.permute.xlu0 %4960
      %4962 = vrot.lane.b32.xlu0 %v4479, 96
      %v4963 = vpop.permute.xlu0 %4962
      %4964 = vrot.lane.b32.xlu0 %v4480, 96
      %v4965 = vpop.permute.xlu0 %4964
      %4966 = vrot.lane.b32.xlu0 %v4481, 96
      %v4967 = vpop.permute.xlu0 %4966
      %4968 = vrot.lane.b32.xlu0 %v4482, 96
      %v4969 = vpop.permute.xlu0 %4968
      %4970 = vrot.lane.b32.xlu0 %v4483, 96
      %v4971 = vpop.permute.xlu0 %4970
      %4972 = vrot.lane.b32.xlu0 %v4484, 96
      %v4973 = vpop.permute.xlu0 %4972
      %4974 = vrot.lane.b32.xlu0 %v4485, 96
      %v4975 = vpop.permute.xlu0 %4974
      %4976 = vrot.lane.b32.xlu0 %v4486, 96
      %v4977 = vpop.permute.xlu0 %4976
      %4978 = vrot.lane.b32.xlu0 %v4487, 96
      %v4979 = vpop.permute.xlu0 %4978
      %4980 = vrot.lane.b32.xlu0 %v4488, 96
      %v4981 = vpop.permute.xlu0 %4980
      %4982 = vrot.lane.b32.xlu0 %v4489, 96
      %v4983 = vpop.permute.xlu0 %4982
      %4984 = vrot.lane.b32.xlu0 %v4490, 96
      %v4985 = vpop.permute.xlu0 %4984
      %4986 = vrot.lane.b32.xlu0 %v4491, 96
      %v4987 = vpop.permute.xlu0 %4986
      %4988 = vrot.lane.b32.xlu0 %v4492, 96
      %v4989 = vpop.permute.xlu0 %4988
      %4990 = vrot.lane.b32.xlu0 %v4493, 96
      %v4991 = vpop.permute.xlu0 %4990
      %4992 = vrot.lane.b32.xlu0 %v4494, 96
      %v4993 = vpop.permute.xlu0 %4992
      %4994 = vrot.lane.b32.xlu0 %v4495, 96
      %v4995 = vpop.permute.xlu0 %4994
      %4996 = vrot.lane.b32.xlu0 %v4496, 96
      %v4997 = vpop.permute.xlu0 %4996
      %4998 = vrot.lane.b32.xlu0 %v4497, 96
      %v4999 = vpop.permute.xlu0 %4998
      %5000 = vrot.lane.b32.xlu0 %v4498, 96
      %v5001 = vpop.permute.xlu0 %5000
      %5002 = vrot.lane.b32.xlu0 %v4499, 96
      %v5003 = vpop.permute.xlu0 %5002
      %5004 = vrot.lane.b32.xlu0 %v4500, 96
      %v5005 = vpop.permute.xlu0 %5004
      %5006 = vrot.lane.b32.xlu0 %v4501, 96
      %v5007 = vpop.permute.xlu0 %5006
      %5008 = vrot.lane.b32.xlu0 %v4502, 96
      %v5009 = vpop.permute.xlu0 %5008
      %5010 = vrot.lane.b32.xlu0 %v4503, 96
      %v5011 = vpop.permute.xlu0 %5010
      %5012 = vrot.lane.b32.xlu0 %v4504, 96
      %v5013 = vpop.permute.xlu0 %5012
      %5014 = vrot.lane.b32.xlu0 %v4505, 96
      %v5015 = vpop.permute.xlu0 %5014
      %5016 = vrot.lane.b32.xlu0 %v4506, 96
      %v5017 = vpop.permute.xlu0 %5016
      %5018 = vrot.lane.b32.xlu0 %v4507, 96
      %v5019 = vpop.permute.xlu0 %5018
      %5084 = vrot.lane.b32.xlu0 %v4540, 32
      %v5085 = vpop.permute.xlu0 %5084
      %5086 = vrot.lane.b32.xlu0 %v4541, 32
      %v5087 = vpop.permute.xlu0 %5086
      %5088 = vrot.lane.b32.xlu0 %v4542, 32
      %v5089 = vpop.permute.xlu0 %5088
      %5090 = vrot.lane.b32.xlu0 %v4543, 32
      %v5091 = vpop.permute.xlu0 %5090
      %5092 = vrot.lane.b32.xlu0 %v4544, 32
      %v5093 = vpop.permute.xlu0 %5092
      %5094 = vrot.lane.b32.xlu0 %v4545, 32
      %v5095 = vpop.permute.xlu0 %5094
      %5096 = vrot.lane.b32.xlu0 %v4546, 32
      %v5097 = vpop.permute.xlu0 %5096
      %5098 = vrot.lane.b32.xlu0 %v4547, 32
      %v5099 = vpop.permute.xlu0 %5098
      %5100 = vrot.lane.b32.xlu0 %v4548, 32
      %v5101 = vpop.permute.xlu0 %5100
      %5102 = vrot.lane.b32.xlu0 %v4549, 32
      %v5103 = vpop.permute.xlu0 %5102
      %5104 = vrot.lane.b32.xlu0 %v4550, 32
      %v5105 = vpop.permute.xlu0 %5104
      %5106 = vrot.lane.b32.xlu0 %v4551, 32
      %v5107 = vpop.permute.xlu0 %5106
      %5108 = vrot.lane.b32.xlu0 %v4552, 32
      %v5109 = vpop.permute.xlu0 %5108
      %5110 = vrot.lane.b32.xlu0 %v4553, 32
      %v5111 = vpop.permute.xlu0 %5110
      %5112 = vrot.lane.b32.xlu0 %v4554, 32
      %v5113 = vpop.permute.xlu0 %5112
      %5114 = vrot.lane.b32.xlu0 %v4555, 32
      %v5115 = vpop.permute.xlu0 %5114
      %5116 = vrot.lane.b32.xlu0 %v4556, 32
      %v5117 = vpop.permute.xlu0 %5116
      %5118 = vrot.lane.b32.xlu0 %v4557, 32
      %v5119 = vpop.permute.xlu0 %5118
      %5120 = vrot.lane.b32.xlu0 %v4558, 32
      %v5121 = vpop.permute.xlu0 %5120
      %5122 = vrot.lane.b32.xlu0 %v4559, 32
      %v5123 = vpop.permute.xlu0 %5122
      %5124 = vrot.lane.b32.xlu0 %v4560, 32
      %v5125 = vpop.permute.xlu0 %5124
      %5126 = vrot.lane.b32.xlu0 %v4561, 32
      %v5127 = vpop.permute.xlu0 %5126
      %5128 = vrot.lane.b32.xlu0 %v4562, 32
      %v5129 = vpop.permute.xlu0 %5128
      %5130 = vrot.lane.b32.xlu0 %v4563, 32
      %v5131 = vpop.permute.xlu0 %5130
      %5132 = vrot.lane.b32.xlu0 %v4564, 32
      %v5133 = vpop.permute.xlu0 %5132
      %5134 = vrot.lane.b32.xlu0 %v4565, 32
      %v5135 = vpop.permute.xlu0 %5134
      %5136 = vrot.lane.b32.xlu0 %v4566, 32
      %v5137 = vpop.permute.xlu0 %5136
      %5138 = vrot.lane.b32.xlu0 %v4567, 32
      %v5139 = vpop.permute.xlu0 %5138
      %5140 = vrot.lane.b32.xlu0 %v4568, 32
      %v5141 = vpop.permute.xlu0 %5140
      %5142 = vrot.lane.b32.xlu0 %v4569, 32
      %v5143 = vpop.permute.xlu0 %5142
      %5144 = vrot.lane.b32.xlu0 %v4570, 32
      %v5145 = vpop.permute.xlu0 %5144
      %5146 = vrot.lane.b32.xlu0 %v4571, 32
      %v5147 = vpop.permute.xlu0 %5146
      %5212 = vrot.lane.b32.xlu0 %v4572, 64
      %v5213 = vpop.permute.xlu0 %5212
      %5214 = vrot.lane.b32.xlu0 %v4573, 64
      %v5215 = vpop.permute.xlu0 %5214
      %5216 = vrot.lane.b32.xlu0 %v4574, 64
      %v5217 = vpop.permute.xlu0 %5216
      %5218 = vrot.lane.b32.xlu0 %v4575, 64
      %v5219 = vpop.permute.xlu0 %5218
      %5220 = vrot.lane.b32.xlu0 %v4576, 64
      %v5221 = vpop.permute.xlu0 %5220
      %5222 = vrot.lane.b32.xlu0 %v4577, 64
      %v5223 = vpop.permute.xlu0 %5222
      %5224 = vrot.lane.b32.xlu0 %v4578, 64
      %v5225 = vpop.permute.xlu0 %5224
      %5226 = vrot.lane.b32.xlu0 %v4579, 64
      %v5227 = vpop.permute.xlu0 %5226
      %5228 = vrot.lane.b32.xlu0 %v4580, 64
      %v5229 = vpop.permute.xlu0 %5228
      %5230 = vrot.lane.b32.xlu0 %v4581, 64
      %v5231 = vpop.permute.xlu0 %5230
      %5232 = vrot.lane.b32.xlu0 %v4582, 64
      %v5233 = vpop.permute.xlu0 %5232
      %5234 = vrot.lane.b32.xlu0 %v4583, 64
      %v5235 = vpop.permute.xlu0 %5234
      %5236 = vrot.lane.b32.xlu0 %v4584, 64
      %v5237 = vpop.permute.xlu0 %5236
      %5238 = vrot.lane.b32.xlu0 %v4585, 64
      %v5239 = vpop.permute.xlu0 %5238
      %5240 = vrot.lane.b32.xlu0 %v4586, 64
      %v5241 = vpop.permute.xlu0 %5240
      %5242 = vrot.lane.b32.xlu0 %v4587, 64
      %v5243 = vpop.permute.xlu0 %5242
      %5244 = vrot.lane.b32.xlu0 %v4588, 64
      %v5245 = vpop.permute.xlu0 %5244
      %5246 = vrot.lane.b32.xlu0 %v4589, 64
      %v5247 = vpop.permute.xlu0 %5246
      %5248 = vrot.lane.b32.xlu0 %v4590, 64
      %v5249 = vpop.permute.xlu0 %5248
      %5250 = vrot.lane.b32.xlu0 %v4591, 64
      %v5251 = vpop.permute.xlu0 %5250
      %5252 = vrot.lane.b32.xlu0 %v4592, 64
      %v5253 = vpop.permute.xlu0 %5252
      %5254 = vrot.lane.b32.xlu0 %v4593, 64
      %v5255 = vpop.permute.xlu0 %5254
      %5256 = vrot.lane.b32.xlu0 %v4594, 64
      %v5257 = vpop.permute.xlu0 %5256
      %5258 = vrot.lane.b32.xlu0 %v4595, 64
      %v5259 = vpop.permute.xlu0 %5258
      %5260 = vrot.lane.b32.xlu0 %v4596, 64
      %v5261 = vpop.permute.xlu0 %5260
      %5262 = vrot.lane.b32.xlu0 %v4597, 64
      %v5263 = vpop.permute.xlu0 %5262
      %5264 = vrot.lane.b32.xlu0 %v4598, 64
      %v5265 = vpop.permute.xlu0 %5264
      %5266 = vrot.lane.b32.xlu0 %v4599, 64
      %v5267 = vpop.permute.xlu0 %5266
      %5268 = vrot.lane.b32.xlu0 %v4600, 64
      %v5269 = vpop.permute.xlu0 %5268
      %5270 = vrot.lane.b32.xlu0 %v4601, 64
      %v5271 = vpop.permute.xlu0 %5270
      %5272 = vrot.lane.b32.xlu0 %v4602, 64
      %v5273 = vpop.permute.xlu0 %5272
      %5274 = vrot.lane.b32.xlu0 %v4603, 64
      %v5275 = vpop.permute.xlu0 %5274
      %5340 = vrot.lane.b32.xlu0 %v4604, 96
      %v5341 = vpop.permute.xlu0 %5340
      %5342 = vrot.lane.b32.xlu0 %v4605, 96
      %v5343 = vpop.permute.xlu0 %5342
      %5344 = vrot.lane.b32.xlu0 %v4606, 96
      %v5345 = vpop.permute.xlu0 %5344
      %5346 = vrot.lane.b32.xlu0 %v4607, 96
      %v5347 = vpop.permute.xlu0 %5346
      %5348 = vrot.lane.b32.xlu0 %v4608, 96
      %v5349 = vpop.permute.xlu0 %5348
      %5350 = vrot.lane.b32.xlu0 %v4609, 96
      %v5351 = vpop.permute.xlu0 %5350
      %5352 = vrot.lane.b32.xlu0 %v4610, 96
      %v5353 = vpop.permute.xlu0 %5352
      %5354 = vrot.lane.b32.xlu0 %v4611, 96
      %v5355 = vpop.permute.xlu0 %5354
      %5356 = vrot.lane.b32.xlu0 %v4612, 96
      %v5357 = vpop.permute.xlu0 %5356
      %5358 = vrot.lane.b32.xlu0 %v4613, 96
      %v5359 = vpop.permute.xlu0 %5358
      %5360 = vrot.lane.b32.xlu0 %v4614, 96
      %v5361 = vpop.permute.xlu0 %5360
      %5362 = vrot.lane.b32.xlu0 %v4615, 96
      %v5363 = vpop.permute.xlu0 %5362
      %5364 = vrot.lane.b32.xlu0 %v4616, 96
      %v5365 = vpop.permute.xlu0 %5364
      %5366 = vrot.lane.b32.xlu0 %v4617, 96
      %v5367 = vpop.permute.xlu0 %5366
      %5368 = vrot.lane.b32.xlu0 %v4618, 96
      %v5369 = vpop.permute.xlu0 %5368
      %5370 = vrot.lane.b32.xlu0 %v4619, 96
      %v5371 = vpop.permute.xlu0 %5370
      %5372 = vrot.lane.b32.xlu0 %v4620, 96
      %v5373 = vpop.permute.xlu0 %5372
      %5374 = vrot.lane.b32.xlu0 %v4621, 96
      %v5375 = vpop.permute.xlu0 %5374
      %5376 = vrot.lane.b32.xlu0 %v4622, 96
      %v5377 = vpop.permute.xlu0 %5376
      %5378 = vrot.lane.b32.xlu0 %v4623, 96
      %v5379 = vpop.permute.xlu0 %5378
      %5380 = vrot.lane.b32.xlu0 %v4624, 96
      %v5381 = vpop.permute.xlu0 %5380
      %5382 = vrot.lane.b32.xlu0 %v4625, 96
      %v5383 = vpop.permute.xlu0 %5382
      %5384 = vrot.lane.b32.xlu0 %v4626, 96
      %v5385 = vpop.permute.xlu0 %5384
      %5386 = vrot.lane.b32.xlu0 %v4627, 96
      %v5387 = vpop.permute.xlu0 %5386
      %5388 = vrot.lane.b32.xlu0 %v4628, 96
      %v5389 = vpop.permute.xlu0 %5388
      %5390 = vrot.lane.b32.xlu0 %v4629, 96
      %v5391 = vpop.permute.xlu0 %5390
      %5392 = vrot.lane.b32.xlu0 %v4630, 96
      %v5393 = vpop.permute.xlu0 %5392
      %5394 = vrot.lane.b32.xlu0 %v4631, 96
      %v5395 = vpop.permute.xlu0 %5394
      %5396 = vrot.lane.b32.xlu0 %v4632, 96
      %v5397 = vpop.permute.xlu0 %5396
      %5398 = vrot.lane.b32.xlu0 %v4633, 96
      %v5399 = vpop.permute.xlu0 %5398
      %5400 = vrot.lane.b32.xlu0 %v4634, 96
      %v5401 = vpop.permute.xlu0 %5400
      %5402 = vrot.lane.b32.xlu0 %v4635, 96
      %v5403 = vpop.permute.xlu0 %5402
      %v5436 = vsel %vm488, %v4380, %v4701
      %v5437 = vsel %vm488, %v4381, %v4703
      %v5438 = vsel %vm488, %v4382, %v4705
      %v5439 = vsel %vm488, %v4383, %v4707
      %v5440 = vsel %vm488, %v4384, %v4709
      %v5441 = vsel %vm488, %v4385, %v4711
      %v5442 = vsel %vm488, %v4386, %v4713
      %v5443 = vsel %vm488, %v4387, %v4715
      %v5444 = vsel %vm488, %v4388, %v4717
      %v5445 = vsel %vm488, %v4389, %v4719
      %v5446 = vsel %vm488, %v4390, %v4721
      %v5447 = vsel %vm488, %v4391, %v4723
      %v5448 = vsel %vm488, %v4392, %v4725
      %v5449 = vsel %vm488, %v4393, %v4727
      %v5450 = vsel %vm488, %v4394, %v4729
      %v5451 = vsel %vm488, %v4395, %v4731
      %v5452 = vsel %vm488, %v4396, %v4733
      %v5453 = vsel %vm488, %v4397, %v4735
      %v5454 = vsel %vm488, %v4398, %v4737
      %v5455 = vsel %vm488, %v4399, %v4739
      %v5456 = vsel %vm488, %v4400, %v4741
      %v5457 = vsel %vm488, %v4401, %v4743
      %v5458 = vsel %vm488, %v4402, %v4745
      %v5459 = vsel %vm488, %v4403, %v4747
      %v5460 = vsel %vm488, %v4404, %v4749
      %v5461 = vsel %vm488, %v4405, %v4751
      %v5462 = vsel %vm488, %v4406, %v4753
      %v5463 = vsel %vm488, %v4407, %v4755
      %v5464 = vsel %vm488, %v4408, %v4757
      %v5465 = vsel %vm488, %v4409, %v4759
      %v5466 = vsel %vm488, %v4410, %v4761
      %v5467 = vsel %vm488, %v4411, %v4763
      %v5468 = vsel %vm3585, %v5436, %v4829
      %v5469 = vsel %vm3585, %v5437, %v4831
      %v5470 = vsel %vm3585, %v5438, %v4833
      %v5471 = vsel %vm3585, %v5439, %v4835
      %v5472 = vsel %vm3585, %v5440, %v4837
      %v5473 = vsel %vm3585, %v5441, %v4839
      %v5474 = vsel %vm3585, %v5442, %v4841
      %v5475 = vsel %vm3585, %v5443, %v4843
      %v5476 = vsel %vm3585, %v5444, %v4845
      %v5477 = vsel %vm3585, %v5445, %v4847
      %v5478 = vsel %vm3585, %v5446, %v4849
      %v5479 = vsel %vm3585, %v5447, %v4851
      %v5480 = vsel %vm3585, %v5448, %v4853
      %v5481 = vsel %vm3585, %v5449, %v4855
      %v5482 = vsel %vm3585, %v5450, %v4857
      %v5483 = vsel %vm3585, %v5451, %v4859
      %v5484 = vsel %vm3585, %v5452, %v4861
      %v5485 = vsel %vm3585, %v5453, %v4863
      %v5486 = vsel %vm3585, %v5454, %v4865
      %v5487 = vsel %vm3585, %v5455, %v4867
      %v5488 = vsel %vm3585, %v5456, %v4869
      %v5489 = vsel %vm3585, %v5457, %v4871
      %v5490 = vsel %vm3585, %v5458, %v4873
      %v5491 = vsel %vm3585, %v5459, %v4875
      %v5492 = vsel %vm3585, %v5460, %v4877
      %v5493 = vsel %vm3585, %v5461, %v4879
      %v5494 = vsel %vm3585, %v5462, %v4881
      %v5495 = vsel %vm3585, %v5463, %v4883
      %v5496 = vsel %vm3585, %v5464, %v4885
      %v5497 = vsel %vm3585, %v5465, %v4887
      %v5498 = vsel %vm3585, %v5466, %v4889
      %v5499 = vsel %vm3585, %v5467, %v4891
      %v5500 = vsel %vm3618, %v5468, %v4957
      %v5501 = vsel %vm3618, %v5469, %v4959
      %v5502 = vsel %vm3618, %v5470, %v4961
      %v5503 = vsel %vm3618, %v5471, %v4963
      %v5504 = vsel %vm3618, %v5472, %v4965
      %v5505 = vsel %vm3618, %v5473, %v4967
      %v5506 = vsel %vm3618, %v5474, %v4969
      %v5507 = vsel %vm3618, %v5475, %v4971
      %v5508 = vsel %vm3618, %v5476, %v4973
      %v5509 = vsel %vm3618, %v5477, %v4975
      %v5510 = vsel %vm3618, %v5478, %v4977
      %v5511 = vsel %vm3618, %v5479, %v4979
      %v5512 = vsel %vm3618, %v5480, %v4981
      %v5513 = vsel %vm3618, %v5481, %v4983
      %v5514 = vsel %vm3618, %v5482, %v4985
      %v5515 = vsel %vm3618, %v5483, %v4987
      %v5516 = vsel %vm3618, %v5484, %v4989
      %v5517 = vsel %vm3618, %v5485, %v4991
      %v5518 = vsel %vm3618, %v5486, %v4993
      %v5519 = vsel %vm3618, %v5487, %v4995
      %v5520 = vsel %vm3618, %v5488, %v4997
      %v5521 = vsel %vm3618, %v5489, %v4999
      %v5522 = vsel %vm3618, %v5490, %v5001
      %v5523 = vsel %vm3618, %v5491, %v5003
      %v5524 = vsel %vm3618, %v5492, %v5005
      %v5525 = vsel %vm3618, %v5493, %v5007
      %v5526 = vsel %vm3618, %v5494, %v5009
      %v5527 = vsel %vm3618, %v5495, %v5011
      %v5528 = vsel %vm3618, %v5496, %v5013
      %v5529 = vsel %vm3618, %v5497, %v5015
      %v5530 = vsel %vm3618, %v5498, %v5017
      %v5531 = vsel %vm3618, %v5499, %v5019
      %v5532 = vsel %vm488, %v4508, %v5085
      %v5533 = vsel %vm488, %v4509, %v5087
      %v5534 = vsel %vm488, %v4510, %v5089
      %v5535 = vsel %vm488, %v4511, %v5091
      %v5536 = vsel %vm488, %v4512, %v5093
      %v5537 = vsel %vm488, %v4513, %v5095
      %v5538 = vsel %vm488, %v4514, %v5097
      %v5539 = vsel %vm488, %v4515, %v5099
      %v5540 = vsel %vm488, %v4516, %v5101
      %v5541 = vsel %vm488, %v4517, %v5103
      %v5542 = vsel %vm488, %v4518, %v5105
      %v5543 = vsel %vm488, %v4519, %v5107
      %v5544 = vsel %vm488, %v4520, %v5109
      %v5545 = vsel %vm488, %v4521, %v5111
      %v5546 = vsel %vm488, %v4522, %v5113
      %v5547 = vsel %vm488, %v4523, %v5115
      %v5548 = vsel %vm488, %v4524, %v5117
      %v5549 = vsel %vm488, %v4525, %v5119
      %v5550 = vsel %vm488, %v4526, %v5121
      %v5551 = vsel %vm488, %v4527, %v5123
      %v5552 = vsel %vm488, %v4528, %v5125
      %v5553 = vsel %vm488, %v4529, %v5127
      %v5554 = vsel %vm488, %v4530, %v5129
      %v5555 = vsel %vm488, %v4531, %v5131
      %v5556 = vsel %vm488, %v4532, %v5133
      %v5557 = vsel %vm488, %v4533, %v5135
      %v5558 = vsel %vm488, %v4534, %v5137
      %v5559 = vsel %vm488, %v4535, %v5139
      %v5560 = vsel %vm488, %v4536, %v5141
      %v5561 = vsel %vm488, %v4537, %v5143
      %v5562 = vsel %vm488, %v4538, %v5145
      %v5563 = vsel %vm488, %v4539, %v5147
      %v5564 = vsel %vm3585, %v5532, %v5213
      %v5565 = vsel %vm3585, %v5533, %v5215
      %v5566 = vsel %vm3585, %v5534, %v5217
      %v5567 = vsel %vm3585, %v5535, %v5219
      %v5568 = vsel %vm3585, %v5536, %v5221
      %v5569 = vsel %vm3585, %v5537, %v5223
      %v5570 = vsel %vm3585, %v5538, %v5225
      %v5571 = vsel %vm3585, %v5539, %v5227
      %v5572 = vsel %vm3585, %v5540, %v5229
      %v5573 = vsel %vm3585, %v5541, %v5231
      %v5574 = vsel %vm3585, %v5542, %v5233
      %v5575 = vsel %vm3585, %v5543, %v5235
      %v5576 = vsel %vm3585, %v5544, %v5237
      %v5577 = vsel %vm3585, %v5545, %v5239
      %v5578 = vsel %vm3585, %v5546, %v5241
      %v5579 = vsel %vm3585, %v5547, %v5243
      %v5580 = vsel %vm3585, %v5548, %v5245
      %v5581 = vsel %vm3585, %v5549, %v5247
      %v5582 = vsel %vm3585, %v5550, %v5249
      %v5583 = vsel %vm3585, %v5551, %v5251
      %v5584 = vsel %vm3585, %v5552, %v5253
      %v5585 = vsel %vm3585, %v5553, %v5255
      %v5586 = vsel %vm3585, %v5554, %v5257
      %v5587 = vsel %vm3585, %v5555, %v5259
      %v5588 = vsel %vm3585, %v5556, %v5261
      %v5589 = vsel %vm3585, %v5557, %v5263
      %v5590 = vsel %vm3585, %v5558, %v5265
      %v5591 = vsel %vm3585, %v5559, %v5267
      %v5592 = vsel %vm3585, %v5560, %v5269
      %v5593 = vsel %vm3585, %v5561, %v5271
      %v5594 = vsel %vm3585, %v5562, %v5273
      %v5595 = vsel %vm3585, %v5563, %v5275
      %v5596 = vsel %vm3618, %v5564, %v5341
      %v5597 = vsel %vm3618, %v5565, %v5343
      %v5598 = vsel %vm3618, %v5566, %v5345
      %v5599 = vsel %vm3618, %v5567, %v5347
      %v5600 = vsel %vm3618, %v5568, %v5349
      %v5601 = vsel %vm3618, %v5569, %v5351
      %v5602 = vsel %vm3618, %v5570, %v5353
      %v5603 = vsel %vm3618, %v5571, %v5355
      %v5604 = vsel %vm3618, %v5572, %v5357
      %v5605 = vsel %vm3618, %v5573, %v5359
      %v5606 = vsel %vm3618, %v5574, %v5361
      %v5607 = vsel %vm3618, %v5575, %v5363
      %v5608 = vsel %vm3618, %v5576, %v5365
      %v5609 = vsel %vm3618, %v5577, %v5367
      %v5610 = vsel %vm3618, %v5578, %v5369
      %v5611 = vsel %vm3618, %v5579, %v5371
      %v5612 = vsel %vm3618, %v5580, %v5373
      %v5613 = vsel %vm3618, %v5581, %v5375
      %v5614 = vsel %vm3618, %v5582, %v5377
      %v5615 = vsel %vm3618, %v5583, %v5379
      %v5616 = vsel %vm3618, %v5584, %v5381
      %v5617 = vsel %vm3618, %v5585, %v5383
      %v5618 = vsel %vm3618, %v5586, %v5385
      %v5619 = vsel %vm3618, %v5587, %v5387
      %v5620 = vsel %vm3618, %v5588, %v5389
      %v5621 = vsel %vm3618, %v5589, %v5391
      %v5622 = vsel %vm3618, %v5590, %v5393
      %v5623 = vsel %vm3618, %v5591, %v5395
      %v5624 = vsel %vm3618, %v5592, %v5397
      %v5625 = vsel %vm3618, %v5593, %v5399
      %v5626 = vsel %vm3618, %v5594, %v5401
      %v5627 = vsel %vm3618, %v5595, %v5403
      %v5628 = vpack.c.bf16 %v5501, %v5500
      %v5629 = vpack.c.bf16 %v5597, %v5596
      %v5630 = vpack.c.bf16 %v4637, %v4636
      %v5631 = vpack.c.bf16 %v5503, %v5502
      %v5632 = vpack.c.bf16 %v5599, %v5598
      %v5633 = vpack.c.bf16 %v4639, %v4638
      %v5634 = vpack.c.bf16 %v5505, %v5504
      %v5635 = vpack.c.bf16 %v5601, %v5600
      %v5636 = vpack.c.bf16 %v4641, %v4640
      %v5637 = vpack.c.bf16 %v5507, %v5506
      %v5638 = vpack.c.bf16 %v5603, %v5602
      %v5639 = vpack.c.bf16 %v4643, %v4642
      %v5640 = vpack.c.bf16 %v5509, %v5508
      %v5641 = vpack.c.bf16 %v5605, %v5604
      %v5642 = vpack.c.bf16 %v4645, %v4644
      %v5643 = vpack.c.bf16 %v5511, %v5510
      %v5644 = vpack.c.bf16 %v5607, %v5606
      %v5645 = vpack.c.bf16 %v4647, %v4646
      %v5646 = vpack.c.bf16 %v5513, %v5512
      %v5647 = vpack.c.bf16 %v5609, %v5608
      %v5648 = vpack.c.bf16 %v4649, %v4648
      %v5649 = vpack.c.bf16 %v5515, %v5514
      %v5650 = vpack.c.bf16 %v5611, %v5610
      %v5651 = vpack.c.bf16 %v4651, %v4650
      %v5652 = vpack.c.bf16 %v5517, %v5516
      %v5653 = vpack.c.bf16 %v5613, %v5612
      %v5654 = vpack.c.bf16 %v4653, %v4652
      %v5655 = vpack.c.bf16 %v5519, %v5518
      %v5656 = vpack.c.bf16 %v5615, %v5614
      %v5657 = vpack.c.bf16 %v4655, %v4654
      %v5658 = vpack.c.bf16 %v5521, %v5520
      %v5659 = vpack.c.bf16 %v5617, %v5616
      %v5660 = vpack.c.bf16 %v4657, %v4656
      %v5661 = vpack.c.bf16 %v5523, %v5522
      %v5662 = vpack.c.bf16 %v5619, %v5618
      %v5663 = vpack.c.bf16 %v4659, %v4658
      %v5664 = vpack.c.bf16 %v5525, %v5524
      %v5665 = vpack.c.bf16 %v5621, %v5620
      %v5666 = vpack.c.bf16 %v4661, %v4660
      %v5667 = vpack.c.bf16 %v5527, %v5526
      %v5668 = vpack.c.bf16 %v5623, %v5622
      %v5669 = vpack.c.bf16 %v4663, %v4662
      %v5670 = vpack.c.bf16 %v5529, %v5528
      %v5671 = vpack.c.bf16 %v5625, %v5624
      %v5672 = vpack.c.bf16 %v4665, %v4664
      %v5673 = vpack.c.bf16 %v5531, %v5530
      %v5674 = vpack.c.bf16 %v5627, %v5626
      %v5675 = vpack.c.bf16 %v4667, %v4666
      %v5676 = vld [vmem:[%s5] sm:$0xf]
      %v5677 = vld [vmem:[%s5 + $0x4] sm:$0xf]
      %v5678 = vld [vmem:[%s5 + $0x8] sm:$0xf]
      %v5679 = vld [vmem:[%s5 + $0xc] sm:$0xf]
      %v5680 = vld [vmem:[%s5 + $0x10] sm:$0xf]
      %v5681 = vld [vmem:[%s5 + $0x14] sm:$0xf]
      %v5682 = vld [vmem:[%s5 + $0x18] sm:$0xf]
      %v5683 = vld [vmem:[%s5 + $0x1c] sm:$0xf]
      %v5684 = vld [vmem:[%s5 + $0x20] sm:$0xf]
      %v5685 = vld [vmem:[%s5 + $0x24] sm:$0xf]
      %v5686 = vld [vmem:[%s5 + $0x28] sm:$0xf]
      %v5687 = vld [vmem:[%s5 + $0x2c] sm:$0xf]
      %v5688 = vld [vmem:[%s5 + $0x30] sm:$0xf]
      %v5689 = vld [vmem:[%s5 + $0x34] sm:$0xf]
      %v5690 = vld [vmem:[%s5 + $0x38] sm:$0xf]
      %v5691 = vld [vmem:[%s5 + $0x3c] sm:$0xf]
      %v5692 = vld [vmem:[%s5 + $0x40] sm:$0xf]
      %v5693 = vld [vmem:[%s5 + $0x44] sm:$0xf]
      %v5694 = vld [vmem:[%s5 + $0x48] sm:$0xf]
      %v5695 = vld [vmem:[%s5 + $0x4c] sm:$0xf]
      %v5696 = vld [vmem:[%s5 + $0x50] sm:$0xf]
      %v5697 = vld [vmem:[%s5 + $0x54] sm:$0xf]
      %v5698 = vld [vmem:[%s5 + $0x58] sm:$0xf]
      %v5699 = vld [vmem:[%s5 + $0x5c] sm:$0xf]
      %v5700 = vld [vmem:[%s5 + $0x60] sm:$0xf]
      %v5701 = vld [vmem:[%s5 + $0x64] sm:$0xf]
      %v5702 = vld [vmem:[%s5 + $0x68] sm:$0xf]
      %v5703 = vld [vmem:[%s5 + $0x6c] sm:$0xf]
      %v5704 = vld [vmem:[%s5 + $0x70] sm:$0xf]
      %v5705 = vld [vmem:[%s5 + $0x74] sm:$0xf]
      %v5706 = vld [vmem:[%s5 + $0x78] sm:$0xf]
      %v5707 = vld [vmem:[%s5 + $0x7c] sm:$0xf]
      %v5708 = vld [vmem:[%s5 + $0x80] sm:$0xf]
      %v5709 = vld [vmem:[%s5 + $0x84] sm:$0xf]
      %v5710 = vld [vmem:[%s5 + $0x88] sm:$0xf]
      %v5711 = vld [vmem:[%s5 + $0x8c] sm:$0xf]
      %v5712 = vld [vmem:[%s6] sm:$0x1]
      %v5714 = vlaneseq
      %v5715 = vshrl.u32 %v5714, 7
      %v5716 = vsub.s32 0, %v5715
      %v5717 = vrot.slane %v5712, %v5716
      %v5755 = vunpack.c.l.b16 %v5676
      %v5756 = vunpack.c.l.b16 %v5677
      %v5757 = vunpack.c.l.b16 %v5678
      %v5758 = vunpack.c.l.b16 %v5679
      %v5759 = vunpack.c.l.b16 %v5680
      %v5760 = vunpack.c.l.b16 %v5681
      %v5761 = vunpack.c.l.b16 %v5682
      %v5762 = vunpack.c.l.b16 %v5683
      %v5763 = vunpack.c.l.b16 %v5684
      %v5764 = vunpack.c.l.b16 %v5685
      %v5765 = vunpack.c.l.b16 %v5686
      %v5766 = vunpack.c.l.b16 %v5687
      %v5767 = vunpack.c.l.b16 %v5688
      %v5768 = vunpack.c.l.b16 %v5689
      %v5769 = vunpack.c.l.b16 %v5690
      %v5770 = vunpack.c.l.b16 %v5691
      %v5771 = vunpack.c.l.b16 %v5692
      %v5772 = vunpack.c.l.b16 %v5693
      %v5773 = vunpack.c.l.b16 %v5694
      %v5774 = vunpack.c.l.b16 %v5695
      %v5775 = vunpack.c.l.b16 %v5696
      %v5776 = vunpack.c.l.b16 %v5697
      %v5777 = vunpack.c.l.b16 %v5698
      %v5778 = vunpack.c.l.b16 %v5699
      %v5779 = vunpack.c.l.b16 %v5700
      %v5780 = vunpack.c.l.b16 %v5701
      %v5781 = vunpack.c.l.b16 %v5702
      %v5782 = vunpack.c.l.b16 %v5703
      %v5783 = vunpack.c.l.b16 %v5704
      %v5784 = vunpack.c.l.b16 %v5705
      %v5785 = vunpack.c.l.b16 %v5706
      %v5786 = vunpack.c.l.b16 %v5707
      %v5787 = vunpack.c.l.b16 %v5708
      %v5788 = vunpack.c.l.b16 %v5709
      %v5789 = vunpack.c.l.b16 %v5710
      %v5790 = vunpack.c.l.b16 %v5711
      %v5791 = vpack.c.b16 %v5756, %v5755
      %v5792 = vpack.c.b16 %v5758, %v5757
      %v5793 = vpack.c.b16 %v5760, %v5759
      %v5794 = vpack.c.b16 %v5762, %v5761
      %v5795 = vpack.c.b16 %v5764, %v5763
      %v5796 = vpack.c.b16 %v5766, %v5765
      %v5797 = vpack.c.b16 %v5768, %v5767
      %v5798 = vpack.c.b16 %v5770, %v5769
      %v5799 = vpack.c.b16 %v5772, %v5771
      %v5800 = vpack.c.b16 %v5774, %v5773
      %v5801 = vpack.c.b16 %v5776, %v5775
      %v5802 = vpack.c.b16 %v5778, %v5777
      %v5803 = vpack.c.b16 %v5780, %v5779
      %v5804 = vpack.c.b16 %v5782, %v5781
      %v5805 = vpack.c.b16 %v5784, %v5783
      %v5806 = vpack.c.b16 %v5786, %v5785
      %v5807 = vpack.c.b16 %v5788, %v5787
      %v5808 = vpack.c.b16 %v5790, %v5789
      %v5828 = vsel %vm488, %v5630, 0
      %v5831 = vsel %vm488, %v5633, 0
      %v5834 = vsel %vm488, %v5636, 0
      %v5837 = vsel %vm488, %v5639, 0
      %v5840 = vsel %vm488, %v5642, 0
      %v5843 = vsel %vm488, %v5645, 0
      %v5846 = vsel %vm488, %v5648, 0
      %v5849 = vsel %vm488, %v5651, 0
      %v5852 = vsel %vm488, %v5654, 0
      %v5855 = vsel %vm488, %v5657, 0
      %v5858 = vsel %vm488, %v5660, 0
      %v5861 = vsel %vm488, %v5663, 0
      %v5864 = vsel %vm488, %v5666, 0
      %v5867 = vsel %vm488, %v5669, 0
      %v5870 = vsel %vm488, %v5672, 0
      %v5873 = vsel %vm488, %v5675, 0
      %5875 = vmatprep.subr.bf16.mxu0 0
      %5876 = vmatpush1.bf16.msra.mxu0 %v5791
      %5877 = vmatprep.subr.bf16.mxu0 0
      %5878 = vmatpush1.bf16.msra.mxu0 %v5792
      %5879 = vmatprep.subr.bf16.mxu0 0
      %5880 = vmatpush1.bf16.msra.mxu0 %v5793
      %5881 = vmatprep.subr.bf16.mxu0 0
      %5882 = vmatpush1.bf16.msra.mxu0 %v5794
      %5883 = vmatprep.subr.bf16.mxu0 0
      %5884 = vmatpush1.bf16.msra.mxu0 %v5795
      %5885 = vmatprep.subr.bf16.mxu0 0
      %5886 = vmatpush1.bf16.msra.mxu0 %v5796
      %5887 = vmatprep.subr.bf16.mxu0 0
      %5888 = vmatpush1.bf16.msra.mxu0 %v5797
      %5889 = vmatprep.subr.bf16.mxu0 0
      %5890 = vmatpush1.bf16.msra.mxu0 %v5798
      %5891 = vmatprep.subr.bf16.mxu0 0
      %5892 = vmatpush1.bf16.msra.mxu0 %v5799
      %5893 = vmatprep.subr.bf16.mxu0 0
      %5894 = vmatpush1.bf16.msra.mxu0 %v5800
      %5895 = vmatprep.subr.bf16.mxu0 0
      %5896 = vmatpush1.bf16.msra.mxu0 %v5801
      %5897 = vmatprep.subr.bf16.mxu0 0
      %5898 = vmatpush1.bf16.msra.mxu0 %v5802
      %5899 = vmatprep.subr.bf16.mxu0 0
      %5900 = vmatpush1.bf16.msra.mxu0 %v5803
      %5901 = vmatprep.subr.bf16.mxu0 0
      %5902 = vmatpush1.bf16.msra.mxu0 %v5804
      %5903 = vmatprep.subr.bf16.mxu0 0
      %5904 = vmatpush1.bf16.msra.mxu0 %v5805
      %5905 = vmatprep.subr.bf16.mxu0 0
      %5906 = vmatpush1.bf16.msra.mxu0 %v5806
      %5907 = vmatprep.mubr.bf16.mxu0 %v5629
      %5908 = vmatmul.mubr.bf16.gmra.mrb[0].mxu0 %v5628
      %v5909 = vpop.f32.mrb[0].mxu0
      %v5910 = vadd.f32 %v5717, %v5909
      %v5911 = vpop.f32.mrb[0].mxu0
      %v5912 = vpop.f32.mrb[0].mxu0
      %v5913 = vadd.f32 %v5717, %v5912
      %v5914 = vpop.f32.mrb[0].mxu0
      %5915 = vmatprep.mubr.bf16.mxu0 %v5632
      %5916 = vmatmul.mubr.bf16.gmra.mrb[0].mxu0 %v5631
      %v5917 = vpop.f32.mrb[0].mxu0
      %v5918 = vadd.f32 %v5717, %v5917
      %v5919 = vpop.f32.mrb[0].mxu0
      %v5920 = vpop.f32.mrb[0].mxu0
      %v5921 = vadd.f32 %v5717, %v5920
      %v5922 = vpop.f32.mrb[0].mxu0
      %5923 = vmatprep.mubr.bf16.mxu0 %v5635
      %5924 = vmatmul.mubr.bf16.gmra.mrb[0].mxu0 %v5634
      %v5925 = vpop.f32.mrb[0].mxu0
      %v5926 = vadd.f32 %v5717, %v5925
      %v5927 = vpop.f32.mrb[0].mxu0
      %v5928 = vpop.f32.mrb[0].mxu0
      %v5929 = vadd.f32 %v5717, %v5928
      %v5930 = vpop.f32.mrb[0].mxu0
      %5931 = vmatprep.mubr.bf16.mxu0 %v5638
      %5932 = vmatmul.mubr.bf16.gmra.mrb[0].mxu0 %v5637
      %v5933 = vpop.f32.mrb[0].mxu0
      %v5934 = vadd.f32 %v5717, %v5933
      %v5935 = vpop.f32.mrb[0].mxu0
      %v5936 = vpop.f32.mrb[0].mxu0
      %v5937 = vadd.f32 %v5717, %v5936
      %v5938 = vpop.f32.mrb[0].mxu0
      %5939 = vmatprep.mubr.bf16.mxu0 %v5641
      %5940 = vmatmul.mubr.bf16.gmra.mrb[0].mxu0 %v5640
      %v5941 = vpop.f32.mrb[0].mxu0
      %v5942 = vadd.f32 %v5717, %v5941
      %v5943 = vpop.f32.mrb[0].mxu0
      %v5944 = vpop.f32.mrb[0].mxu0
      %v5945 = vadd.f32 %v5717, %v5944
      %v5946 = vpop.f32.mrb[0].mxu0
      %5947 = vmatprep.mubr.bf16.mxu0 %v5644
      %5948 = vmatmul.mubr.bf16.gmra.mrb[0].mxu0 %v5643
      %v5949 = vpop.f32.mrb[0].mxu0
      %v5950 = vadd.f32 %v5717, %v5949
      %v5951 = vpop.f32.mrb[0].mxu0
      %v5952 = vpop.f32.mrb[0].mxu0
      %v5953 = vadd.f32 %v5717, %v5952
      %v5954 = vpop.f32.mrb[0].mxu0
      %5955 = vmatprep.mubr.bf16.mxu0 %v5647
      %5956 = vmatmul.mubr.bf16.gmra.mrb[0].mxu0 %v5646
      %v5957 = vpop.f32.mrb[0].mxu0
      %v5958 = vadd.f32 %v5717, %v5957
      %v5959 = vpop.f32.mrb[0].mxu0
      %v5960 = vpop.f32.mrb[0].mxu0
      %v5961 = vadd.f32 %v5717, %v5960
      %v5962 = vpop.f32.mrb[0].mxu0
      %5963 = vmatprep.mubr.bf16.mxu0 %v5650
      %5964 = vmatmul.mubr.bf16.gmra.mrb[0].mxu0 %v5649
      %v5965 = vpop.f32.mrb[0].mxu0
      %v5966 = vadd.f32 %v5717, %v5965
      %v5967 = vpop.f32.mrb[0].mxu0
      %v5968 = vpop.f32.mrb[0].mxu0
      %v5969 = vadd.f32 %v5717, %v5968
      %v5970 = vpop.f32.mrb[0].mxu0
      %5971 = vmatprep.mubr.bf16.mxu0 %v5653
      %5972 = vmatmul.mubr.bf16.gmra.mrb[0].mxu0 %v5652
      %v5973 = vpop.f32.mrb[0].mxu0
      %v5974 = vadd.f32 %v5717, %v5973
      %v5975 = vpop.f32.mrb[0].mxu0
      %v5976 = vpop.f32.mrb[0].mxu0
      %v5977 = vadd.f32 %v5717, %v5976
      %v5978 = vpop.f32.mrb[0].mxu0
      %5979 = vmatprep.mubr.bf16.mxu0 %v5656
      %5980 = vmatmul.mubr.bf16.gmra.mrb[0].mxu0 %v5655
      %v5981 = vpop.f32.mrb[0].mxu0
      %v5982 = vadd.f32 %v5717, %v5981
      %v5983 = vpop.f32.mrb[0].mxu0
      %v5984 = vpop.f32.mrb[0].mxu0
      %v5985 = vadd.f32 %v5717, %v5984
      %v5986 = vpop.f32.mrb[0].mxu0
      %5987 = vmatprep.mubr.bf16.mxu0 %v5659
      %5988 = vmatmul.mubr.bf16.gmra.mrb[0].mxu0 %v5658
      %v5989 = vpop.f32.mrb[0].mxu0
      %v5990 = vadd.f32 %v5717, %v5989
      %v5991 = vpop.f32.mrb[0].mxu0
      %v5992 = vpop.f32.mrb[0].mxu0
      %v5993 = vadd.f32 %v5717, %v5992
      %v5994 = vpop.f32.mrb[0].mxu0
      %5995 = vmatprep.mubr.bf16.mxu0 %v5662
      %5996 = vmatmul.mubr.bf16.gmra.mrb[0].mxu0 %v5661
      %v5997 = vpop.f32.mrb[0].mxu0
      %v5998 = vadd.f32 %v5717, %v5997
      %v5999 = vpop.f32.mrb[0].mxu0
      %v6000 = vpop.f32.mrb[0].mxu0
      %v6001 = vadd.f32 %v5717, %v6000
      %v6002 = vpop.f32.mrb[0].mxu0
      %6003 = vmatprep.mubr.bf16.mxu0 %v5665
      %6004 = vmatmul.mubr.bf16.gmra.mrb[0].mxu0 %v5664
      %v6005 = vpop.f32.mrb[0].mxu0
      %v6006 = vadd.f32 %v5717, %v6005
      %v6007 = vpop.f32.mrb[0].mxu0
      %v6008 = vpop.f32.mrb[0].mxu0
      %v6009 = vadd.f32 %v5717, %v6008
      %v6010 = vpop.f32.mrb[0].mxu0
      %6011 = vmatprep.mubr.bf16.mxu0 %v5668
      %6012 = vmatmul.mubr.bf16.gmra.mrb[0].mxu0 %v5667
      %v6013 = vpop.f32.mrb[0].mxu0
      %v6014 = vadd.f32 %v5717, %v6013
      %v6015 = vpop.f32.mrb[0].mxu0
      %v6016 = vpop.f32.mrb[0].mxu0
      %v6017 = vadd.f32 %v5717, %v6016
      %v6018 = vpop.f32.mrb[0].mxu0
      %6019 = vmatprep.mubr.bf16.mxu0 %v5671
      %6020 = vmatmul.mubr.bf16.gmra.mrb[0].mxu0 %v5670
      %v6021 = vpop.f32.mrb[0].mxu0
      %v6022 = vadd.f32 %v5717, %v6021
      %v6023 = vpop.f32.mrb[0].mxu0
      %v6024 = vpop.f32.mrb[0].mxu0
      %v6025 = vadd.f32 %v5717, %v6024
      %v6026 = vpop.f32.mrb[0].mxu0
      %6027 = vmatprep.mubr.bf16.mxu0 %v5674
      %6028 = vmatmul.mubr.bf16.gmra.mrb[0].mxu0 %v5673
      %v6029 = vpop.f32.mrb[0].mxu0
      %v6030 = vadd.f32 %v5717, %v6029
      %v6031 = vpop.f32.mrb[0].mxu0
      %v6032 = vpop.f32.mrb[0].mxu0
      %v6033 = vadd.f32 %v5717, %v6032
      %v6034 = vpop.f32.mrb[0].mxu0
      %6035 = vdwg.mxu0
      %6036 = vmatprep.subr.bf16.mxu0 0
      %6037 = vmatpush1.bf16.msra.mxu0 %v5807
      %6038 = vmatprep.subr.bf16.mxu0 0
      %6039 = vmatpush1.bf16.msra.mxu0 %v5808
      %6040 = vmatprep.subr.bf16.mxu0 0
      %6041 = vmatpush1.bf16.msra.mxu0 0
      %6042 = vmatprep.subr.bf16.mxu0 0
      %6043 = vmatpush1.bf16.msra.mxu0 0
      %6044 = vmatprep.subr.bf16.mxu0 0
      %6045 = vmatpush1.bf16.msra.mxu0 0
      %6046 = vmatprep.subr.bf16.mxu0 0
      %6047 = vmatpush1.bf16.msra.mxu0 0
      %6048 = vmatprep.subr.bf16.mxu0 0
      %6049 = vmatpush1.bf16.msra.mxu0 0
      %6050 = vmatprep.subr.bf16.mxu0 0
      %6051 = vmatpush1.bf16.msra.mxu0 0
      %6052 = vmatprep.subr.bf16.mxu0 0
      %6053 = vmatpush1.bf16.msra.mxu0 0
      %6054 = vmatprep.subr.bf16.mxu0 0
      %6055 = vmatpush1.bf16.msra.mxu0 0
      %6056 = vmatprep.subr.bf16.mxu0 0
      %6057 = vmatpush1.bf16.msra.mxu0 0
      %6058 = vmatprep.subr.bf16.mxu0 0
      %6059 = vmatpush1.bf16.msra.mxu0 0
      %6060 = vmatprep.subr.bf16.mxu0 0
      %6061 = vmatpush1.bf16.msra.mxu0 0
      %6062 = vmatprep.subr.bf16.mxu0 0
      %6063 = vmatpush1.bf16.msra.mxu0 0
      %6064 = vmatprep.subr.bf16.mxu0 0
      %6065 = vmatpush1.bf16.msra.mxu0 0
      %6066 = vmatprep.subr.bf16.mxu0 0
      %6067 = vmatpush1.bf16.msra.mxu0 0
      %6068 = vmatprep.mubr.bf16.mxu0 0
      %6069 = vmatmul.mubr.bf16.gmra.mrb[0].mxu0 %v5828
      %v6070 = vpop.f32.mrb[0].mxu0
      %v6071 = vadd.f32 %v5910, %v6070
      %v6072 = vpop.f32.mrb[0].mxu0
      %v6073 = vpop.f32.mrb[0].mxu0
      %v6074 = vadd.f32 %v5913, %v6073
      %v6075 = vpop.f32.mrb[0].mxu0
      %6076 = vmatprep.mubr.bf16.mxu0 0
      %6077 = vmatmul.mubr.bf16.gmra.mrb[0].mxu0 %v5831
      %v6078 = vpop.f32.mrb[0].mxu0
      %v6079 = vadd.f32 %v5918, %v6078
      %v6080 = vpop.f32.mrb[0].mxu0
      %v6081 = vpop.f32.mrb[0].mxu0
      %v6082 = vadd.f32 %v5921, %v6081
      %v6083 = vpop.f32.mrb[0].mxu0
      %6084 = vmatprep.mubr.bf16.mxu0 0
      %6085 = vmatmul.mubr.bf16.gmra.mrb[0].mxu0 %v5834
      %v6086 = vpop.f32.mrb[0].mxu0
      %v6087 = vadd.f32 %v5926, %v6086
      %v6088 = vpop.f32.mrb[0].mxu0
      %v6089 = vpop.f32.mrb[0].mxu0
      %v6090 = vadd.f32 %v5929, %v6089
      %v6091 = vpop.f32.mrb[0].mxu0
      %6092 = vmatprep.mubr.bf16.mxu0 0
      %6093 = vmatmul.mubr.bf16.gmra.mrb[0].mxu0 %v5837
      %v6094 = vpop.f32.mrb[0].mxu0
      %v6095 = vadd.f32 %v5934, %v6094
      %v6096 = vpop.f32.mrb[0].mxu0
      %v6097 = vpop.f32.mrb[0].mxu0
      %v6098 = vadd.f32 %v5937, %v6097
      %v6099 = vpop.f32.mrb[0].mxu0
      %6100 = vmatprep.mubr.bf16.mxu0 0
      %6101 = vmatmul.mubr.bf16.gmra.mrb[0].mxu0 %v5840
      %v6102 = vpop.f32.mrb[0].mxu0
      %v6103 = vadd.f32 %v5942, %v6102
      %v6104 = vpop.f32.mrb[0].mxu0
      %v6105 = vpop.f32.mrb[0].mxu0
      %v6106 = vadd.f32 %v5945, %v6105
      %v6107 = vpop.f32.mrb[0].mxu0
      %6108 = vmatprep.mubr.bf16.mxu0 0
      %6109 = vmatmul.mubr.bf16.gmra.mrb[0].mxu0 %v5843
      %v6110 = vpop.f32.mrb[0].mxu0
      %v6111 = vadd.f32 %v5950, %v6110
      %v6112 = vpop.f32.mrb[0].mxu0
      %v6113 = vpop.f32.mrb[0].mxu0
      %v6114 = vadd.f32 %v5953, %v6113
      %v6115 = vpop.f32.mrb[0].mxu0
      %6116 = vmatprep.mubr.bf16.mxu0 0
      %6117 = vmatmul.mubr.bf16.gmra.mrb[0].mxu0 %v5846
      %v6118 = vpop.f32.mrb[0].mxu0
      %v6119 = vadd.f32 %v5958, %v6118
      %v6120 = vpop.f32.mrb[0].mxu0
      %v6121 = vpop.f32.mrb[0].mxu0
      %v6122 = vadd.f32 %v5961, %v6121
      %v6123 = vpop.f32.mrb[0].mxu0
      %6124 = vmatprep.mubr.bf16.mxu0 0
      %6125 = vmatmul.mubr.bf16.gmra.mrb[0].mxu0 %v5849
      %v6126 = vpop.f32.mrb[0].mxu0
      %v6127 = vadd.f32 %v5966, %v6126
      %v6128 = vpop.f32.mrb[0].mxu0
      %v6129 = vpop.f32.mrb[0].mxu0
      %v6130 = vadd.f32 %v5969, %v6129
      %v6131 = vpop.f32.mrb[0].mxu0
      %6132 = vmatprep.mubr.bf16.mxu0 0
      %6133 = vmatmul.mubr.bf16.gmra.mrb[0].mxu0 %v5852
      %v6134 = vpop.f32.mrb[0].mxu0
      %v6135 = vadd.f32 %v5974, %v6134
      %v6136 = vpop.f32.mrb[0].mxu0
      %v6137 = vpop.f32.mrb[0].mxu0
      %v6138 = vadd.f32 %v5977, %v6137
      %v6139 = vpop.f32.mrb[0].mxu0
      %6140 = vmatprep.mubr.bf16.mxu0 0
      %6141 = vmatmul.mubr.bf16.gmra.mrb[0].mxu0 %v5855
      %v6142 = vpop.f32.mrb[0].mxu0
      %v6143 = vadd.f32 %v5982, %v6142
      %v6144 = vpop.f32.mrb[0].mxu0
      %v6145 = vpop.f32.mrb[0].mxu0
      %v6146 = vadd.f32 %v5985, %v6145
      %v6147 = vpop.f32.mrb[0].mxu0
      %6148 = vmatprep.mubr.bf16.mxu0 0
      %6149 = vmatmul.mubr.bf16.gmra.mrb[0].mxu0 %v5858
      %v6150 = vpop.f32.mrb[0].mxu0
      %v6151 = vadd.f32 %v5990, %v6150
      %v6152 = vpop.f32.mrb[0].mxu0
      %v6153 = vpop.f32.mrb[0].mxu0
      %v6154 = vadd.f32 %v5993, %v6153
      %v6155 = vpop.f32.mrb[0].mxu0
      %6156 = vmatprep.mubr.bf16.mxu0 0
      %6157 = vmatmul.mubr.bf16.gmra.mrb[0].mxu0 %v5861
      %v6158 = vpop.f32.mrb[0].mxu0
      %v6159 = vadd.f32 %v5998, %v6158
      %v6160 = vpop.f32.mrb[0].mxu0
      %v6161 = vpop.f32.mrb[0].mxu0
      %v6162 = vadd.f32 %v6001, %v6161
      %v6163 = vpop.f32.mrb[0].mxu0
      %6164 = vmatprep.mubr.bf16.mxu0 0
      %6165 = vmatmul.mubr.bf16.gmra.mrb[0].mxu0 %v5864
      %v6166 = vpop.f32.mrb[0].mxu0
      %v6167 = vadd.f32 %v6006, %v6166
      %v6168 = vpop.f32.mrb[0].mxu0
      %v6169 = vpop.f32.mrb[0].mxu0
      %v6170 = vadd.f32 %v6009, %v6169
      %v6171 = vpop.f32.mrb[0].mxu0
      %6172 = vmatprep.mubr.bf16.mxu0 0
      %6173 = vmatmul.mubr.bf16.gmra.mrb[0].mxu0 %v5867
      %v6174 = vpop.f32.mrb[0].mxu0
      %v6175 = vadd.f32 %v6014, %v6174
      %v6176 = vpop.f32.mrb[0].mxu0
      %v6177 = vpop.f32.mrb[0].mxu0
      %v6178 = vadd.f32 %v6017, %v6177
      %v6179 = vpop.f32.mrb[0].mxu0
      %6180 = vmatprep.mubr.bf16.mxu0 0
      %6181 = vmatmul.mubr.bf16.gmra.mrb[0].mxu0 %v5870
      %v6182 = vpop.f32.mrb[0].mxu0
      %v6183 = vadd.f32 %v6022, %v6182
      %v6184 = vpop.f32.mrb[0].mxu0
      %v6185 = vpop.f32.mrb[0].mxu0
      %v6186 = vadd.f32 %v6025, %v6185
      %v6187 = vpop.f32.mrb[0].mxu0
      %6188 = vmatprep.mubr.bf16.mxu0 0
      %6189 = vmatmul.mubr.bf16.gmra.mrb[0].mxu0 %v5873
      %v6190 = vpop.f32.mrb[0].mxu0
      %v6191 = vadd.f32 %v6030, %v6190
      %v6192 = vpop.f32.mrb[0].mxu0
      %v6193 = vpop.f32.mrb[0].mxu0
      %v6194 = vadd.f32 %v6033, %v6193
      %v6195 = vpop.f32.mrb[0].mxu0
      %6196 = vdwg.mxu0
      %v6197 = vmax.f32 %v6071, 0.0
      %v6198 = vmax.f32 %v6074, 0.0
      %v6199 = vmax.f32 %v6079, 0.0
      %v6200 = vmax.f32 %v6082, 0.0
      %v6201 = vmax.f32 %v6087, 0.0
      %v6202 = vmax.f32 %v6090, 0.0
      %v6203 = vmax.f32 %v6095, 0.0
      %v6204 = vmax.f32 %v6098, 0.0
      %v6205 = vmax.f32 %v6103, 0.0
      %v6206 = vmax.f32 %v6106, 0.0
      %v6207 = vmax.f32 %v6111, 0.0
      %v6208 = vmax.f32 %v6114, 0.0
      %v6209 = vmax.f32 %v6119, 0.0
      %v6210 = vmax.f32 %v6122, 0.0
      %v6211 = vmax.f32 %v6127, 0.0
      %v6212 = vmax.f32 %v6130, 0.0
      %v6213 = vmax.f32 %v6135, 0.0
      %v6214 = vmax.f32 %v6138, 0.0
      %v6215 = vmax.f32 %v6143, 0.0
      %v6216 = vmax.f32 %v6146, 0.0
      %v6217 = vmax.f32 %v6151, 0.0
      %v6218 = vmax.f32 %v6154, 0.0
      %v6219 = vmax.f32 %v6159, 0.0
      %v6220 = vmax.f32 %v6162, 0.0
      %v6221 = vmax.f32 %v6167, 0.0
      %v6222 = vmax.f32 %v6170, 0.0
      %v6223 = vmax.f32 %v6175, 0.0
      %v6224 = vmax.f32 %v6178, 0.0
      %v6225 = vmax.f32 %v6183, 0.0
      %v6226 = vmax.f32 %v6186, 0.0
      %v6227 = vmax.f32 %v6191, 0.0
      %v6228 = vmax.f32 %v6194, 0.0
      %6229 = vst.msk [vmem:[%s2463 + $0x1] sm:$0xff] %vm488, %v6197
      %6230 = vst.msk [vmem:[%s2463 + $0x9] sm:$0xff] %vm488, %v6198
      %6231 = vst.msk [vmem:[%s2463 + $0x19] sm:$0xff] %vm488, %v6199
      %6232 = vst.msk [vmem:[%s2463 + $0x21] sm:$0xff] %vm488, %v6200
      %6233 = vst.msk [vmem:[%s2463 + $0x31] sm:$0xff] %vm488, %v6201
      %6234 = vst.msk [vmem:[%s2463 + $0x39] sm:$0xff] %vm488, %v6202
      %6235 = vst.msk [vmem:[%s2463 + $0x49] sm:$0xff] %vm488, %v6203
      %6236 = vst.msk [vmem:[%s2463 + $0x51] sm:$0xff] %vm488, %v6204
      %6237 = vst.msk [vmem:[%s2463 + $0x61] sm:$0xff] %vm488, %v6205
      %6238 = vst.msk [vmem:[%s2463 + $0x69] sm:$0xff] %vm488, %v6206
      %6239 = vst.msk [vmem:[%s2463 + $0x79] sm:$0xff] %vm488, %v6207
      %6240 = vst.msk [vmem:[%s2463 + $0x81] sm:$0xff] %vm488, %v6208
      %6241 = vst.msk [vmem:[%s2463 + $0x91] sm:$0xff] %vm488, %v6209
      %6242 = vst.msk [vmem:[%s2463 + $0x99] sm:$0xff] %vm488, %v6210
      %6243 = vst.msk [vmem:[%s2463 + $0xa9] sm:$0xff] %vm488, %v6211
      %6244 = vst.msk [vmem:[%s2463 + $0xb1] sm:$0xff] %vm488, %v6212
      %6245 = vst.msk [vmem:[%s2463 + $0xc1] sm:$0xff] %vm488, %v6213
      %6246 = vst.msk [vmem:[%s2463 + $0xc9] sm:$0xff] %vm488, %v6214
      %6247 = vst.msk [vmem:[%s2463 + $0xd9] sm:$0xff] %vm488, %v6215
      %6248 = vst.msk [vmem:[%s2463 + $0xe1] sm:$0xff] %vm488, %v6216
      %6249 = vst.msk [vmem:[%s2463 + $0xf1] sm:$0xff] %vm488, %v6217
      %6250 = vst.msk [vmem:[%s2463 + $0xf9] sm:$0xff] %vm488, %v6218
      %6251 = vst.msk [vmem:[%s2463 + $0x109] sm:$0xff] %vm488, %v6219
      %6252 = vst.msk [vmem:[%s2463 + $0x111] sm:$0xff] %vm488, %v6220
      %6253 = vst.msk [vmem:[%s2463 + $0x121] sm:$0xff] %vm488, %v6221
      %6254 = vst.msk [vmem:[%s2463 + $0x129] sm:$0xff] %vm488, %v6222
      %6255 = vst.msk [vmem:[%s2463 + $0x139] sm:$0xff] %vm488, %v6223
      %6256 = vst.msk [vmem:[%s2463 + $0x141] sm:$0xff] %vm488, %v6224
      %6257 = vst.msk [vmem:[%s2463 + $0x151] sm:$0xff] %vm488, %v6225
      %6258 = vst.msk [vmem:[%s2463 + $0x159] sm:$0xff] %vm488, %v6226
      %6259 = vst.msk [vmem:[%s2463 + $0x169] sm:$0xff] %vm488, %v6227
      %6260 = vst.msk [vmem:[%s2463 + $0x171] sm:$0xff] %vm488, %v6228
      %v6261 = vld [vmem:[#allocation3] sm:$0xff]
      %v6262 = vld [vmem:[#allocation3 + $0x8] sm:$0xff]
      %v6263 = vld [vmem:[#allocation3 + $0x18] sm:$0xff]
      %v6264 = vld [vmem:[#allocation3 + $0x20] sm:$0xff]
      %v6265 = vld [vmem:[#allocation3 + $0x30] sm:$0xff]
      %v6266 = vld [vmem:[#allocation3 + $0x38] sm:$0xff]
      %v6267 = vld [vmem:[#allocation3 + $0x48] sm:$0xff]
      %v6268 = vld [vmem:[#allocation3 + $0x50] sm:$0xff]
      %v6269 = vld [vmem:[#allocation3 + $0x60] sm:$0xff]
      %v6270 = vld [vmem:[#allocation3 + $0x68] sm:$0xff]
      %v6271 = vld [vmem:[#allocation3 + $0x78] sm:$0xff]
      %v6272 = vld [vmem:[#allocation3 + $0x80] sm:$0xff]
      %v6273 = vld [vmem:[#allocation3 + $0x90] sm:$0xff]
      %v6274 = vld [vmem:[#allocation3 + $0x98] sm:$0xff]
      %v6275 = vld [vmem:[#allocation3 + $0xa8] sm:$0xff]
      %v6276 = vld [vmem:[#allocation3 + $0xb0] sm:$0xff]
      %v6277 = vld [vmem:[#allocation3 + $0xc0] sm:$0xff]
      %v6278 = vld [vmem:[#allocation3 + $0xc8] sm:$0xff]
      %v6279 = vld [vmem:[#allocation3 + $0xd8] sm:$0xff]
      %v6280 = vld [vmem:[#allocation3 + $0xe0] sm:$0xff]
      %v6281 = vld [vmem:[#allocation3 + $0xf0] sm:$0xff]
      %v6282 = vld [vmem:[#allocation3 + $0xf8] sm:$0xff]
      %v6283 = vld [vmem:[#allocation3 + $0x108] sm:$0xff]
      %v6284 = vld [vmem:[#allocation3 + $0x110] sm:$0xff]
      %v6285 = vld [vmem:[#allocation3 + $0x120] sm:$0xff]
      %v6286 = vld [vmem:[#allocation3 + $0x128] sm:$0xff]
      %v6287 = vld [vmem:[#allocation3 + $0x138] sm:$0xff]
      %v6288 = vld [vmem:[#allocation3 + $0x140] sm:$0xff]
      %v6289 = vld [vmem:[#allocation3 + $0x150] sm:$0xff]
      %v6290 = vld [vmem:[#allocation3 + $0x158] sm:$0xff]
      %v6291 = vld [vmem:[#allocation3 + $0x168] sm:$0xff]
      %v6292 = vld [vmem:[#allocation3 + $0x170] sm:$0xff]
      %v6293 = vld [vmem:[#allocation3 + $0x1] sm:$0xff]
      %v6294 = vld [vmem:[#allocation3 + $0x9] sm:$0xff]
      %v6295 = vld [vmem:[#allocation3 + $0x19] sm:$0xff]
      %v6296 = vld [vmem:[#allocation3 + $0x21] sm:$0xff]
      %v6297 = vld [vmem:[#allocation3 + $0x31] sm:$0xff]
      %v6298 = vld [vmem:[#allocation3 + $0x39] sm:$0xff]
      %v6299 = vld [vmem:[#allocation3 + $0x49] sm:$0xff]
      %v6300 = vld [vmem:[#allocation3 + $0x51] sm:$0xff]
      %v6301 = vld [vmem:[#allocation3 + $0x61] sm:$0xff]
      %v6302 = vld [vmem:[#allocation3 + $0x69] sm:$0xff]
      %v6303 = vld [vmem:[#allocation3 + $0x79] sm:$0xff]
      %v6304 = vld [vmem:[#allocation3 + $0x81] sm:$0xff]
      %v6305 = vld [vmem:[#allocation3 + $0x91] sm:$0xff]
      %v6306 = vld [vmem:[#allocation3 + $0x99] sm:$0xff]
      %v6307 = vld [vmem:[#allocation3 + $0xa9] sm:$0xff]
      %v6308 = vld [vmem:[#allocation3 + $0xb1] sm:$0xff]
      %v6309 = vld [vmem:[#allocation3 + $0xc1] sm:$0xff]
      %v6310 = vld [vmem:[#allocation3 + $0xc9] sm:$0xff]
      %v6311 = vld [vmem:[#allocation3 + $0xd9] sm:$0xff]
      %v6312 = vld [vmem:[#allocation3 + $0xe1] sm:$0xff]
      %v6313 = vld [vmem:[#allocation3 + $0xf1] sm:$0xff]
      %v6314 = vld [vmem:[#allocation3 + $0xf9] sm:$0xff]
      %v6315 = vld [vmem:[#allocation3 + $0x109] sm:$0xff]
      %v6316 = vld [vmem:[#allocation3 + $0x111] sm:$0xff]
      %v6317 = vld [vmem:[#allocation3 + $0x121] sm:$0xff]
      %v6318 = vld [vmem:[#allocation3 + $0x129] sm:$0xff]
      %v6319 = vld [vmem:[#allocation3 + $0x139] sm:$0xff]
      %v6320 = vld [vmem:[#allocation3 + $0x141] sm:$0xff]
      %v6321 = vld [vmem:[#allocation3 + $0x151] sm:$0xff]
      %v6322 = vld [vmem:[#allocation3 + $0x159] sm:$0xff]
      %v6323 = vld [vmem:[#allocation3 + $0x169] sm:$0xff]
      %v6324 = vld [vmem:[#allocation3 + $0x171] sm:$0xff]
      %v6325 = vld [vmem:[#allocation3 + $0x2] sm:$0xff]
      %v6326 = vld [vmem:[#allocation3 + $0xa] sm:$0xff]
      %v6327 = vld [vmem:[#allocation3 + $0x1a] sm:$0xff]
      %v6328 = vld [vmem:[#allocation3 + $0x22] sm:$0xff]
      %v6329 = vld [vmem:[#allocation3 + $0x32] sm:$0xff]
      %v6330 = vld [vmem:[#allocation3 + $0x3a] sm:$0xff]
      %v6331 = vld [vmem:[#allocation3 + $0x4a] sm:$0xff]
      %v6332 = vld [vmem:[#allocation3 + $0x52] sm:$0xff]
      %v6333 = vld [vmem:[#allocation3 + $0x62] sm:$0xff]
      %v6334 = vld [vmem:[#allocation3 + $0x6a] sm:$0xff]
      %v6335 = vld [vmem:[#allocation3 + $0x7a] sm:$0xff]
      %v6336 = vld [vmem:[#allocation3 + $0x82] sm:$0xff]
      %v6337 = vld [vmem:[#allocation3 + $0x92] sm:$0xff]
      %v6338 = vld [vmem:[#allocation3 + $0x9a] sm:$0xff]
      %v6339 = vld [vmem:[#allocation3 + $0xaa] sm:$0xff]
      %v6340 = vld [vmem:[#allocation3 + $0xb2] sm:$0xff]
      %v6341 = vld [vmem:[#allocation3 + $0xc2] sm:$0xff]
      %v6342 = vld [vmem:[#allocation3 + $0xca] sm:$0xff]
      %v6343 = vld [vmem:[#allocation3 + $0xda] sm:$0xff]
      %v6344 = vld [vmem:[#allocation3 + $0xe2] sm:$0xff]
      %v6345 = vld [vmem:[#allocation3 + $0xf2] sm:$0xff]
      %v6346 = vld [vmem:[#allocation3 + $0xfa] sm:$0xff]
      %v6347 = vld [vmem:[#allocation3 + $0x10a] sm:$0xff]
      %v6348 = vld [vmem:[#allocation3 + $0x112] sm:$0xff]
      %v6349 = vld [vmem:[#allocation3 + $0x122] sm:$0xff]
      %v6350 = vld [vmem:[#allocation3 + $0x12a] sm:$0xff]
      %v6351 = vld [vmem:[#allocation3 + $0x13a] sm:$0xff]
      %v6352 = vld [vmem:[#allocation3 + $0x142] sm:$0xff]
      %v6353 = vld [vmem:[#allocation3 + $0x152] sm:$0xff]
      %v6354 = vld [vmem:[#allocation3 + $0x15a] sm:$0xff]
      %v6355 = vld [vmem:[#allocation3 + $0x16a] sm:$0xff]
      %v6356 = vld [vmem:[#allocation3 + $0x172] sm:$0xff]
      %v6357 = vld [vmem:[%s2463] sm:$0xff]
      %v6358 = vld [vmem:[%s2463 + $0x8] sm:$0xff]
      %v6359 = vld [vmem:[%s2463 + $0x18] sm:$0xff]
      %v6360 = vld [vmem:[%s2463 + $0x20] sm:$0xff]
      %v6361 = vld [vmem:[%s2463 + $0x30] sm:$0xff]
      %v6362 = vld [vmem:[%s2463 + $0x38] sm:$0xff]
      %v6363 = vld [vmem:[%s2463 + $0x48] sm:$0xff]
      %v6364 = vld [vmem:[%s2463 + $0x50] sm:$0xff]
      %v6365 = vld [vmem:[%s2463 + $0x60] sm:$0xff]
      %v6366 = vld [vmem:[%s2463 + $0x68] sm:$0xff]
      %v6367 = vld [vmem:[%s2463 + $0x78] sm:$0xff]
      %v6368 = vld [vmem:[%s2463 + $0x80] sm:$0xff]
      %v6369 = vld [vmem:[%s2463 + $0x90] sm:$0xff]
      %v6370 = vld [vmem:[%s2463 + $0x98] sm:$0xff]
      %v6371 = vld [vmem:[%s2463 + $0xa8] sm:$0xff]
      %v6372 = vld [vmem:[%s2463 + $0xb0] sm:$0xff]
      %v6373 = vld [vmem:[%s2463 + $0xc0] sm:$0xff]
      %v6374 = vld [vmem:[%s2463 + $0xc8] sm:$0xff]
      %v6375 = vld [vmem:[%s2463 + $0xd8] sm:$0xff]
      %v6376 = vld [vmem:[%s2463 + $0xe0] sm:$0xff]
      %v6377 = vld [vmem:[%s2463 + $0xf0] sm:$0xff]
      %v6378 = vld [vmem:[%s2463 + $0xf8] sm:$0xff]
      %v6379 = vld [vmem:[%s2463 + $0x108] sm:$0xff]
      %v6380 = vld [vmem:[%s2463 + $0x110] sm:$0xff]
      %v6381 = vld [vmem:[%s2463 + $0x120] sm:$0xff]
      %v6382 = vld [vmem:[%s2463 + $0x128] sm:$0xff]
      %v6383 = vld [vmem:[%s2463 + $0x138] sm:$0xff]
      %v6384 = vld [vmem:[%s2463 + $0x140] sm:$0xff]
      %v6385 = vld [vmem:[%s2463 + $0x150] sm:$0xff]
      %v6386 = vld [vmem:[%s2463 + $0x158] sm:$0xff]
      %v6387 = vld [vmem:[%s2463 + $0x168] sm:$0xff]
      %v6388 = vld [vmem:[%s2463 + $0x170] sm:$0xff]
      %v6389 = vld [vmem:[%s2463 + $0x1] sm:$0xff]
      %v6390 = vld [vmem:[%s2463 + $0x9] sm:$0xff]
      %v6391 = vld [vmem:[%s2463 + $0x19] sm:$0xff]
      %v6392 = vld [vmem:[%s2463 + $0x21] sm:$0xff]
      %v6393 = vld [vmem:[%s2463 + $0x31] sm:$0xff]
      %v6394 = vld [vmem:[%s2463 + $0x39] sm:$0xff]
      %v6395 = vld [vmem:[%s2463 + $0x49] sm:$0xff]
      %v6396 = vld [vmem:[%s2463 + $0x51] sm:$0xff]
      %v6397 = vld [vmem:[%s2463 + $0x61] sm:$0xff]
      %v6398 = vld [vmem:[%s2463 + $0x69] sm:$0xff]
      %v6399 = vld [vmem:[%s2463 + $0x79] sm:$0xff]
      %v6400 = vld [vmem:[%s2463 + $0x81] sm:$0xff]
      %v6401 = vld [vmem:[%s2463 + $0x91] sm:$0xff]
      %v6402 = vld [vmem:[%s2463 + $0x99] sm:$0xff]
      %v6403 = vld [vmem:[%s2463 + $0xa9] sm:$0xff]
      %v6404 = vld [vmem:[%s2463 + $0xb1] sm:$0xff]
      %v6405 = vld [vmem:[%s2463 + $0xc1] sm:$0xff]
      %v6406 = vld [vmem:[%s2463 + $0xc9] sm:$0xff]
      %v6407 = vld [vmem:[%s2463 + $0xd9] sm:$0xff]
      %v6408 = vld [vmem:[%s2463 + $0xe1] sm:$0xff]
      %v6409 = vld [vmem:[%s2463 + $0xf1] sm:$0xff]
      %v6410 = vld [vmem:[%s2463 + $0xf9] sm:$0xff]
      %v6411 = vld [vmem:[%s2463 + $0x109] sm:$0xff]
      %v6412 = vld [vmem:[%s2463 + $0x111] sm:$0xff]
      %v6413 = vld [vmem:[%s2463 + $0x121] sm:$0xff]
      %v6414 = vld [vmem:[%s2463 + $0x129] sm:$0xff]
      %v6415 = vld [vmem:[%s2463 + $0x139] sm:$0xff]
      %v6416 = vld [vmem:[%s2463 + $0x141] sm:$0xff]
      %v6417 = vld [vmem:[%s2463 + $0x151] sm:$0xff]
      %v6418 = vld [vmem:[%s2463 + $0x159] sm:$0xff]
      %v6419 = vld [vmem:[%s2463 + $0x169] sm:$0xff]
      %v6420 = vld [vmem:[%s2463 + $0x171] sm:$0xff]
      %v6421 = vld [vmem:[%s2463 + $0x2] sm:$0xff]
      %v6422 = vld [vmem:[%s2463 + $0xa] sm:$0xff]
      %v6423 = vld [vmem:[%s2463 + $0x1a] sm:$0xff]
      %v6424 = vld [vmem:[%s2463 + $0x22] sm:$0xff]
      %v6425 = vld [vmem:[%s2463 + $0x32] sm:$0xff]
      %v6426 = vld [vmem:[%s2463 + $0x3a] sm:$0xff]
      %v6427 = vld [vmem:[%s2463 + $0x4a] sm:$0xff]
      %v6428 = vld [vmem:[%s2463 + $0x52] sm:$0xff]
      %v6429 = vld [vmem:[%s2463 + $0x62] sm:$0xff]
      %v6430 = vld [vmem:[%s2463 + $0x6a] sm:$0xff]
      %v6431 = vld [vmem:[%s2463 + $0x7a] sm:$0xff]
      %v6432 = vld [vmem:[%s2463 + $0x82] sm:$0xff]
      %v6433 = vld [vmem:[%s2463 + $0x92] sm:$0xff]
      %v6434 = vld [vmem:[%s2463 + $0x9a] sm:$0xff]
      %v6435 = vld [vmem:[%s2463 + $0xaa] sm:$0xff]
      %v6436 = vld [vmem:[%s2463 + $0xb2] sm:$0xff]
      %v6437 = vld [vmem:[%s2463 + $0xc2] sm:$0xff]
      %v6438 = vld [vmem:[%s2463 + $0xca] sm:$0xff]
      %v6439 = vld [vmem:[%s2463 + $0xda] sm:$0xff]
      %v6440 = vld [vmem:[%s2463 + $0xe2] sm:$0xff]
      %v6441 = vld [vmem:[%s2463 + $0xf2] sm:$0xff]
      %v6442 = vld [vmem:[%s2463 + $0xfa] sm:$0xff]
      %v6443 = vld [vmem:[%s2463 + $0x10a] sm:$0xff]
      %v6444 = vld [vmem:[%s2463 + $0x112] sm:$0xff]
      %v6445 = vld [vmem:[%s2463 + $0x122] sm:$0xff]
      %v6446 = vld [vmem:[%s2463 + $0x12a] sm:$0xff]
      %v6447 = vld [vmem:[%s2463 + $0x13a] sm:$0xff]
      %v6448 = vld [vmem:[%s2463 + $0x142] sm:$0xff]
      %v6449 = vld [vmem:[%s2463 + $0x152] sm:$0xff]
      %v6450 = vld [vmem:[%s2463 + $0x15a] sm:$0xff]
      %v6451 = vld [vmem:[%s2463 + $0x16a] sm:$0xff]
      %v6452 = vld [vmem:[%s2463 + $0x172] sm:$0xff]
      %v6453 = vld [vmem:[%s2688] sm:$0xff]
      %v6454 = vld [vmem:[%s2688 + $0x8] sm:$0xff]
      %v6455 = vld [vmem:[%s2688 + $0x18] sm:$0xff]
      %v6456 = vld [vmem:[%s2688 + $0x20] sm:$0xff]
      %v6457 = vld [vmem:[%s2688 + $0x30] sm:$0xff]
      %v6458 = vld [vmem:[%s2688 + $0x38] sm:$0xff]
      %v6459 = vld [vmem:[%s2688 + $0x48] sm:$0xff]
      %v6460 = vld [vmem:[%s2688 + $0x50] sm:$0xff]
      %v6461 = vld [vmem:[%s2688 + $0x60] sm:$0xff]
      %v6462 = vld [vmem:[%s2688 + $0x68] sm:$0xff]
      %v6463 = vld [vmem:[%s2688 + $0x78] sm:$0xff]
      %v6464 = vld [vmem:[%s2688 + $0x80] sm:$0xff]
      %v6465 = vld [vmem:[%s2688 + $0x90] sm:$0xff]
      %v6466 = vld [vmem:[%s2688 + $0x98] sm:$0xff]
      %v6467 = vld [vmem:[%s2688 + $0xa8] sm:$0xff]
      %v6468 = vld [vmem:[%s2688 + $0xb0] sm:$0xff]
      %v6469 = vld [vmem:[%s2688 + $0xc0] sm:$0xff]
      %v6470 = vld [vmem:[%s2688 + $0xc8] sm:$0xff]
      %v6471 = vld [vmem:[%s2688 + $0xd8] sm:$0xff]
      %v6472 = vld [vmem:[%s2688 + $0xe0] sm:$0xff]
      %v6473 = vld [vmem:[%s2688 + $0xf0] sm:$0xff]
      %v6474 = vld [vmem:[%s2688 + $0xf8] sm:$0xff]
      %v6475 = vld [vmem:[%s2688 + $0x108] sm:$0xff]
      %v6476 = vld [vmem:[%s2688 + $0x110] sm:$0xff]
      %v6477 = vld [vmem:[%s2688 + $0x120] sm:$0xff]
      %v6478 = vld [vmem:[%s2688 + $0x128] sm:$0xff]
      %v6479 = vld [vmem:[%s2688 + $0x138] sm:$0xff]
      %v6480 = vld [vmem:[%s2688 + $0x140] sm:$0xff]
      %v6481 = vld [vmem:[%s2688 + $0x150] sm:$0xff]
      %v6482 = vld [vmem:[%s2688 + $0x158] sm:$0xff]
      %v6483 = vld [vmem:[%s2688 + $0x168] sm:$0xff]
      %v6484 = vld [vmem:[%s2688 + $0x170] sm:$0xff]
      %v6485 = vld [vmem:[%s2688 + $0x1] sm:$0xff]
      %v6486 = vld [vmem:[%s2688 + $0x9] sm:$0xff]
      %v6487 = vld [vmem:[%s2688 + $0x19] sm:$0xff]
      %v6488 = vld [vmem:[%s2688 + $0x21] sm:$0xff]
      %v6489 = vld [vmem:[%s2688 + $0x31] sm:$0xff]
      %v6490 = vld [vmem:[%s2688 + $0x39] sm:$0xff]
      %v6491 = vld [vmem:[%s2688 + $0x49] sm:$0xff]
      %v6492 = vld [vmem:[%s2688 + $0x51] sm:$0xff]
      %v6493 = vld [vmem:[%s2688 + $0x61] sm:$0xff]
      %v6494 = vld [vmem:[%s2688 + $0x69] sm:$0xff]
      %v6495 = vld [vmem:[%s2688 + $0x79] sm:$0xff]
      %v6496 = vld [vmem:[%s2688 + $0x81] sm:$0xff]
      %v6497 = vld [vmem:[%s2688 + $0x91] sm:$0xff]
      %v6498 = vld [vmem:[%s2688 + $0x99] sm:$0xff]
      %v6499 = vld [vmem:[%s2688 + $0xa9] sm:$0xff]
      %v6500 = vld [vmem:[%s2688 + $0xb1] sm:$0xff]
      %v6501 = vld [vmem:[%s2688 + $0xc1] sm:$0xff]
      %v6502 = vld [vmem:[%s2688 + $0xc9] sm:$0xff]
      %v6503 = vld [vmem:[%s2688 + $0xd9] sm:$0xff]
      %v6504 = vld [vmem:[%s2688 + $0xe1] sm:$0xff]
      %v6505 = vld [vmem:[%s2688 + $0xf1] sm:$0xff]
      %v6506 = vld [vmem:[%s2688 + $0xf9] sm:$0xff]
      %v6507 = vld [vmem:[%s2688 + $0x109] sm:$0xff]
      %v6508 = vld [vmem:[%s2688 + $0x111] sm:$0xff]
      %v6509 = vld [vmem:[%s2688 + $0x121] sm:$0xff]
      %v6510 = vld [vmem:[%s2688 + $0x129] sm:$0xff]
      %v6511 = vld [vmem:[%s2688 + $0x139] sm:$0xff]
      %v6512 = vld [vmem:[%s2688 + $0x141] sm:$0xff]
      %v6513 = vld [vmem:[%s2688 + $0x151] sm:$0xff]
      %v6514 = vld [vmem:[%s2688 + $0x159] sm:$0xff]
      %v6515 = vld [vmem:[%s2688 + $0x169] sm:$0xff]
      %v6516 = vld [vmem:[%s2688 + $0x171] sm:$0xff]
      %v6517 = vld [vmem:[%s2688 + $0x2] sm:$0xff]
      %v6518 = vld [vmem:[%s2688 + $0xa] sm:$0xff]
      %v6519 = vld [vmem:[%s2688 + $0x1a] sm:$0xff]
      %v6520 = vld [vmem:[%s2688 + $0x22] sm:$0xff]
      %v6521 = vld [vmem:[%s2688 + $0x32] sm:$0xff]
      %v6522 = vld [vmem:[%s2688 + $0x3a] sm:$0xff]
      %v6523 = vld [vmem:[%s2688 + $0x4a] sm:$0xff]
      %v6524 = vld [vmem:[%s2688 + $0x52] sm:$0xff]
      %v6525 = vld [vmem:[%s2688 + $0x62] sm:$0xff]
      %v6526 = vld [vmem:[%s2688 + $0x6a] sm:$0xff]
      %v6527 = vld [vmem:[%s2688 + $0x7a] sm:$0xff]
      %v6528 = vld [vmem:[%s2688 + $0x82] sm:$0xff]
      %v6529 = vld [vmem:[%s2688 + $0x92] sm:$0xff]
      %v6530 = vld [vmem:[%s2688 + $0x9a] sm:$0xff]
      %v6531 = vld [vmem:[%s2688 + $0xaa] sm:$0xff]
      %v6532 = vld [vmem:[%s2688 + $0xb2] sm:$0xff]
      %v6533 = vld [vmem:[%s2688 + $0xc2] sm:$0xff]
      %v6534 = vld [vmem:[%s2688 + $0xca] sm:$0xff]
      %v6535 = vld [vmem:[%s2688 + $0xda] sm:$0xff]
      %v6536 = vld [vmem:[%s2688 + $0xe2] sm:$0xff]
      %v6537 = vld [vmem:[%s2688 + $0xf2] sm:$0xff]
      %v6538 = vld [vmem:[%s2688 + $0xfa] sm:$0xff]
      %v6539 = vld [vmem:[%s2688 + $0x10a] sm:$0xff]
      %v6540 = vld [vmem:[%s2688 + $0x112] sm:$0xff]
      %v6541 = vld [vmem:[%s2688 + $0x122] sm:$0xff]
      %v6542 = vld [vmem:[%s2688 + $0x12a] sm:$0xff]
      %v6543 = vld [vmem:[%s2688 + $0x13a] sm:$0xff]
      %v6544 = vld [vmem:[%s2688 + $0x142] sm:$0xff]
      %v6545 = vld [vmem:[%s2688 + $0x152] sm:$0xff]
      %v6546 = vld [vmem:[%s2688 + $0x15a] sm:$0xff]
      %v6547 = vld [vmem:[%s2688 + $0x16a] sm:$0xff]
      %v6548 = vld [vmem:[%s2688 + $0x172] sm:$0xff]
      %6581 = vrot.lane.b32.xlu0 %v6293, 32
      %v6582 = vpop.permute.xlu0 %6581
      %6583 = vrot.lane.b32.xlu0 %v6294, 32
      %v6584 = vpop.permute.xlu0 %6583
      %6585 = vrot.lane.b32.xlu0 %v6295, 32
      %v6586 = vpop.permute.xlu0 %6585
      %6587 = vrot.lane.b32.xlu0 %v6296, 32
      %v6588 = vpop.permute.xlu0 %6587
      %6589 = vrot.lane.b32.xlu0 %v6297, 32
      %v6590 = vpop.permute.xlu0 %6589
      %6591 = vrot.lane.b32.xlu0 %v6298, 32
      %v6592 = vpop.permute.xlu0 %6591
      %6593 = vrot.lane.b32.xlu0 %v6299, 32
      %v6594 = vpop.permute.xlu0 %6593
      %6595 = vrot.lane.b32.xlu0 %v6300, 32
      %v6596 = vpop.permute.xlu0 %6595
      %6597 = vrot.lane.b32.xlu0 %v6301, 32
      %v6598 = vpop.permute.xlu0 %6597
      %6599 = vrot.lane.b32.xlu0 %v6302, 32
      %v6600 = vpop.permute.xlu0 %6599
      %6601 = vrot.lane.b32.xlu0 %v6303, 32
      %v6602 = vpop.permute.xlu0 %6601
      %6603 = vrot.lane.b32.xlu0 %v6304, 32
      %v6604 = vpop.permute.xlu0 %6603
      %6605 = vrot.lane.b32.xlu0 %v6305, 32
      %v6606 = vpop.permute.xlu0 %6605
      %6607 = vrot.lane.b32.xlu0 %v6306, 32
      %v6608 = vpop.permute.xlu0 %6607
      %6609 = vrot.lane.b32.xlu0 %v6307, 32
      %v6610 = vpop.permute.xlu0 %6609
      %6611 = vrot.lane.b32.xlu0 %v6308, 32
      %v6612 = vpop.permute.xlu0 %6611
      %6613 = vrot.lane.b32.xlu0 %v6309, 32
      %v6614 = vpop.permute.xlu0 %6613
      %6615 = vrot.lane.b32.xlu0 %v6310, 32
      %v6616 = vpop.permute.xlu0 %6615
      %6617 = vrot.lane.b32.xlu0 %v6311, 32
      %v6618 = vpop.permute.xlu0 %6617
      %6619 = vrot.lane.b32.xlu0 %v6312, 32
      %v6620 = vpop.permute.xlu0 %6619
      %6621 = vrot.lane.b32.xlu0 %v6313, 32
      %v6622 = vpop.permute.xlu0 %6621
      %6623 = vrot.lane.b32.xlu0 %v6314, 32
      %v6624 = vpop.permute.xlu0 %6623
      %6625 = vrot.lane.b32.xlu0 %v6315, 32
      %v6626 = vpop.permute.xlu0 %6625
      %6627 = vrot.lane.b32.xlu0 %v6316, 32
      %v6628 = vpop.permute.xlu0 %6627
      %6629 = vrot.lane.b32.xlu0 %v6317, 32
      %v6630 = vpop.permute.xlu0 %6629
      %6631 = vrot.lane.b32.xlu0 %v6318, 32
      %v6632 = vpop.permute.xlu0 %6631
      %6633 = vrot.lane.b32.xlu0 %v6319, 32
      %v6634 = vpop.permute.xlu0 %6633
      %6635 = vrot.lane.b32.xlu0 %v6320, 32
      %v6636 = vpop.permute.xlu0 %6635
      %6637 = vrot.lane.b32.xlu0 %v6321, 32
      %v6638 = vpop.permute.xlu0 %6637
      %6639 = vrot.lane.b32.xlu0 %v6322, 32
      %v6640 = vpop.permute.xlu0 %6639
      %6641 = vrot.lane.b32.xlu0 %v6323, 32
      %v6642 = vpop.permute.xlu0 %6641
      %6643 = vrot.lane.b32.xlu0 %v6324, 32
      %v6644 = vpop.permute.xlu0 %6643
      %6709 = vrot.lane.b32.xlu0 %v6325, 64
      %v6710 = vpop.permute.xlu0 %6709
      %6711 = vrot.lane.b32.xlu0 %v6326, 64
      %v6712 = vpop.permute.xlu0 %6711
      %6713 = vrot.lane.b32.xlu0 %v6327, 64
      %v6714 = vpop.permute.xlu0 %6713
      %6715 = vrot.lane.b32.xlu0 %v6328, 64
      %v6716 = vpop.permute.xlu0 %6715
      %6717 = vrot.lane.b32.xlu0 %v6329, 64
      %v6718 = vpop.permute.xlu0 %6717
      %6719 = vrot.lane.b32.xlu0 %v6330, 64
      %v6720 = vpop.permute.xlu0 %6719
      %6721 = vrot.lane.b32.xlu0 %v6331, 64
      %v6722 = vpop.permute.xlu0 %6721
      %6723 = vrot.lane.b32.xlu0 %v6332, 64
      %v6724 = vpop.permute.xlu0 %6723
      %6725 = vrot.lane.b32.xlu0 %v6333, 64
      %v6726 = vpop.permute.xlu0 %6725
      %6727 = vrot.lane.b32.xlu0 %v6334, 64
      %v6728 = vpop.permute.xlu0 %6727
      %6729 = vrot.lane.b32.xlu0 %v6335, 64
      %v6730 = vpop.permute.xlu0 %6729
      %6731 = vrot.lane.b32.xlu0 %v6336, 64
      %v6732 = vpop.permute.xlu0 %6731
      %6733 = vrot.lane.b32.xlu0 %v6337, 64
      %v6734 = vpop.permute.xlu0 %6733
      %6735 = vrot.lane.b32.xlu0 %v6338, 64
      %v6736 = vpop.permute.xlu0 %6735
      %6737 = vrot.lane.b32.xlu0 %v6339, 64
      %v6738 = vpop.permute.xlu0 %6737
      %6739 = vrot.lane.b32.xlu0 %v6340, 64
      %v6740 = vpop.permute.xlu0 %6739
      %6741 = vrot.lane.b32.xlu0 %v6341, 64
      %v6742 = vpop.permute.xlu0 %6741
      %6743 = vrot.lane.b32.xlu0 %v6342, 64
      %v6744 = vpop.permute.xlu0 %6743
      %6745 = vrot.lane.b32.xlu0 %v6343, 64
      %v6746 = vpop.permute.xlu0 %6745
      %6747 = vrot.lane.b32.xlu0 %v6344, 64
      %v6748 = vpop.permute.xlu0 %6747
      %6749 = vrot.lane.b32.xlu0 %v6345, 64
      %v6750 = vpop.permute.xlu0 %6749
      %6751 = vrot.lane.b32.xlu0 %v6346, 64
      %v6752 = vpop.permute.xlu0 %6751
      %6753 = vrot.lane.b32.xlu0 %v6347, 64
      %v6754 = vpop.permute.xlu0 %6753
      %6755 = vrot.lane.b32.xlu0 %v6348, 64
      %v6756 = vpop.permute.xlu0 %6755
      %6757 = vrot.lane.b32.xlu0 %v6349, 64
      %v6758 = vpop.permute.xlu0 %6757
      %6759 = vrot.lane.b32.xlu0 %v6350, 64
      %v6760 = vpop.permute.xlu0 %6759
      %6761 = vrot.lane.b32.xlu0 %v6351, 64
      %v6762 = vpop.permute.xlu0 %6761
      %6763 = vrot.lane.b32.xlu0 %v6352, 64
      %v6764 = vpop.permute.xlu0 %6763
      %6765 = vrot.lane.b32.xlu0 %v6353, 64
      %v6766 = vpop.permute.xlu0 %6765
      %6767 = vrot.lane.b32.xlu0 %v6354, 64
      %v6768 = vpop.permute.xlu0 %6767
      %6769 = vrot.lane.b32.xlu0 %v6355, 64
      %v6770 = vpop.permute.xlu0 %6769
      %6771 = vrot.lane.b32.xlu0 %v6356, 64
      %v6772 = vpop.permute.xlu0 %6771
      %6837 = vrot.lane.b32.xlu0 %v6357, 96
      %v6838 = vpop.permute.xlu0 %6837
      %6839 = vrot.lane.b32.xlu0 %v6358, 96
      %v6840 = vpop.permute.xlu0 %6839
      %6841 = vrot.lane.b32.xlu0 %v6359, 96
      %v6842 = vpop.permute.xlu0 %6841
      %6843 = vrot.lane.b32.xlu0 %v6360, 96
      %v6844 = vpop.permute.xlu0 %6843
      %6845 = vrot.lane.b32.xlu0 %v6361, 96
      %v6846 = vpop.permute.xlu0 %6845
      %6847 = vrot.lane.b32.xlu0 %v6362, 96
      %v6848 = vpop.permute.xlu0 %6847
      %6849 = vrot.lane.b32.xlu0 %v6363, 96
      %v6850 = vpop.permute.xlu0 %6849
      %6851 = vrot.lane.b32.xlu0 %v6364, 96
      %v6852 = vpop.permute.xlu0 %6851
      %6853 = vrot.lane.b32.xlu0 %v6365, 96
      %v6854 = vpop.permute.xlu0 %6853
      %6855 = vrot.lane.b32.xlu0 %v6366, 96
      %v6856 = vpop.permute.xlu0 %6855
      %6857 = vrot.lane.b32.xlu0 %v6367, 96
      %v6858 = vpop.permute.xlu0 %6857
      %6859 = vrot.lane.b32.xlu0 %v6368, 96
      %v6860 = vpop.permute.xlu0 %6859
      %6861 = vrot.lane.b32.xlu0 %v6369, 96
      %v6862 = vpop.permute.xlu0 %6861
      %6863 = vrot.lane.b32.xlu0 %v6370, 96
      %v6864 = vpop.permute.xlu0 %6863
      %6865 = vrot.lane.b32.xlu0 %v6371, 96
      %v6866 = vpop.permute.xlu0 %6865
      %6867 = vrot.lane.b32.xlu0 %v6372, 96
      %v6868 = vpop.permute.xlu0 %6867
      %6869 = vrot.lane.b32.xlu0 %v6373, 96
      %v6870 = vpop.permute.xlu0 %6869
      %6871 = vrot.lane.b32.xlu0 %v6374, 96
      %v6872 = vpop.permute.xlu0 %6871
      %6873 = vrot.lane.b32.xlu0 %v6375, 96
      %v6874 = vpop.permute.xlu0 %6873
      %6875 = vrot.lane.b32.xlu0 %v6376, 96
      %v6876 = vpop.permute.xlu0 %6875
      %6877 = vrot.lane.b32.xlu0 %v6377, 96
      %v6878 = vpop.permute.xlu0 %6877
      %6879 = vrot.lane.b32.xlu0 %v6378, 96
      %v6880 = vpop.permute.xlu0 %6879
      %6881 = vrot.lane.b32.xlu0 %v6379, 96
      %v6882 = vpop.permute.xlu0 %6881
      %6883 = vrot.lane.b32.xlu0 %v6380, 96
      %v6884 = vpop.permute.xlu0 %6883
      %6885 = vrot.lane.b32.xlu0 %v6381, 96
      %v6886 = vpop.permute.xlu0 %6885
      %6887 = vrot.lane.b32.xlu0 %v6382, 96
      %v6888 = vpop.permute.xlu0 %6887
      %6889 = vrot.lane.b32.xlu0 %v6383, 96
      %v6890 = vpop.permute.xlu0 %6889
      %6891 = vrot.lane.b32.xlu0 %v6384, 96
      %v6892 = vpop.permute.xlu0 %6891
      %6893 = vrot.lane.b32.xlu0 %v6385, 96
      %v6894 = vpop.permute.xlu0 %6893
      %6895 = vrot.lane.b32.xlu0 %v6386, 96
      %v6896 = vpop.permute.xlu0 %6895
      %6897 = vrot.lane.b32.xlu0 %v6387, 96
      %v6898 = vpop.permute.xlu0 %6897
      %6899 = vrot.lane.b32.xlu0 %v6388, 96
      %v6900 = vpop.permute.xlu0 %6899
      %6965 = vrot.lane.b32.xlu0 %v6421, 32
      %v6966 = vpop.permute.xlu0 %6965
      %6967 = vrot.lane.b32.xlu0 %v6422, 32
      %v6968 = vpop.permute.xlu0 %6967
      %6969 = vrot.lane.b32.xlu0 %v6423, 32
      %v6970 = vpop.permute.xlu0 %6969
      %6971 = vrot.lane.b32.xlu0 %v6424, 32
      %v6972 = vpop.permute.xlu0 %6971
      %6973 = vrot.lane.b32.xlu0 %v6425, 32
      %v6974 = vpop.permute.xlu0 %6973
      %6975 = vrot.lane.b32.xlu0 %v6426, 32
      %v6976 = vpop.permute.xlu0 %6975
      %6977 = vrot.lane.b32.xlu0 %v6427, 32
      %v6978 = vpop.permute.xlu0 %6977
      %6979 = vrot.lane.b32.xlu0 %v6428, 32
      %v6980 = vpop.permute.xlu0 %6979
      %6981 = vrot.lane.b32.xlu0 %v6429, 32
      %v6982 = vpop.permute.xlu0 %6981
      %6983 = vrot.lane.b32.xlu0 %v6430, 32
      %v6984 = vpop.permute.xlu0 %6983
      %6985 = vrot.lane.b32.xlu0 %v6431, 32
      %v6986 = vpop.permute.xlu0 %6985
      %6987 = vrot.lane.b32.xlu0 %v6432, 32
      %v6988 = vpop.permute.xlu0 %6987
      %6989 = vrot.lane.b32.xlu0 %v6433, 32
      %v6990 = vpop.permute.xlu0 %6989
      %6991 = vrot.lane.b32.xlu0 %v6434, 32
      %v6992 = vpop.permute.xlu0 %6991
      %6993 = vrot.lane.b32.xlu0 %v6435, 32
      %v6994 = vpop.permute.xlu0 %6993
      %6995 = vrot.lane.b32.xlu0 %v6436, 32
      %v6996 = vpop.permute.xlu0 %6995
      %6997 = vrot.lane.b32.xlu0 %v6437, 32
      %v6998 = vpop.permute.xlu0 %6997
      %6999 = vrot.lane.b32.xlu0 %v6438, 32
      %v7000 = vpop.permute.xlu0 %6999
      %7001 = vrot.lane.b32.xlu0 %v6439, 32
      %v7002 = vpop.permute.xlu0 %7001
      %7003 = vrot.lane.b32.xlu0 %v6440, 32
      %v7004 = vpop.permute.xlu0 %7003
      %7005 = vrot.lane.b32.xlu0 %v6441, 32
      %v7006 = vpop.permute.xlu0 %7005
      %7007 = vrot.lane.b32.xlu0 %v6442, 32
      %v7008 = vpop.permute.xlu0 %7007
      %7009 = vrot.lane.b32.xlu0 %v6443, 32
      %v7010 = vpop.permute.xlu0 %7009
      %7011 = vrot.lane.b32.xlu0 %v6444, 32
      %v7012 = vpop.permute.xlu0 %7011
      %7013 = vrot.lane.b32.xlu0 %v6445, 32
      %v7014 = vpop.permute.xlu0 %7013
      %7015 = vrot.lane.b32.xlu0 %v6446, 32
      %v7016 = vpop.permute.xlu0 %7015
      %7017 = vrot.lane.b32.xlu0 %v6447, 32
      %v7018 = vpop.permute.xlu0 %7017
      %7019 = vrot.lane.b32.xlu0 %v6448, 32
      %v7020 = vpop.permute.xlu0 %7019
      %7021 = vrot.lane.b32.xlu0 %v6449, 32
      %v7022 = vpop.permute.xlu0 %7021
      %7023 = vrot.lane.b32.xlu0 %v6450, 32
      %v7024 = vpop.permute.xlu0 %7023
      %7025 = vrot.lane.b32.xlu0 %v6451, 32
      %v7026 = vpop.permute.xlu0 %7025
      %7027 = vrot.lane.b32.xlu0 %v6452, 32
      %v7028 = vpop.permute.xlu0 %7027
      %7093 = vrot.lane.b32.xlu0 %v6453, 64
      %v7094 = vpop.permute.xlu0 %7093
      %7095 = vrot.lane.b32.xlu0 %v6454, 64
      %v7096 = vpop.permute.xlu0 %7095
      %7097 = vrot.lane.b32.xlu0 %v6455, 64
      %v7098 = vpop.permute.xlu0 %7097
      %7099 = vrot.lane.b32.xlu0 %v6456, 64
      %v7100 = vpop.permute.xlu0 %7099
      %7101 = vrot.lane.b32.xlu0 %v6457, 64
      %v7102 = vpop.permute.xlu0 %7101
      %7103 = vrot.lane.b32.xlu0 %v6458, 64
      %v7104 = vpop.permute.xlu0 %7103
      %7105 = vrot.lane.b32.xlu0 %v6459, 64
      %v7106 = vpop.permute.xlu0 %7105
      %7107 = vrot.lane.b32.xlu0 %v6460, 64
      %v7108 = vpop.permute.xlu0 %7107
      %7109 = vrot.lane.b32.xlu0 %v6461, 64
      %v7110 = vpop.permute.xlu0 %7109
      %7111 = vrot.lane.b32.xlu0 %v6462, 64
      %v7112 = vpop.permute.xlu0 %7111
      %7113 = vrot.lane.b32.xlu0 %v6463, 64
      %v7114 = vpop.permute.xlu0 %7113
      %7115 = vrot.lane.b32.xlu0 %v6464, 64
      %v7116 = vpop.permute.xlu0 %7115
      %7117 = vrot.lane.b32.xlu0 %v6465, 64
      %v7118 = vpop.permute.xlu0 %7117
      %7119 = vrot.lane.b32.xlu0 %v6466, 64
      %v7120 = vpop.permute.xlu0 %7119
      %7121 = vrot.lane.b32.xlu0 %v6467, 64
      %v7122 = vpop.permute.xlu0 %7121
      %7123 = vrot.lane.b32.xlu0 %v6468, 64
      %v7124 = vpop.permute.xlu0 %7123
      %7125 = vrot.lane.b32.xlu0 %v6469, 64
      %v7126 = vpop.permute.xlu0 %7125
      %7127 = vrot.lane.b32.xlu0 %v6470, 64
      %v7128 = vpop.permute.xlu0 %7127
      %7129 = vrot.lane.b32.xlu0 %v6471, 64
      %v7130 = vpop.permute.xlu0 %7129
      %7131 = vrot.lane.b32.xlu0 %v6472, 64
      %v7132 = vpop.permute.xlu0 %7131
      %7133 = vrot.lane.b32.xlu0 %v6473, 64
      %v7134 = vpop.permute.xlu0 %7133
      %7135 = vrot.lane.b32.xlu0 %v6474, 64
      %v7136 = vpop.permute.xlu0 %7135
      %7137 = vrot.lane.b32.xlu0 %v6475, 64
      %v7138 = vpop.permute.xlu0 %7137
      %7139 = vrot.lane.b32.xlu0 %v6476, 64
      %v7140 = vpop.permute.xlu0 %7139
      %7141 = vrot.lane.b32.xlu0 %v6477, 64
      %v7142 = vpop.permute.xlu0 %7141
      %7143 = vrot.lane.b32.xlu0 %v6478, 64
      %v7144 = vpop.permute.xlu0 %7143
      %7145 = vrot.lane.b32.xlu0 %v6479, 64
      %v7146 = vpop.permute.xlu0 %7145
      %7147 = vrot.lane.b32.xlu0 %v6480, 64
      %v7148 = vpop.permute.xlu0 %7147
      %7149 = vrot.lane.b32.xlu0 %v6481, 64
      %v7150 = vpop.permute.xlu0 %7149
      %7151 = vrot.lane.b32.xlu0 %v6482, 64
      %v7152 = vpop.permute.xlu0 %7151
      %7153 = vrot.lane.b32.xlu0 %v6483, 64
      %v7154 = vpop.permute.xlu0 %7153
      %7155 = vrot.lane.b32.xlu0 %v6484, 64
      %v7156 = vpop.permute.xlu0 %7155
      %7221 = vrot.lane.b32.xlu0 %v6485, 96
      %v7222 = vpop.permute.xlu0 %7221
      %7223 = vrot.lane.b32.xlu0 %v6486, 96
      %v7224 = vpop.permute.xlu0 %7223
      %7225 = vrot.lane.b32.xlu0 %v6487, 96
      %v7226 = vpop.permute.xlu0 %7225
      %7227 = vrot.lane.b32.xlu0 %v6488, 96
      %v7228 = vpop.permute.xlu0 %7227
      %7229 = vrot.lane.b32.xlu0 %v6489, 96
      %v7230 = vpop.permute.xlu0 %7229
      %7231 = vrot.lane.b32.xlu0 %v6490, 96
      %v7232 = vpop.permute.xlu0 %7231
      %7233 = vrot.lane.b32.xlu0 %v6491, 96
      %v7234 = vpop.permute.xlu0 %7233
      %7235 = vrot.lane.b32.xlu0 %v6492, 96
      %v7236 = vpop.permute.xlu0 %7235
      %7237 = vrot.lane.b32.xlu0 %v6493, 96
      %v7238 = vpop.permute.xlu0 %7237
      %7239 = vrot.lane.b32.xlu0 %v6494, 96
      %v7240 = vpop.permute.xlu0 %7239
      %7241 = vrot.lane.b32.xlu0 %v6495, 96
      %v7242 = vpop.permute.xlu0 %7241
      %7243 = vrot.lane.b32.xlu0 %v6496, 96
      %v7244 = vpop.permute.xlu0 %7243
      %7245 = vrot.lane.b32.xlu0 %v6497, 96
      %v7246 = vpop.permute.xlu0 %7245
      %7247 = vrot.lane.b32.xlu0 %v6498, 96
      %v7248 = vpop.permute.xlu0 %7247
      %7249 = vrot.lane.b32.xlu0 %v6499, 96
      %v7250 = vpop.permute.xlu0 %7249
      %7251 = vrot.lane.b32.xlu0 %v6500, 96
      %v7252 = vpop.permute.xlu0 %7251
      %7253 = vrot.lane.b32.xlu0 %v6501, 96
      %v7254 = vpop.permute.xlu0 %7253
      %7255 = vrot.lane.b32.xlu0 %v6502, 96
      %v7256 = vpop.permute.xlu0 %7255
      %7257 = vrot.lane.b32.xlu0 %v6503, 96
      %v7258 = vpop.permute.xlu0 %7257
      %7259 = vrot.lane.b32.xlu0 %v6504, 96
      %v7260 = vpop.permute.xlu0 %7259
      %7261 = vrot.lane.b32.xlu0 %v6505, 96
      %v7262 = vpop.permute.xlu0 %7261
      %7263 = vrot.lane.b32.xlu0 %v6506, 96
      %v7264 = vpop.permute.xlu0 %7263
      %7265 = vrot.lane.b32.xlu0 %v6507, 96
      %v7266 = vpop.permute.xlu0 %7265
      %7267 = vrot.lane.b32.xlu0 %v6508, 96
      %v7268 = vpop.permute.xlu0 %7267
      %7269 = vrot.lane.b32.xlu0 %v6509, 96
      %v7270 = vpop.permute.xlu0 %7269
      %7271 = vrot.lane.b32.xlu0 %v6510, 96
      %v7272 = vpop.permute.xlu0 %7271
      %7273 = vrot.lane.b32.xlu0 %v6511, 96
      %v7274 = vpop.permute.xlu0 %7273
      %7275 = vrot.lane.b32.xlu0 %v6512, 96
      %v7276 = vpop.permute.xlu0 %7275
      %7277 = vrot.lane.b32.xlu0 %v6513, 96
      %v7278 = vpop.permute.xlu0 %7277
      %7279 = vrot.lane.b32.xlu0 %v6514, 96
      %v7280 = vpop.permute.xlu0 %7279
      %7281 = vrot.lane.b32.xlu0 %v6515, 96
      %v7282 = vpop.permute.xlu0 %7281
      %7283 = vrot.lane.b32.xlu0 %v6516, 96
      %v7284 = vpop.permute.xlu0 %7283
      %v7317 = vsel %vm488, %v6261, %v6582
      %v7318 = vsel %vm488, %v6262, %v6584
      %v7319 = vsel %vm488, %v6263, %v6586
      %v7320 = vsel %vm488, %v6264, %v6588
      %v7321 = vsel %vm488, %v6265, %v6590
      %v7322 = vsel %vm488, %v6266, %v6592
      %v7323 = vsel %vm488, %v6267, %v6594
      %v7324 = vsel %vm488, %v6268, %v6596
      %v7325 = vsel %vm488, %v6269, %v6598
      %v7326 = vsel %vm488, %v6270, %v6600
      %v7327 = vsel %vm488, %v6271, %v6602
      %v7328 = vsel %vm488, %v6272, %v6604
      %v7329 = vsel %vm488, %v6273, %v6606
      %v7330 = vsel %vm488, %v6274, %v6608
      %v7331 = vsel %vm488, %v6275, %v6610
      %v7332 = vsel %vm488, %v6276, %v6612
      %v7333 = vsel %vm488, %v6277, %v6614
      %v7334 = vsel %vm488, %v6278, %v6616
      %v7335 = vsel %vm488, %v6279, %v6618
      %v7336 = vsel %vm488, %v6280, %v6620
      %v7337 = vsel %vm488, %v6281, %v6622
      %v7338 = vsel %vm488, %v6282, %v6624
      %v7339 = vsel %vm488, %v6283, %v6626
      %v7340 = vsel %vm488, %v6284, %v6628
      %v7341 = vsel %vm488, %v6285, %v6630
      %v7342 = vsel %vm488, %v6286, %v6632
      %v7343 = vsel %vm488, %v6287, %v6634
      %v7344 = vsel %vm488, %v6288, %v6636
      %v7345 = vsel %vm488, %v6289, %v6638
      %v7346 = vsel %vm488, %v6290, %v6640
      %v7347 = vsel %vm488, %v6291, %v6642
      %v7348 = vsel %vm488, %v6292, %v6644
      %v7349 = vsel %vm3585, %v7317, %v6710
      %v7350 = vsel %vm3585, %v7318, %v6712
      %v7351 = vsel %vm3585, %v7319, %v6714
      %v7352 = vsel %vm3585, %v7320, %v6716
      %v7353 = vsel %vm3585, %v7321, %v6718
      %v7354 = vsel %vm3585, %v7322, %v6720
      %v7355 = vsel %vm3585, %v7323, %v6722
      %v7356 = vsel %vm3585, %v7324, %v6724
      %v7357 = vsel %vm3585, %v7325, %v6726
      %v7358 = vsel %vm3585, %v7326, %v6728
      %v7359 = vsel %vm3585, %v7327, %v6730
      %v7360 = vsel %vm3585, %v7328, %v6732
      %v7361 = vsel %vm3585, %v7329, %v6734
      %v7362 = vsel %vm3585, %v7330, %v6736
      %v7363 = vsel %vm3585, %v7331, %v6738
      %v7364 = vsel %vm3585, %v7332, %v6740
      %v7365 = vsel %vm3585, %v7333, %v6742
      %v7366 = vsel %vm3585, %v7334, %v6744
      %v7367 = vsel %vm3585, %v7335, %v6746
      %v7368 = vsel %vm3585, %v7336, %v6748
      %v7369 = vsel %vm3585, %v7337, %v6750
      %v7370 = vsel %vm3585, %v7338, %v6752
      %v7371 = vsel %vm3585, %v7339, %v6754
      %v7372 = vsel %vm3585, %v7340, %v6756
      %v7373 = vsel %vm3585, %v7341, %v6758
      %v7374 = vsel %vm3585, %v7342, %v6760
      %v7375 = vsel %vm3585, %v7343, %v6762
      %v7376 = vsel %vm3585, %v7344, %v6764
      %v7377 = vsel %vm3585, %v7345, %v6766
      %v7378 = vsel %vm3585, %v7346, %v6768
      %v7379 = vsel %vm3585, %v7347, %v6770
      %v7380 = vsel %vm3585, %v7348, %v6772
      %v7381 = vsel %vm3618, %v7349, %v6838
      %v7382 = vsel %vm3618, %v7350, %v6840
      %v7383 = vsel %vm3618, %v7351, %v6842
      %v7384 = vsel %vm3618, %v7352, %v6844
      %v7385 = vsel %vm3618, %v7353, %v6846
      %v7386 = vsel %vm3618, %v7354, %v6848
      %v7387 = vsel %vm3618, %v7355, %v6850
      %v7388 = vsel %vm3618, %v7356, %v6852
      %v7389 = vsel %vm3618, %v7357, %v6854
      %v7390 = vsel %vm3618, %v7358, %v6856
      %v7391 = vsel %vm3618, %v7359, %v6858
      %v7392 = vsel %vm3618, %v7360, %v6860
      %v7393 = vsel %vm3618, %v7361, %v6862
      %v7394 = vsel %vm3618, %v7362, %v6864
      %v7395 = vsel %vm3618, %v7363, %v6866
      %v7396 = vsel %vm3618, %v7364, %v6868
      %v7397 = vsel %vm3618, %v7365, %v6870
      %v7398 = vsel %vm3618, %v7366, %v6872
      %v7399 = vsel %vm3618, %v7367, %v6874
      %v7400 = vsel %vm3618, %v7368, %v6876
      %v7401 = vsel %vm3618, %v7369, %v6878
      %v7402 = vsel %vm3618, %v7370, %v6880
      %v7403 = vsel %vm3618, %v7371, %v6882
      %v7404 = vsel %vm3618, %v7372, %v6884
      %v7405 = vsel %vm3618, %v7373, %v6886
      %v7406 = vsel %vm3618, %v7374, %v6888
      %v7407 = vsel %vm3618, %v7375, %v6890
      %v7408 = vsel %vm3618, %v7376, %v6892
      %v7409 = vsel %vm3618, %v7377, %v6894
      %v7410 = vsel %vm3618, %v7378, %v6896
      %v7411 = vsel %vm3618, %v7379, %v6898
      %v7412 = vsel %vm3618, %v7380, %v6900
      %v7413 = vsel %vm488, %v6389, %v6966
      %v7414 = vsel %vm488, %v6390, %v6968
      %v7415 = vsel %vm488, %v6391, %v6970
      %v7416 = vsel %vm488, %v6392, %v6972
      %v7417 = vsel %vm488, %v6393, %v6974
      %v7418 = vsel %vm488, %v6394, %v6976
      %v7419 = vsel %vm488, %v6395, %v6978
      %v7420 = vsel %vm488, %v6396, %v6980
      %v7421 = vsel %vm488, %v6397, %v6982
      %v7422 = vsel %vm488, %v6398, %v6984
      %v7423 = vsel %vm488, %v6399, %v6986
      %v7424 = vsel %vm488, %v6400, %v6988
      %v7425 = vsel %vm488, %v6401, %v6990
      %v7426 = vsel %vm488, %v6402, %v6992
      %v7427 = vsel %vm488, %v6403, %v6994
      %v7428 = vsel %vm488, %v6404, %v6996
      %v7429 = vsel %vm488, %v6405, %v6998
      %v7430 = vsel %vm488, %v6406, %v7000
      %v7431 = vsel %vm488, %v6407, %v7002
      %v7432 = vsel %vm488, %v6408, %v7004
      %v7433 = vsel %vm488, %v6409, %v7006
      %v7434 = vsel %vm488, %v6410, %v7008
      %v7435 = vsel %vm488, %v6411, %v7010
      %v7436 = vsel %vm488, %v6412, %v7012
      %v7437 = vsel %vm488, %v6413, %v7014
      %v7438 = vsel %vm488, %v6414, %v7016
      %v7439 = vsel %vm488, %v6415, %v7018
      %v7440 = vsel %vm488, %v6416, %v7020
      %v7441 = vsel %vm488, %v6417, %v7022
      %v7442 = vsel %vm488, %v6418, %v7024
      %v7443 = vsel %vm488, %v6419, %v7026
      %v7444 = vsel %vm488, %v6420, %v7028
      %v7445 = vsel %vm3585, %v7413, %v7094
      %v7446 = vsel %vm3585, %v7414, %v7096
      %v7447 = vsel %vm3585, %v7415, %v7098
      %v7448 = vsel %vm3585, %v7416, %v7100
      %v7449 = vsel %vm3585, %v7417, %v7102
      %v7450 = vsel %vm3585, %v7418, %v7104
      %v7451 = vsel %vm3585, %v7419, %v7106
      %v7452 = vsel %vm3585, %v7420, %v7108
      %v7453 = vsel %vm3585, %v7421, %v7110
      %v7454 = vsel %vm3585, %v7422, %v7112
      %v7455 = vsel %vm3585, %v7423, %v7114
      %v7456 = vsel %vm3585, %v7424, %v7116
      %v7457 = vsel %vm3585, %v7425, %v7118
      %v7458 = vsel %vm3585, %v7426, %v7120
      %v7459 = vsel %vm3585, %v7427, %v7122
      %v7460 = vsel %vm3585, %v7428, %v7124
      %v7461 = vsel %vm3585, %v7429, %v7126
      %v7462 = vsel %vm3585, %v7430, %v7128
      %v7463 = vsel %vm3585, %v7431, %v7130
      %v7464 = vsel %vm3585, %v7432, %v7132
      %v7465 = vsel %vm3585, %v7433, %v7134
      %v7466 = vsel %vm3585, %v7434, %v7136
      %v7467 = vsel %vm3585, %v7435, %v7138
      %v7468 = vsel %vm3585, %v7436, %v7140
      %v7469 = vsel %vm3585, %v7437, %v7142
      %v7470 = vsel %vm3585, %v7438, %v7144
      %v7471 = vsel %vm3585, %v7439, %v7146
      %v7472 = vsel %vm3585, %v7440, %v7148
      %v7473 = vsel %vm3585, %v7441, %v7150
      %v7474 = vsel %vm3585, %v7442, %v7152
      %v7475 = vsel %vm3585, %v7443, %v7154
      %v7476 = vsel %vm3585, %v7444, %v7156
      %v7477 = vsel %vm3618, %v7445, %v7222
      %v7478 = vsel %vm3618, %v7446, %v7224
      %v7479 = vsel %vm3618, %v7447, %v7226
      %v7480 = vsel %vm3618, %v7448, %v7228
      %v7481 = vsel %vm3618, %v7449, %v7230
      %v7482 = vsel %vm3618, %v7450, %v7232
      %v7483 = vsel %vm3618, %v7451, %v7234
      %v7484 = vsel %vm3618, %v7452, %v7236
      %v7485 = vsel %vm3618, %v7453, %v7238
      %v7486 = vsel %vm3618, %v7454, %v7240
      %v7487 = vsel %vm3618, %v7455, %v7242
      %v7488 = vsel %vm3618, %v7456, %v7244
      %v7489 = vsel %vm3618, %v7457, %v7246
      %v7490 = vsel %vm3618, %v7458, %v7248
      %v7491 = vsel %vm3618, %v7459, %v7250
      %v7492 = vsel %vm3618, %v7460, %v7252
      %v7493 = vsel %vm3618, %v7461, %v7254
      %v7494 = vsel %vm3618, %v7462, %v7256
      %v7495 = vsel %vm3618, %v7463, %v7258
      %v7496 = vsel %vm3618, %v7464, %v7260
      %v7497 = vsel %vm3618, %v7465, %v7262
      %v7498 = vsel %vm3618, %v7466, %v7264
      %v7499 = vsel %vm3618, %v7467, %v7266
      %v7500 = vsel %vm3618, %v7468, %v7268
      %v7501 = vsel %vm3618, %v7469, %v7270
      %v7502 = vsel %vm3618, %v7470, %v7272
      %v7503 = vsel %vm3618, %v7471, %v7274
      %v7504 = vsel %vm3618, %v7472, %v7276
      %v7505 = vsel %vm3618, %v7473, %v7278
      %v7506 = vsel %vm3618, %v7474, %v7280
      %v7507 = vsel %vm3618, %v7475, %v7282
      %v7508 = vsel %vm3618, %v7476, %v7284
      %v7509 = vpack.c.bf16 %v7382, %v7381
      %v7510 = vpack.c.bf16 %v7478, %v7477
      %v7511 = vpack.c.bf16 %v6518, %v6517
      %v7512 = vpack.c.bf16 %v7384, %v7383
      %v7513 = vpack.c.bf16 %v7480, %v7479
      %v7514 = vpack.c.bf16 %v6520, %v6519
      %v7515 = vpack.c.bf16 %v7386, %v7385
      %v7516 = vpack.c.bf16 %v7482, %v7481
      %v7517 = vpack.c.bf16 %v6522, %v6521
      %v7518 = vpack.c.bf16 %v7388, %v7387
      %v7519 = vpack.c.bf16 %v7484, %v7483
      %v7520 = vpack.c.bf16 %v6524, %v6523
      %v7521 = vpack.c.bf16 %v7390, %v7389
      %v7522 = vpack.c.bf16 %v7486, %v7485
      %v7523 = vpack.c.bf16 %v6526, %v6525
      %v7524 = vpack.c.bf16 %v7392, %v7391
      %v7525 = vpack.c.bf16 %v7488, %v7487
      %v7526 = vpack.c.bf16 %v6528, %v6527
      %v7527 = vpack.c.bf16 %v7394, %v7393
      %v7528 = vpack.c.bf16 %v7490, %v7489
      %v7529 = vpack.c.bf16 %v6530, %v6529
      %v7530 = vpack.c.bf16 %v7396, %v7395
      %v7531 = vpack.c.bf16 %v7492, %v7491
      %v7532 = vpack.c.bf16 %v6532, %v6531
      %v7533 = vpack.c.bf16 %v7398, %v7397
      %v7534 = vpack.c.bf16 %v7494, %v7493
      %v7535 = vpack.c.bf16 %v6534, %v6533
      %v7536 = vpack.c.bf16 %v7400, %v7399
      %v7537 = vpack.c.bf16 %v7496, %v7495
      %v7538 = vpack.c.bf16 %v6536, %v6535
      %v7539 = vpack.c.bf16 %v7402, %v7401
      %v7540 = vpack.c.bf16 %v7498, %v7497
      %v7541 = vpack.c.bf16 %v6538, %v6537
      %v7542 = vpack.c.bf16 %v7404, %v7403
      %v7543 = vpack.c.bf16 %v7500, %v7499
      %v7544 = vpack.c.bf16 %v6540, %v6539
      %v7545 = vpack.c.bf16 %v7406, %v7405
      %v7546 = vpack.c.bf16 %v7502, %v7501
      %v7547 = vpack.c.bf16 %v6542, %v6541
      %v7548 = vpack.c.bf16 %v7408, %v7407
      %v7549 = vpack.c.bf16 %v7504, %v7503
      %v7550 = vpack.c.bf16 %v6544, %v6543
      %v7551 = vpack.c.bf16 %v7410, %v7409
      %v7552 = vpack.c.bf16 %v7506, %v7505
      %v7553 = vpack.c.bf16 %v6546, %v6545
      %v7554 = vpack.c.bf16 %v7412, %v7411
      %v7555 = vpack.c.bf16 %v7508, %v7507
      %v7556 = vpack.c.bf16 %v6548, %v6547
      %v7557 = vld [vmem:[%s7] sm:$0xf]
      %v7558 = vld [vmem:[%s7 + $0x4] sm:$0xf]
      %v7559 = vld [vmem:[%s7 + $0x8] sm:$0xf]
      %v7560 = vld [vmem:[%s7 + $0xc] sm:$0xf]
      %v7561 = vld [vmem:[%s7 + $0x10] sm:$0xf]
      %v7562 = vld [vmem:[%s7 + $0x14] sm:$0xf]
      %v7563 = vld [vmem:[%s7 + $0x18] sm:$0xf]
      %v7564 = vld [vmem:[%s7 + $0x1c] sm:$0xf]
      %v7565 = vld [vmem:[%s7 + $0x20] sm:$0xf]
      %v7566 = vld [vmem:[%s7 + $0x24] sm:$0xf]
      %v7567 = vld [vmem:[%s7 + $0x28] sm:$0xf]
      %v7568 = vld [vmem:[%s7 + $0x2c] sm:$0xf]
      %v7569 = vld [vmem:[%s7 + $0x30] sm:$0xf]
      %v7570 = vld [vmem:[%s7 + $0x34] sm:$0xf]
      %v7571 = vld [vmem:[%s7 + $0x38] sm:$0xf]
      %v7572 = vld [vmem:[%s7 + $0x3c] sm:$0xf]
      %v7573 = vld [vmem:[%s7 + $0x40] sm:$0xf]
      %v7574 = vld [vmem:[%s7 + $0x44] sm:$0xf]
      %v7575 = vld [vmem:[%s7 + $0x48] sm:$0xf]
      %v7576 = vld [vmem:[%s7 + $0x4c] sm:$0xf]
      %v7577 = vld [vmem:[%s7 + $0x50] sm:$0xf]
      %v7578 = vld [vmem:[%s7 + $0x54] sm:$0xf]
      %v7579 = vld [vmem:[%s7 + $0x58] sm:$0xf]
      %v7580 = vld [vmem:[%s7 + $0x5c] sm:$0xf]
      %v7581 = vld [vmem:[%s7 + $0x60] sm:$0xf]
      %v7582 = vld [vmem:[%s7 + $0x64] sm:$0xf]
      %v7583 = vld [vmem:[%s7 + $0x68] sm:$0xf]
      %v7584 = vld [vmem:[%s7 + $0x6c] sm:$0xf]
      %v7585 = vld [vmem:[%s7 + $0x70] sm:$0xf]
      %v7586 = vld [vmem:[%s7 + $0x74] sm:$0xf]
      %v7587 = vld [vmem:[%s7 + $0x78] sm:$0xf]
      %v7588 = vld [vmem:[%s7 + $0x7c] sm:$0xf]
      %v7589 = vld [vmem:[%s7 + $0x80] sm:$0xf]
      %v7590 = vld [vmem:[%s7 + $0x84] sm:$0xf]
      %v7591 = vld [vmem:[%s7 + $0x88] sm:$0xf]
      %v7592 = vld [vmem:[%s7 + $0x8c] sm:$0xf]
      %v7593 = vld [vmem:[%s8] sm:$0x1]
      %v7595 = vlaneseq
      %v7596 = vshrl.u32 %v7595, 7
      %v7597 = vsub.s32 0, %v7596
      %v7598 = vrot.slane %v7593, %v7597
      %v7636 = vunpack.c.l.b16 %v7557
      %v7637 = vunpack.c.l.b16 %v7558
      %v7638 = vunpack.c.l.b16 %v7559
      %v7639 = vunpack.c.l.b16 %v7560
      %v7640 = vunpack.c.l.b16 %v7561
      %v7641 = vunpack.c.l.b16 %v7562
      %v7642 = vunpack.c.l.b16 %v7563
      %v7643 = vunpack.c.l.b16 %v7564
      %v7644 = vunpack.c.l.b16 %v7565
      %v7645 = vunpack.c.l.b16 %v7566
      %v7646 = vunpack.c.l.b16 %v7567
      %v7647 = vunpack.c.l.b16 %v7568
      %v7648 = vunpack.c.l.b16 %v7569
      %v7649 = vunpack.c.l.b16 %v7570
      %v7650 = vunpack.c.l.b16 %v7571
      %v7651 = vunpack.c.l.b16 %v7572
      %v7652 = vunpack.c.l.b16 %v7573
      %v7653 = vunpack.c.l.b16 %v7574
      %v7654 = vunpack.c.l.b16 %v7575
      %v7655 = vunpack.c.l.b16 %v7576
      %v7656 = vunpack.c.l.b16 %v7577
      %v7657 = vunpack.c.l.b16 %v7578
      %v7658 = vunpack.c.l.b16 %v7579
      %v7659 = vunpack.c.l.b16 %v7580
      %v7660 = vunpack.c.l.b16 %v7581
      %v7661 = vunpack.c.l.b16 %v7582
      %v7662 = vunpack.c.l.b16 %v7583
      %v7663 = vunpack.c.l.b16 %v7584
      %v7664 = vunpack.c.l.b16 %v7585
      %v7665 = vunpack.c.l.b16 %v7586
      %v7666 = vunpack.c.l.b16 %v7587
      %v7667 = vunpack.c.l.b16 %v7588
      %v7668 = vunpack.c.l.b16 %v7589
      %v7669 = vunpack.c.l.b16 %v7590
      %v7670 = vunpack.c.l.b16 %v7591
      %v7671 = vunpack.c.l.b16 %v7592
      %v7672 = vpack.c.b16 %v7637, %v7636
      %v7673 = vpack.c.b16 %v7639, %v7638
      %v7674 = vpack.c.b16 %v7641, %v7640
      %v7675 = vpack.c.b16 %v7643, %v7642
      %v7676 = vpack.c.b16 %v7645, %v7644
      %v7677 = vpack.c.b16 %v7647, %v7646
      %v7678 = vpack.c.b16 %v7649, %v7648
      %v7679 = vpack.c.b16 %v7651, %v7650
      %v7680 = vpack.c.b16 %v7653, %v7652
      %v7681 = vpack.c.b16 %v7655, %v7654
      %v7682 = vpack.c.b16 %v7657, %v7656
      %v7683 = vpack.c.b16 %v7659, %v7658
      %v7684 = vpack.c.b16 %v7661, %v7660
      %v7685 = vpack.c.b16 %v7663, %v7662
      %v7686 = vpack.c.b16 %v7665, %v7664
      %v7687 = vpack.c.b16 %v7667, %v7666
      %v7688 = vpack.c.b16 %v7669, %v7668
      %v7689 = vpack.c.b16 %v7671, %v7670
      %v7709 = vsel %vm488, %v7511, 0
      %v7712 = vsel %vm488, %v7514, 0
      %v7715 = vsel %vm488, %v7517, 0
      %v7718 = vsel %vm488, %v7520, 0
      %v7721 = vsel %vm488, %v7523, 0
      %v7724 = vsel %vm488, %v7526, 0
      %v7727 = vsel %vm488, %v7529, 0
      %v7730 = vsel %vm488, %v7532, 0
      %v7733 = vsel %vm488, %v7535, 0
      %v7736 = vsel %vm488, %v7538, 0
      %v7739 = vsel %vm488, %v7541, 0
      %v7742 = vsel %vm488, %v7544, 0
      %v7745 = vsel %vm488, %v7547, 0
      %v7748 = vsel %vm488, %v7550, 0
      %v7751 = vsel %vm488, %v7553, 0
      %v7754 = vsel %vm488, %v7556, 0
      %7756 = vmatprep.subr.bf16.mxu0 0
      %7757 = vmatpush1.bf16.msra.mxu0 %v7672
      %7758 = vmatprep.subr.bf16.mxu0 0
      %7759 = vmatpush1.bf16.msra.mxu0 %v7673
      %7760 = vmatprep.subr.bf16.mxu0 0
      %7761 = vmatpush1.bf16.msra.mxu0 %v7674
      %7762 = vmatprep.subr.bf16.mxu0 0
      %7763 = vmatpush1.bf16.msra.mxu0 %v7675
      %7764 = vmatprep.subr.bf16.mxu0 0
      %7765 = vmatpush1.bf16.msra.mxu0 %v7676
      %7766 = vmatprep.subr.bf16.mxu0 0
      %7767 = vmatpush1.bf16.msra.mxu0 %v7677
      %7768 = vmatprep.subr.bf16.mxu0 0
      %7769 = vmatpush1.bf16.msra.mxu0 %v7678
      %7770 = vmatprep.subr.bf16.mxu0 0
      %7771 = vmatpush1.bf16.msra.mxu0 %v7679
      %7772 = vmatprep.subr.bf16.mxu0 0
      %7773 = vmatpush1.bf16.msra.mxu0 %v7680
      %7774 = vmatprep.subr.bf16.mxu0 0
      %7775 = vmatpush1.bf16.msra.mxu0 %v7681
      %7776 = vmatprep.subr.bf16.mxu0 0
      %7777 = vmatpush1.bf16.msra.mxu0 %v7682
      %7778 = vmatprep.subr.bf16.mxu0 0
      %7779 = vmatpush1.bf16.msra.mxu0 %v7683
      %7780 = vmatprep.subr.bf16.mxu0 0
      %7781 = vmatpush1.bf16.msra.mxu0 %v7684
      %7782 = vmatprep.subr.bf16.mxu0 0
      %7783 = vmatpush1.bf16.msra.mxu0 %v7685
      %7784 = vmatprep.subr.bf16.mxu0 0
      %7785 = vmatpush1.bf16.msra.mxu0 %v7686
      %7786 = vmatprep.subr.bf16.mxu0 0
      %7787 = vmatpush1.bf16.msra.mxu0 %v7687
      %7788 = vmatprep.mubr.bf16.mxu0 %v7510
      %7789 = vmatmul.mubr.bf16.gmra.mrb[0].mxu0 %v7509
      %v7790 = vpop.f32.mrb[0].mxu0
      %v7791 = vadd.f32 %v7598, %v7790
      %v7792 = vpop.f32.mrb[0].mxu0
      %v7793 = vpop.f32.mrb[0].mxu0
      %v7794 = vadd.f32 %v7598, %v7793
      %v7795 = vpop.f32.mrb[0].mxu0
      %7796 = vmatprep.mubr.bf16.mxu0 %v7513
      %7797 = vmatmul.mubr.bf16.gmra.mrb[0].mxu0 %v7512
      %v7798 = vpop.f32.mrb[0].mxu0
      %v7799 = vadd.f32 %v7598, %v7798
      %v7800 = vpop.f32.mrb[0].mxu0
      %v7801 = vpop.f32.mrb[0].mxu0
      %v7802 = vadd.f32 %v7598, %v7801
      %v7803 = vpop.f32.mrb[0].mxu0
      %7804 = vmatprep.mubr.bf16.mxu0 %v7516
      %7805 = vmatmul.mubr.bf16.gmra.mrb[0].mxu0 %v7515
      %v7806 = vpop.f32.mrb[0].mxu0
      %v7807 = vadd.f32 %v7598, %v7806
      %v7808 = vpop.f32.mrb[0].mxu0
      %v7809 = vpop.f32.mrb[0].mxu0
      %v7810 = vadd.f32 %v7598, %v7809
      %v7811 = vpop.f32.mrb[0].mxu0
      %7812 = vmatprep.mubr.bf16.mxu0 %v7519
      %7813 = vmatmul.mubr.bf16.gmra.mrb[0].mxu0 %v7518
      %v7814 = vpop.f32.mrb[0].mxu0
      %v7815 = vadd.f32 %v7598, %v7814
      %v7816 = vpop.f32.mrb[0].mxu0
      %v7817 = vpop.f32.mrb[0].mxu0
      %v7818 = vadd.f32 %v7598, %v7817
      %v7819 = vpop.f32.mrb[0].mxu0
      %7820 = vmatprep.mubr.bf16.mxu0 %v7522
      %7821 = vmatmul.mubr.bf16.gmra.mrb[0].mxu0 %v7521
      %v7822 = vpop.f32.mrb[0].mxu0
      %v7823 = vadd.f32 %v7598, %v7822
      %v7824 = vpop.f32.mrb[0].mxu0
      %v7825 = vpop.f32.mrb[0].mxu0
      %v7826 = vadd.f32 %v7598, %v7825
      %v7827 = vpop.f32.mrb[0].mxu0
      %7828 = vmatprep.mubr.bf16.mxu0 %v7525
      %7829 = vmatmul.mubr.bf16.gmra.mrb[0].mxu0 %v7524
      %v7830 = vpop.f32.mrb[0].mxu0
      %v7831 = vadd.f32 %v7598, %v7830
      %v7832 = vpop.f32.mrb[0].mxu0
      %v7833 = vpop.f32.mrb[0].mxu0
      %v7834 = vadd.f32 %v7598, %v7833
      %v7835 = vpop.f32.mrb[0].mxu0
      %7836 = vmatprep.mubr.bf16.mxu0 %v7528
      %7837 = vmatmul.mubr.bf16.gmra.mrb[0].mxu0 %v7527
      %v7838 = vpop.f32.mrb[0].mxu0
      %v7839 = vadd.f32 %v7598, %v7838
      %v7840 = vpop.f32.mrb[0].mxu0
      %v7841 = vpop.f32.mrb[0].mxu0
      %v7842 = vadd.f32 %v7598, %v7841
      %v7843 = vpop.f32.mrb[0].mxu0
      %7844 = vmatprep.mubr.bf16.mxu0 %v7531
      %7845 = vmatmul.mubr.bf16.gmra.mrb[0].mxu0 %v7530
      %v7846 = vpop.f32.mrb[0].mxu0
      %v7847 = vadd.f32 %v7598, %v7846
      %v7848 = vpop.f32.mrb[0].mxu0
      %v7849 = vpop.f32.mrb[0].mxu0
      %v7850 = vadd.f32 %v7598, %v7849
      %v7851 = vpop.f32.mrb[0].mxu0
      %7852 = vmatprep.mubr.bf16.mxu0 %v7534
      %7853 = vmatmul.mubr.bf16.gmra.mrb[0].mxu0 %v7533
      %v7854 = vpop.f32.mrb[0].mxu0
      %v7855 = vadd.f32 %v7598, %v7854
      %v7856 = vpop.f32.mrb[0].mxu0
      %v7857 = vpop.f32.mrb[0].mxu0
      %v7858 = vadd.f32 %v7598, %v7857
      %v7859 = vpop.f32.mrb[0].mxu0
      %7860 = vmatprep.mubr.bf16.mxu0 %v7537
      %7861 = vmatmul.mubr.bf16.gmra.mrb[0].mxu0 %v7536
      %v7862 = vpop.f32.mrb[0].mxu0
      %v7863 = vadd.f32 %v7598, %v7862
      %v7864 = vpop.f32.mrb[0].mxu0
      %v7865 = vpop.f32.mrb[0].mxu0
      %v7866 = vadd.f32 %v7598, %v7865
      %v7867 = vpop.f32.mrb[0].mxu0
      %7868 = vmatprep.mubr.bf16.mxu0 %v7540
      %7869 = vmatmul.mubr.bf16.gmra.mrb[0].mxu0 %v7539
      %v7870 = vpop.f32.mrb[0].mxu0
      %v7871 = vadd.f32 %v7598, %v7870
      %v7872 = vpop.f32.mrb[0].mxu0
      %v7873 = vpop.f32.mrb[0].mxu0
      %v7874 = vadd.f32 %v7598, %v7873
      %v7875 = vpop.f32.mrb[0].mxu0
      %7876 = vmatprep.mubr.bf16.mxu0 %v7543
      %7877 = vmatmul.mubr.bf16.gmra.mrb[0].mxu0 %v7542
      %v7878 = vpop.f32.mrb[0].mxu0
      %v7879 = vadd.f32 %v7598, %v7878
      %v7880 = vpop.f32.mrb[0].mxu0
      %v7881 = vpop.f32.mrb[0].mxu0
      %v7882 = vadd.f32 %v7598, %v7881
      %v7883 = vpop.f32.mrb[0].mxu0
      %7884 = vmatprep.mubr.bf16.mxu0 %v7546
      %7885 = vmatmul.mubr.bf16.gmra.mrb[0].mxu0 %v7545
      %v7886 = vpop.f32.mrb[0].mxu0
      %v7887 = vadd.f32 %v7598, %v7886
      %v7888 = vpop.f32.mrb[0].mxu0
      %v7889 = vpop.f32.mrb[0].mxu0
      %v7890 = vadd.f32 %v7598, %v7889
      %v7891 = vpop.f32.mrb[0].mxu0
      %7892 = vmatprep.mubr.bf16.mxu0 %v7549
      %7893 = vmatmul.mubr.bf16.gmra.mrb[0].mxu0 %v7548
      %v7894 = vpop.f32.mrb[0].mxu0
      %v7895 = vadd.f32 %v7598, %v7894
      %v7896 = vpop.f32.mrb[0].mxu0
      %v7897 = vpop.f32.mrb[0].mxu0
      %v7898 = vadd.f32 %v7598, %v7897
      %v7899 = vpop.f32.mrb[0].mxu0
      %7900 = vmatprep.mubr.bf16.mxu0 %v7552
      %7901 = vmatmul.mubr.bf16.gmra.mrb[0].mxu0 %v7551
      %v7902 = vpop.f32.mrb[0].mxu0
      %v7903 = vadd.f32 %v7598, %v7902
      %v7904 = vpop.f32.mrb[0].mxu0
      %v7905 = vpop.f32.mrb[0].mxu0
      %v7906 = vadd.f32 %v7598, %v7905
      %v7907 = vpop.f32.mrb[0].mxu0
      %7908 = vmatprep.mubr.bf16.mxu0 %v7555
      %7909 = vmatmul.mubr.bf16.gmra.mrb[0].mxu0 %v7554
      %v7910 = vpop.f32.mrb[0].mxu0
      %v7911 = vadd.f32 %v7598, %v7910
      %v7912 = vpop.f32.mrb[0].mxu0
      %v7913 = vpop.f32.mrb[0].mxu0
      %v7914 = vadd.f32 %v7598, %v7913
      %v7915 = vpop.f32.mrb[0].mxu0
      %7916 = vdwg.mxu0
      %7917 = vmatprep.subr.bf16.mxu0 0
      %7918 = vmatpush1.bf16.msra.mxu0 %v7688
      %7919 = vmatprep.subr.bf16.mxu0 0
      %7920 = vmatpush1.bf16.msra.mxu0 %v7689
      %7921 = vmatprep.subr.bf16.mxu0 0
      %7922 = vmatpush1.bf16.msra.mxu0 0
      %7923 = vmatprep.subr.bf16.mxu0 0
      %7924 = vmatpush1.bf16.msra.mxu0 0
      %7925 = vmatprep.subr.bf16.mxu0 0
      %7926 = vmatpush1.bf16.msra.mxu0 0
      %7927 = vmatprep.subr.bf16.mxu0 0
      %7928 = vmatpush1.bf16.msra.mxu0 0
      %7929 = vmatprep.subr.bf16.mxu0 0
      %7930 = vmatpush1.bf16.msra.mxu0 0
      %7931 = vmatprep.subr.bf16.mxu0 0
      %7932 = vmatpush1.bf16.msra.mxu0 0
      %7933 = vmatprep.subr.bf16.mxu0 0
      %7934 = vmatpush1.bf16.msra.mxu0 0
      %7935 = vmatprep.subr.bf16.mxu0 0
      %7936 = vmatpush1.bf16.msra.mxu0 0
      %7937 = vmatprep.subr.bf16.mxu0 0
      %7938 = vmatpush1.bf16.msra.mxu0 0
      %7939 = vmatprep.subr.bf16.mxu0 0
      %7940 = vmatpush1.bf16.msra.mxu0 0
      %7941 = vmatprep.subr.bf16.mxu0 0
      %7942 = vmatpush1.bf16.msra.mxu0 0
      %7943 = vmatprep.subr.bf16.mxu0 0
      %7944 = vmatpush1.bf16.msra.mxu0 0
      %7945 = vmatprep.subr.bf16.mxu0 0
      %7946 = vmatpush1.bf16.msra.mxu0 0
      %7947 = vmatprep.subr.bf16.mxu0 0
      %7948 = vmatpush1.bf16.msra.mxu0 0
      %7949 = vmatprep.mubr.bf16.mxu0 0
      %7950 = vmatmul.mubr.bf16.gmra.mrb[0].mxu0 %v7709
      %v7951 = vpop.f32.mrb[0].mxu0
      %v7952 = vadd.f32 %v7791, %v7951
      %v7953 = vpop.f32.mrb[0].mxu0
      %v7954 = vpop.f32.mrb[0].mxu0
      %v7955 = vadd.f32 %v7794, %v7954
      %v7956 = vpop.f32.mrb[0].mxu0
      %7957 = vmatprep.mubr.bf16.mxu0 0
      %7958 = vmatmul.mubr.bf16.gmra.mrb[0].mxu0 %v7712
      %v7959 = vpop.f32.mrb[0].mxu0
      %v7960 = vadd.f32 %v7799, %v7959
      %v7961 = vpop.f32.mrb[0].mxu0
      %v7962 = vpop.f32.mrb[0].mxu0
      %v7963 = vadd.f32 %v7802, %v7962
      %v7964 = vpop.f32.mrb[0].mxu0
      %7965 = vmatprep.mubr.bf16.mxu0 0
      %7966 = vmatmul.mubr.bf16.gmra.mrb[0].mxu0 %v7715
      %v7967 = vpop.f32.mrb[0].mxu0
      %v7968 = vadd.f32 %v7807, %v7967
      %v7969 = vpop.f32.mrb[0].mxu0
      %v7970 = vpop.f32.mrb[0].mxu0
      %v7971 = vadd.f32 %v7810, %v7970
      %v7972 = vpop.f32.mrb[0].mxu0
      %7973 = vmatprep.mubr.bf16.mxu0 0
      %7974 = vmatmul.mubr.bf16.gmra.mrb[0].mxu0 %v7718
      %v7975 = vpop.f32.mrb[0].mxu0
      %v7976 = vadd.f32 %v7815, %v7975
      %v7977 = vpop.f32.mrb[0].mxu0
      %v7978 = vpop.f32.mrb[0].mxu0
      %v7979 = vadd.f32 %v7818, %v7978
      %v7980 = vpop.f32.mrb[0].mxu0
      %7981 = vmatprep.mubr.bf16.mxu0 0
      %7982 = vmatmul.mubr.bf16.gmra.mrb[0].mxu0 %v7721
      %v7983 = vpop.f32.mrb[0].mxu0
      %v7984 = vadd.f32 %v7823, %v7983
      %v7985 = vpop.f32.mrb[0].mxu0
      %v7986 = vpop.f32.mrb[0].mxu0
      %v7987 = vadd.f32 %v7826, %v7986
      %v7988 = vpop.f32.mrb[0].mxu0
      %7989 = vmatprep.mubr.bf16.mxu0 0
      %7990 = vmatmul.mubr.bf16.gmra.mrb[0].mxu0 %v7724
      %v7991 = vpop.f32.mrb[0].mxu0
      %v7992 = vadd.f32 %v7831, %v7991
      %v7993 = vpop.f32.mrb[0].mxu0
      %v7994 = vpop.f32.mrb[0].mxu0
      %v7995 = vadd.f32 %v7834, %v7994
      %v7996 = vpop.f32.mrb[0].mxu0
      %7997 = vmatprep.mubr.bf16.mxu0 0
      %7998 = vmatmul.mubr.bf16.gmra.mrb[0].mxu0 %v7727
      %v7999 = vpop.f32.mrb[0].mxu0
      %v8000 = vadd.f32 %v7839, %v7999
      %v8001 = vpop.f32.mrb[0].mxu0
      %v8002 = vpop.f32.mrb[0].mxu0
      %v8003 = vadd.f32 %v7842, %v8002
      %v8004 = vpop.f32.mrb[0].mxu0
      %8005 = vmatprep.mubr.bf16.mxu0 0
      %8006 = vmatmul.mubr.bf16.gmra.mrb[0].mxu0 %v7730
      %v8007 = vpop.f32.mrb[0].mxu0
      %v8008 = vadd.f32 %v7847, %v8007
      %v8009 = vpop.f32.mrb[0].mxu0
      %v8010 = vpop.f32.mrb[0].mxu0
      %v8011 = vadd.f32 %v7850, %v8010
      %v8012 = vpop.f32.mrb[0].mxu0
      %8013 = vmatprep.mubr.bf16.mxu0 0
      %8014 = vmatmul.mubr.bf16.gmra.mrb[0].mxu0 %v7733
      %v8015 = vpop.f32.mrb[0].mxu0
      %v8016 = vadd.f32 %v7855, %v8015
      %v8017 = vpop.f32.mrb[0].mxu0
      %v8018 = vpop.f32.mrb[0].mxu0
      %v8019 = vadd.f32 %v7858, %v8018
      %v8020 = vpop.f32.mrb[0].mxu0
      %8021 = vmatprep.mubr.bf16.mxu0 0
      %8022 = vmatmul.mubr.bf16.gmra.mrb[0].mxu0 %v7736
      %v8023 = vpop.f32.mrb[0].mxu0
      %v8024 = vadd.f32 %v7863, %v8023
      %v8025 = vpop.f32.mrb[0].mxu0
      %v8026 = vpop.f32.mrb[0].mxu0
      %v8027 = vadd.f32 %v7866, %v8026
      %v8028 = vpop.f32.mrb[0].mxu0
      %8029 = vmatprep.mubr.bf16.mxu0 0
      %8030 = vmatmul.mubr.bf16.gmra.mrb[0].mxu0 %v7739
      %v8031 = vpop.f32.mrb[0].mxu0
      %v8032 = vadd.f32 %v7871, %v8031
      %v8033 = vpop.f32.mrb[0].mxu0
      %v8034 = vpop.f32.mrb[0].mxu0
      %v8035 = vadd.f32 %v7874, %v8034
      %v8036 = vpop.f32.mrb[0].mxu0
      %8037 = vmatprep.mubr.bf16.mxu0 0
      %8038 = vmatmul.mubr.bf16.gmra.mrb[0].mxu0 %v7742
      %v8039 = vpop.f32.mrb[0].mxu0
      %v8040 = vadd.f32 %v7879, %v8039
      %v8041 = vpop.f32.mrb[0].mxu0
      %v8042 = vpop.f32.mrb[0].mxu0
      %v8043 = vadd.f32 %v7882, %v8042
      %v8044 = vpop.f32.mrb[0].mxu0
      %8045 = vmatprep.mubr.bf16.mxu0 0
      %8046 = vmatmul.mubr.bf16.gmra.mrb[0].mxu0 %v7745
      %v8047 = vpop.f32.mrb[0].mxu0
      %v8048 = vadd.f32 %v7887, %v8047
      %v8049 = vpop.f32.mrb[0].mxu0
      %v8050 = vpop.f32.mrb[0].mxu0
      %v8051 = vadd.f32 %v7890, %v8050
      %v8052 = vpop.f32.mrb[0].mxu0
      %8053 = vmatprep.mubr.bf16.mxu0 0
      %8054 = vmatmul.mubr.bf16.gmra.mrb[0].mxu0 %v7748
      %v8055 = vpop.f32.mrb[0].mxu0
      %v8056 = vadd.f32 %v7895, %v8055
      %v8057 = vpop.f32.mrb[0].mxu0
      %v8058 = vpop.f32.mrb[0].mxu0
      %v8059 = vadd.f32 %v7898, %v8058
      %v8060 = vpop.f32.mrb[0].mxu0
      %8061 = vmatprep.mubr.bf16.mxu0 0
      %8062 = vmatmul.mubr.bf16.gmra.mrb[0].mxu0 %v7751
      %v8063 = vpop.f32.mrb[0].mxu0
      %v8064 = vadd.f32 %v7903, %v8063
      %v8065 = vpop.f32.mrb[0].mxu0
      %v8066 = vpop.f32.mrb[0].mxu0
      %v8067 = vadd.f32 %v7906, %v8066
      %v8068 = vpop.f32.mrb[0].mxu0
      %8069 = vmatprep.mubr.bf16.mxu0 0
      %8070 = vmatmul.mubr.bf16.gmra.mrb[0].mxu0 %v7754
      %v8071 = vpop.f32.mrb[0].mxu0
      %v8072 = vadd.f32 %v7911, %v8071
      %v8073 = vpop.f32.mrb[0].mxu0
      %v8074 = vpop.f32.mrb[0].mxu0
      %v8075 = vadd.f32 %v7914, %v8074
      %v8076 = vpop.f32.mrb[0].mxu0
      %8077 = vdwg.mxu0
      %v8078 = vmax.f32 %v7952, 0.0
      %v8079 = vmax.f32 %v7955, 0.0
      %v8080 = vmax.f32 %v7960, 0.0
      %v8081 = vmax.f32 %v7963, 0.0
      %v8082 = vmax.f32 %v7968, 0.0
      %v8083 = vmax.f32 %v7971, 0.0
      %v8084 = vmax.f32 %v7976, 0.0
      %v8085 = vmax.f32 %v7979, 0.0
      %v8086 = vmax.f32 %v7984, 0.0
      %v8087 = vmax.f32 %v7987, 0.0
      %v8088 = vmax.f32 %v7992, 0.0
      %v8089 = vmax.f32 %v7995, 0.0
      %v8090 = vmax.f32 %v8000, 0.0
      %v8091 = vmax.f32 %v8003, 0.0
      %v8092 = vmax.f32 %v8008, 0.0
      %v8093 = vmax.f32 %v8011, 0.0
      %v8094 = vmax.f32 %v8016, 0.0
      %v8095 = vmax.f32 %v8019, 0.0
      %v8096 = vmax.f32 %v8024, 0.0
      %v8097 = vmax.f32 %v8027, 0.0
      %v8098 = vmax.f32 %v8032, 0.0
      %v8099 = vmax.f32 %v8035, 0.0
      %v8100 = vmax.f32 %v8040, 0.0
      %v8101 = vmax.f32 %v8043, 0.0
      %v8102 = vmax.f32 %v8048, 0.0
      %v8103 = vmax.f32 %v8051, 0.0
      %v8104 = vmax.f32 %v8056, 0.0
      %v8105 = vmax.f32 %v8059, 0.0
      %v8106 = vmax.f32 %v8064, 0.0
      %v8107 = vmax.f32 %v8067, 0.0
      %v8108 = vmax.f32 %v8072, 0.0
      %v8109 = vmax.f32 %v8075, 0.0
      %8110 = vst.msk [vmem:[%s2463 + $0x1] sm:$0xff] %vm488, %v8078
      %8111 = vst.msk [vmem:[%s2463 + $0x9] sm:$0xff] %vm488, %v8079
      %8112 = vst.msk [vmem:[%s2463 + $0x19] sm:$0xff] %vm488, %v8080
      %8113 = vst.msk [vmem:[%s2463 + $0x21] sm:$0xff] %vm488, %v8081
      %8114 = vst.msk [vmem:[%s2463 + $0x31] sm:$0xff] %vm488, %v8082
      %8115 = vst.msk [vmem:[%s2463 + $0x39] sm:$0xff] %vm488, %v8083
      %8116 = vst.msk [vmem:[%s2463 + $0x49] sm:$0xff] %vm488, %v8084
      %8117 = vst.msk [vmem:[%s2463 + $0x51] sm:$0xff] %vm488, %v8085
      %8118 = vst.msk [vmem:[%s2463 + $0x61] sm:$0xff] %vm488, %v8086
      %8119 = vst.msk [vmem:[%s2463 + $0x69] sm:$0xff] %vm488, %v8087
      %8120 = vst.msk [vmem:[%s2463 + $0x79] sm:$0xff] %vm488, %v8088
      %8121 = vst.msk [vmem:[%s2463 + $0x81] sm:$0xff] %vm488, %v8089
      %8122 = vst.msk [vmem:[%s2463 + $0x91] sm:$0xff] %vm488, %v8090
      %8123 = vst.msk [vmem:[%s2463 + $0x99] sm:$0xff] %vm488, %v8091
      %8124 = vst.msk [vmem:[%s2463 + $0xa9] sm:$0xff] %vm488, %v8092
      %8125 = vst.msk [vmem:[%s2463 + $0xb1] sm:$0xff] %vm488, %v8093
      %8126 = vst.msk [vmem:[%s2463 + $0xc1] sm:$0xff] %vm488, %v8094
      %8127 = vst.msk [vmem:[%s2463 + $0xc9] sm:$0xff] %vm488, %v8095
      %8128 = vst.msk [vmem:[%s2463 + $0xd9] sm:$0xff] %vm488, %v8096
      %8129 = vst.msk [vmem:[%s2463 + $0xe1] sm:$0xff] %vm488, %v8097
      %8130 = vst.msk [vmem:[%s2463 + $0xf1] sm:$0xff] %vm488, %v8098
      %8131 = vst.msk [vmem:[%s2463 + $0xf9] sm:$0xff] %vm488, %v8099
      %8132 = vst.msk [vmem:[%s2463 + $0x109] sm:$0xff] %vm488, %v8100
      %8133 = vst.msk [vmem:[%s2463 + $0x111] sm:$0xff] %vm488, %v8101
      %8134 = vst.msk [vmem:[%s2463 + $0x121] sm:$0xff] %vm488, %v8102
      %8135 = vst.msk [vmem:[%s2463 + $0x129] sm:$0xff] %vm488, %v8103
      %8136 = vst.msk [vmem:[%s2463 + $0x139] sm:$0xff] %vm488, %v8104
      %8137 = vst.msk [vmem:[%s2463 + $0x141] sm:$0xff] %vm488, %v8105
      %8138 = vst.msk [vmem:[%s2463 + $0x151] sm:$0xff] %vm488, %v8106
      %8139 = vst.msk [vmem:[%s2463 + $0x159] sm:$0xff] %vm488, %v8107
      %8140 = vst.msk [vmem:[%s2463 + $0x169] sm:$0xff] %vm488, %v8108
      %8141 = vst.msk [vmem:[%s2463 + $0x171] sm:$0xff] %vm488, %v8109
      %v8142 = vld [vmem:[#allocation3] sm:$0xff]
      %v8143 = vld [vmem:[#allocation3 + $0x8] sm:$0xff]
      %v8144 = vld [vmem:[#allocation3 + $0x18] sm:$0xff]
      %v8145 = vld [vmem:[#allocation3 + $0x20] sm:$0xff]
      %v8146 = vld [vmem:[#allocation3 + $0x30] sm:$0xff]
      %v8147 = vld [vmem:[#allocation3 + $0x38] sm:$0xff]
      %v8148 = vld [vmem:[#allocation3 + $0x48] sm:$0xff]
      %v8149 = vld [vmem:[#allocation3 + $0x50] sm:$0xff]
      %v8150 = vld [vmem:[#allocation3 + $0x60] sm:$0xff]
      %v8151 = vld [vmem:[#allocation3 + $0x68] sm:$0xff]
      %v8152 = vld [vmem:[#allocation3 + $0x78] sm:$0xff]
      %v8153 = vld [vmem:[#allocation3 + $0x80] sm:$0xff]
      %v8154 = vld [vmem:[#allocation3 + $0x90] sm:$0xff]
      %v8155 = vld [vmem:[#allocation3 + $0x98] sm:$0xff]
      %v8156 = vld [vmem:[#allocation3 + $0xa8] sm:$0xff]
      %v8157 = vld [vmem:[#allocation3 + $0xb0] sm:$0xff]
      %v8158 = vld [vmem:[#allocation3 + $0xc0] sm:$0xff]
      %v8159 = vld [vmem:[#allocation3 + $0xc8] sm:$0xff]
      %v8160 = vld [vmem:[#allocation3 + $0xd8] sm:$0xff]
      %v8161 = vld [vmem:[#allocation3 + $0xe0] sm:$0xff]
      %v8162 = vld [vmem:[#allocation3 + $0xf0] sm:$0xff]
      %v8163 = vld [vmem:[#allocation3 + $0xf8] sm:$0xff]
      %v8164 = vld [vmem:[#allocation3 + $0x108] sm:$0xff]
      %v8165 = vld [vmem:[#allocation3 + $0x110] sm:$0xff]
      %v8166 = vld [vmem:[#allocation3 + $0x120] sm:$0xff]
      %v8167 = vld [vmem:[#allocation3 + $0x128] sm:$0xff]
      %v8168 = vld [vmem:[#allocation3 + $0x138] sm:$0xff]
      %v8169 = vld [vmem:[#allocation3 + $0x140] sm:$0xff]
      %v8170 = vld [vmem:[#allocation3 + $0x150] sm:$0xff]
      %v8171 = vld [vmem:[#allocation3 + $0x158] sm:$0xff]
      %v8172 = vld [vmem:[#allocation3 + $0x168] sm:$0xff]
      %v8173 = vld [vmem:[#allocation3 + $0x170] sm:$0xff]
      %v8174 = vld [vmem:[#allocation3 + $0x1] sm:$0xff]
      %v8175 = vld [vmem:[#allocation3 + $0x9] sm:$0xff]
      %v8176 = vld [vmem:[#allocation3 + $0x19] sm:$0xff]
      %v8177 = vld [vmem:[#allocation3 + $0x21] sm:$0xff]
      %v8178 = vld [vmem:[#allocation3 + $0x31] sm:$0xff]
      %v8179 = vld [vmem:[#allocation3 + $0x39] sm:$0xff]
      %v8180 = vld [vmem:[#allocation3 + $0x49] sm:$0xff]
      %v8181 = vld [vmem:[#allocation3 + $0x51] sm:$0xff]
      %v8182 = vld [vmem:[#allocation3 + $0x61] sm:$0xff]
      %v8183 = vld [vmem:[#allocation3 + $0x69] sm:$0xff]
      %v8184 = vld [vmem:[#allocation3 + $0x79] sm:$0xff]
      %v8185 = vld [vmem:[#allocation3 + $0x81] sm:$0xff]
      %v8186 = vld [vmem:[#allocation3 + $0x91] sm:$0xff]
      %v8187 = vld [vmem:[#allocation3 + $0x99] sm:$0xff]
      %v8188 = vld [vmem:[#allocation3 + $0xa9] sm:$0xff]
      %v8189 = vld [vmem:[#allocation3 + $0xb1] sm:$0xff]
      %v8190 = vld [vmem:[#allocation3 + $0xc1] sm:$0xff]
      %v8191 = vld [vmem:[#allocation3 + $0xc9] sm:$0xff]
      %v8192 = vld [vmem:[#allocation3 + $0xd9] sm:$0xff]
      %v8193 = vld [vmem:[#allocation3 + $0xe1] sm:$0xff]
      %v8194 = vld [vmem:[#allocation3 + $0xf1] sm:$0xff]
      %v8195 = vld [vmem:[#allocation3 + $0xf9] sm:$0xff]
      %v8196 = vld [vmem:[#allocation3 + $0x109] sm:$0xff]
      %v8197 = vld [vmem:[#allocation3 + $0x111] sm:$0xff]
      %v8198 = vld [vmem:[#allocation3 + $0x121] sm:$0xff]
      %v8199 = vld [vmem:[#allocation3 + $0x129] sm:$0xff]
      %v8200 = vld [vmem:[#allocation3 + $0x139] sm:$0xff]
      %v8201 = vld [vmem:[#allocation3 + $0x141] sm:$0xff]
      %v8202 = vld [vmem:[#allocation3 + $0x151] sm:$0xff]
      %v8203 = vld [vmem:[#allocation3 + $0x159] sm:$0xff]
      %v8204 = vld [vmem:[#allocation3 + $0x169] sm:$0xff]
      %v8205 = vld [vmem:[#allocation3 + $0x171] sm:$0xff]
      %v8206 = vld [vmem:[#allocation3 + $0x2] sm:$0xff]
      %v8207 = vld [vmem:[#allocation3 + $0xa] sm:$0xff]
      %v8208 = vld [vmem:[#allocation3 + $0x1a] sm:$0xff]
      %v8209 = vld [vmem:[#allocation3 + $0x22] sm:$0xff]
      %v8210 = vld [vmem:[#allocation3 + $0x32] sm:$0xff]
      %v8211 = vld [vmem:[#allocation3 + $0x3a] sm:$0xff]
      %v8212 = vld [vmem:[#allocation3 + $0x4a] sm:$0xff]
      %v8213 = vld [vmem:[#allocation3 + $0x52] sm:$0xff]
      %v8214 = vld [vmem:[#allocation3 + $0x62] sm:$0xff]
      %v8215 = vld [vmem:[#allocation3 + $0x6a] sm:$0xff]
      %v8216 = vld [vmem:[#allocation3 + $0x7a] sm:$0xff]
      %v8217 = vld [vmem:[#allocation3 + $0x82] sm:$0xff]
      %v8218 = vld [vmem:[#allocation3 + $0x92] sm:$0xff]
      %v8219 = vld [vmem:[#allocation3 + $0x9a] sm:$0xff]
      %v8220 = vld [vmem:[#allocation3 + $0xaa] sm:$0xff]
      %v8221 = vld [vmem:[#allocation3 + $0xb2] sm:$0xff]
      %v8222 = vld [vmem:[#allocation3 + $0xc2] sm:$0xff]
      %v8223 = vld [vmem:[#allocation3 + $0xca] sm:$0xff]
      %v8224 = vld [vmem:[#allocation3 + $0xda] sm:$0xff]
      %v8225 = vld [vmem:[#allocation3 + $0xe2] sm:$0xff]
      %v8226 = vld [vmem:[#allocation3 + $0xf2] sm:$0xff]
      %v8227 = vld [vmem:[#allocation3 + $0xfa] sm:$0xff]
      %v8228 = vld [vmem:[#allocation3 + $0x10a] sm:$0xff]
      %v8229 = vld [vmem:[#allocation3 + $0x112] sm:$0xff]
      %v8230 = vld [vmem:[#allocation3 + $0x122] sm:$0xff]
      %v8231 = vld [vmem:[#allocation3 + $0x12a] sm:$0xff]
      %v8232 = vld [vmem:[#allocation3 + $0x13a] sm:$0xff]
      %v8233 = vld [vmem:[#allocation3 + $0x142] sm:$0xff]
      %v8234 = vld [vmem:[#allocation3 + $0x152] sm:$0xff]
      %v8235 = vld [vmem:[#allocation3 + $0x15a] sm:$0xff]
      %v8236 = vld [vmem:[#allocation3 + $0x16a] sm:$0xff]
      %v8237 = vld [vmem:[#allocation3 + $0x172] sm:$0xff]
      %v8238 = vld [vmem:[%s2463] sm:$0xff]
      %v8239 = vld [vmem:[%s2463 + $0x8] sm:$0xff]
      %v8240 = vld [vmem:[%s2463 + $0x18] sm:$0xff]
      %v8241 = vld [vmem:[%s2463 + $0x20] sm:$0xff]
      %v8242 = vld [vmem:[%s2463 + $0x30] sm:$0xff]
      %v8243 = vld [vmem:[%s2463 + $0x38] sm:$0xff]
      %v8244 = vld [vmem:[%s2463 + $0x48] sm:$0xff]
      %v8245 = vld [vmem:[%s2463 + $0x50] sm:$0xff]
      %v8246 = vld [vmem:[%s2463 + $0x60] sm:$0xff]
      %v8247 = vld [vmem:[%s2463 + $0x68] sm:$0xff]
      %v8248 = vld [vmem:[%s2463 + $0x78] sm:$0xff]
      %v8249 = vld [vmem:[%s2463 + $0x80] sm:$0xff]
      %v8250 = vld [vmem:[%s2463 + $0x90] sm:$0xff]
      %v8251 = vld [vmem:[%s2463 + $0x98] sm:$0xff]
      %v8252 = vld [vmem:[%s2463 + $0xa8] sm:$0xff]
      %v8253 = vld [vmem:[%s2463 + $0xb0] sm:$0xff]
      %v8254 = vld [vmem:[%s2463 + $0xc0] sm:$0xff]
      %v8255 = vld [vmem:[%s2463 + $0xc8] sm:$0xff]
      %v8256 = vld [vmem:[%s2463 + $0xd8] sm:$0xff]
      %v8257 = vld [vmem:[%s2463 + $0xe0] sm:$0xff]
      %v8258 = vld [vmem:[%s2463 + $0xf0] sm:$0xff]
      %v8259 = vld [vmem:[%s2463 + $0xf8] sm:$0xff]
      %v8260 = vld [vmem:[%s2463 + $0x108] sm:$0xff]
      %v8261 = vld [vmem:[%s2463 + $0x110] sm:$0xff]
      %v8262 = vld [vmem:[%s2463 + $0x120] sm:$0xff]
      %v8263 = vld [vmem:[%s2463 + $0x128] sm:$0xff]
      %v8264 = vld [vmem:[%s2463 + $0x138] sm:$0xff]
      %v8265 = vld [vmem:[%s2463 + $0x140] sm:$0xff]
      %v8266 = vld [vmem:[%s2463 + $0x150] sm:$0xff]
      %v8267 = vld [vmem:[%s2463 + $0x158] sm:$0xff]
      %v8268 = vld [vmem:[%s2463 + $0x168] sm:$0xff]
      %v8269 = vld [vmem:[%s2463 + $0x170] sm:$0xff]
      %v8270 = vld [vmem:[%s2463 + $0x1] sm:$0xff]
      %v8271 = vld [vmem:[%s2463 + $0x9] sm:$0xff]
      %v8272 = vld [vmem:[%s2463 + $0x19] sm:$0xff]
      %v8273 = vld [vmem:[%s2463 + $0x21] sm:$0xff]
      %v8274 = vld [vmem:[%s2463 + $0x31] sm:$0xff]
      %v8275 = vld [vmem:[%s2463 + $0x39] sm:$0xff]
      %v8276 = vld [vmem:[%s2463 + $0x49] sm:$0xff]
      %v8277 = vld [vmem:[%s2463 + $0x51] sm:$0xff]
      %v8278 = vld [vmem:[%s2463 + $0x61] sm:$0xff]
      %v8279 = vld [vmem:[%s2463 + $0x69] sm:$0xff]
      %v8280 = vld [vmem:[%s2463 + $0x79] sm:$0xff]
      %v8281 = vld [vmem:[%s2463 + $0x81] sm:$0xff]
      %v8282 = vld [vmem:[%s2463 + $0x91] sm:$0xff]
      %v8283 = vld [vmem:[%s2463 + $0x99] sm:$0xff]
      %v8284 = vld [vmem:[%s2463 + $0xa9] sm:$0xff]
      %v8285 = vld [vmem:[%s2463 + $0xb1] sm:$0xff]
      %v8286 = vld [vmem:[%s2463 + $0xc1] sm:$0xff]
      %v8287 = vld [vmem:[%s2463 + $0xc9] sm:$0xff]
      %v8288 = vld [vmem:[%s2463 + $0xd9] sm:$0xff]
      %v8289 = vld [vmem:[%s2463 + $0xe1] sm:$0xff]
      %v8290 = vld [vmem:[%s2463 + $0xf1] sm:$0xff]
      %v8291 = vld [vmem:[%s2463 + $0xf9] sm:$0xff]
      %v8292 = vld [vmem:[%s2463 + $0x109] sm:$0xff]
      %v8293 = vld [vmem:[%s2463 + $0x111] sm:$0xff]
      %v8294 = vld [vmem:[%s2463 + $0x121] sm:$0xff]
      %v8295 = vld [vmem:[%s2463 + $0x129] sm:$0xff]
      %v8296 = vld [vmem:[%s2463 + $0x139] sm:$0xff]
      %v8297 = vld [vmem:[%s2463 + $0x141] sm:$0xff]
      %v8298 = vld [vmem:[%s2463 + $0x151] sm:$0xff]
      %v8299 = vld [vmem:[%s2463 + $0x159] sm:$0xff]
      %v8300 = vld [vmem:[%s2463 + $0x169] sm:$0xff]
      %v8301 = vld [vmem:[%s2463 + $0x171] sm:$0xff]
      %v8302 = vld [vmem:[%s2463 + $0x2] sm:$0xff]
      %v8303 = vld [vmem:[%s2463 + $0xa] sm:$0xff]
      %v8304 = vld [vmem:[%s2463 + $0x1a] sm:$0xff]
      %v8305 = vld [vmem:[%s2463 + $0x22] sm:$0xff]
      %v8306 = vld [vmem:[%s2463 + $0x32] sm:$0xff]
      %v8307 = vld [vmem:[%s2463 + $0x3a] sm:$0xff]
      %v8308 = vld [vmem:[%s2463 + $0x4a] sm:$0xff]
      %v8309 = vld [vmem:[%s2463 + $0x52] sm:$0xff]
      %v8310 = vld [vmem:[%s2463 + $0x62] sm:$0xff]
      %v8311 = vld [vmem:[%s2463 + $0x6a] sm:$0xff]
      %v8312 = vld [vmem:[%s2463 + $0x7a] sm:$0xff]
      %v8313 = vld [vmem:[%s2463 + $0x82] sm:$0xff]
      %v8314 = vld [vmem:[%s2463 + $0x92] sm:$0xff]
      %v8315 = vld [vmem:[%s2463 + $0x9a] sm:$0xff]
      %v8316 = vld [vmem:[%s2463 + $0xaa] sm:$0xff]
      %v8317 = vld [vmem:[%s2463 + $0xb2] sm:$0xff]
      %v8318 = vld [vmem:[%s2463 + $0xc2] sm:$0xff]
      %v8319 = vld [vmem:[%s2463 + $0xca] sm:$0xff]
      %v8320 = vld [vmem:[%s2463 + $0xda] sm:$0xff]
      %v8321 = vld [vmem:[%s2463 + $0xe2] sm:$0xff]
      %v8322 = vld [vmem:[%s2463 + $0xf2] sm:$0xff]
      %v8323 = vld [vmem:[%s2463 + $0xfa] sm:$0xff]
      %v8324 = vld [vmem:[%s2463 + $0x10a] sm:$0xff]
      %v8325 = vld [vmem:[%s2463 + $0x112] sm:$0xff]
      %v8326 = vld [vmem:[%s2463 + $0x122] sm:$0xff]
      %v8327 = vld [vmem:[%s2463 + $0x12a] sm:$0xff]
      %v8328 = vld [vmem:[%s2463 + $0x13a] sm:$0xff]
      %v8329 = vld [vmem:[%s2463 + $0x142] sm:$0xff]
      %v8330 = vld [vmem:[%s2463 + $0x152] sm:$0xff]
      %v8331 = vld [vmem:[%s2463 + $0x15a] sm:$0xff]
      %v8332 = vld [vmem:[%s2463 + $0x16a] sm:$0xff]
      %v8333 = vld [vmem:[%s2463 + $0x172] sm:$0xff]
      %v8334 = vld [vmem:[%s2688] sm:$0xff]
      %v8335 = vld [vmem:[%s2688 + $0x8] sm:$0xff]
      %v8336 = vld [vmem:[%s2688 + $0x18] sm:$0xff]
      %v8337 = vld [vmem:[%s2688 + $0x20] sm:$0xff]
      %v8338 = vld [vmem:[%s2688 + $0x30] sm:$0xff]
      %v8339 = vld [vmem:[%s2688 + $0x38] sm:$0xff]
      %v8340 = vld [vmem:[%s2688 + $0x48] sm:$0xff]
      %v8341 = vld [vmem:[%s2688 + $0x50] sm:$0xff]
      %v8342 = vld [vmem:[%s2688 + $0x60] sm:$0xff]
      %v8343 = vld [vmem:[%s2688 + $0x68] sm:$0xff]
      %v8344 = vld [vmem:[%s2688 + $0x78] sm:$0xff]
      %v8345 = vld [vmem:[%s2688 + $0x80] sm:$0xff]
      %v8346 = vld [vmem:[%s2688 + $0x90] sm:$0xff]
      %v8347 = vld [vmem:[%s2688 + $0x98] sm:$0xff]
      %v8348 = vld [vmem:[%s2688 + $0xa8] sm:$0xff]
      %v8349 = vld [vmem:[%s2688 + $0xb0] sm:$0xff]
      %v8350 = vld [vmem:[%s2688 + $0xc0] sm:$0xff]
      %v8351 = vld [vmem:[%s2688 + $0xc8] sm:$0xff]
      %v8352 = vld [vmem:[%s2688 + $0xd8] sm:$0xff]
      %v8353 = vld [vmem:[%s2688 + $0xe0] sm:$0xff]
      %v8354 = vld [vmem:[%s2688 + $0xf0] sm:$0xff]
      %v8355 = vld [vmem:[%s2688 + $0xf8] sm:$0xff]
      %v8356 = vld [vmem:[%s2688 + $0x108] sm:$0xff]
      %v8357 = vld [vmem:[%s2688 + $0x110] sm:$0xff]
      %v8358 = vld [vmem:[%s2688 + $0x120] sm:$0xff]
      %v8359 = vld [vmem:[%s2688 + $0x128] sm:$0xff]
      %v8360 = vld [vmem:[%s2688 + $0x138] sm:$0xff]
      %v8361 = vld [vmem:[%s2688 + $0x140] sm:$0xff]
      %v8362 = vld [vmem:[%s2688 + $0x150] sm:$0xff]
      %v8363 = vld [vmem:[%s2688 + $0x158] sm:$0xff]
      %v8364 = vld [vmem:[%s2688 + $0x168] sm:$0xff]
      %v8365 = vld [vmem:[%s2688 + $0x170] sm:$0xff]
      %v8366 = vld [vmem:[%s2688 + $0x1] sm:$0xff]
      %v8367 = vld [vmem:[%s2688 + $0x9] sm:$0xff]
      %v8368 = vld [vmem:[%s2688 + $0x19] sm:$0xff]
      %v8369 = vld [vmem:[%s2688 + $0x21] sm:$0xff]
      %v8370 = vld [vmem:[%s2688 + $0x31] sm:$0xff]
      %v8371 = vld [vmem:[%s2688 + $0x39] sm:$0xff]
      %v8372 = vld [vmem:[%s2688 + $0x49] sm:$0xff]
      %v8373 = vld [vmem:[%s2688 + $0x51] sm:$0xff]
      %v8374 = vld [vmem:[%s2688 + $0x61] sm:$0xff]
      %v8375 = vld [vmem:[%s2688 + $0x69] sm:$0xff]
      %v8376 = vld [vmem:[%s2688 + $0x79] sm:$0xff]
      %v8377 = vld [vmem:[%s2688 + $0x81] sm:$0xff]
      %v8378 = vld [vmem:[%s2688 + $0x91] sm:$0xff]
      %v8379 = vld [vmem:[%s2688 + $0x99] sm:$0xff]
      %v8380 = vld [vmem:[%s2688 + $0xa9] sm:$0xff]
      %v8381 = vld [vmem:[%s2688 + $0xb1] sm:$0xff]
      %v8382 = vld [vmem:[%s2688 + $0xc1] sm:$0xff]
      %v8383 = vld [vmem:[%s2688 + $0xc9] sm:$0xff]
      %v8384 = vld [vmem:[%s2688 + $0xd9] sm:$0xff]
      %v8385 = vld [vmem:[%s2688 + $0xe1] sm:$0xff]
      %v8386 = vld [vmem:[%s2688 + $0xf1] sm:$0xff]
      %v8387 = vld [vmem:[%s2688 + $0xf9] sm:$0xff]
      %v8388 = vld [vmem:[%s2688 + $0x109] sm:$0xff]
      %v8389 = vld [vmem:[%s2688 + $0x111] sm:$0xff]
      %v8390 = vld [vmem:[%s2688 + $0x121] sm:$0xff]
      %v8391 = vld [vmem:[%s2688 + $0x129] sm:$0xff]
      %v8392 = vld [vmem:[%s2688 + $0x139] sm:$0xff]
      %v8393 = vld [vmem:[%s2688 + $0x141] sm:$0xff]
      %v8394 = vld [vmem:[%s2688 + $0x151] sm:$0xff]
      %v8395 = vld [vmem:[%s2688 + $0x159] sm:$0xff]
      %v8396 = vld [vmem:[%s2688 + $0x169] sm:$0xff]
      %v8397 = vld [vmem:[%s2688 + $0x171] sm:$0xff]
      %v8398 = vld [vmem:[%s2688 + $0x2] sm:$0xff]
      %v8399 = vld [vmem:[%s2688 + $0xa] sm:$0xff]
      %v8400 = vld [vmem:[%s2688 + $0x1a] sm:$0xff]
      %v8401 = vld [vmem:[%s2688 + $0x22] sm:$0xff]
      %v8402 = vld [vmem:[%s2688 + $0x32] sm:$0xff]
      %v8403 = vld [vmem:[%s2688 + $0x3a] sm:$0xff]
      %v8404 = vld [vmem:[%s2688 + $0x4a] sm:$0xff]
      %v8405 = vld [vmem:[%s2688 + $0x52] sm:$0xff]
      %v8406 = vld [vmem:[%s2688 + $0x62] sm:$0xff]
      %v8407 = vld [vmem:[%s2688 + $0x6a] sm:$0xff]
      %v8408 = vld [vmem:[%s2688 + $0x7a] sm:$0xff]
      %v8409 = vld [vmem:[%s2688 + $0x82] sm:$0xff]
      %v8410 = vld [vmem:[%s2688 + $0x92] sm:$0xff]
      %v8411 = vld [vmem:[%s2688 + $0x9a] sm:$0xff]
      %v8412 = vld [vmem:[%s2688 + $0xaa] sm:$0xff]
      %v8413 = vld [vmem:[%s2688 + $0xb2] sm:$0xff]
      %v8414 = vld [vmem:[%s2688 + $0xc2] sm:$0xff]
      %v8415 = vld [vmem:[%s2688 + $0xca] sm:$0xff]
      %v8416 = vld [vmem:[%s2688 + $0xda] sm:$0xff]
      %v8417 = vld [vmem:[%s2688 + $0xe2] sm:$0xff]
      %v8418 = vld [vmem:[%s2688 + $0xf2] sm:$0xff]
      %v8419 = vld [vmem:[%s2688 + $0xfa] sm:$0xff]
      %v8420 = vld [vmem:[%s2688 + $0x10a] sm:$0xff]
      %v8421 = vld [vmem:[%s2688 + $0x112] sm:$0xff]
      %v8422 = vld [vmem:[%s2688 + $0x122] sm:$0xff]
      %v8423 = vld [vmem:[%s2688 + $0x12a] sm:$0xff]
      %v8424 = vld [vmem:[%s2688 + $0x13a] sm:$0xff]
      %v8425 = vld [vmem:[%s2688 + $0x142] sm:$0xff]
      %v8426 = vld [vmem:[%s2688 + $0x152] sm:$0xff]
      %v8427 = vld [vmem:[%s2688 + $0x15a] sm:$0xff]
      %v8428 = vld [vmem:[%s2688 + $0x16a] sm:$0xff]
      %v8429 = vld [vmem:[%s2688 + $0x172] sm:$0xff]
      %8462 = vrot.lane.b32.xlu0 %v8174, 32
      %v8463 = vpop.permute.xlu0 %8462
      %8464 = vrot.lane.b32.xlu0 %v8175, 32
      %v8465 = vpop.permute.xlu0 %8464
      %8466 = vrot.lane.b32.xlu0 %v8176, 32
      %v8467 = vpop.permute.xlu0 %8466
      %8468 = vrot.lane.b32.xlu0 %v8177, 32
      %v8469 = vpop.permute.xlu0 %8468
      %8470 = vrot.lane.b32.xlu0 %v8178, 32
      %v8471 = vpop.permute.xlu0 %8470
      %8472 = vrot.lane.b32.xlu0 %v8179, 32
      %v8473 = vpop.permute.xlu0 %8472
      %8474 = vrot.lane.b32.xlu0 %v8180, 32
      %v8475 = vpop.permute.xlu0 %8474
      %8476 = vrot.lane.b32.xlu0 %v8181, 32
      %v8477 = vpop.permute.xlu0 %8476
      %8478 = vrot.lane.b32.xlu0 %v8182, 32
      %v8479 = vpop.permute.xlu0 %8478
      %8480 = vrot.lane.b32.xlu0 %v8183, 32
      %v8481 = vpop.permute.xlu0 %8480
      %8482 = vrot.lane.b32.xlu0 %v8184, 32
      %v8483 = vpop.permute.xlu0 %8482
      %8484 = vrot.lane.b32.xlu0 %v8185, 32
      %v8485 = vpop.permute.xlu0 %8484
      %8486 = vrot.lane.b32.xlu0 %v8186, 32
      %v8487 = vpop.permute.xlu0 %8486
      %8488 = vrot.lane.b32.xlu0 %v8187, 32
      %v8489 = vpop.permute.xlu0 %8488
      %8490 = vrot.lane.b32.xlu0 %v8188, 32
      %v8491 = vpop.permute.xlu0 %8490
      %8492 = vrot.lane.b32.xlu0 %v8189, 32
      %v8493 = vpop.permute.xlu0 %8492
      %8494 = vrot.lane.b32.xlu0 %v8190, 32
      %v8495 = vpop.permute.xlu0 %8494
      %8496 = vrot.lane.b32.xlu0 %v8191, 32
      %v8497 = vpop.permute.xlu0 %8496
      %8498 = vrot.lane.b32.xlu0 %v8192, 32
      %v8499 = vpop.permute.xlu0 %8498
      %8500 = vrot.lane.b32.xlu0 %v8193, 32
      %v8501 = vpop.permute.xlu0 %8500
      %8502 = vrot.lane.b32.xlu0 %v8194, 32
      %v8503 = vpop.permute.xlu0 %8502
      %8504 = vrot.lane.b32.xlu0 %v8195, 32
      %v8505 = vpop.permute.xlu0 %8504
      %8506 = vrot.lane.b32.xlu0 %v8196, 32
      %v8507 = vpop.permute.xlu0 %8506
      %8508 = vrot.lane.b32.xlu0 %v8197, 32
      %v8509 = vpop.permute.xlu0 %8508
      %8510 = vrot.lane.b32.xlu0 %v8198, 32
      %v8511 = vpop.permute.xlu0 %8510
      %8512 = vrot.lane.b32.xlu0 %v8199, 32
      %v8513 = vpop.permute.xlu0 %8512
      %8514 = vrot.lane.b32.xlu0 %v8200, 32
      %v8515 = vpop.permute.xlu0 %8514
      %8516 = vrot.lane.b32.xlu0 %v8201, 32
      %v8517 = vpop.permute.xlu0 %8516
      %8518 = vrot.lane.b32.xlu0 %v8202, 32
      %v8519 = vpop.permute.xlu0 %8518
      %8520 = vrot.lane.b32.xlu0 %v8203, 32
      %v8521 = vpop.permute.xlu0 %8520
      %8522 = vrot.lane.b32.xlu0 %v8204, 32
      %v8523 = vpop.permute.xlu0 %8522
      %8524 = vrot.lane.b32.xlu0 %v8205, 32
      %v8525 = vpop.permute.xlu0 %8524
      %8590 = vrot.lane.b32.xlu0 %v8206, 64
      %v8591 = vpop.permute.xlu0 %8590
      %8592 = vrot.lane.b32.xlu0 %v8207, 64
      %v8593 = vpop.permute.xlu0 %8592
      %8594 = vrot.lane.b32.xlu0 %v8208, 64
      %v8595 = vpop.permute.xlu0 %8594
      %8596 = vrot.lane.b32.xlu0 %v8209, 64
      %v8597 = vpop.permute.xlu0 %8596
      %8598 = vrot.lane.b32.xlu0 %v8210, 64
      %v8599 = vpop.permute.xlu0 %8598
      %8600 = vrot.lane.b32.xlu0 %v8211, 64
      %v8601 = vpop.permute.xlu0 %8600
      %8602 = vrot.lane.b32.xlu0 %v8212, 64
      %v8603 = vpop.permute.xlu0 %8602
      %8604 = vrot.lane.b32.xlu0 %v8213, 64
      %v8605 = vpop.permute.xlu0 %8604
      %8606 = vrot.lane.b32.xlu0 %v8214, 64
      %v8607 = vpop.permute.xlu0 %8606
      %8608 = vrot.lane.b32.xlu0 %v8215, 64
      %v8609 = vpop.permute.xlu0 %8608
      %8610 = vrot.lane.b32.xlu0 %v8216, 64
      %v8611 = vpop.permute.xlu0 %8610
      %8612 = vrot.lane.b32.xlu0 %v8217, 64
      %v8613 = vpop.permute.xlu0 %8612
      %8614 = vrot.lane.b32.xlu0 %v8218, 64
      %v8615 = vpop.permute.xlu0 %8614
      %8616 = vrot.lane.b32.xlu0 %v8219, 64
      %v8617 = vpop.permute.xlu0 %8616
      %8618 = vrot.lane.b32.xlu0 %v8220, 64
      %v8619 = vpop.permute.xlu0 %8618
      %8620 = vrot.lane.b32.xlu0 %v8221, 64
      %v8621 = vpop.permute.xlu0 %8620
      %8622 = vrot.lane.b32.xlu0 %v8222, 64
      %v8623 = vpop.permute.xlu0 %8622
      %8624 = vrot.lane.b32.xlu0 %v8223, 64
      %v8625 = vpop.permute.xlu0 %8624
      %8626 = vrot.lane.b32.xlu0 %v8224, 64
      %v8627 = vpop.permute.xlu0 %8626
      %8628 = vrot.lane.b32.xlu0 %v8225, 64
      %v8629 = vpop.permute.xlu0 %8628
      %8630 = vrot.lane.b32.xlu0 %v8226, 64
      %v8631 = vpop.permute.xlu0 %8630
      %8632 = vrot.lane.b32.xlu0 %v8227, 64
      %v8633 = vpop.permute.xlu0 %8632
      %8634 = vrot.lane.b32.xlu0 %v8228, 64
      %v8635 = vpop.permute.xlu0 %8634
      %8636 = vrot.lane.b32.xlu0 %v8229, 64
      %v8637 = vpop.permute.xlu0 %8636
      %8638 = vrot.lane.b32.xlu0 %v8230, 64
      %v8639 = vpop.permute.xlu0 %8638
      %8640 = vrot.lane.b32.xlu0 %v8231, 64
      %v8641 = vpop.permute.xlu0 %8640
      %8642 = vrot.lane.b32.xlu0 %v8232, 64
      %v8643 = vpop.permute.xlu0 %8642
      %8644 = vrot.lane.b32.xlu0 %v8233, 64
      %v8645 = vpop.permute.xlu0 %8644
      %8646 = vrot.lane.b32.xlu0 %v8234, 64
      %v8647 = vpop.permute.xlu0 %8646
      %8648 = vrot.lane.b32.xlu0 %v8235, 64
      %v8649 = vpop.permute.xlu0 %8648
      %8650 = vrot.lane.b32.xlu0 %v8236, 64
      %v8651 = vpop.permute.xlu0 %8650
      %8652 = vrot.lane.b32.xlu0 %v8237, 64
      %v8653 = vpop.permute.xlu0 %8652
      %8718 = vrot.lane.b32.xlu0 %v8238, 96
      %v8719 = vpop.permute.xlu0 %8718
      %8720 = vrot.lane.b32.xlu0 %v8239, 96
      %v8721 = vpop.permute.xlu0 %8720
      %8722 = vrot.lane.b32.xlu0 %v8240, 96
      %v8723 = vpop.permute.xlu0 %8722
      %8724 = vrot.lane.b32.xlu0 %v8241, 96
      %v8725 = vpop.permute.xlu0 %8724
      %8726 = vrot.lane.b32.xlu0 %v8242, 96
      %v8727 = vpop.permute.xlu0 %8726
      %8728 = vrot.lane.b32.xlu0 %v8243, 96
      %v8729 = vpop.permute.xlu0 %8728
      %8730 = vrot.lane.b32.xlu0 %v8244, 96
      %v8731 = vpop.permute.xlu0 %8730
      %8732 = vrot.lane.b32.xlu0 %v8245, 96
      %v8733 = vpop.permute.xlu0 %8732
      %8734 = vrot.lane.b32.xlu0 %v8246, 96
      %v8735 = vpop.permute.xlu0 %8734
      %8736 = vrot.lane.b32.xlu0 %v8247, 96
      %v8737 = vpop.permute.xlu0 %8736
      %8738 = vrot.lane.b32.xlu0 %v8248, 96
      %v8739 = vpop.permute.xlu0 %8738
      %8740 = vrot.lane.b32.xlu0 %v8249, 96
      %v8741 = vpop.permute.xlu0 %8740
      %8742 = vrot.lane.b32.xlu0 %v8250, 96
      %v8743 = vpop.permute.xlu0 %8742
      %8744 = vrot.lane.b32.xlu0 %v8251, 96
      %v8745 = vpop.permute.xlu0 %8744
      %8746 = vrot.lane.b32.xlu0 %v8252, 96
      %v8747 = vpop.permute.xlu0 %8746
      %8748 = vrot.lane.b32.xlu0 %v8253, 96
      %v8749 = vpop.permute.xlu0 %8748
      %8750 = vrot.lane.b32.xlu0 %v8254, 96
      %v8751 = vpop.permute.xlu0 %8750
      %8752 = vrot.lane.b32.xlu0 %v8255, 96
      %v8753 = vpop.permute.xlu0 %8752
      %8754 = vrot.lane.b32.xlu0 %v8256, 96
      %v8755 = vpop.permute.xlu0 %8754
      %8756 = vrot.lane.b32.xlu0 %v8257, 96
      %v8757 = vpop.permute.xlu0 %8756
      %8758 = vrot.lane.b32.xlu0 %v8258, 96
      %v8759 = vpop.permute.xlu0 %8758
      %8760 = vrot.lane.b32.xlu0 %v8259, 96
      %v8761 = vpop.permute.xlu0 %8760
      %8762 = vrot.lane.b32.xlu0 %v8260, 96
      %v8763 = vpop.permute.xlu0 %8762
      %8764 = vrot.lane.b32.xlu0 %v8261, 96
      %v8765 = vpop.permute.xlu0 %8764
      %8766 = vrot.lane.b32.xlu0 %v8262, 96
      %v8767 = vpop.permute.xlu0 %8766
      %8768 = vrot.lane.b32.xlu0 %v8263, 96
      %v8769 = vpop.permute.xlu0 %8768
      %8770 = vrot.lane.b32.xlu0 %v8264, 96
      %v8771 = vpop.permute.xlu0 %8770
      %8772 = vrot.lane.b32.xlu0 %v8265, 96
      %v8773 = vpop.permute.xlu0 %8772
      %8774 = vrot.lane.b32.xlu0 %v8266, 96
      %v8775 = vpop.permute.xlu0 %8774
      %8776 = vrot.lane.b32.xlu0 %v8267, 96
      %v8777 = vpop.permute.xlu0 %8776
      %8778 = vrot.lane.b32.xlu0 %v8268, 96
      %v8779 = vpop.permute.xlu0 %8778
      %8780 = vrot.lane.b32.xlu0 %v8269, 96
      %v8781 = vpop.permute.xlu0 %8780
      %8846 = vrot.lane.b32.xlu0 %v8302, 32
      %v8847 = vpop.permute.xlu0 %8846
      %8848 = vrot.lane.b32.xlu0 %v8303, 32
      %v8849 = vpop.permute.xlu0 %8848
      %8850 = vrot.lane.b32.xlu0 %v8304, 32
      %v8851 = vpop.permute.xlu0 %8850
      %8852 = vrot.lane.b32.xlu0 %v8305, 32
      %v8853 = vpop.permute.xlu0 %8852
      %8854 = vrot.lane.b32.xlu0 %v8306, 32
      %v8855 = vpop.permute.xlu0 %8854
      %8856 = vrot.lane.b32.xlu0 %v8307, 32
      %v8857 = vpop.permute.xlu0 %8856
      %8858 = vrot.lane.b32.xlu0 %v8308, 32
      %v8859 = vpop.permute.xlu0 %8858
      %8860 = vrot.lane.b32.xlu0 %v8309, 32
      %v8861 = vpop.permute.xlu0 %8860
      %8862 = vrot.lane.b32.xlu0 %v8310, 32
      %v8863 = vpop.permute.xlu0 %8862
      %8864 = vrot.lane.b32.xlu0 %v8311, 32
      %v8865 = vpop.permute.xlu0 %8864
      %8866 = vrot.lane.b32.xlu0 %v8312, 32
      %v8867 = vpop.permute.xlu0 %8866
      %8868 = vrot.lane.b32.xlu0 %v8313, 32
      %v8869 = vpop.permute.xlu0 %8868
      %8870 = vrot.lane.b32.xlu0 %v8314, 32
      %v8871 = vpop.permute.xlu0 %8870
      %8872 = vrot.lane.b32.xlu0 %v8315, 32
      %v8873 = vpop.permute.xlu0 %8872
      %8874 = vrot.lane.b32.xlu0 %v8316, 32
      %v8875 = vpop.permute.xlu0 %8874
      %8876 = vrot.lane.b32.xlu0 %v8317, 32
      %v8877 = vpop.permute.xlu0 %8876
      %8878 = vrot.lane.b32.xlu0 %v8318, 32
      %v8879 = vpop.permute.xlu0 %8878
      %8880 = vrot.lane.b32.xlu0 %v8319, 32
      %v8881 = vpop.permute.xlu0 %8880
      %8882 = vrot.lane.b32.xlu0 %v8320, 32
      %v8883 = vpop.permute.xlu0 %8882
      %8884 = vrot.lane.b32.xlu0 %v8321, 32
      %v8885 = vpop.permute.xlu0 %8884
      %8886 = vrot.lane.b32.xlu0 %v8322, 32
      %v8887 = vpop.permute.xlu0 %8886
      %8888 = vrot.lane.b32.xlu0 %v8323, 32
      %v8889 = vpop.permute.xlu0 %8888
      %8890 = vrot.lane.b32.xlu0 %v8324, 32
      %v8891 = vpop.permute.xlu0 %8890
      %8892 = vrot.lane.b32.xlu0 %v8325, 32
      %v8893 = vpop.permute.xlu0 %8892
      %8894 = vrot.lane.b32.xlu0 %v8326, 32
      %v8895 = vpop.permute.xlu0 %8894
      %8896 = vrot.lane.b32.xlu0 %v8327, 32
      %v8897 = vpop.permute.xlu0 %8896
      %8898 = vrot.lane.b32.xlu0 %v8328, 32
      %v8899 = vpop.permute.xlu0 %8898
      %8900 = vrot.lane.b32.xlu0 %v8329, 32
      %v8901 = vpop.permute.xlu0 %8900
      %8902 = vrot.lane.b32.xlu0 %v8330, 32
      %v8903 = vpop.permute.xlu0 %8902
      %8904 = vrot.lane.b32.xlu0 %v8331, 32
      %v8905 = vpop.permute.xlu0 %8904
      %8906 = vrot.lane.b32.xlu0 %v8332, 32
      %v8907 = vpop.permute.xlu0 %8906
      %8908 = vrot.lane.b32.xlu0 %v8333, 32
      %v8909 = vpop.permute.xlu0 %8908
      %8974 = vrot.lane.b32.xlu0 %v8334, 64
      %v8975 = vpop.permute.xlu0 %8974
      %8976 = vrot.lane.b32.xlu0 %v8335, 64
      %v8977 = vpop.permute.xlu0 %8976
      %8978 = vrot.lane.b32.xlu0 %v8336, 64
      %v8979 = vpop.permute.xlu0 %8978
      %8980 = vrot.lane.b32.xlu0 %v8337, 64
      %v8981 = vpop.permute.xlu0 %8980
      %8982 = vrot.lane.b32.xlu0 %v8338, 64
      %v8983 = vpop.permute.xlu0 %8982
      %8984 = vrot.lane.b32.xlu0 %v8339, 64
      %v8985 = vpop.permute.xlu0 %8984
      %8986 = vrot.lane.b32.xlu0 %v8340, 64
      %v8987 = vpop.permute.xlu0 %8986
      %8988 = vrot.lane.b32.xlu0 %v8341, 64
      %v8989 = vpop.permute.xlu0 %8988
      %8990 = vrot.lane.b32.xlu0 %v8342, 64
      %v8991 = vpop.permute.xlu0 %8990
      %8992 = vrot.lane.b32.xlu0 %v8343, 64
      %v8993 = vpop.permute.xlu0 %8992
      %8994 = vrot.lane.b32.xlu0 %v8344, 64
      %v8995 = vpop.permute.xlu0 %8994
      %8996 = vrot.lane.b32.xlu0 %v8345, 64
      %v8997 = vpop.permute.xlu0 %8996
      %8998 = vrot.lane.b32.xlu0 %v8346, 64
      %v8999 = vpop.permute.xlu0 %8998
      %9000 = vrot.lane.b32.xlu0 %v8347, 64
      %v9001 = vpop.permute.xlu0 %9000
      %9002 = vrot.lane.b32.xlu0 %v8348, 64
      %v9003 = vpop.permute.xlu0 %9002
      %9004 = vrot.lane.b32.xlu0 %v8349, 64
      %v9005 = vpop.permute.xlu0 %9004
      %9006 = vrot.lane.b32.xlu0 %v8350, 64
      %v9007 = vpop.permute.xlu0 %9006
      %9008 = vrot.lane.b32.xlu0 %v8351, 64
      %v9009 = vpop.permute.xlu0 %9008
      %9010 = vrot.lane.b32.xlu0 %v8352, 64
      %v9011 = vpop.permute.xlu0 %9010
      %9012 = vrot.lane.b32.xlu0 %v8353, 64
      %v9013 = vpop.permute.xlu0 %9012
      %9014 = vrot.lane.b32.xlu0 %v8354, 64
      %v9015 = vpop.permute.xlu0 %9014
      %9016 = vrot.lane.b32.xlu0 %v8355, 64
      %v9017 = vpop.permute.xlu0 %9016
      %9018 = vrot.lane.b32.xlu0 %v8356, 64
      %v9019 = vpop.permute.xlu0 %9018
      %9020 = vrot.lane.b32.xlu0 %v8357, 64
      %v9021 = vpop.permute.xlu0 %9020
      %9022 = vrot.lane.b32.xlu0 %v8358, 64
      %v9023 = vpop.permute.xlu0 %9022
      %9024 = vrot.lane.b32.xlu0 %v8359, 64
      %v9025 = vpop.permute.xlu0 %9024
      %9026 = vrot.lane.b32.xlu0 %v8360, 64
      %v9027 = vpop.permute.xlu0 %9026
      %9028 = vrot.lane.b32.xlu0 %v8361, 64
      %v9029 = vpop.permute.xlu0 %9028
      %9030 = vrot.lane.b32.xlu0 %v8362, 64
      %v9031 = vpop.permute.xlu0 %9030
      %9032 = vrot.lane.b32.xlu0 %v8363, 64
      %v9033 = vpop.permute.xlu0 %9032
      %9034 = vrot.lane.b32.xlu0 %v8364, 64
      %v9035 = vpop.permute.xlu0 %9034
      %9036 = vrot.lane.b32.xlu0 %v8365, 64
      %v9037 = vpop.permute.xlu0 %9036
      %9102 = vrot.lane.b32.xlu0 %v8366, 96
      %v9103 = vpop.permute.xlu0 %9102
      %9104 = vrot.lane.b32.xlu0 %v8367, 96
      %v9105 = vpop.permute.xlu0 %9104
      %9106 = vrot.lane.b32.xlu0 %v8368, 96
      %v9107 = vpop.permute.xlu0 %9106
      %9108 = vrot.lane.b32.xlu0 %v8369, 96
      %v9109 = vpop.permute.xlu0 %9108
      %9110 = vrot.lane.b32.xlu0 %v8370, 96
      %v9111 = vpop.permute.xlu0 %9110
      %9112 = vrot.lane.b32.xlu0 %v8371, 96
      %v9113 = vpop.permute.xlu0 %9112
      %9114 = vrot.lane.b32.xlu0 %v8372, 96
      %v9115 = vpop.permute.xlu0 %9114
      %9116 = vrot.lane.b32.xlu0 %v8373, 96
      %v9117 = vpop.permute.xlu0 %9116
      %9118 = vrot.lane.b32.xlu0 %v8374, 96
      %v9119 = vpop.permute.xlu0 %9118
      %9120 = vrot.lane.b32.xlu0 %v8375, 96
      %v9121 = vpop.permute.xlu0 %9120
      %9122 = vrot.lane.b32.xlu0 %v8376, 96
      %v9123 = vpop.permute.xlu0 %9122
      %9124 = vrot.lane.b32.xlu0 %v8377, 96
      %v9125 = vpop.permute.xlu0 %9124
      %9126 = vrot.lane.b32.xlu0 %v8378, 96
      %v9127 = vpop.permute.xlu0 %9126
      %9128 = vrot.lane.b32.xlu0 %v8379, 96
      %v9129 = vpop.permute.xlu0 %9128
      %9130 = vrot.lane.b32.xlu0 %v8380, 96
      %v9131 = vpop.permute.xlu0 %9130
      %9132 = vrot.lane.b32.xlu0 %v8381, 96
      %v9133 = vpop.permute.xlu0 %9132
      %9134 = vrot.lane.b32.xlu0 %v8382, 96
      %v9135 = vpop.permute.xlu0 %9134
      %9136 = vrot.lane.b32.xlu0 %v8383, 96
      %v9137 = vpop.permute.xlu0 %9136
      %9138 = vrot.lane.b32.xlu0 %v8384, 96
      %v9139 = vpop.permute.xlu0 %9138
      %9140 = vrot.lane.b32.xlu0 %v8385, 96
      %v9141 = vpop.permute.xlu0 %9140
      %9142 = vrot.lane.b32.xlu0 %v8386, 96
      %v9143 = vpop.permute.xlu0 %9142
      %9144 = vrot.lane.b32.xlu0 %v8387, 96
      %v9145 = vpop.permute.xlu0 %9144
      %9146 = vrot.lane.b32.xlu0 %v8388, 96
      %v9147 = vpop.permute.xlu0 %9146
      %9148 = vrot.lane.b32.xlu0 %v8389, 96
      %v9149 = vpop.permute.xlu0 %9148
      %9150 = vrot.lane.b32.xlu0 %v8390, 96
      %v9151 = vpop.permute.xlu0 %9150
      %9152 = vrot.lane.b32.xlu0 %v8391, 96
      %v9153 = vpop.permute.xlu0 %9152
      %9154 = vrot.lane.b32.xlu0 %v8392, 96
      %v9155 = vpop.permute.xlu0 %9154
      %9156 = vrot.lane.b32.xlu0 %v8393, 96
      %v9157 = vpop.permute.xlu0 %9156
      %9158 = vrot.lane.b32.xlu0 %v8394, 96
      %v9159 = vpop.permute.xlu0 %9158
      %9160 = vrot.lane.b32.xlu0 %v8395, 96
      %v9161 = vpop.permute.xlu0 %9160
      %9162 = vrot.lane.b32.xlu0 %v8396, 96
      %v9163 = vpop.permute.xlu0 %9162
      %9164 = vrot.lane.b32.xlu0 %v8397, 96
      %v9165 = vpop.permute.xlu0 %9164
      %v9198 = vsel %vm488, %v8142, %v8463
      %v9199 = vsel %vm488, %v8143, %v8465
      %v9200 = vsel %vm488, %v8144, %v8467
      %v9201 = vsel %vm488, %v8145, %v8469
      %v9202 = vsel %vm488, %v8146, %v8471
      %v9203 = vsel %vm488, %v8147, %v8473
      %v9204 = vsel %vm488, %v8148, %v8475
      %v9205 = vsel %vm488, %v8149, %v8477
      %v9206 = vsel %vm488, %v8150, %v8479
      %v9207 = vsel %vm488, %v8151, %v8481
      %v9208 = vsel %vm488, %v8152, %v8483
      %v9209 = vsel %vm488, %v8153, %v8485
      %v9210 = vsel %vm488, %v8154, %v8487
      %v9211 = vsel %vm488, %v8155, %v8489
      %v9212 = vsel %vm488, %v8156, %v8491
      %v9213 = vsel %vm488, %v8157, %v8493
      %v9214 = vsel %vm488, %v8158, %v8495
      %v9215 = vsel %vm488, %v8159, %v8497
      %v9216 = vsel %vm488, %v8160, %v8499
      %v9217 = vsel %vm488, %v8161, %v8501
      %v9218 = vsel %vm488, %v8162, %v8503
      %v9219 = vsel %vm488, %v8163, %v8505
      %v9220 = vsel %vm488, %v8164, %v8507
      %v9221 = vsel %vm488, %v8165, %v8509
      %v9222 = vsel %vm488, %v8166, %v8511
      %v9223 = vsel %vm488, %v8167, %v8513
      %v9224 = vsel %vm488, %v8168, %v8515
      %v9225 = vsel %vm488, %v8169, %v8517
      %v9226 = vsel %vm488, %v8170, %v8519
      %v9227 = vsel %vm488, %v8171, %v8521
      %v9228 = vsel %vm488, %v8172, %v8523
      %v9229 = vsel %vm488, %v8173, %v8525
      %v9230 = vsel %vm3585, %v9198, %v8591
      %v9231 = vsel %vm3585, %v9199, %v8593
      %v9232 = vsel %vm3585, %v9200, %v8595
      %v9233 = vsel %vm3585, %v9201, %v8597
      %v9234 = vsel %vm3585, %v9202, %v8599
      %v9235 = vsel %vm3585, %v9203, %v8601
      %v9236 = vsel %vm3585, %v9204, %v8603
      %v9237 = vsel %vm3585, %v9205, %v8605
      %v9238 = vsel %vm3585, %v9206, %v8607
      %v9239 = vsel %vm3585, %v9207, %v8609
      %v9240 = vsel %vm3585, %v9208, %v8611
      %v9241 = vsel %vm3585, %v9209, %v8613
      %v9242 = vsel %vm3585, %v9210, %v8615
      %v9243 = vsel %vm3585, %v9211, %v8617
      %v9244 = vsel %vm3585, %v9212, %v8619
      %v9245 = vsel %vm3585, %v9213, %v8621
      %v9246 = vsel %vm3585, %v9214, %v8623
      %v9247 = vsel %vm3585, %v9215, %v8625
      %v9248 = vsel %vm3585, %v9216, %v8627
      %v9249 = vsel %vm3585, %v9217, %v8629
      %v9250 = vsel %vm3585, %v9218, %v8631
      %v9251 = vsel %vm3585, %v9219, %v8633
      %v9252 = vsel %vm3585, %v9220, %v8635
      %v9253 = vsel %vm3585, %v9221, %v8637
      %v9254 = vsel %vm3585, %v9222, %v8639
      %v9255 = vsel %vm3585, %v9223, %v8641
      %v9256 = vsel %vm3585, %v9224, %v8643
      %v9257 = vsel %vm3585, %v9225, %v8645
      %v9258 = vsel %vm3585, %v9226, %v8647
      %v9259 = vsel %vm3585, %v9227, %v8649
      %v9260 = vsel %vm3585, %v9228, %v8651
      %v9261 = vsel %vm3585, %v9229, %v8653
      %v9262 = vsel %vm3618, %v9230, %v8719
      %v9263 = vsel %vm3618, %v9231, %v8721
      %v9264 = vsel %vm3618, %v9232, %v8723
      %v9265 = vsel %vm3618, %v9233, %v8725
      %v9266 = vsel %vm3618, %v9234, %v8727
      %v9267 = vsel %vm3618, %v9235, %v8729
      %v9268 = vsel %vm3618, %v9236, %v8731
      %v9269 = vsel %vm3618, %v9237, %v8733
      %v9270 = vsel %vm3618, %v9238, %v8735
      %v9271 = vsel %vm3618, %v9239, %v8737
      %v9272 = vsel %vm3618, %v9240, %v8739
      %v9273 = vsel %vm3618, %v9241, %v8741
      %v9274 = vsel %vm3618, %v9242, %v8743
      %v9275 = vsel %vm3618, %v9243, %v8745
      %v9276 = vsel %vm3618, %v9244, %v8747
      %v9277 = vsel %vm3618, %v9245, %v8749
      %v9278 = vsel %vm3618, %v9246, %v8751
      %v9279 = vsel %vm3618, %v9247, %v8753
      %v9280 = vsel %vm3618, %v9248, %v8755
      %v9281 = vsel %vm3618, %v9249, %v8757
      %v9282 = vsel %vm3618, %v9250, %v8759
      %v9283 = vsel %vm3618, %v9251, %v8761
      %v9284 = vsel %vm3618, %v9252, %v8763
      %v9285 = vsel %vm3618, %v9253, %v8765
      %v9286 = vsel %vm3618, %v9254, %v8767
      %v9287 = vsel %vm3618, %v9255, %v8769
      %v9288 = vsel %vm3618, %v9256, %v8771
      %v9289 = vsel %vm3618, %v9257, %v8773
      %v9290 = vsel %vm3618, %v9258, %v8775
      %v9291 = vsel %vm3618, %v9259, %v8777
      %v9292 = vsel %vm3618, %v9260, %v8779
      %v9293 = vsel %vm3618, %v9261, %v8781
      %v9294 = vsel %vm488, %v8270, %v8847
      %v9295 = vsel %vm488, %v8271, %v8849
      %v9296 = vsel %vm488, %v8272, %v8851
      %v9297 = vsel %vm488, %v8273, %v8853
      %v9298 = vsel %vm488, %v8274, %v8855
      %v9299 = vsel %vm488, %v8275, %v8857
      %v9300 = vsel %vm488, %v8276, %v8859
      %v9301 = vsel %vm488, %v8277, %v8861
      %v9302 = vsel %vm488, %v8278, %v8863
      %v9303 = vsel %vm488, %v8279, %v8865
      %v9304 = vsel %vm488, %v8280, %v8867
      %v9305 = vsel %vm488, %v8281, %v8869
      %v9306 = vsel %vm488, %v8282, %v8871
      %v9307 = vsel %vm488, %v8283, %v8873
      %v9308 = vsel %vm488, %v8284, %v8875
      %v9309 = vsel %vm488, %v8285, %v8877
      %v9310 = vsel %vm488, %v8286, %v8879
      %v9311 = vsel %vm488, %v8287, %v8881
      %v9312 = vsel %vm488, %v8288, %v8883
      %v9313 = vsel %vm488, %v8289, %v8885
      %v9314 = vsel %vm488, %v8290, %v8887
      %v9315 = vsel %vm488, %v8291, %v8889
      %v9316 = vsel %vm488, %v8292, %v8891
      %v9317 = vsel %vm488, %v8293, %v8893
      %v9318 = vsel %vm488, %v8294, %v8895
      %v9319 = vsel %vm488, %v8295, %v8897
      %v9320 = vsel %vm488, %v8296, %v8899
      %v9321 = vsel %vm488, %v8297, %v8901
      %v9322 = vsel %vm488, %v8298, %v8903
      %v9323 = vsel %vm488, %v8299, %v8905
      %v9324 = vsel %vm488, %v8300, %v8907
      %v9325 = vsel %vm488, %v8301, %v8909
      %v9326 = vsel %vm3585, %v9294, %v8975
      %v9327 = vsel %vm3585, %v9295, %v8977
      %v9328 = vsel %vm3585, %v9296, %v8979
      %v9329 = vsel %vm3585, %v9297, %v8981
      %v9330 = vsel %vm3585, %v9298, %v8983
      %v9331 = vsel %vm3585, %v9299, %v8985
      %v9332 = vsel %vm3585, %v9300, %v8987
      %v9333 = vsel %vm3585, %v9301, %v8989
      %v9334 = vsel %vm3585, %v9302, %v8991
      %v9335 = vsel %vm3585, %v9303, %v8993
      %v9336 = vsel %vm3585, %v9304, %v8995
      %v9337 = vsel %vm3585, %v9305, %v8997
      %v9338 = vsel %vm3585, %v9306, %v8999
      %v9339 = vsel %vm3585, %v9307, %v9001
      %v9340 = vsel %vm3585, %v9308, %v9003
      %v9341 = vsel %vm3585, %v9309, %v9005
      %v9342 = vsel %vm3585, %v9310, %v9007
      %v9343 = vsel %vm3585, %v9311, %v9009
      %v9344 = vsel %vm3585, %v9312, %v9011
      %v9345 = vsel %vm3585, %v9313, %v9013
      %v9346 = vsel %vm3585, %v9314, %v9015
      %v9347 = vsel %vm3585, %v9315, %v9017
      %v9348 = vsel %vm3585, %v9316, %v9019
      %v9349 = vsel %vm3585, %v9317, %v9021
      %v9350 = vsel %vm3585, %v9318, %v9023
      %v9351 = vsel %vm3585, %v9319, %v9025
      %v9352 = vsel %vm3585, %v9320, %v9027
      %v9353 = vsel %vm3585, %v9321, %v9029
      %v9354 = vsel %vm3585, %v9322, %v9031
      %v9355 = vsel %vm3585, %v9323, %v9033
      %v9356 = vsel %vm3585, %v9324, %v9035
      %v9357 = vsel %vm3585, %v9325, %v9037
      %v9358 = vsel %vm3618, %v9326, %v9103
      %v9359 = vsel %vm3618, %v9327, %v9105
      %v9360 = vsel %vm3618, %v9328, %v9107
      %v9361 = vsel %vm3618, %v9329, %v9109
      %v9362 = vsel %vm3618, %v9330, %v9111
      %v9363 = vsel %vm3618, %v9331, %v9113
      %v9364 = vsel %vm3618, %v9332, %v9115
      %v9365 = vsel %vm3618, %v9333, %v9117
      %v9366 = vsel %vm3618, %v9334, %v9119
      %v9367 = vsel %vm3618, %v9335, %v9121
      %v9368 = vsel %vm3618, %v9336, %v9123
      %v9369 = vsel %vm3618, %v9337, %v9125
      %v9370 = vsel %vm3618, %v9338, %v9127
      %v9371 = vsel %vm3618, %v9339, %v9129
      %v9372 = vsel %vm3618, %v9340, %v9131
      %v9373 = vsel %vm3618, %v9341, %v9133
      %v9374 = vsel %vm3618, %v9342, %v9135
      %v9375 = vsel %vm3618, %v9343, %v9137
      %v9376 = vsel %vm3618, %v9344, %v9139
      %v9377 = vsel %vm3618, %v9345, %v9141
      %v9378 = vsel %vm3618, %v9346, %v9143
      %v9379 = vsel %vm3618, %v9347, %v9145
      %v9380 = vsel %vm3618, %v9348, %v9147
      %v9381 = vsel %vm3618, %v9349, %v9149
      %v9382 = vsel %vm3618, %v9350, %v9151
      %v9383 = vsel %vm3618, %v9351, %v9153
      %v9384 = vsel %vm3618, %v9352, %v9155
      %v9385 = vsel %vm3618, %v9353, %v9157
      %v9386 = vsel %vm3618, %v9354, %v9159
      %v9387 = vsel %vm3618, %v9355, %v9161
      %v9388 = vsel %vm3618, %v9356, %v9163
      %v9389 = vsel %vm3618, %v9357, %v9165
      %v9390 = vpack.c.bf16 %v9263, %v9262
      %v9391 = vpack.c.bf16 %v9359, %v9358
      %v9392 = vpack.c.bf16 %v8399, %v8398
      %v9393 = vpack.c.bf16 %v9265, %v9264
      %v9394 = vpack.c.bf16 %v9361, %v9360
      %v9395 = vpack.c.bf16 %v8401, %v8400
      %v9396 = vpack.c.bf16 %v9267, %v9266
      %v9397 = vpack.c.bf16 %v9363, %v9362
      %v9398 = vpack.c.bf16 %v8403, %v8402
      %v9399 = vpack.c.bf16 %v9269, %v9268
      %v9400 = vpack.c.bf16 %v9365, %v9364
      %v9401 = vpack.c.bf16 %v8405, %v8404
      %v9402 = vpack.c.bf16 %v9271, %v9270
      %v9403 = vpack.c.bf16 %v9367, %v9366
      %v9404 = vpack.c.bf16 %v8407, %v8406
      %v9405 = vpack.c.bf16 %v9273, %v9272
      %v9406 = vpack.c.bf16 %v9369, %v9368
      %v9407 = vpack.c.bf16 %v8409, %v8408
      %v9408 = vpack.c.bf16 %v9275, %v9274
      %v9409 = vpack.c.bf16 %v9371, %v9370
      %v9410 = vpack.c.bf16 %v8411, %v8410
      %v9411 = vpack.c.bf16 %v9277, %v9276
      %v9412 = vpack.c.bf16 %v9373, %v9372
      %v9413 = vpack.c.bf16 %v8413, %v8412
      %v9414 = vpack.c.bf16 %v9279, %v9278
      %v9415 = vpack.c.bf16 %v9375, %v9374
      %v9416 = vpack.c.bf16 %v8415, %v8414
      %v9417 = vpack.c.bf16 %v9281, %v9280
      %v9418 = vpack.c.bf16 %v9377, %v9376
      %v9419 = vpack.c.bf16 %v8417, %v8416
      %v9420 = vpack.c.bf16 %v9283, %v9282
      %v9421 = vpack.c.bf16 %v9379, %v9378
      %v9422 = vpack.c.bf16 %v8419, %v8418
      %v9423 = vpack.c.bf16 %v9285, %v9284
      %v9424 = vpack.c.bf16 %v9381, %v9380
      %v9425 = vpack.c.bf16 %v8421, %v8420
      %v9426 = vpack.c.bf16 %v9287, %v9286
      %v9427 = vpack.c.bf16 %v9383, %v9382
      %v9428 = vpack.c.bf16 %v8423, %v8422
      %v9429 = vpack.c.bf16 %v9289, %v9288
      %v9430 = vpack.c.bf16 %v9385, %v9384
      %v9431 = vpack.c.bf16 %v8425, %v8424
      %v9432 = vpack.c.bf16 %v9291, %v9290
      %v9433 = vpack.c.bf16 %v9387, %v9386
      %v9434 = vpack.c.bf16 %v8427, %v8426
      %v9435 = vpack.c.bf16 %v9293, %v9292
      %v9436 = vpack.c.bf16 %v9389, %v9388
      %v9437 = vpack.c.bf16 %v8429, %v8428
      %v9438 = vld [vmem:[%s9] sm:$0xf]
      %v9439 = vld [vmem:[%s9 + $0x4] sm:$0xf]
      %v9440 = vld [vmem:[%s9 + $0x8] sm:$0xf]
      %v9441 = vld [vmem:[%s9 + $0xc] sm:$0xf]
      %v9442 = vld [vmem:[%s9 + $0x10] sm:$0xf]
      %v9443 = vld [vmem:[%s9 + $0x14] sm:$0xf]
      %v9444 = vld [vmem:[%s9 + $0x18] sm:$0xf]
      %v9445 = vld [vmem:[%s9 + $0x1c] sm:$0xf]
      %v9446 = vld [vmem:[%s9 + $0x20] sm:$0xf]
      %v9447 = vld [vmem:[%s9 + $0x24] sm:$0xf]
      %v9448 = vld [vmem:[%s9 + $0x28] sm:$0xf]
      %v9449 = vld [vmem:[%s9 + $0x2c] sm:$0xf]
      %v9450 = vld [vmem:[%s9 + $0x30] sm:$0xf]
      %v9451 = vld [vmem:[%s9 + $0x34] sm:$0xf]
      %v9452 = vld [vmem:[%s9 + $0x38] sm:$0xf]
      %v9453 = vld [vmem:[%s9 + $0x3c] sm:$0xf]
      %v9454 = vld [vmem:[%s9 + $0x40] sm:$0xf]
      %v9455 = vld [vmem:[%s9 + $0x44] sm:$0xf]
      %v9456 = vld [vmem:[%s9 + $0x48] sm:$0xf]
      %v9457 = vld [vmem:[%s9 + $0x4c] sm:$0xf]
      %v9458 = vld [vmem:[%s9 + $0x50] sm:$0xf]
      %v9459 = vld [vmem:[%s9 + $0x54] sm:$0xf]
      %v9460 = vld [vmem:[%s9 + $0x58] sm:$0xf]
      %v9461 = vld [vmem:[%s9 + $0x5c] sm:$0xf]
      %v9462 = vld [vmem:[%s9 + $0x60] sm:$0xf]
      %v9463 = vld [vmem:[%s9 + $0x64] sm:$0xf]
      %v9464 = vld [vmem:[%s9 + $0x68] sm:$0xf]
      %v9465 = vld [vmem:[%s9 + $0x6c] sm:$0xf]
      %v9466 = vld [vmem:[%s9 + $0x70] sm:$0xf]
      %v9467 = vld [vmem:[%s9 + $0x74] sm:$0xf]
      %v9468 = vld [vmem:[%s9 + $0x78] sm:$0xf]
      %v9469 = vld [vmem:[%s9 + $0x7c] sm:$0xf]
      %v9470 = vld [vmem:[%s9 + $0x80] sm:$0xf]
      %v9471 = vld [vmem:[%s9 + $0x84] sm:$0xf]
      %v9472 = vld [vmem:[%s9 + $0x88] sm:$0xf]
      %v9473 = vld [vmem:[%s9 + $0x8c] sm:$0xf]
      %v9474 = vld [vmem:[%s10] sm:$0x1]
      %v9476 = vlaneseq
      %v9477 = vshrl.u32 %v9476, 7
      %v9478 = vsub.s32 0, %v9477
      %v9479 = vrot.slane %v9474, %v9478
      %v9517 = vunpack.c.l.b16 %v9438
      %v9518 = vunpack.c.l.b16 %v9439
      %v9519 = vunpack.c.l.b16 %v9440
      %v9520 = vunpack.c.l.b16 %v9441
      %v9521 = vunpack.c.l.b16 %v9442
      %v9522 = vunpack.c.l.b16 %v9443
      %v9523 = vunpack.c.l.b16 %v9444
      %v9524 = vunpack.c.l.b16 %v9445
      %v9525 = vunpack.c.l.b16 %v9446
      %v9526 = vunpack.c.l.b16 %v9447
      %v9527 = vunpack.c.l.b16 %v9448
      %v9528 = vunpack.c.l.b16 %v9449
      %v9529 = vunpack.c.l.b16 %v9450
      %v9530 = vunpack.c.l.b16 %v9451
      %v9531 = vunpack.c.l.b16 %v9452
      %v9532 = vunpack.c.l.b16 %v9453
      %v9533 = vunpack.c.l.b16 %v9454
      %v9534 = vunpack.c.l.b16 %v9455
      %v9535 = vunpack.c.l.b16 %v9456
      %v9536 = vunpack.c.l.b16 %v9457
      %v9537 = vunpack.c.l.b16 %v9458
      %v9538 = vunpack.c.l.b16 %v9459
      %v9539 = vunpack.c.l.b16 %v9460
      %v9540 = vunpack.c.l.b16 %v9461
      %v9541 = vunpack.c.l.b16 %v9462
      %v9542 = vunpack.c.l.b16 %v9463
      %v9543 = vunpack.c.l.b16 %v9464
      %v9544 = vunpack.c.l.b16 %v9465
      %v9545 = vunpack.c.l.b16 %v9466
      %v9546 = vunpack.c.l.b16 %v9467
      %v9547 = vunpack.c.l.b16 %v9468
      %v9548 = vunpack.c.l.b16 %v9469
      %v9549 = vunpack.c.l.b16 %v9470
      %v9550 = vunpack.c.l.b16 %v9471
      %v9551 = vunpack.c.l.b16 %v9472
      %v9552 = vunpack.c.l.b16 %v9473
      %v9553 = vpack.c.b16 %v9518, %v9517
      %v9554 = vpack.c.b16 %v9520, %v9519
      %v9555 = vpack.c.b16 %v9522, %v9521
      %v9556 = vpack.c.b16 %v9524, %v9523
      %v9557 = vpack.c.b16 %v9526, %v9525
      %v9558 = vpack.c.b16 %v9528, %v9527
      %v9559 = vpack.c.b16 %v9530, %v9529
      %v9560 = vpack.c.b16 %v9532, %v9531
      %v9561 = vpack.c.b16 %v9534, %v9533
      %v9562 = vpack.c.b16 %v9536, %v9535
      %v9563 = vpack.c.b16 %v9538, %v9537
      %v9564 = vpack.c.b16 %v9540, %v9539
      %v9565 = vpack.c.b16 %v9542, %v9541
      %v9566 = vpack.c.b16 %v9544, %v9543
      %v9567 = vpack.c.b16 %v9546, %v9545
      %v9568 = vpack.c.b16 %v9548, %v9547
      %v9569 = vpack.c.b16 %v9550, %v9549
      %v9570 = vpack.c.b16 %v9552, %v9551
      %v9590 = vsel %vm488, %v9392, 0
      %v9593 = vsel %vm488, %v9395, 0
      %v9596 = vsel %vm488, %v9398, 0
      %v9599 = vsel %vm488, %v9401, 0
      %v9602 = vsel %vm488, %v9404, 0
      %v9605 = vsel %vm488, %v9407, 0
      %v9608 = vsel %vm488, %v9410, 0
      %v9611 = vsel %vm488, %v9413, 0
      %v9614 = vsel %vm488, %v9416, 0
      %v9617 = vsel %vm488, %v9419, 0
      %v9620 = vsel %vm488, %v9422, 0
      %v9623 = vsel %vm488, %v9425, 0
      %v9626 = vsel %vm488, %v9428, 0
      %v9629 = vsel %vm488, %v9431, 0
      %v9632 = vsel %vm488, %v9434, 0
      %v9635 = vsel %vm488, %v9437, 0
      %9637 = vmatprep.subr.bf16.mxu0 0
      %9638 = vmatpush1.bf16.msra.mxu0 %v9553
      %9639 = vmatprep.subr.bf16.mxu0 0
      %9640 = vmatpush1.bf16.msra.mxu0 %v9554
      %9641 = vmatprep.subr.bf16.mxu0 0
      %9642 = vmatpush1.bf16.msra.mxu0 %v9555
      %9643 = vmatprep.subr.bf16.mxu0 0
      %9644 = vmatpush1.bf16.msra.mxu0 %v9556
      %9645 = vmatprep.subr.bf16.mxu0 0
      %9646 = vmatpush1.bf16.msra.mxu0 %v9557
      %9647 = vmatprep.subr.bf16.mxu0 0
      %9648 = vmatpush1.bf16.msra.mxu0 %v9558
      %9649 = vmatprep.subr.bf16.mxu0 0
      %9650 = vmatpush1.bf16.msra.mxu0 %v9559
      %9651 = vmatprep.subr.bf16.mxu0 0
      %9652 = vmatpush1.bf16.msra.mxu0 %v9560
      %9653 = vmatprep.subr.bf16.mxu0 0
      %9654 = vmatpush1.bf16.msra.mxu0 %v9561
      %9655 = vmatprep.subr.bf16.mxu0 0
      %9656 = vmatpush1.bf16.msra.mxu0 %v9562
      %9657 = vmatprep.subr.bf16.mxu0 0
      %9658 = vmatpush1.bf16.msra.mxu0 %v9563
      %9659 = vmatprep.subr.bf16.mxu0 0
      %9660 = vmatpush1.bf16.msra.mxu0 %v9564
      %9661 = vmatprep.subr.bf16.mxu0 0
      %9662 = vmatpush1.bf16.msra.mxu0 %v9565
      %9663 = vmatprep.subr.bf16.mxu0 0
      %9664 = vmatpush1.bf16.msra.mxu0 %v9566
      %9665 = vmatprep.subr.bf16.mxu0 0
      %9666 = vmatpush1.bf16.msra.mxu0 %v9567
      %9667 = vmatprep.subr.bf16.mxu0 0
      %9668 = vmatpush1.bf16.msra.mxu0 %v9568
      %9669 = vmatprep.mubr.bf16.mxu0 %v9391
      %9670 = vmatmul.mubr.bf16.gmra.mrb[0].mxu0 %v9390
      %v9671 = vpop.f32.mrb[0].mxu0
      %v9672 = vadd.f32 %v9479, %v9671
      %v9673 = vpop.f32.mrb[0].mxu0
      %v9674 = vpop.f32.mrb[0].mxu0
      %v9675 = vadd.f32 %v9479, %v9674
      %v9676 = vpop.f32.mrb[0].mxu0
      %9677 = vmatprep.mubr.bf16.mxu0 %v9394
      %9678 = vmatmul.mubr.bf16.gmra.mrb[0].mxu0 %v9393
      %v9679 = vpop.f32.mrb[0].mxu0
      %v9680 = vadd.f32 %v9479, %v9679
      %v9681 = vpop.f32.mrb[0].mxu0
      %v9682 = vpop.f32.mrb[0].mxu0
      %v9683 = vadd.f32 %v9479, %v9682
      %v9684 = vpop.f32.mrb[0].mxu0
      %9685 = vmatprep.mubr.bf16.mxu0 %v9397
      %9686 = vmatmul.mubr.bf16.gmra.mrb[0].mxu0 %v9396
      %v9687 = vpop.f32.mrb[0].mxu0
      %v9688 = vadd.f32 %v9479, %v9687
      %v9689 = vpop.f32.mrb[0].mxu0
      %v9690 = vpop.f32.mrb[0].mxu0
      %v9691 = vadd.f32 %v9479, %v9690
      %v9692 = vpop.f32.mrb[0].mxu0
      %9693 = vmatprep.mubr.bf16.mxu0 %v9400
      %9694 = vmatmul.mubr.bf16.gmra.mrb[0].mxu0 %v9399
      %v9695 = vpop.f32.mrb[0].mxu0
      %v9696 = vadd.f32 %v9479, %v9695
      %v9697 = vpop.f32.mrb[0].mxu0
      %v9698 = vpop.f32.mrb[0].mxu0
      %v9699 = vadd.f32 %v9479, %v9698
      %v9700 = vpop.f32.mrb[0].mxu0
      %9701 = vmatprep.mubr.bf16.mxu0 %v9403
      %9702 = vmatmul.mubr.bf16.gmra.mrb[0].mxu0 %v9402
      %v9703 = vpop.f32.mrb[0].mxu0
      %v9704 = vadd.f32 %v9479, %v9703
      %v9705 = vpop.f32.mrb[0].mxu0
      %v9706 = vpop.f32.mrb[0].mxu0
      %v9707 = vadd.f32 %v9479, %v9706
      %v9708 = vpop.f32.mrb[0].mxu0
      %9709 = vmatprep.mubr.bf16.mxu0 %v9406
      %9710 = vmatmul.mubr.bf16.gmra.mrb[0].mxu0 %v9405
      %v9711 = vpop.f32.mrb[0].mxu0
      %v9712 = vadd.f32 %v9479, %v9711
      %v9713 = vpop.f32.mrb[0].mxu0
      %v9714 = vpop.f32.mrb[0].mxu0
      %v9715 = vadd.f32 %v9479, %v9714
      %v9716 = vpop.f32.mrb[0].mxu0
      %9717 = vmatprep.mubr.bf16.mxu0 %v9409
      %9718 = vmatmul.mubr.bf16.gmra.mrb[0].mxu0 %v9408
      %v9719 = vpop.f32.mrb[0].mxu0
      %v9720 = vadd.f32 %v9479, %v9719
      %v9721 = vpop.f32.mrb[0].mxu0
      %v9722 = vpop.f32.mrb[0].mxu0
      %v9723 = vadd.f32 %v9479, %v9722
      %v9724 = vpop.f32.mrb[0].mxu0
      %9725 = vmatprep.mubr.bf16.mxu0 %v9412
      %9726 = vmatmul.mubr.bf16.gmra.mrb[0].mxu0 %v9411
      %v9727 = vpop.f32.mrb[0].mxu0
      %v9728 = vadd.f32 %v9479, %v9727
      %v9729 = vpop.f32.mrb[0].mxu0
      %v9730 = vpop.f32.mrb[0].mxu0
      %v9731 = vadd.f32 %v9479, %v9730
      %v9732 = vpop.f32.mrb[0].mxu0
      %9733 = vmatprep.mubr.bf16.mxu0 %v9415
      %9734 = vmatmul.mubr.bf16.gmra.mrb[0].mxu0 %v9414
      %v9735 = vpop.f32.mrb[0].mxu0
      %v9736 = vadd.f32 %v9479, %v9735
      %v9737 = vpop.f32.mrb[0].mxu0
      %v9738 = vpop.f32.mrb[0].mxu0
      %v9739 = vadd.f32 %v9479, %v9738
      %v9740 = vpop.f32.mrb[0].mxu0
      %9741 = vmatprep.mubr.bf16.mxu0 %v9418
      %9742 = vmatmul.mubr.bf16.gmra.mrb[0].mxu0 %v9417
      %v9743 = vpop.f32.mrb[0].mxu0
      %v9744 = vadd.f32 %v9479, %v9743
      %v9745 = vpop.f32.mrb[0].mxu0
      %v9746 = vpop.f32.mrb[0].mxu0
      %v9747 = vadd.f32 %v9479, %v9746
      %v9748 = vpop.f32.mrb[0].mxu0
      %9749 = vmatprep.mubr.bf16.mxu0 %v9421
      %9750 = vmatmul.mubr.bf16.gmra.mrb[0].mxu0 %v9420
      %v9751 = vpop.f32.mrb[0].mxu0
      %v9752 = vadd.f32 %v9479, %v9751
      %v9753 = vpop.f32.mrb[0].mxu0
      %v9754 = vpop.f32.mrb[0].mxu0
      %v9755 = vadd.f32 %v9479, %v9754
      %v9756 = vpop.f32.mrb[0].mxu0
      %9757 = vmatprep.mubr.bf16.mxu0 %v9424
      %9758 = vmatmul.mubr.bf16.gmra.mrb[0].mxu0 %v9423
      %v9759 = vpop.f32.mrb[0].mxu0
      %v9760 = vadd.f32 %v9479, %v9759
      %v9761 = vpop.f32.mrb[0].mxu0
      %v9762 = vpop.f32.mrb[0].mxu0
      %v9763 = vadd.f32 %v9479, %v9762
      %v9764 = vpop.f32.mrb[0].mxu0
      %9765 = vmatprep.mubr.bf16.mxu0 %v9427
      %9766 = vmatmul.mubr.bf16.gmra.mrb[0].mxu0 %v9426
      %v9767 = vpop.f32.mrb[0].mxu0
      %v9768 = vadd.f32 %v9479, %v9767
      %v9769 = vpop.f32.mrb[0].mxu0
      %v9770 = vpop.f32.mrb[0].mxu0
      %v9771 = vadd.f32 %v9479, %v9770
      %v9772 = vpop.f32.mrb[0].mxu0
      %9773 = vmatprep.mubr.bf16.mxu0 %v9430
      %9774 = vmatmul.mubr.bf16.gmra.mrb[0].mxu0 %v9429
      %v9775 = vpop.f32.mrb[0].mxu0
      %v9776 = vadd.f32 %v9479, %v9775
      %v9777 = vpop.f32.mrb[0].mxu0
      %v9778 = vpop.f32.mrb[0].mxu0
      %v9779 = vadd.f32 %v9479, %v9778
      %v9780 = vpop.f32.mrb[0].mxu0
      %9781 = vmatprep.mubr.bf16.mxu0 %v9433
      %9782 = vmatmul.mubr.bf16.gmra.mrb[0].mxu0 %v9432
      %v9783 = vpop.f32.mrb[0].mxu0
      %v9784 = vadd.f32 %v9479, %v9783
      %v9785 = vpop.f32.mrb[0].mxu0
      %v9786 = vpop.f32.mrb[0].mxu0
      %v9787 = vadd.f32 %v9479, %v9786
      %v9788 = vpop.f32.mrb[0].mxu0
      %9789 = vmatprep.mubr.bf16.mxu0 %v9436
      %9790 = vmatmul.mubr.bf16.gmra.mrb[0].mxu0 %v9435
      %v9791 = vpop.f32.mrb[0].mxu0
      %v9792 = vadd.f32 %v9479, %v9791
      %v9793 = vpop.f32.mrb[0].mxu0
      %v9794 = vpop.f32.mrb[0].mxu0
      %v9795 = vadd.f32 %v9479, %v9794
      %v9796 = vpop.f32.mrb[0].mxu0
      %9797 = vdwg.mxu0
      %9798 = vmatprep.subr.bf16.mxu0 0
      %9799 = vmatpush1.bf16.msra.mxu0 %v9569
      %9800 = vmatprep.subr.bf16.mxu0 0
      %9801 = vmatpush1.bf16.msra.mxu0 %v9570
      %9802 = vmatprep.subr.bf16.mxu0 0
      %9803 = vmatpush1.bf16.msra.mxu0 0
      %9804 = vmatprep.subr.bf16.mxu0 0
      %9805 = vmatpush1.bf16.msra.mxu0 0
      %9806 = vmatprep.subr.bf16.mxu0 0
      %9807 = vmatpush1.bf16.msra.mxu0 0
      %9808 = vmatprep.subr.bf16.mxu0 0
      %9809 = vmatpush1.bf16.msra.mxu0 0
      %9810 = vmatprep.subr.bf16.mxu0 0
      %9811 = vmatpush1.bf16.msra.mxu0 0
      %9812 = vmatprep.subr.bf16.mxu0 0
      %9813 = vmatpush1.bf16.msra.mxu0 0
      %9814 = vmatprep.subr.bf16.mxu0 0
      %9815 = vmatpush1.bf16.msra.mxu0 0
      %9816 = vmatprep.subr.bf16.mxu0 0
      %9817 = vmatpush1.bf16.msra.mxu0 0
      %9818 = vmatprep.subr.bf16.mxu0 0
      %9819 = vmatpush1.bf16.msra.mxu0 0
      %9820 = vmatprep.subr.bf16.mxu0 0
      %9821 = vmatpush1.bf16.msra.mxu0 0
      %9822 = vmatprep.subr.bf16.mxu0 0
      %9823 = vmatpush1.bf16.msra.mxu0 0
      %9824 = vmatprep.subr.bf16.mxu0 0
      %9825 = vmatpush1.bf16.msra.mxu0 0
      %9826 = vmatprep.subr.bf16.mxu0 0
      %9827 = vmatpush1.bf16.msra.mxu0 0
      %9828 = vmatprep.subr.bf16.mxu0 0
      %9829 = vmatpush1.bf16.msra.mxu0 0
      %9830 = vmatprep.mubr.bf16.mxu0 0
      %9831 = vmatmul.mubr.bf16.gmra.mrb[0].mxu0 %v9590
      %v9832 = vpop.f32.mrb[0].mxu0
      %v9833 = vadd.f32 %v9672, %v9832
      %v9834 = vpop.f32.mrb[0].mxu0
      %v9835 = vpop.f32.mrb[0].mxu0
      %v9836 = vadd.f32 %v9675, %v9835
      %v9837 = vpop.f32.mrb[0].mxu0
      %9838 = vmatprep.mubr.bf16.mxu0 0
      %9839 = vmatmul.mubr.bf16.gmra.mrb[0].mxu0 %v9593
      %v9840 = vpop.f32.mrb[0].mxu0
      %v9841 = vadd.f32 %v9680, %v9840
      %v9842 = vpop.f32.mrb[0].mxu0
      %v9843 = vpop.f32.mrb[0].mxu0
      %v9844 = vadd.f32 %v9683, %v9843
      %v9845 = vpop.f32.mrb[0].mxu0
      %9846 = vmatprep.mubr.bf16.mxu0 0
      %9847 = vmatmul.mubr.bf16.gmra.mrb[0].mxu0 %v9596
      %v9848 = vpop.f32.mrb[0].mxu0
      %v9849 = vadd.f32 %v9688, %v9848
      %v9850 = vpop.f32.mrb[0].mxu0
      %v9851 = vpop.f32.mrb[0].mxu0
      %v9852 = vadd.f32 %v9691, %v9851
      %v9853 = vpop.f32.mrb[0].mxu0
      %9854 = vmatprep.mubr.bf16.mxu0 0
      %9855 = vmatmul.mubr.bf16.gmra.mrb[0].mxu0 %v9599
      %v9856 = vpop.f32.mrb[0].mxu0
      %v9857 = vadd.f32 %v9696, %v9856
      %v9858 = vpop.f32.mrb[0].mxu0
      %v9859 = vpop.f32.mrb[0].mxu0
      %v9860 = vadd.f32 %v9699, %v9859
      %v9861 = vpop.f32.mrb[0].mxu0
      %9862 = vmatprep.mubr.bf16.mxu0 0
      %9863 = vmatmul.mubr.bf16.gmra.mrb[0].mxu0 %v9602
      %v9864 = vpop.f32.mrb[0].mxu0
      %v9865 = vadd.f32 %v9704, %v9864
      %v9866 = vpop.f32.mrb[0].mxu0
      %v9867 = vpop.f32.mrb[0].mxu0
      %v9868 = vadd.f32 %v9707, %v9867
      %v9869 = vpop.f32.mrb[0].mxu0
      %9870 = vmatprep.mubr.bf16.mxu0 0
      %9871 = vmatmul.mubr.bf16.gmra.mrb[0].mxu0 %v9605
      %v9872 = vpop.f32.mrb[0].mxu0
      %v9873 = vadd.f32 %v9712, %v9872
      %v9874 = vpop.f32.mrb[0].mxu0
      %v9875 = vpop.f32.mrb[0].mxu0
      %v9876 = vadd.f32 %v9715, %v9875
      %v9877 = vpop.f32.mrb[0].mxu0
      %9878 = vmatprep.mubr.bf16.mxu0 0
      %9879 = vmatmul.mubr.bf16.gmra.mrb[0].mxu0 %v9608
      %v9880 = vpop.f32.mrb[0].mxu0
      %v9881 = vadd.f32 %v9720, %v9880
      %v9882 = vpop.f32.mrb[0].mxu0
      %v9883 = vpop.f32.mrb[0].mxu0
      %v9884 = vadd.f32 %v9723, %v9883
      %v9885 = vpop.f32.mrb[0].mxu0
      %9886 = vmatprep.mubr.bf16.mxu0 0
      %9887 = vmatmul.mubr.bf16.gmra.mrb[0].mxu0 %v9611
      %v9888 = vpop.f32.mrb[0].mxu0
      %v9889 = vadd.f32 %v9728, %v9888
      %v9890 = vpop.f32.mrb[0].mxu0
      %v9891 = vpop.f32.mrb[0].mxu0
      %v9892 = vadd.f32 %v9731, %v9891
      %v9893 = vpop.f32.mrb[0].mxu0
      %9894 = vmatprep.mubr.bf16.mxu0 0
      %9895 = vmatmul.mubr.bf16.gmra.mrb[0].mxu0 %v9614
      %v9896 = vpop.f32.mrb[0].mxu0
      %v9897 = vadd.f32 %v9736, %v9896
      %v9898 = vpop.f32.mrb[0].mxu0
      %v9899 = vpop.f32.mrb[0].mxu0
      %v9900 = vadd.f32 %v9739, %v9899
      %v9901 = vpop.f32.mrb[0].mxu0
      %9902 = vmatprep.mubr.bf16.mxu0 0
      %9903 = vmatmul.mubr.bf16.gmra.mrb[0].mxu0 %v9617
      %v9904 = vpop.f32.mrb[0].mxu0
      %v9905 = vadd.f32 %v9744, %v9904
      %v9906 = vpop.f32.mrb[0].mxu0
      %v9907 = vpop.f32.mrb[0].mxu0
      %v9908 = vadd.f32 %v9747, %v9907
      %v9909 = vpop.f32.mrb[0].mxu0
      %9910 = vmatprep.mubr.bf16.mxu0 0
      %9911 = vmatmul.mubr.bf16.gmra.mrb[0].mxu0 %v9620
      %v9912 = vpop.f32.mrb[0].mxu0
      %v9913 = vadd.f32 %v9752, %v9912
      %v9914 = vpop.f32.mrb[0].mxu0
      %v9915 = vpop.f32.mrb[0].mxu0
      %v9916 = vadd.f32 %v9755, %v9915
      %v9917 = vpop.f32.mrb[0].mxu0
      %9918 = vmatprep.mubr.bf16.mxu0 0
      %9919 = vmatmul.mubr.bf16.gmra.mrb[0].mxu0 %v9623
      %v9920 = vpop.f32.mrb[0].mxu0
      %v9921 = vadd.f32 %v9760, %v9920
      %v9922 = vpop.f32.mrb[0].mxu0
      %v9923 = vpop.f32.mrb[0].mxu0
      %v9924 = vadd.f32 %v9763, %v9923
      %v9925 = vpop.f32.mrb[0].mxu0
      %9926 = vmatprep.mubr.bf16.mxu0 0
      %9927 = vmatmul.mubr.bf16.gmra.mrb[0].mxu0 %v9626
      %v9928 = vpop.f32.mrb[0].mxu0
      %v9929 = vadd.f32 %v9768, %v9928
      %v9930 = vpop.f32.mrb[0].mxu0
      %v9931 = vpop.f32.mrb[0].mxu0
      %v9932 = vadd.f32 %v9771, %v9931
      %v9933 = vpop.f32.mrb[0].mxu0
      %9934 = vmatprep.mubr.bf16.mxu0 0
      %9935 = vmatmul.mubr.bf16.gmra.mrb[0].mxu0 %v9629
      %v9936 = vpop.f32.mrb[0].mxu0
      %v9937 = vadd.f32 %v9776, %v9936
      %v9938 = vpop.f32.mrb[0].mxu0
      %v9939 = vpop.f32.mrb[0].mxu0
      %v9940 = vadd.f32 %v9779, %v9939
      %v9941 = vpop.f32.mrb[0].mxu0
      %9942 = vmatprep.mubr.bf16.mxu0 0
      %9943 = vmatmul.mubr.bf16.gmra.mrb[0].mxu0 %v9632
      %v9944 = vpop.f32.mrb[0].mxu0
      %v9945 = vadd.f32 %v9784, %v9944
      %v9946 = vpop.f32.mrb[0].mxu0
      %v9947 = vpop.f32.mrb[0].mxu0
      %v9948 = vadd.f32 %v9787, %v9947
      %v9949 = vpop.f32.mrb[0].mxu0
      %9950 = vmatprep.mubr.bf16.mxu0 0
      %9951 = vmatmul.mubr.bf16.gmra.mrb[0].mxu0 %v9635
      %v9952 = vpop.f32.mrb[0].mxu0
      %v9953 = vadd.f32 %v9792, %v9952
      %v9954 = vpop.f32.mrb[0].mxu0
      %v9955 = vpop.f32.mrb[0].mxu0
      %v9956 = vadd.f32 %v9795, %v9955
      %v9957 = vpop.f32.mrb[0].mxu0
      %9958 = vdwg.mxu0
      %v9959 = vmax.f32 %v9833, 0.0
      %v9960 = vmax.f32 %v9836, 0.0
      %v9961 = vmax.f32 %v9841, 0.0
      %v9962 = vmax.f32 %v9844, 0.0
      %v9963 = vmax.f32 %v9849, 0.0
      %v9964 = vmax.f32 %v9852, 0.0
      %v9965 = vmax.f32 %v9857, 0.0
      %v9966 = vmax.f32 %v9860, 0.0
      %v9967 = vmax.f32 %v9865, 0.0
      %v9968 = vmax.f32 %v9868, 0.0
      %v9969 = vmax.f32 %v9873, 0.0
      %v9970 = vmax.f32 %v9876, 0.0
      %v9971 = vmax.f32 %v9881, 0.0
      %v9972 = vmax.f32 %v9884, 0.0
      %v9973 = vmax.f32 %v9889, 0.0
      %v9974 = vmax.f32 %v9892, 0.0
      %v9975 = vmax.f32 %v9897, 0.0
      %v9976 = vmax.f32 %v9900, 0.0
      %v9977 = vmax.f32 %v9905, 0.0
      %v9978 = vmax.f32 %v9908, 0.0
      %v9979 = vmax.f32 %v9913, 0.0
      %v9980 = vmax.f32 %v9916, 0.0
      %v9981 = vmax.f32 %v9921, 0.0
      %v9982 = vmax.f32 %v9924, 0.0
      %v9983 = vmax.f32 %v9929, 0.0
      %v9984 = vmax.f32 %v9932, 0.0
      %v9985 = vmax.f32 %v9937, 0.0
      %v9986 = vmax.f32 %v9940, 0.0
      %v9987 = vmax.f32 %v9945, 0.0
      %v9988 = vmax.f32 %v9948, 0.0
      %v9989 = vmax.f32 %v9953, 0.0
      %v9990 = vmax.f32 %v9956, 0.0
      %v9991 = vld [vmem:[%s11] sm:$0x3]
      %v9992 = vpack.c.bf16 %v9960, %v9959
      %v9993 = vpack.c.bf16 %v9962, %v9961
      %v9994 = vpack.c.bf16 %v9964, %v9963
      %v9995 = vpack.c.bf16 %v9966, %v9965
      %v9996 = vpack.c.bf16 %v9968, %v9967
      %v9997 = vpack.c.bf16 %v9970, %v9969
      %v9998 = vpack.c.bf16 %v9972, %v9971
      %v9999 = vpack.c.bf16 %v9974, %v9973
      %v10000 = vpack.c.bf16 %v9976, %v9975
      %v10001 = vpack.c.bf16 %v9978, %v9977
      %v10002 = vpack.c.bf16 %v9980, %v9979
      %v10003 = vpack.c.bf16 %v9982, %v9981
      %v10004 = vpack.c.bf16 %v9984, %v9983
      %v10005 = vpack.c.bf16 %v9986, %v9985
      %v10006 = vpack.c.bf16 %v9988, %v9987
      %v10007 = vpack.c.bf16 %v9990, %v9989
      %v10008 = vld [vmem:[%s12] sm:$0x7]
      %10010 = vset.pattern.permute.xlu0 0
      %10011 = vperm.xlu0 %10010, %v10008
      %v10012 = vpop.permute.xlu0 %10011
      %v10015 = vsel %vm488, %v9991, 0
      %v10018 = vsel %vm488, %v9992, 0
      %v10021 = vsel %vm488, %v9993, 0
      %v10024 = vsel %vm488, %v9994, 0
      %v10027 = vsel %vm488, %v9995, 0
      %v10030 = vsel %vm488, %v9996, 0
      %v10033 = vsel %vm488, %v9997, 0
      %v10036 = vsel %vm488, %v9998, 0
      %v10039 = vsel %vm488, %v9999, 0
      %v10042 = vsel %vm488, %v10000, 0
      %v10045 = vsel %vm488, %v10001, 0
      %v10048 = vsel %vm488, %v10002, 0
      %v10051 = vsel %vm488, %v10003, 0
      %v10054 = vsel %vm488, %v10004, 0
      %v10057 = vsel %vm488, %v10005, 0
      %v10060 = vsel %vm488, %v10006, 0
      %v10063 = vsel %vm488, %v10007, 0
      %10065 = vmatprep.subr.bf16.mxu0 0
      %10066 = vmatpush1.bf16.xpose.msra.mxu0 %v10018
      %10067 = vmatprep.subr.bf16.mxu0 0
      %10068 = vmatpush1.bf16.xpose.msra.mxu0 %v10021
      %10069 = vmatprep.subr.bf16.mxu0 0
      %10070 = vmatpush1.bf16.xpose.msra.mxu0 %v10024
      %10071 = vmatprep.subr.bf16.mxu0 0
      %10072 = vmatpush1.bf16.xpose.msra.mxu0 %v10027
      %10073 = vmatprep.subr.bf16.mxu0 0
      %10074 = vmatpush1.bf16.xpose.msra.mxu0 %v10030
      %10075 = vmatprep.subr.bf16.mxu0 0
      %10076 = vmatpush1.bf16.xpose.msra.mxu0 %v10033
      %10077 = vmatprep.subr.bf16.mxu0 0
      %10078 = vmatpush1.bf16.xpose.msra.mxu0 %v10036
      %10079 = vmatprep.subr.bf16.mxu0 0
      %10080 = vmatpush1.bf16.xpose.msra.mxu0 %v10039
      %10081 = vmatprep.subr.bf16.mxu0 0
      %10082 = vmatpush1.bf16.xpose.msra.mxu0 %v10042
      %10083 = vmatprep.subr.bf16.mxu0 0
      %10084 = vmatpush1.bf16.xpose.msra.mxu0 %v10045
      %10085 = vmatprep.subr.bf16.mxu0 0
      %10086 = vmatpush1.bf16.xpose.msra.mxu0 %v10048
      %10087 = vmatprep.subr.bf16.mxu0 0
      %10088 = vmatpush1.bf16.xpose.msra.mxu0 %v10051
      %10089 = vmatprep.subr.bf16.mxu0 0
      %10090 = vmatpush1.bf16.xpose.msra.mxu0 %v10054
      %10091 = vmatprep.subr.bf16.mxu0 0
      %10092 = vmatpush1.bf16.xpose.msra.mxu0 %v10057
      %10093 = vmatprep.subr.bf16.mxu0 0
      %10094 = vmatpush1.bf16.xpose.msra.mxu0 %v10060
      %10095 = vmatprep.subr.bf16.mxu0 0
      %10096 = vmatpush1.bf16.xpose.msra.mxu0 %v10063
      %10097 = vmatprep.mubr.bf16.mxu0 0
      %10098 = vmatmul.mubr.bf16.gmra.mrb[0].mxu0 %v10015
      %v10099 = vpop.f32.mrb[0].mxu0
      %v10100 = vadd.f32 %v10012, %v10099
      %v10101 = vpop.f32.mrb[0].mxu0
      %v10102 = vadd.f32 %v10012, %v10101
      %v10103 = vpop.f32.mrb[0].mxu0
      %v10104 = vpop.f32.mrb[0].mxu0
      %10105 = vdwg.mxu0
      %v10108 = vcombine.low %v10100, %v10102
      %10110 = vst [vmem:[%s440] sm:$0x77] %v10108
      %p10111 = scmp.lt.s32.totalorder %s24, 1
      %s10112 = scalar_select %p10111, %s24, 1
      %s10113 = smul.addr %s10112, 2
      %s10114 = smul.addr %s10113, 4
      %s10115 = scalar_lea.vmem %s13, %s10114
      // Predicated region
      $region73: #{tpu_custom_call.1} parent=71 // pred_check
        %p10116 = pneg %p320
      $region74: #{tpu_custom_call.1} parent=71 // pred_check_branch
        %10118 = sbr.rel (%p10116) target = $region76
      $region75: #{tpu_custom_call.1} parent=71 // pred_region
        _
      $region76: #{tpu_custom_call.1} parent=71 // pred_fallthru
        _
    $region72: #{tpu_custom_call.1} parent=5 // pred_fallthru
      _
    %p10119 = scmp.le.s32.totalorder 2, %s19
    // Predicated region
    $region77: #{tpu_custom_call.1} parent=5 // pred_check
      %p10120 = pneg %p10119
    $region78: #{tpu_custom_call.1} parent=5 // pred_check_branch
      %10122 = sbr.rel (%p10120) target = $region80
    $region79: #{tpu_custom_call.1} parent=5 // pred_region
      %s10123 = ssub.s32 %s19, 2
      // Predicated region
      $region81: #{tpu_custom_call.1} parent=79 // pred_check
        %p10124 = pneg %p326
      $region82: #{tpu_custom_call.1} parent=79 // pred_check_branch
        %10126 = sbr.rel (%p10124) target = $region84
      $region83: #{tpu_custom_call.1} parent=79 // pred_region
        %p10127 = scmp.lt.s32.totalorder %s25, 1
        %s10128 = scalar_select %p10127, %s25, 1
        %s10129 = smul.addr %s10128, 2
        %s10130 = smul.addr %s10129, 4
        %s10131 = scalar_lea.vmem %s13, %s10130
      $region84: #{tpu_custom_call.1} parent=79 // pred_fallthru
        _
    $region80: #{tpu_custom_call.1} parent=5 // pred_fallthru
      _
  $region6: #{tpu_custom_call.1} parent=0 // loop_footer
    %s23 = sadd.s32 1, %s19
  $region7: #{tpu_custom_call.1} parent=0 // loop_footer_branch
    %18 = sbr.rel target = $region3
  $region8: #{tpu_custom_call.1} parent=0 // loop_exit
    _

</llo_original>
